<compile_context>
chip_gen: v7x
topology: tpu7x:2x2x1
jax: 0.10.0
libtpu: 0.0.40
codegen_flags: <defaults>
</compile_context>

<pallas_src>
import math

import jax
import jax.numpy as jnp
import numpy as np
from jax import lax
from jax.experimental import pallas as pl
from jax.experimental.pallas import tpu as pltpu


# ----------------------------------------------------------------------------
# Fused kernel: all T timesteps of both ConvLSTM layers + decoder, per batch b.
# ----------------------------------------------------------------------------
def _make_kernel(T, W, HW, hid1, hid2, dec_mid):
    R = HW + 2 * W  # flat (H+2, W) spatial extent: one zero halo row top/bottom

    def kernel(xt_ref, wx1_ref, wh1_ref, b1_ref, wg2_ref, b2_ref,
               wd1_ref, bd1_ref, wd2_ref, bd2_ref, o_ref,
               q1_ref, q2_ref, c1_ref, c2_ref):
        # Scratch persists across grid steps -> re-init per batch element.
        q1_ref[...] = jnp.zeros(q1_ref.shape, q1_ref.dtype)
        q2_ref[...] = jnp.zeros(q2_ref.shape, q2_ref.dtype)
        c1_ref[...] = jnp.zeros(c1_ref.shape, c1_ref.dtype)
        c2_ref[...] = jnp.zeros(c2_ref.shape, c2_ref.dtype)

        # Boundary-column masks for the W-direction +-1 shifts (hoisted).
        col = lax.broadcasted_iota(jnp.int32, (R, 1), 0) % W
        not_first = col != 0
        not_last = col != (W - 1)

        b1v = b1_ref[...]  # (1, 4*hid1)
        b2v = b2_ref[...]  # (1, 4*hid2)

        def build_patch(q_ref):
            """im2col LHS (HW, 9*nc) bf16 from a flat, H-halo'd state buffer.

            The +-1 column shift is a single 1-sublane roll whose row-wraparound
            is zeroed by the boundary mask (pltpu.roll is a drop-in here); the
            three dy taps are 8-aligned row slices and the slab concatenation is
            128-lane aligned, so no tile-crossing relayouts occur.
            """
            q = q_ref[...]                                         # (R, nc) f32
            left = jnp.where(not_first, jnp.roll(q, 1, axis=0), 0.0)    # col x-1
            right = jnp.where(not_last, jnp.roll(q, -1, axis=0), 0.0)   # col x+1
            sh = (left.astype(jnp.bfloat16),
                  q.astype(jnp.bfloat16),
                  right.astype(jnp.bfloat16))
            slabs = [sh[dx][dy * W:dy * W + HW, :]
                     for dy in range(3) for dx in range(3)]
            return jnp.concatenate(slabs, axis=1)                  # (HW, 9*nc) bf16

        def lstm_update(gates, c_ref, hid):
            # gate order (i, f, o, g) == torch.split(conv_out, hid, dim=1)
            i = jax.nn.sigmoid(gates[:, 0 * hid:1 * hid])
            f = jax.nn.sigmoid(gates[:, 1 * hid:2 * hid])
            o = jax.nn.sigmoid(gates[:, 2 * hid:3 * hid])
            g = jnp.tanh(gates[:, 3 * hid:4 * hid])
            c_next = f * c_ref[...] + i * g
            c_ref[...] = c_next
            return o * jnp.tanh(c_next)                            # (HW, hid) f32

        def step(t, carry):
            # ---- ConvLSTM layer 1: fused h-conv matmul + tiny x-conv matmul --
            xt = xt_ref[0, t].astype(jnp.bfloat16)                 # (HW, 9*Cin)
            g1 = jnp.dot(build_patch(q1_ref), wh1_ref[...],
                         preferred_element_type=jnp.float32)
            g1 = g1 + jnp.dot(xt, wx1_ref[...],
                              preferred_element_type=jnp.float32) + b1v
            h1 = lstm_update(g1, c1_ref, hid1)
            q1_ref[W:W + HW, 0:hid1] = h1
            q2_ref[W:W + HW, hid2:hid2 + hid1] = h1
            # ---- ConvLSTM layer 2: ONE fused matmul over [h2 | h1] ----------
            g2 = jnp.dot(build_patch(q2_ref), wg2_ref[...],
                         preferred_element_type=jnp.float32) + b2v
            h2 = lstm_update(g2, c2_ref, hid2)
            q2_ref[W:W + HW, 0:hid2] = h2
            return carry

        lax.fori_loop(0, T, step, 0)

        # ---- decoder conv1 (eval-mode BatchNorm folded into wd1/bd1) + ReLU --
        # TODO(synk): BN uses freshly-initialized eval running stats folded
        # host-side; Dropout2d(0.2) is eval-mode identity.
        y = jnp.dot(build_patch(q2_ref), wd1_ref[...],
                    preferred_element_type=jnp.float32) + bd1_ref[...]
        y = jnp.maximum(y, 0.0)
        q1_ref[W:W + HW, 0:dec_mid] = y          # reuse the layer-1 buffer for y

        # ---- decoder conv2 (dec_mid -> 1), emitted directly as a lane-dense
        # (1, HW) row via a transposed-RHS dot_general (no per-pixel-column
        # relayout, dense output writeback).
        out_row = lax.dot_general(
            wd2_ref[...], build_patch(q1_ref),
            dimension_numbers=(((1,), (1,)), ((), ())),
            preferred_element_type=jnp.float32)                    # (1, HW)
        o_ref[0] = out_row + bd2_ref[...]

    return kernel


# ----------------------------------------------------------------------------
# Wrapper
# ----------------------------------------------------------------------------
def _convlstm_forward(x, params):
    """x: (B, T, H, W, C) f32 -> (B, 1, H, W) f32 (matches the PyTorch module)."""
    B, T, H, W, Cin = x.shape
    assert W % 8 == 0, "W must be a multiple of 8 (sublane tile)"
    HW = H * W

    wx1, wh1, b1 = params["wx1"], params["wh1"], params["b1"]
    wg2, b2 = params["wg2"], params["b2"]
    wd1, bd1 = params["wd1"], params["bd1"]
    wd2, bd2 = params["wd2"], params["bd2"]
    hid1 = wh1.shape[1] // 4
    hid2 = wg2.shape[1] // 4
    dec_mid = wd1.shape[1]
    n1 = wh1.shape[0] // 9
    n2 = wg2.shape[0] // 9

    # Host/XLA-side im2col of the input frames (pure data rearrangement): the
    # kernel receives a lane-dense (B, T, HW, 9*Cin) block so the layer-1 input
    # conv is a single small matmul per step and the HBM->VMEM DMA stays dense.
    xp = jnp.pad(x, ((0, 0), (0, 0), (1, 1), (1, 1), (0, 0)))
    xtaps = jnp.concatenate(
        [xp[:, :, dy:dy + H, dx:dx + W, :] for dy in range(3) for dx in range(3)],
        axis=-1).reshape(B, T, HW, 9 * Cin)

    kernel = _make_kernel(T, W, HW, hid1, hid2, dec_mid)
    out = pl.pallas_call(
        kernel,
        out_shape=jax.ShapeDtypeStruct((B, 1, HW), jnp.float32),
        grid=(B,),
        in_specs=[
            pl.BlockSpec((1, T, HW, 9 * Cin), lambda b: (b, 0, 0, 0)),  # x im2col
            pl.BlockSpec((9 * Cin, 4 * hid1), lambda b: (0, 0)),        # wx1
            pl.BlockSpec((9 * n1, 4 * hid1), lambda b: (0, 0)),         # wh1 packed
            pl.BlockSpec((1, 4 * hid1), lambda b: (0, 0)),              # b1
            pl.BlockSpec((9 * n2, 4 * hid2), lambda b: (0, 0)),         # wg2 packed
            pl.BlockSpec((1, 4 * hid2), lambda b: (0, 0)),              # b2
            pl.BlockSpec((9 * n2, dec_mid), lambda b: (0, 0)),          # wd1 packed (BN folded)
            pl.BlockSpec((1, dec_mid), lambda b: (0, 0)),               # bd1
            pl.BlockSpec((1, 9 * n1), lambda b: (0, 0)),                # wd2 packed row
            pl.BlockSpec((1, 1), lambda b: (0, 0)),                     # bd2
        ],
        out_specs=pl.BlockSpec((1, 1, HW), lambda b: (b, 0, 0)),
        scratch_shapes=[
            pltpu.VMEM((HW + 2 * W, n1), jnp.float32),  # layer-1 state [h1 | pad]
            pltpu.VMEM((HW + 2 * W, n2), jnp.float32),  # layer-2 state [h2 | h1 | pad]
            pltpu.VMEM((HW, hid1), jnp.float32),        # c1
            pltpu.VMEM((HW, hid2), jnp.float32),        # c2
        ],
        compiler_params=pltpu.CompilerParams(
            dimension_semantics=("parallel",),  # v7x: batch shards across both TCs (B >= 2)
            vmem_limit_bytes=32 * 1024 * 1024),
    )(xtaps, wx1, wh1, b1, wg2, b2, wd1, bd1, wd2, bd2)
    return out.reshape(B, 1, H, W)


convlstm_wrapper_forward = jax.jit(_convlstm_forward)


# ----------------------------------------------------------------------------
# Parameter init + host-side weight packing
# ----------------------------------------------------------------------------
def _round_up(v, m):
    return ((v + m - 1) // m) * m


def _xavier_uniform(key, cin, cout):
    # equivalent to nn.init.xavier_uniform_ on a (cout, cin, 3, 3) conv weight
    bound = math.sqrt(6.0 / ((cin + cout) * 9))
    return jax.random.uniform(key, (3, 3, cin, cout), jnp.float32, -bound, bound)


def _conv_bias(key, cin, cout):
    bound = 1.0 / math.sqrt(cin * 9)
    return jax.random.uniform(key, (cout,), jnp.float32, -bound, bound)


def _pack_taps(w_hwio, placements, n_cols):
    """(3,3,cin,cout) HWIO conv weight -> (9*n_cols, cout) rows for the fused
    im2col matmul.  `placements` = [(buffer_col_offset, ch_start, ch_count)]
    describes where each input-channel group lives in the 128-padded state
    buffer columns; unused rows stay zero."""
    w = np.asarray(w_hwio, np.float32)
    cout = w.shape[-1]
    packed = np.zeros((9, n_cols, cout), np.float32)
    for dy in range(3):
        for dx in range(3):
            k = dy * 3 + dx
            for off, cs, cc in placements:
                packed[k, off:off + cc, :] = w[dy, dx, cs:cs + cc, :]
    return packed.reshape(9 * n_cols, cout)


def init_params(key, in_ch=1, hid_chs=(32, 64), dec_mid=64):
    """Returns (kernel-packed params, raw HWIO weights for the reference).

    PyTorch layout semantics are preserved: cell conv input channels are
    ordered [x, h] (torch.cat(dim=1)), output channels gate-fused [i|f|o|g]
    (torch.split(dim=1)).  A trained torch weight (OIHW) maps onto the raw
    HWIO arrays via w.transpose(2, 3, 1, 0).
    """
    hid1, hid2 = hid_chs
    n1 = _round_up(max(hid1, dec_mid), 128)   # layer-1 / decoder-mid buffer cols
    n2 = _round_up(hid1 + hid2, 128)          # layer-2 buffer cols

    ks = jax.random.split(key, 8)
    w1 = _xavier_uniform(ks[0], in_ch + hid1, 4 * hid1)
    b1 = _conv_bias(ks[1], in_ch + hid1, 4 * hid1)
    w2 = _xavier_uniform(ks[2], hid1 + hid2, 4 * hid2)
    b2 = _conv_bias(ks[3], hid1 + hid2, 4 * hid2)
    wd1 = _xavier_uniform(ks[4], hid2, dec_mid)
    bd1 = _conv_bias(ks[5], hid2, dec_mid)
    wd2 = _xavier_uniform(ks[6], dec_mid, 1)
    bd2 = _conv_bias(ks[7], dec_mid, 1)

    # TODO(synk): eval-mode BatchNorm2d with freshly-initialized running stats
    # (mean=0, var=1, gamma=1, beta=0) folded into decoder conv1; fold the real
    # trained stats/affine params here when loading a checkpoint.
    bn_scale = np.float32(1.0 / math.sqrt(1.0 + 1e-5))

    w1np = np.asarray(w1)
    params = {
        # layer 1: x-conv as a tiny (9*Cin, 4*hid1) matmul ...
        "wx1": jnp.asarray(w1np[:, :, :in_ch, :].reshape(9 * in_ch, 4 * hid1),
                           jnp.bfloat16),
        # ... and h-conv tap-fused; h1 lives at buffer cols [0:hid1].
        "wh1": jnp.asarray(_pack_taps(w1np[:, :, in_ch:, :], [(0, 0, hid1)], n1),
                           jnp.bfloat16),
        "b1": jnp.asarray(b1).reshape(1, -1),
        # layer 2 buffer: cols [0:hid2]=h2 (hidden), [hid2:hid2+hid1]=h1 (input);
        # the torch conv's input channels are ordered [h1, h2].
        "wg2": jnp.asarray(_pack_taps(w2, [(hid2, 0, hid1), (0, hid1, hid2)], n2),
                           jnp.bfloat16),
        "b2": jnp.asarray(b2).reshape(1, -1),
        # decoder conv1 reads only the h2 columns of the layer-2 buffer.
        "wd1": jnp.asarray(_pack_taps(np.asarray(wd1) * bn_scale, [(0, 0, hid2)], n2),
                           jnp.bfloat16),
        "bd1": jnp.asarray(np.asarray(bd1) * bn_scale).reshape(1, -1),
        # decoder conv2 reads the y columns of the (reused) layer-1 buffer;
        # stored as a row for the transposed dot_general.
        "wd2": jnp.asarray(_pack_taps(wd2, [(0, 0, dec_mid)], n1).T.copy(),
                           jnp.bfloat16),
        "bd2": jnp.asarray(bd2).reshape(1, 1),
    }
    raw = {"w1": w1, "b1": b1, "w2": w2, "b2": b2,
           "wd1": wd1, "bd1": bd1, "wd2": wd2, "bd2": bd2}
    return params, raw


# ----------------------------------------------------------------------------
# Pure-JAX reference of the PyTorch module (f32, NHWC) for correctness check
# ----------------------------------------------------------------------------
@jax.jit
def reference_forward(x, raw):
    w1, b1, w2, b2 = raw["w1"], raw["b1"], raw["w2"], raw["b2"]
    wd1, bd1, wd2, bd2 = raw["wd1"], raw["bd1"], raw["wd2"], raw["bd2"]
    hid1 = w1.shape[-1] // 4
    hid2 = w2.shape[-1] // 4
    B, T, H, W, _ = x.shape

    def conv(z, w, b):
        return lax.conv_general_dilated(
            z, w, (1, 1), "SAME",
            dimension_numbers=("NHWC", "HWIO", "NHWC")) + b

    def cell(z, h, c, w, b):
        i, f, o, g = jnp.split(conv(jnp.concatenate([z, h], -1), w, b), 4, axis=-1)
        c = jax.nn.sigmoid(f) * c + jax.nn.sigmoid(i) * jnp.tanh(g)
        h = jax.nn.sigmoid(o) * jnp.tanh(c)
        return h, c

    h1 = jnp.zeros((B, H, W, hid1)); c1 = jnp.zeros_like(h1)
    h2 = jnp.zeros((B, H, W, hid2)); c2 = jnp.zeros_like(h2)
    for t in range(T):
        h1, c1 = cell(x[:, t], h1, c1, w1, b1)
        h2, c2 = cell(h1, h2, c2, w2, b2)
    bn_scale = 1.0 / np.sqrt(1.0 + 1e-5)           # eval-mode BN, fresh stats
    y = jax.nn.relu(conv(h2, wd1, bd1) * bn_scale)  # Dropout2d eval = identity
    out = conv(y, wd2, bd2)                         # (B, H, W, 1)
    return jnp.transpose(out, (0, 3, 1, 2))         # (B, 1, H, W)


if __name__ == "__main__":
    key = jax.random.PRNGKey(0)
    kp, kx = jax.random.split(key)

    B, T, H, W, C = 2, 4, 16, 16, 1               # small demo shapes
    params, raw = init_params(kp, in_ch=C, hid_chs=(32, 64), dec_mid=64)
    x = jax.random.normal(kx, (B, T, H, W, C), jnp.float32)

    out = jax.block_until_ready(convlstm_wrapper_forward(x, params))
    assert out.shape == (B, 1, H, W), out.shape
    assert bool(jnp.all(jnp.isfinite(out)))

    ref = jax.block_until_ready(reference_forward(x, raw))
    np.testing.assert_allclose(np.asarray(out), np.asarray(ref),
                               rtol=5e-2, atol=5e-2)
    print("KERNEL_OK")
</pallas_src>

<mosaic_0001>
module attributes {stable_mosaic.version = 11 : i64} {
  func.func @kernel(%arg0: i32, %arg1: memref<1x4x256x9xf32, #tpu.memory_space<vmem>>, %arg2: memref<9x128xbf16, #tpu.memory_space<vmem>>, %arg3: memref<1152x128xbf16, #tpu.memory_space<vmem>>, %arg4: memref<1x128xf32, #tpu.memory_space<vmem>>, %arg5: memref<1152x256xbf16, #tpu.memory_space<vmem>>, %arg6: memref<1x256xf32, #tpu.memory_space<vmem>>, %arg7: memref<1152x64xbf16, #tpu.memory_space<vmem>>, %arg8: memref<1x64xf32, #tpu.memory_space<vmem>>, %arg9: memref<1x1152xbf16, #tpu.memory_space<vmem>>, %arg10: memref<1x1xf32, #tpu.memory_space<vmem>>, %arg11: memref<1x1x256xf32, #tpu.memory_space<vmem>>, %arg12: memref<288x128xf32, #tpu.memory_space<vmem>>, %arg13: memref<288x128xf32, #tpu.memory_space<vmem>>, %arg14: memref<256x32xf32, #tpu.memory_space<vmem>>, %arg15: memref<256x64xf32, #tpu.memory_space<vmem>>) attributes {dimension_semantics = [#tpu.dimension_semantics<parallel>], iteration_bounds = array<i64: 2>, scalar_prefetch = 0 : i64, scratch_operands = 4 : i64, tpu.core_type = #tpu.core_type<tc>, window_params = [{transform_indices = @transform_0, window_bounds = array<i64: 1, 4, 256, 9>}, {pipeline_mode = #tpu.pipeline_mode<synchronous>, transform_indices = @transform_1, window_bounds = array<i64: 9, 128>}, {pipeline_mode = #tpu.pipeline_mode<synchronous>, transform_indices = @transform_2, window_bounds = array<i64: 1152, 128>}, {pipeline_mode = #tpu.pipeline_mode<synchronous>, transform_indices = @transform_3, window_bounds = array<i64: 1, 128>}, {pipeline_mode = #tpu.pipeline_mode<synchronous>, transform_indices = @transform_4, window_bounds = array<i64: 1152, 256>}, {pipeline_mode = #tpu.pipeline_mode<synchronous>, transform_indices = @transform_5, window_bounds = array<i64: 1, 256>}, {pipeline_mode = #tpu.pipeline_mode<synchronous>, transform_indices = @transform_6, window_bounds = array<i64: 1152, 64>}, {pipeline_mode = #tpu.pipeline_mode<synchronous>, transform_indices = @transform_7, window_bounds = array<i64: 1, 64>}, {pipeline_mode = #tpu.pipeline_mode<synchronous>, transform_indices = @transform_8, window_bounds = array<i64: 1, 1152>}, {pipeline_mode = #tpu.pipeline_mode<synchronous>, transform_indices = @transform_9, window_bounds = array<i64: 1, 1>}, {transform_indices = @transform_10, window_bounds = array<i64: 1, 1, 256>}]} {
    %cst = arith.constant 0.000000e+00 : f32
    %0 = vector.broadcast %cst : f32 to vector<288x128xf32>
    %c0 = arith.constant 0 : index
    %c0_0 = arith.constant 0 : index
    %1 = vector.load %arg12[%c0, %c0_0] : memref<288x128xf32, #tpu.memory_space<vmem>>, vector<288x128xf32>
    tpu.vector_store %arg12[%c0, %c0_0], %0 {strides = array<i32>} : memref<288x128xf32, #tpu.memory_space<vmem>>, vector<288x128xf32>,
    %cst_1 = arith.constant 0.000000e+00 : f32
    %2 = vector.broadcast %cst_1 : f32 to vector<288x128xf32>
    %c0_2 = arith.constant 0 : index
    %c0_3 = arith.constant 0 : index
    %3 = vector.load %arg13[%c0_2, %c0_3] : memref<288x128xf32, #tpu.memory_space<vmem>>, vector<288x128xf32>
    tpu.vector_store %arg13[%c0_2, %c0_3], %2 {strides = array<i32>} : memref<288x128xf32, #tpu.memory_space<vmem>>, vector<288x128xf32>,
    %cst_4 = arith.constant 0.000000e+00 : f32
    %4 = vector.broadcast %cst_4 : f32 to vector<256x32xf32>
    %c0_5 = arith.constant 0 : index
    %c0_6 = arith.constant 0 : index
    %5 = vector.load %arg14[%c0_5, %c0_6] : memref<256x32xf32, #tpu.memory_space<vmem>>, vector<256x32xf32>
    tpu.vector_store %arg14[%c0_5, %c0_6], %4 {strides = array<i32>} : memref<256x32xf32, #tpu.memory_space<vmem>>, vector<256x32xf32>,
    %cst_7 = arith.constant 0.000000e+00 : f32
    %6 = vector.broadcast %cst_7 : f32 to vector<256x64xf32>
    %c0_8 = arith.constant 0 : index
    %c0_9 = arith.constant 0 : index
    %7 = vector.load %arg15[%c0_8, %c0_9] : memref<256x64xf32, #tpu.memory_space<vmem>>, vector<256x64xf32>
    tpu.vector_store %arg15[%c0_8, %c0_9], %6 {strides = array<i32>} : memref<256x64xf32, #tpu.memory_space<vmem>>, vector<256x64xf32>,
    %8 = tpu.iota {dimensions = array<i32: 0>} : vector<288x1xi32>
    %c16_i32 = arith.constant 16 : i32
    %c0_i32 = arith.constant 0 : i32
    %9 = arith.cmpi eq, %c16_i32, %c0_i32 : i32
    %c1_i32 = arith.constant 1 : i32
    %10 = arith.select %9, %c1_i32, %c16_i32 : i32
    %11 = vector.broadcast %10 : i32 to vector<288x1xi32>
    %12 = arith.remsi %8, %11 : vector<288x1xi32>
    %c0_i32_10 = arith.constant 0 : i32
    %13 = vector.broadcast %c0_i32_10 : i32 to vector<288x1xi32>
    %14 = arith.cmpi ne, %12, %13 : vector<288x1xi32>
    %c0_i32_11 = arith.constant 0 : i32
    %15 = vector.broadcast %c0_i32_11 : i32 to vector<288x1xi32>
    %16 = arith.cmpi slt, %12, %15 : vector<288x1xi32>
    %c0_i32_12 = arith.constant 0 : i32
    %17 = arith.cmpi slt, %10, %c0_i32_12 : i32
    %18 = vector.broadcast %17 : i1 to vector<288x1xi1>
    %19 = vector.broadcast %18 : vector<288x1xi1> to vector<288x1xi1>
    %20 = arith.xori %16, %19 : vector<288x1xi1>
    %21 = arith.andi %20, %14 : vector<288x1xi1>
    %22 = vector.broadcast %10 : i32 to vector<288x1xi32>
    %23 = arith.addi %12, %22 : vector<288x1xi32>
    %24 = arith.select %21, %23, %12 : vector<288x1xi1>, vector<288x1xi32>
    %c0_i32_13 = arith.constant 0 : i32
    %25 = vector.broadcast %c0_i32_13 : i32 to vector<288x1xi32>
    %26 = arith.cmpi ne, %24, %25 : vector<288x1xi32>
    %c15_i32 = arith.constant 15 : i32
    %27 = vector.broadcast %c15_i32 : i32 to vector<288x1xi32>
    %28 = arith.cmpi ne, %24, %27 : vector<288x1xi32>
    %c0_14 = arith.constant 0 : index
    %c0_15 = arith.constant 0 : index
    %29 = vector.load %arg4[%c0_14, %c0_15] : memref<1x128xf32, #tpu.memory_space<vmem>>, vector<1x128xf32>
    %c0_16 = arith.constant 0 : index
    %c0_17 = arith.constant 0 : index
    %30 = vector.load %arg6[%c0_16, %c0_17] : memref<1x256xf32, #tpu.memory_space<vmem>>, vector<1x256xf32>
    %c0_i32_18 = arith.constant 0 : i32
    %c4_i32 = arith.constant 4 : i32
    %31 = arith.addi %c0_i32_18, %c4_i32 : i32
    %c1_i32_19 = arith.constant 1 : i32
    scf.for %arg16 = %c0_i32_18 to %31 step %c1_i32_19  : i32 {
      %c0_44 = arith.constant 0 : index
      %104 = arith.index_cast %arg16 : i32 to index
      %c0_45 = arith.constant 0 : index
      %c0_46 = arith.constant 0 : index
      %105 = vector.load %arg1[%c0_44, %104, %c0_45, %c0_46] : memref<1x4x256x9xf32, #tpu.memory_space<vmem>>, vector<1x1x256x9xf32>
      %106 = vector.shape_cast %105 : vector<1x1x256x9xf32> to vector<256x9xf32>
      %107 = arith.truncf %106 : vector<256x9xf32> to vector<256x9xbf16>
      %c0_47 = arith.constant 0 : index
      %c0_48 = arith.constant 0 : index
      %108 = vector.load %arg12[%c0_47, %c0_48] : memref<288x128xf32, #tpu.memory_space<vmem>>, vector<288x128xf32>
      %109 = vector.extract_strided_slice %108 {offsets = [287, 0], sizes = [1, 128], strides = [1, 1]} : vector<288x128xf32> to vector<1x128xf32>
      %110 = vector.extract_strided_slice %108 {offsets = [0, 0], sizes = [287, 128], strides = [1, 1]} : vector<288x128xf32> to vector<287x128xf32>
      %111 = tpu.concatenate %109, %110 in 0 : vector<1x128xf32>, vector<287x128xf32> -> vector<288x128xf32>
      %cst_49 = arith.constant 0.000000e+00 : f32
      %112 = vector.shape_cast %26 : vector<288x1xi1> to vector<288x1xi1>
      %113 = vector.broadcast %112 : vector<288x1xi1> to vector<288x128xi1>
      %114 = vector.broadcast %cst_49 : f32 to vector<288x128xf32>
      %115 = arith.select %113, %111, %114 : vector<288x128xi1>, vector<288x128xf32>
      %116 = vector.extract_strided_slice %108 {offsets = [1, 0], sizes = [287, 128], strides = [1, 1]} : vector<288x128xf32> to vector<287x128xf32>
      %117 = vector.extract_strided_slice %108 {offsets = [0, 0], sizes = [1, 128], strides = [1, 1]} : vector<288x128xf32> to vector<1x128xf32>
      %118 = tpu.concatenate %116, %117 in 0 : vector<287x128xf32>, vector<1x128xf32> -> vector<288x128xf32>
      %cst_50 = arith.constant 0.000000e+00 : f32
      %119 = vector.shape_cast %28 : vector<288x1xi1> to vector<288x1xi1>
      %120 = vector.broadcast %119 : vector<288x1xi1> to vector<288x128xi1>
      %121 = vector.broadcast %cst_50 : f32 to vector<288x128xf32>
      %122 = arith.select %120, %118, %121 : vector<288x128xi1>, vector<288x128xf32>
      %123 = arith.truncf %115 : vector<288x128xf32> to vector<288x128xbf16>
      %124 = arith.truncf %108 : vector<288x128xf32> to vector<288x128xbf16>
      %125 = arith.truncf %122 : vector<288x128xf32> to vector<288x128xbf16>
      %126 = vector.extract_strided_slice %123 {offsets = [0, 0], sizes = [256, 128], strides = [1, 1]} : vector<288x128xbf16> to vector<256x128xbf16>
      %127 = vector.extract_strided_slice %124 {offsets = [0, 0], sizes = [256, 128], strides = [1, 1]} : vector<288x128xbf16> to vector<256x128xbf16>
      %128 = vector.extract_strided_slice %125 {offsets = [0, 0], sizes = [256, 128], strides = [1, 1]} : vector<288x128xbf16> to vector<256x128xbf16>
      %129 = vector.extract_strided_slice %123 {offsets = [16, 0], sizes = [256, 128], strides = [1, 1]} : vector<288x128xbf16> to vector<256x128xbf16>
      %130 = vector.extract_strided_slice %124 {offsets = [16, 0], sizes = [256, 128], strides = [1, 1]} : vector<288x128xbf16> to vector<256x128xbf16>
      %131 = vector.extract_strided_slice %125 {offsets = [16, 0], sizes = [256, 128], strides = [1, 1]} : vector<288x128xbf16> to vector<256x128xbf16>
      %132 = vector.extract_strided_slice %123 {offsets = [32, 0], sizes = [256, 128], strides = [1, 1]} : vector<288x128xbf16> to vector<256x128xbf16>
      %133 = vector.extract_strided_slice %124 {offsets = [32, 0], sizes = [256, 128], strides = [1, 1]} : vector<288x128xbf16> to vector<256x128xbf16>
      %134 = vector.extract_strided_slice %125 {offsets = [32, 0], sizes = [256, 128], strides = [1, 1]} : vector<288x128xbf16> to vector<256x128xbf16>
      %135 = tpu.concatenate %126, %127, %128, %129, %130, %131, %132, %133, %134 in 1 : vector<256x128xbf16>, vector<256x128xbf16>, vector<256x128xbf16>, vector<256x128xbf16>, vector<256x128xbf16>, vector<256x128xbf16>, vector<256x128xbf16>, vector<256x128xbf16>, vector<256x128xbf16> -> vector<256x1152xbf16>
      %c0_51 = arith.constant 0 : index
      %c0_52 = arith.constant 0 : index
      %136 = vector.load %arg3[%c0_51, %c0_52] : memref<1152x128xbf16, #tpu.memory_space<vmem>>, vector<1152x128xbf16>
      %cst_53 = arith.constant dense<0.000000e+00> : vector<256x128xf32>
      %137 = tpu.matmul %135, %136, %cst_53 {dimension_numbers = #tpu.dot_dimension_numbers<[1], [0], [0], [1], [0, 0, 1, 1], [], []>} : vector<256x1152xbf16>, vector<1152x128xbf16>, vector<256x128xf32> -> vector<256x128xf32>
      %c0_54 = arith.constant 0 : index
      %c0_55 = arith.constant 0 : index
      %138 = vector.load %arg2[%c0_54, %c0_55] : memref<9x128xbf16, #tpu.memory_space<vmem>>, vector<9x128xbf16>
      %cst_56 = arith.constant dense<0.000000e+00> : vector<256x128xf32>
      %139 = tpu.matmul %107, %138, %cst_56 {dimension_numbers = #tpu.dot_dimension_numbers<[1], [0], [0], [1], [0, 0, 1, 1], [], []>} : vector<256x9xbf16>, vector<9x128xbf16>, vector<256x128xf32> -> vector<256x128xf32>
      %140 = arith.addf %137, %139 : vector<256x128xf32>
      %141 = vector.broadcast %29 : vector<1x128xf32> to vector<256x128xf32>
      %142 = arith.addf %140, %141 : vector<256x128xf32>
      %143 = vector.extract_strided_slice %142 {offsets = [0, 0], sizes = [256, 32], strides = [1, 1]} : vector<256x128xf32> to vector<256x32xf32>
      %144 = arith.negf %143 : vector<256x32xf32>
      %145 = math.exp %144 : vector<256x32xf32>
      %cst_57 = arith.constant 1.000000e+00 : f32
      %146 = vector.broadcast %cst_57 : f32 to vector<256x32xf32>
      %147 = arith.addf %146, %145 : vector<256x32xf32>
      %148 = arith.divf %146, %147 : vector<256x32xf32>
      %149 = vector.extract_strided_slice %142 {offsets = [0, 32], sizes = [256, 32], strides = [1, 1]} : vector<256x128xf32> to vector<256x32xf32>
      %150 = arith.negf %149 : vector<256x32xf32>
      %151 = math.exp %150 : vector<256x32xf32>
      %cst_58 = arith.constant 1.000000e+00 : f32
      %152 = vector.broadcast %cst_58 : f32 to vector<256x32xf32>
      %153 = arith.addf %152, %151 : vector<256x32xf32>
      %154 = arith.divf %152, %153 : vector<256x32xf32>
      %155 = vector.extract_strided_slice %142 {offsets = [0, 64], sizes = [256, 32], strides = [1, 1]} : vector<256x128xf32> to vector<256x32xf32>
      %156 = arith.negf %155 : vector<256x32xf32>
      %157 = math.exp %156 : vector<256x32xf32>
      %cst_59 = arith.constant 1.000000e+00 : f32
      %158 = vector.broadcast %cst_59 : f32 to vector<256x32xf32>
      %159 = arith.addf %158, %157 : vector<256x32xf32>
      %160 = arith.divf %158, %159 : vector<256x32xf32>
      %161 = vector.extract_strided_slice %142 {offsets = [0, 96], sizes = [256, 32], strides = [1, 1]} : vector<256x128xf32> to vector<256x32xf32>
      %162 = math.tanh %161 : vector<256x32xf32>
      %c0_60 = arith.constant 0 : index
      %c0_61 = arith.constant 0 : index
      %163 = vector.load %arg14[%c0_60, %c0_61] : memref<256x32xf32, #tpu.memory_space<vmem>>, vector<256x32xf32>
      %164 = arith.mulf %154, %163 : vector<256x32xf32>
      %165 = arith.mulf %148, %162 : vector<256x32xf32>
      %166 = arith.addf %164, %165 : vector<256x32xf32>
      %c0_62 = arith.constant 0 : index
      %c0_63 = arith.constant 0 : index
      %167 = vector.load %arg14[%c0_62, %c0_63] : memref<256x32xf32, #tpu.memory_space<vmem>>, vector<256x32xf32>
      tpu.vector_store %arg14[%c0_62, %c0_63], %166 {strides = array<i32>} : memref<256x32xf32, #tpu.memory_space<vmem>>, vector<256x32xf32>,
      %168 = math.tanh %166 : vector<256x32xf32>
      %169 = arith.mulf %160, %168 : vector<256x32xf32>
      %c16_64 = arith.constant 16 : index
      %c0_65 = arith.constant 0 : index
      %170 = vector.load %arg12[%c16_64, %c0_65] : memref<288x128xf32, #tpu.memory_space<vmem>>, vector<256x32xf32>
      tpu.vector_store %arg12[%c16_64, %c0_65], %169 {strides = array<i32>} : memref<288x128xf32, #tpu.memory_space<vmem>>, vector<256x32xf32>,
      %c16_66 = arith.constant 16 : index
      %c64 = arith.constant 64 : index
      %171 = vector.load %arg13[%c16_66, %c64] : memref<288x128xf32, #tpu.memory_space<vmem>>, vector<256x32xf32>
      tpu.vector_store %arg13[%c16_66, %c64], %169 {strides = array<i32>} : memref<288x128xf32, #tpu.memory_space<vmem>>, vector<256x32xf32>,
      %c0_67 = arith.constant 0 : index
      %c0_68 = arith.constant 0 : index
      %172 = vector.load %arg13[%c0_67, %c0_68] : memref<288x128xf32, #tpu.memory_space<vmem>>, vector<288x128xf32>
      %173 = vector.extract_strided_slice %172 {offsets = [287, 0], sizes = [1, 128], strides = [1, 1]} : vector<288x128xf32> to vector<1x128xf32>
      %174 = vector.extract_strided_slice %172 {offsets = [0, 0], sizes = [287, 128], strides = [1, 1]} : vector<288x128xf32> to vector<287x128xf32>
      %175 = tpu.concatenate %173, %174 in 0 : vector<1x128xf32>, vector<287x128xf32> -> vector<288x128xf32>
      %cst_69 = arith.constant 0.000000e+00 : f32
      %176 = vector.shape_cast %26 : vector<288x1xi1> to vector<288x1xi1>
      %177 = vector.broadcast %176 : vector<288x1xi1> to vector<288x128xi1>
      %178 = vector.broadcast %cst_69 : f32 to vector<288x128xf32>
      %179 = arith.select %177, %175, %178 : vector<288x128xi1>, vector<288x128xf32>
      %180 = vector.extract_strided_slice %172 {offsets = [1, 0], sizes = [287, 128], strides = [1, 1]} : vector<288x128xf32> to vector<287x128xf32>
      %181 = vector.extract_strided_slice %172 {offsets = [0, 0], sizes = [1, 128], strides = [1, 1]} : vector<288x128xf32> to vector<1x128xf32>
      %182 = tpu.concatenate %180, %181 in 0 : vector<287x128xf32>, vector<1x128xf32> -> vector<288x128xf32>
      %cst_70 = arith.constant 0.000000e+00 : f32
      %183 = vector.shape_cast %28 : vector<288x1xi1> to vector<288x1xi1>
      %184 = vector.broadcast %183 : vector<288x1xi1> to vector<288x128xi1>
      %185 = vector.broadcast %cst_70 : f32 to vector<288x128xf32>
      %186 = arith.select %184, %182, %185 : vector<288x128xi1>, vector<288x128xf32>
      %187 = arith.truncf %179 : vector<288x128xf32> to vector<288x128xbf16>
      %188 = arith.truncf %172 : vector<288x128xf32> to vector<288x128xbf16>
      %189 = arith.truncf %186 : vector<288x128xf32> to vector<288x128xbf16>
      %190 = vector.extract_strided_slice %187 {offsets = [0, 0], sizes = [256, 128], strides = [1, 1]} : vector<288x128xbf16> to vector<256x128xbf16>
      %191 = vector.extract_strided_slice %188 {offsets = [0, 0], sizes = [256, 128], strides = [1, 1]} : vector<288x128xbf16> to vector<256x128xbf16>
      %192 = vector.extract_strided_slice %189 {offsets = [0, 0], sizes = [256, 128], strides = [1, 1]} : vector<288x128xbf16> to vector<256x128xbf16>
      %193 = vector.extract_strided_slice %187 {offsets = [16, 0], sizes = [256, 128], strides = [1, 1]} : vector<288x128xbf16> to vector<256x128xbf16>
      %194 = vector.extract_strided_slice %188 {offsets = [16, 0], sizes = [256, 128], strides = [1, 1]} : vector<288x128xbf16> to vector<256x128xbf16>
      %195 = vector.extract_strided_slice %189 {offsets = [16, 0], sizes = [256, 128], strides = [1, 1]} : vector<288x128xbf16> to vector<256x128xbf16>
      %196 = vector.extract_strided_slice %187 {offsets = [32, 0], sizes = [256, 128], strides = [1, 1]} : vector<288x128xbf16> to vector<256x128xbf16>
      %197 = vector.extract_strided_slice %188 {offsets = [32, 0], sizes = [256, 128], strides = [1, 1]} : vector<288x128xbf16> to vector<256x128xbf16>
      %198 = vector.extract_strided_slice %189 {offsets = [32, 0], sizes = [256, 128], strides = [1, 1]} : vector<288x128xbf16> to vector<256x128xbf16>
      %199 = tpu.concatenate %190, %191, %192, %193, %194, %195, %196, %197, %198 in 1 : vector<256x128xbf16>, vector<256x128xbf16>, vector<256x128xbf16>, vector<256x128xbf16>, vector<256x128xbf16>, vector<256x128xbf16>, vector<256x128xbf16>, vector<256x128xbf16>, vector<256x128xbf16> -> vector<256x1152xbf16>
      %c0_71 = arith.constant 0 : index
      %c0_72 = arith.constant 0 : index
      %200 = vector.load %arg5[%c0_71, %c0_72] : memref<1152x256xbf16, #tpu.memory_space<vmem>>, vector<1152x256xbf16>
      %cst_73 = arith.constant dense<0.000000e+00> : vector<256x256xf32>
      %201 = tpu.matmul %199, %200, %cst_73 {dimension_numbers = #tpu.dot_dimension_numbers<[1], [0], [0], [1], [0, 0, 1, 1], [], []>} : vector<256x1152xbf16>, vector<1152x256xbf16>, vector<256x256xf32> -> vector<256x256xf32>
      %202 = vector.broadcast %30 : vector<1x256xf32> to vector<256x256xf32>
      %203 = arith.addf %201, %202 : vector<256x256xf32>
      %204 = vector.extract_strided_slice %203 {offsets = [0, 0], sizes = [256, 64], strides = [1, 1]} : vector<256x256xf32> to vector<256x64xf32>
      %205 = arith.negf %204 : vector<256x64xf32>
      %206 = math.exp %205 : vector<256x64xf32>
      %cst_74 = arith.constant 1.000000e+00 : f32
      %207 = vector.broadcast %cst_74 : f32 to vector<256x64xf32>
      %208 = arith.addf %207, %206 : vector<256x64xf32>
      %209 = arith.divf %207, %208 : vector<256x64xf32>
      %210 = vector.extract_strided_slice %203 {offsets = [0, 64], sizes = [256, 64], strides = [1, 1]} : vector<256x256xf32> to vector<256x64xf32>
      %211 = arith.negf %210 : vector<256x64xf32>
      %212 = math.exp %211 : vector<256x64xf32>
      %cst_75 = arith.constant 1.000000e+00 : f32
      %213 = vector.broadcast %cst_75 : f32 to vector<256x64xf32>
      %214 = arith.addf %213, %212 : vector<256x64xf32>
      %215 = arith.divf %213, %214 : vector<256x64xf32>
      %216 = vector.extract_strided_slice %203 {offsets = [0, 128], sizes = [256, 64], strides = [1, 1]} : vector<256x256xf32> to vector<256x64xf32>
      %217 = arith.negf %216 : vector<256x64xf32>
      %218 = math.exp %217 : vector<256x64xf32>
      %cst_76 = arith.constant 1.000000e+00 : f32
      %219 = vector.broadcast %cst_76 : f32 to vector<256x64xf32>
      %220 = arith.addf %219, %218 : vector<256x64xf32>
      %221 = arith.divf %219, %220 : vector<256x64xf32>
      %222 = vector.extract_strided_slice %203 {offsets = [0, 192], sizes = [256, 64], strides = [1, 1]} : vector<256x256xf32> to vector<256x64xf32>
      %223 = math.tanh %222 : vector<256x64xf32>
      %c0_77 = arith.constant 0 : index
      %c0_78 = arith.constant 0 : index
      %224 = vector.load %arg15[%c0_77, %c0_78] : memref<256x64xf32, #tpu.memory_space<vmem>>, vector<256x64xf32>
      %225 = arith.mulf %215, %224 : vector<256x64xf32>
      %226 = arith.mulf %209, %223 : vector<256x64xf32>
      %227 = arith.addf %225, %226 : vector<256x64xf32>
      %c0_79 = arith.constant 0 : index
      %c0_80 = arith.constant 0 : index
      %228 = vector.load %arg15[%c0_79, %c0_80] : memref<256x64xf32, #tpu.memory_space<vmem>>, vector<256x64xf32>
      tpu.vector_store %arg15[%c0_79, %c0_80], %227 {strides = array<i32>} : memref<256x64xf32, #tpu.memory_space<vmem>>, vector<256x64xf32>,
      %229 = math.tanh %227 : vector<256x64xf32>
      %230 = arith.mulf %221, %229 : vector<256x64xf32>
      %c16_81 = arith.constant 16 : index
      %c0_82 = arith.constant 0 : index
      %231 = vector.load %arg13[%c16_81, %c0_82] : memref<288x128xf32, #tpu.memory_space<vmem>>, vector<256x64xf32>
      tpu.vector_store %arg13[%c16_81, %c0_82], %230 {strides = array<i32>} : memref<288x128xf32, #tpu.memory_space<vmem>>, vector<256x64xf32>,
    }
    %c4_i32_20 = arith.constant 4 : i32
    %c0_21 = arith.constant 0 : index
    %c0_22 = arith.constant 0 : index
    %32 = vector.load %arg13[%c0_21, %c0_22] : memref<288x128xf32, #tpu.memory_space<vmem>>, vector<288x128xf32>
    %33 = vector.extract_strided_slice %32 {offsets = [287, 0], sizes = [1, 128], strides = [1, 1]} : vector<288x128xf32> to vector<1x128xf32>
    %34 = vector.extract_strided_slice %32 {offsets = [0, 0], sizes = [287, 128], strides = [1, 1]} : vector<288x128xf32> to vector<287x128xf32>
    %35 = tpu.concatenate %33, %34 in 0 : vector<1x128xf32>, vector<287x128xf32> -> vector<288x128xf32>
    %cst_23 = arith.constant 0.000000e+00 : f32
    %36 = vector.shape_cast %26 : vector<288x1xi1> to vector<288x1xi1>
    %37 = vector.broadcast %36 : vector<288x1xi1> to vector<288x128xi1>
    %38 = vector.broadcast %cst_23 : f32 to vector<288x128xf32>
    %39 = arith.select %37, %35, %38 : vector<288x128xi1>, vector<288x128xf32>
    %40 = vector.extract_strided_slice %32 {offsets = [1, 0], sizes = [287, 128], strides = [1, 1]} : vector<288x128xf32> to vector<287x128xf32>
    %41 = vector.extract_strided_slice %32 {offsets = [0, 0], sizes = [1, 128], strides = [1, 1]} : vector<288x128xf32> to vector<1x128xf32>
    %42 = tpu.concatenate %40, %41 in 0 : vector<287x128xf32>, vector<1x128xf32> -> vector<288x128xf32>
    %cst_24 = arith.constant 0.000000e+00 : f32
    %43 = vector.shape_cast %28 : vector<288x1xi1> to vector<288x1xi1>
    %44 = vector.broadcast %43 : vector<288x1xi1> to vector<288x128xi1>
    %45 = vector.broadcast %cst_24 : f32 to vector<288x128xf32>
    %46 = arith.select %44, %42, %45 : vector<288x128xi1>, vector<288x128xf32>
    %47 = arith.truncf %39 : vector<288x128xf32> to vector<288x128xbf16>
    %48 = arith.truncf %32 : vector<288x128xf32> to vector<288x128xbf16>
    %49 = arith.truncf %46 : vector<288x128xf32> to vector<288x128xbf16>
    %50 = vector.extract_strided_slice %47 {offsets = [0, 0], sizes = [256, 128], strides = [1, 1]} : vector<288x128xbf16> to vector<256x128xbf16>
    %51 = vector.extract_strided_slice %48 {offsets = [0, 0], sizes = [256, 128], strides = [1, 1]} : vector<288x128xbf16> to vector<256x128xbf16>
    %52 = vector.extract_strided_slice %49 {offsets = [0, 0], sizes = [256, 128], strides = [1, 1]} : vector<288x128xbf16> to vector<256x128xbf16>
    %53 = vector.extract_strided_slice %47 {offsets = [16, 0], sizes = [256, 128], strides = [1, 1]} : vector<288x128xbf16> to vector<256x128xbf16>
    %54 = vector.extract_strided_slice %48 {offsets = [16, 0], sizes = [256, 128], strides = [1, 1]} : vector<288x128xbf16> to vector<256x128xbf16>
    %55 = vector.extract_strided_slice %49 {offsets = [16, 0], sizes = [256, 128], strides = [1, 1]} : vector<288x128xbf16> to vector<256x128xbf16>
    %56 = vector.extract_strided_slice %47 {offsets = [32, 0], sizes = [256, 128], strides = [1, 1]} : vector<288x128xbf16> to vector<256x128xbf16>
    %57 = vector.extract_strided_slice %48 {offsets = [32, 0], sizes = [256, 128], strides = [1, 1]} : vector<288x128xbf16> to vector<256x128xbf16>
    %58 = vector.extract_strided_slice %49 {offsets = [32, 0], sizes = [256, 128], strides = [1, 1]} : vector<288x128xbf16> to vector<256x128xbf16>
    %59 = tpu.concatenate %50, %51, %52, %53, %54, %55, %56, %57, %58 in 1 : vector<256x128xbf16>, vector<256x128xbf16>, vector<256x128xbf16>, vector<256x128xbf16>, vector<256x128xbf16>, vector<256x128xbf16>, vector<256x128xbf16>, vector<256x128xbf16>, vector<256x128xbf16> -> vector<256x1152xbf16>
    %c0_25 = arith.constant 0 : index
    %c0_26 = arith.constant 0 : index
    %60 = vector.load %arg7[%c0_25, %c0_26] : memref<1152x64xbf16, #tpu.memory_space<vmem>>, vector<1152x64xbf16>
    %cst_27 = arith.constant dense<0.000000e+00> : vector<256x64xf32>
    %61 = tpu.matmul %59, %60, %cst_27 {dimension_numbers = #tpu.dot_dimension_numbers<[1], [0], [0], [1], [0, 0, 1, 1], [], []>} : vector<256x1152xbf16>, vector<1152x64xbf16>, vector<256x64xf32> -> vector<256x64xf32>
    %c0_28 = arith.constant 0 : index
    %c0_29 = arith.constant 0 : index
    %62 = vector.load %arg8[%c0_28, %c0_29] : memref<1x64xf32, #tpu.memory_space<vmem>>, vector<1x64xf32>
    %63 = vector.broadcast %62 : vector<1x64xf32> to vector<256x64xf32>
    %64 = arith.addf %61, %63 : vector<256x64xf32>
    %cst_30 = arith.constant 0.000000e+00 : f32
    %65 = vector.broadcast %cst_30 : f32 to vector<256x64xf32>
    %66 = arith.maximumf %64, %65 : vector<256x64xf32>
    %c16 = arith.constant 16 : index
    %c0_31 = arith.constant 0 : index
    %67 = vector.load %arg12[%c16, %c0_31] : memref<288x128xf32, #tpu.memory_space<vmem>>, vector<256x64xf32>
    tpu.vector_store %arg12[%c16, %c0_31], %66 {strides = array<i32>} : memref<288x128xf32, #tpu.memory_space<vmem>>, vector<256x64xf32>,
    %c0_32 = arith.constant 0 : index
    %c0_33 = arith.constant 0 : index
    %68 = vector.load %arg9[%c0_32, %c0_33] : memref<1x1152xbf16, #tpu.memory_space<vmem>>, vector<1x1152xbf16>
    %c0_34 = arith.constant 0 : index
    %c0_35 = arith.constant 0 : index
    %69 = vector.load %arg12[%c0_34, %c0_35] : memref<288x128xf32, #tpu.memory_space<vmem>>, vector<288x128xf32>
    %70 = vector.extract_strided_slice %69 {offsets = [287, 0], sizes = [1, 128], strides = [1, 1]} : vector<288x128xf32> to vector<1x128xf32>
    %71 = vector.extract_strided_slice %69 {offsets = [0, 0], sizes = [287, 128], strides = [1, 1]} : vector<288x128xf32> to vector<287x128xf32>
    %72 = tpu.concatenate %70, %71 in 0 : vector<1x128xf32>, vector<287x128xf32> -> vector<288x128xf32>
    %cst_36 = arith.constant 0.000000e+00 : f32
    %73 = vector.shape_cast %26 : vector<288x1xi1> to vector<288x1xi1>
    %74 = vector.broadcast %73 : vector<288x1xi1> to vector<288x128xi1>
    %75 = vector.broadcast %cst_36 : f32 to vector<288x128xf32>
    %76 = arith.select %74, %72, %75 : vector<288x128xi1>, vector<288x128xf32>
    %77 = vector.extract_strided_slice %69 {offsets = [1, 0], sizes = [287, 128], strides = [1, 1]} : vector<288x128xf32> to vector<287x128xf32>
    %78 = vector.extract_strided_slice %69 {offsets = [0, 0], sizes = [1, 128], strides = [1, 1]} : vector<288x128xf32> to vector<1x128xf32>
    %79 = tpu.concatenate %77, %78 in 0 : vector<287x128xf32>, vector<1x128xf32> -> vector<288x128xf32>
    %cst_37 = arith.constant 0.000000e+00 : f32
    %80 = vector.shape_cast %28 : vector<288x1xi1> to vector<288x1xi1>
    %81 = vector.broadcast %80 : vector<288x1xi1> to vector<288x128xi1>
    %82 = vector.broadcast %cst_37 : f32 to vector<288x128xf32>
    %83 = arith.select %81, %79, %82 : vector<288x128xi1>, vector<288x128xf32>
    %84 = arith.truncf %76 : vector<288x128xf32> to vector<288x128xbf16>
    %85 = arith.truncf %69 : vector<288x128xf32> to vector<288x128xbf16>
    %86 = arith.truncf %83 : vector<288x128xf32> to vector<288x128xbf16>
    %87 = vector.extract_strided_slice %84 {offsets = [0, 0], sizes = [256, 128], strides = [1, 1]} : vector<288x128xbf16> to vector<256x128xbf16>
    %88 = vector.extract_strided_slice %85 {offsets = [0, 0], sizes = [256, 128], strides = [1, 1]} : vector<288x128xbf16> to vector<256x128xbf16>
    %89 = vector.extract_strided_slice %86 {offsets = [0, 0], sizes = [256, 128], strides = [1, 1]} : vector<288x128xbf16> to vector<256x128xbf16>
    %90 = vector.extract_strided_slice %84 {offsets = [16, 0], sizes = [256, 128], strides = [1, 1]} : vector<288x128xbf16> to vector<256x128xbf16>
    %91 = vector.extract_strided_slice %85 {offsets = [16, 0], sizes = [256, 128], strides = [1, 1]} : vector<288x128xbf16> to vector<256x128xbf16>
    %92 = vector.extract_strided_slice %86 {offsets = [16, 0], sizes = [256, 128], strides = [1, 1]} : vector<288x128xbf16> to vector<256x128xbf16>
    %93 = vector.extract_strided_slice %84 {offsets = [32, 0], sizes = [256, 128], strides = [1, 1]} : vector<288x128xbf16> to vector<256x128xbf16>
    %94 = vector.extract_strided_slice %85 {offsets = [32, 0], sizes = [256, 128], strides = [1, 1]} : vector<288x128xbf16> to vector<256x128xbf16>
    %95 = vector.extract_strided_slice %86 {offsets = [32, 0], sizes = [256, 128], strides = [1, 1]} : vector<288x128xbf16> to vector<256x128xbf16>
    %96 = tpu.concatenate %87, %88, %89, %90, %91, %92, %93, %94, %95 in 1 : vector<256x128xbf16>, vector<256x128xbf16>, vector<256x128xbf16>, vector<256x128xbf16>, vector<256x128xbf16>, vector<256x128xbf16>, vector<256x128xbf16>, vector<256x128xbf16>, vector<256x128xbf16> -> vector<256x1152xbf16>
    %cst_38 = arith.constant dense<0.000000e+00> : vector<1x256xf32>
    %97 = tpu.matmul %68, %96, %cst_38 {dimension_numbers = #tpu.dot_dimension_numbers<[1], [1], [0], [0], [0, 0, 1, 0], [], []>} : vector<1x1152xbf16>, vector<256x1152xbf16>, vector<1x256xf32> -> vector<1x256xf32>
    %c0_39 = arith.constant 0 : index
    %c0_40 = arith.constant 0 : index
    %98 = vector.load %arg10[%c0_39, %c0_40] : memref<1x1xf32, #tpu.memory_space<vmem>>, vector<1x1xf32>
    %99 = vector.broadcast %98 : vector<1x1xf32> to vector<1x256xf32>
    %100 = arith.addf %97, %99 : vector<1x256xf32>
    %c0_41 = arith.constant 0 : index
    %c0_42 = arith.constant 0 : index
    %c0_43 = arith.constant 0 : index
    %101 = vector.load %arg11[%c0_41, %c0_42, %c0_43] : memref<1x1x256xf32, #tpu.memory_space<vmem>>, vector<1x1x256xf32>
    %102 = vector.shape_cast %101 : vector<1x1x256xf32> to vector<1x256xf32>
    %103 = vector.shape_cast %100 : vector<1x256xf32> to vector<1x1x256xf32>
    tpu.vector_store %arg11[%c0_41, %c0_42, %c0_43], %103 {strides = array<i32>} : memref<1x1x256xf32, #tpu.memory_space<vmem>>, vector<1x1x256xf32>,
    return
  }
  func.func @transform_0(%arg0: i32) -> (i32, i32, i32, i32) {
    %c0_i32 = arith.constant 0 : i32
    %c0_i32_0 = arith.constant 0 : i32
    %c0_i32_1 = arith.constant 0 : i32
    %c0_i32_2 = arith.constant 0 : i32
    return %arg0, %c0_i32, %c0_i32_0, %c0_i32_1 : i32, i32, i32, i32
  }
  func.func @transform_1(%arg0: i32) -> (i32, i32) {
    %c0_i32 = arith.constant 0 : i32
    %c0_i32_0 = arith.constant 0 : i32
    %c0_i32_1 = arith.constant 0 : i32
    return %c0_i32, %c0_i32_0 : i32, i32
  }
  func.func @transform_2(%arg0: i32) -> (i32, i32) {
    %c0_i32 = arith.constant 0 : i32
    %c0_i32_0 = arith.constant 0 : i32
    %c0_i32_1 = arith.constant 0 : i32
    return %c0_i32, %c0_i32_0 : i32, i32
  }
  func.func @transform_3(%arg0: i32) -> (i32, i32) {
    %c0_i32 = arith.constant 0 : i32
    %c0_i32_0 = arith.constant 0 : i32
    %c0_i32_1 = arith.constant 0 : i32
    return %c0_i32, %c0_i32_0 : i32, i32
  }
  func.func @transform_4(%arg0: i32) -> (i32, i32) {
    %c0_i32 = arith.constant 0 : i32
    %c0_i32_0 = arith.constant 0 : i32
    %c0_i32_1 = arith.constant 0 : i32
    return %c0_i32, %c0_i32_0 : i32, i32
  }
  func.func @transform_5(%arg0: i32) -> (i32, i32) {
    %c0_i32 = arith.constant 0 : i32
    %c0_i32_0 = arith.constant 0 : i32
    %c0_i32_1 = arith.constant 0 : i32
    return %c0_i32, %c0_i32_0 : i32, i32
  }
  func.func @transform_6(%arg0: i32) -> (i32, i32) {
    %c0_i32 = arith.constant 0 : i32
    %c0_i32_0 = arith.constant 0 : i32
    %c0_i32_1 = arith.constant 0 : i32
    return %c0_i32, %c0_i32_0 : i32, i32
  }
  func.func @transform_7(%arg0: i32) -> (i32, i32) {
    %c0_i32 = arith.constant 0 : i32
    %c0_i32_0 = arith.constant 0 : i32
    %c0_i32_1 = arith.constant 0 : i32
    return %c0_i32, %c0_i32_0 : i32, i32
  }
  func.func @transform_8(%arg0: i32) -> (i32, i32) {
    %c0_i32 = arith.constant 0 : i32
    %c0_i32_0 = arith.constant 0 : i32
    %c0_i32_1 = arith.constant 0 : i32
    return %c0_i32, %c0_i32_0 : i32, i32
  }
  func.func @transform_9(%arg0: i32) -> (i32, i32) {
    %c0_i32 = arith.constant 0 : i32
    %c0_i32_0 = arith.constant 0 : i32
    %c0_i32_1 = arith.constant 0 : i32
    return %c0_i32, %c0_i32_0 : i32, i32
  }
  func.func @transform_10(%arg0: i32) -> (i32, i32, i32) {
    %c0_i32 = arith.constant 0 : i32
    %c0_i32_0 = arith.constant 0 : i32
    %c0_i32_1 = arith.constant 0 : i32
    return %arg0, %c0_i32, %c0_i32_0 : i32, i32, i32
  }
}

</mosaic_0001>

<llo_original>
// kernel: _convlstm_forward.1
$region0: #{_convlstm_forward.1}
  #allocation0 [shape = 'u32[]', space=smem, size = 0x4, offset = 0x4, fixed_abs, tag = 'smem constant byte address 0x4 - core index']
  #allocation1 [shape = 'u32[144,128]{1,0:T(1,128)}', space=vmem, size = 0x12000, scoped, tag = 'internal scratch']
  #allocation2 [shape = 'f32[288,128]{1,0:T(8,128)}', space=vmem, size = 0x24000, scoped, tag = 'scratch operand']
  #allocation3 [shape = 'f32[288,128]{1,0:T(8,128)}', space=vmem, size = 0x24000, scoped, tag = 'scratch operand']
  #allocation4 [shape = 'f32[256,32]{1,0:T(8,128)}', space=vmem, size = 0x20000, scoped, tag = 'scratch operand']
  #allocation5 [shape = 'f32[256,64]{1,0:T(8,128)}', space=vmem, size = 0x20000, scoped, tag = 'scratch operand']
  #allocation6 [shape = 'f32[1,1]{1,0:T(1,128)S(1)}', space=vmem, size = 0x200, scoped, tag = 'scoped memory for _convlstm_forward.1']
  %s0 = inlined_call_operand.vmem [shape: f32[2,4,256,9], index: 0, kind: input, shape index: {}]
  %s1 = inlined_call_operand.vmem [shape: bf16[9,128], index: 1, kind: input, shape index: {}]
  %s2 = inlined_call_operand.vmem [shape: bf16[1152,128], index: 2, kind: input, shape index: {}]
  %s3 = inlined_call_operand.vmem [shape: f32[1,128], index: 3, kind: input, shape index: {}]
  %s4 = inlined_call_operand.vmem [shape: bf16[1152,256], index: 4, kind: input, shape index: {}]
  %s5 = inlined_call_operand.vmem [shape: f32[1,256], index: 5, kind: input, shape index: {}]
  %s6 = inlined_call_operand.vmem [shape: bf16[1152,64], index: 6, kind: input, shape index: {}]
  %s7 = inlined_call_operand.vmem [shape: f32[1,64], index: 7, kind: input, shape index: {}]
  %s8 = inlined_call_operand.vmem [shape: bf16[1,1152], index: 8, kind: input, shape index: {}]
  %s9 = inlined_call_operand.<no memory space> [shape: f32[1,1], index: 9, kind: input, shape index: {}]
  %s10 = inlined_call_operand.vmem [shape: f32[2,1,256], index: 10, kind: output, shape index: {}]
  %s11 = sld [smem:[#allocation0]]
  $region80: #{_convlstm_forward.1} parent=0
    _
  %s13 = ssub.s32 1, %s11
  %s14 = scalar_select 0, %s13, %s11
  %v15 = vstv %s9
  %16 = vst [vmem:[#allocation6] sm:$0x1] %v15
  loop: start=0, step=1, limit=4
  $region2: #{_convlstm_forward.1} parent=0 // loop_pre_header
    _
  $region3: #{_convlstm_forward.1} parent=0 // loop_header
    %s18 = sphi 0, %s22
    %p19 = scmp.ge.s32.totalorder %s18, 4
    %s28 = sphi 0, %s30
    %s31 = sphi 0, %s28
    %s32 = sphi 0, %s31
    %s48 = sphi 0, %s32
    %s52 = sphi 0, %s52
    %s54 = sphi 0, %s52
    %s55 = sphi 0, %s54
    %s69 = sphi 0, %s55
    %s73 = sphi 0, %s73
    %s75 = sphi 0, %s73
    %s76 = sphi 0, %s75
    %s90 = sphi 0, %s76
    %s94 = sphi 0, %s94
    %s96 = sphi 0, %s94
    %s97 = sphi 0, %s96
    %s111 = sphi 0, %s97
    %s115 = sphi 0, %s115
    %s117 = sphi 0, %s115
    %s118 = sphi 0, %s117
    %s132 = sphi 0, %s118
    %s136 = sphi 0, %s136
    %s138 = sphi 0, %s136
    %s139 = sphi 0, %s138
    %s153 = sphi 0, %s139
    %s157 = sphi 0, %s157
    %s159 = sphi 0, %s157
    %s160 = sphi 0, %s159
    %s174 = sphi 0, %s160
    %s178 = sphi 0, %s178
    %s180 = sphi 0, %s178
    %s181 = sphi 0, %s180
    %s195 = sphi 0, %s181
    %s199 = sphi 0, %s199
    %s201 = sphi 0, %s199
    %s202 = sphi 0, %s201
    %s216 = sphi 0, %s202
    %s220 = sphi 0, %s220
    %s222 = sphi 0, %s220
    %s223 = sphi 0, %s222
    %s237 = sphi 0, %s223
    %s243 = sphi 0, %s245
    %s246 = sphi 0, %s243
    %s247 = sphi 0, %s246
    %s263 = sphi 0, %s247
  $region4: #{_convlstm_forward.1} parent=0 // loop_header_branch
    %21 = sbr.rel (%p19) target = $region8
  $region5: #{_convlstm_forward.1} parent=0 // loop_body
    %s23 = ssub.s32 %s18, 1
    %s24 = ssub.s32 %s18, 2
    %s25 = sadd.s32 %s18, 1
    %s26 = ssub.s32 %s18, %s25
    %p27 = scmp.eq.s32.totalorder %s26, 0
    %s29 = sadd.s32 %s28, 1
    %s30 = scalar_select %p27, %s28, %s29
    %p33 = pneg %p27
    %p34 = scmp.eq.s32.totalorder %s18, 1
    %p35 = por %p33, %p34
    %p36 = scmp.ne.s32.totalorder %s28, %s31
    %p37 = scmp.eq.s32.totalorder %s18, 0
    %p38 = por %p36, %p37
    %p39 = scmp.ne.s32.totalorder %s28, %s31
    %p40 = scmp.eq.s32.totalorder %s23, 1
    %p41 = por %p39, %p40
    %p42 = scmp.ne.s32.totalorder %s31, %s32
    %p43 = scmp.eq.s32.totalorder %s23, 0
    %p44 = por %p42, %p43
    %p45 = scmp.ne.s32.totalorder %s31, %s32
    %p46 = scmp.eq.s32.totalorder %s24, 1
    %p47 = por %p45, %p46
    %p49 = scmp.ne.s32.totalorder %s32, %s48
    %p50 = scmp.eq.s32.totalorder %s24, 0
    %p51 = por %p49, %p50
    %s53 = sadd.s32 %s52, 1
    %p56 = scmp.eq.s32.totalorder %s18, 1
    %p57 = scmp.ne.s32.totalorder %s52, %s54
    %p58 = scmp.eq.s32.totalorder %s18, 0
    %p59 = por %p57, %p58
    %p60 = scmp.ne.s32.totalorder %s52, %s54
    %p61 = scmp.eq.s32.totalorder %s23, 1
    %p62 = por %p60, %p61
    %p63 = scmp.ne.s32.totalorder %s54, %s55
    %p64 = scmp.eq.s32.totalorder %s23, 0
    %p65 = por %p63, %p64
    %p66 = scmp.ne.s32.totalorder %s54, %s55
    %p67 = scmp.eq.s32.totalorder %s24, 1
    %p68 = por %p66, %p67
    %p70 = scmp.ne.s32.totalorder %s55, %s69
    %p71 = scmp.eq.s32.totalorder %s24, 0
    %p72 = por %p70, %p71
    %s74 = sadd.s32 %s73, 1
    %p77 = scmp.eq.s32.totalorder %s18, 1
    %p78 = scmp.ne.s32.totalorder %s73, %s75
    %p79 = scmp.eq.s32.totalorder %s18, 0
    %p80 = por %p78, %p79
    %p81 = scmp.ne.s32.totalorder %s73, %s75
    %p82 = scmp.eq.s32.totalorder %s23, 1
    %p83 = por %p81, %p82
    %p84 = scmp.ne.s32.totalorder %s75, %s76
    %p85 = scmp.eq.s32.totalorder %s23, 0
    %p86 = por %p84, %p85
    %p87 = scmp.ne.s32.totalorder %s75, %s76
    %p88 = scmp.eq.s32.totalorder %s24, 1
    %p89 = por %p87, %p88
    %p91 = scmp.ne.s32.totalorder %s76, %s90
    %p92 = scmp.eq.s32.totalorder %s24, 0
    %p93 = por %p91, %p92
    %s95 = sadd.s32 %s94, 1
    %p98 = scmp.eq.s32.totalorder %s18, 1
    %p99 = scmp.ne.s32.totalorder %s94, %s96
    %p100 = scmp.eq.s32.totalorder %s18, 0
    %p101 = por %p99, %p100
    %p102 = scmp.ne.s32.totalorder %s94, %s96
    %p103 = scmp.eq.s32.totalorder %s23, 1
    %p104 = por %p102, %p103
    %p105 = scmp.ne.s32.totalorder %s96, %s97
    %p106 = scmp.eq.s32.totalorder %s23, 0
    %p107 = por %p105, %p106
    %p108 = scmp.ne.s32.totalorder %s96, %s97
    %p109 = scmp.eq.s32.totalorder %s24, 1
    %p110 = por %p108, %p109
    %p112 = scmp.ne.s32.totalorder %s97, %s111
    %p113 = scmp.eq.s32.totalorder %s24, 0
    %p114 = por %p112, %p113
    %s116 = sadd.s32 %s115, 1
    %p119 = scmp.eq.s32.totalorder %s18, 1
    %p120 = scmp.ne.s32.totalorder %s115, %s117
    %p121 = scmp.eq.s32.totalorder %s18, 0
    %p122 = por %p120, %p121
    %p123 = scmp.ne.s32.totalorder %s115, %s117
    %p124 = scmp.eq.s32.totalorder %s23, 1
    %p125 = por %p123, %p124
    %p126 = scmp.ne.s32.totalorder %s117, %s118
    %p127 = scmp.eq.s32.totalorder %s23, 0
    %p128 = por %p126, %p127
    %p129 = scmp.ne.s32.totalorder %s117, %s118
    %p130 = scmp.eq.s32.totalorder %s24, 1
    %p131 = por %p129, %p130
    %p133 = scmp.ne.s32.totalorder %s118, %s132
    %p134 = scmp.eq.s32.totalorder %s24, 0
    %p135 = por %p133, %p134
    %s137 = sadd.s32 %s136, 1
    %p140 = scmp.eq.s32.totalorder %s18, 1
    %p141 = scmp.ne.s32.totalorder %s136, %s138
    %p142 = scmp.eq.s32.totalorder %s18, 0
    %p143 = por %p141, %p142
    %p144 = scmp.ne.s32.totalorder %s136, %s138
    %p145 = scmp.eq.s32.totalorder %s23, 1
    %p146 = por %p144, %p145
    %p147 = scmp.ne.s32.totalorder %s138, %s139
    %p148 = scmp.eq.s32.totalorder %s23, 0
    %p149 = por %p147, %p148
    %p150 = scmp.ne.s32.totalorder %s138, %s139
    %p151 = scmp.eq.s32.totalorder %s24, 1
    %p152 = por %p150, %p151
    %p154 = scmp.ne.s32.totalorder %s139, %s153
    %p155 = scmp.eq.s32.totalorder %s24, 0
    %p156 = por %p154, %p155
    %s158 = sadd.s32 %s157, 1
    %p161 = scmp.eq.s32.totalorder %s18, 1
    %p162 = scmp.ne.s32.totalorder %s157, %s159
    %p163 = scmp.eq.s32.totalorder %s18, 0
    %p164 = por %p162, %p163
    %p165 = scmp.ne.s32.totalorder %s157, %s159
    %p166 = scmp.eq.s32.totalorder %s23, 1
    %p167 = por %p165, %p166
    %p168 = scmp.ne.s32.totalorder %s159, %s160
    %p169 = scmp.eq.s32.totalorder %s23, 0
    %p170 = por %p168, %p169
    %p171 = scmp.ne.s32.totalorder %s159, %s160
    %p172 = scmp.eq.s32.totalorder %s24, 1
    %p173 = por %p171, %p172
    %p175 = scmp.ne.s32.totalorder %s160, %s174
    %p176 = scmp.eq.s32.totalorder %s24, 0
    %p177 = por %p175, %p176
    %s179 = sadd.s32 %s178, 1
    %p182 = scmp.eq.s32.totalorder %s18, 1
    %p183 = scmp.ne.s32.totalorder %s178, %s180
    %p184 = scmp.eq.s32.totalorder %s18, 0
    %p185 = por %p183, %p184
    %p186 = scmp.ne.s32.totalorder %s178, %s180
    %p187 = scmp.eq.s32.totalorder %s23, 1
    %p188 = por %p186, %p187
    %p189 = scmp.ne.s32.totalorder %s180, %s181
    %p190 = scmp.eq.s32.totalorder %s23, 0
    %p191 = por %p189, %p190
    %p192 = scmp.ne.s32.totalorder %s180, %s181
    %p193 = scmp.eq.s32.totalorder %s24, 1
    %p194 = por %p192, %p193
    %p196 = scmp.ne.s32.totalorder %s181, %s195
    %p197 = scmp.eq.s32.totalorder %s24, 0
    %p198 = por %p196, %p197
    %s200 = sadd.s32 %s199, 1
    %p203 = scmp.eq.s32.totalorder %s18, 1
    %p204 = scmp.ne.s32.totalorder %s199, %s201
    %p205 = scmp.eq.s32.totalorder %s18, 0
    %p206 = por %p204, %p205
    %p207 = scmp.ne.s32.totalorder %s199, %s201
    %p208 = scmp.eq.s32.totalorder %s23, 1
    %p209 = por %p207, %p208
    %p210 = scmp.ne.s32.totalorder %s201, %s202
    %p211 = scmp.eq.s32.totalorder %s23, 0
    %p212 = por %p210, %p211
    %p213 = scmp.ne.s32.totalorder %s201, %s202
    %p214 = scmp.eq.s32.totalorder %s24, 1
    %p215 = por %p213, %p214
    %p217 = scmp.ne.s32.totalorder %s202, %s216
    %p218 = scmp.eq.s32.totalorder %s24, 0
    %p219 = por %p217, %p218
    %s221 = sadd.s32 %s220, 1
    %p224 = scmp.eq.s32.totalorder %s18, 1
    %p225 = scmp.ne.s32.totalorder %s220, %s222
    %p226 = scmp.eq.s32.totalorder %s18, 0
    %p227 = por %p225, %p226
    %p228 = scmp.ne.s32.totalorder %s220, %s222
    %p229 = scmp.eq.s32.totalorder %s23, 1
    %p230 = por %p228, %p229
    %p231 = scmp.ne.s32.totalorder %s222, %s223
    %p232 = scmp.eq.s32.totalorder %s23, 0
    %p233 = por %p231, %p232
    %p234 = scmp.ne.s32.totalorder %s222, %s223
    %p235 = scmp.eq.s32.totalorder %s24, 1
    %p236 = por %p234, %p235
    %p238 = scmp.ne.s32.totalorder %s223, %s237
    %p239 = scmp.eq.s32.totalorder %s24, 0
    %p240 = por %p238, %p239
    %s241 = ssub.s32 %s18, %s25
    %p242 = scmp.eq.s32.totalorder %s241, 0
    %s244 = sadd.s32 %s243, 1
    %s245 = scalar_select %p242, %s243, %s244
    %p248 = pneg %p242
    %p249 = scmp.eq.s32.totalorder %s18, 1
    %p250 = por %p248, %p249
    %p251 = scmp.ne.s32.totalorder %s243, %s246
    %p252 = scmp.eq.s32.totalorder %s18, 0
    %p253 = por %p251, %p252
    %p254 = scmp.ne.s32.totalorder %s243, %s246
    %p255 = scmp.eq.s32.totalorder %s23, 1
    %p256 = por %p254, %p255
    %p257 = scmp.ne.s32.totalorder %s246, %s247
    %p258 = scmp.eq.s32.totalorder %s23, 0
    %p259 = por %p257, %p258
    %p260 = scmp.ne.s32.totalorder %s246, %s247
    %p261 = scmp.eq.s32.totalorder %s24, 1
    %p262 = por %p260, %p261
    %p264 = scmp.ne.s32.totalorder %s247, %s263
    %p265 = scmp.eq.s32.totalorder %s24, 0
    %p266 = por %p264, %p265
    %p267 = scmp.le.s32.totalorder 1, %s18
    %p268 = scmp.lt.s32.totalorder %s18, 3
    %p269 = pnand %p267, %p268
    %p270 = pneg %p269
    // Predicated region
    $region9: #{_convlstm_forward.1} parent=5 // pred_check
      _
    $region10: #{_convlstm_forward.1} parent=5 // pred_check_branch
      %272 = sbr.rel (%p269) target = $region12
    $region11: #{_convlstm_forward.1} parent=5 // pred_region
      %s273 = ssub.s32 %s18, 1
      // Predicated region
      $region13: #{_convlstm_forward.1} parent=11 // pred_check
        %p274 = pneg %p65
      $region14: #{_convlstm_forward.1} parent=11 // pred_check_branch
        %276 = sbr.rel (%p274) target = $region16
      $region15: #{_convlstm_forward.1} parent=11 // pred_region
        _
      $region16: #{_convlstm_forward.1} parent=11 // pred_fallthru
        _
      // Predicated region
      $region17: #{_convlstm_forward.1} parent=11 // pred_check
        %p277 = pneg %p86
      $region18: #{_convlstm_forward.1} parent=11 // pred_check_branch
        %279 = sbr.rel (%p277) target = $region20
      $region19: #{_convlstm_forward.1} parent=11 // pred_region
        _
      $region20: #{_convlstm_forward.1} parent=11 // pred_fallthru
        _
      // Predicated region
      $region21: #{_convlstm_forward.1} parent=11 // pred_check
        %p280 = pneg %p107
      $region22: #{_convlstm_forward.1} parent=11 // pred_check_branch
        %282 = sbr.rel (%p280) target = $region24
      $region23: #{_convlstm_forward.1} parent=11 // pred_region
        _
      $region24: #{_convlstm_forward.1} parent=11 // pred_fallthru
        _
      // Predicated region
      $region25: #{_convlstm_forward.1} parent=11 // pred_check
        %p283 = pneg %p128
      $region26: #{_convlstm_forward.1} parent=11 // pred_check_branch
        %285 = sbr.rel (%p283) target = $region28
      $region27: #{_convlstm_forward.1} parent=11 // pred_region
        _
      $region28: #{_convlstm_forward.1} parent=11 // pred_fallthru
        _
      // Predicated region
      $region29: #{_convlstm_forward.1} parent=11 // pred_check
        %p286 = pneg %p149
      $region30: #{_convlstm_forward.1} parent=11 // pred_check_branch
        %288 = sbr.rel (%p286) target = $region32
      $region31: #{_convlstm_forward.1} parent=11 // pred_region
        _
      $region32: #{_convlstm_forward.1} parent=11 // pred_fallthru
        _
      // Predicated region
      $region33: #{_convlstm_forward.1} parent=11 // pred_check
        %p289 = pneg %p170
      $region34: #{_convlstm_forward.1} parent=11 // pred_check_branch
        %291 = sbr.rel (%p289) target = $region36
      $region35: #{_convlstm_forward.1} parent=11 // pred_region
        _
      $region36: #{_convlstm_forward.1} parent=11 // pred_fallthru
        _
      // Predicated region
      $region37: #{_convlstm_forward.1} parent=11 // pred_check
        %p292 = pneg %p191
      $region38: #{_convlstm_forward.1} parent=11 // pred_check_branch
        %294 = sbr.rel (%p292) target = $region40
      $region39: #{_convlstm_forward.1} parent=11 // pred_region
        _
      $region40: #{_convlstm_forward.1} parent=11 // pred_fallthru
        _
      // Predicated region
      $region41: #{_convlstm_forward.1} parent=11 // pred_check
        %p295 = pneg %p212
      $region42: #{_convlstm_forward.1} parent=11 // pred_check_branch
        %297 = sbr.rel (%p295) target = $region44
      $region43: #{_convlstm_forward.1} parent=11 // pred_region
        _
      $region44: #{_convlstm_forward.1} parent=11 // pred_fallthru
        _
      // Predicated region
      $region45: #{_convlstm_forward.1} parent=11 // pred_check
        %p298 = pneg %p233
      $region46: #{_convlstm_forward.1} parent=11 // pred_check_branch
        %300 = sbr.rel (%p298) target = $region48
      $region47: #{_convlstm_forward.1} parent=11 // pred_region
        _
      $region48: #{_convlstm_forward.1} parent=11 // pred_fallthru
        _
    $region12: #{_convlstm_forward.1} parent=5 // pred_fallthru
      _
    %p301 = scmp.lt.s32.totalorder %s18, 2
    // Predicated region
    $region49: #{_convlstm_forward.1} parent=5 // pred_check
      %p302 = pneg %p301
    $region50: #{_convlstm_forward.1} parent=5 // pred_check_branch
      %304 = sbr.rel (%p302) target = $region52
    $region51: #{_convlstm_forward.1} parent=5 // pred_region
      // Predicated region
      $region53: #{_convlstm_forward.1} parent=51 // pred_check
        %p305 = pneg %p38
      $region54: #{_convlstm_forward.1} parent=51 // pred_check_branch
        %307 = sbr.rel (%p305) target = $region56
      $region55: #{_convlstm_forward.1} parent=51 // pred_region
        %p308 = scmp.lt.s32.totalorder %s18, 1
        %s309 = scalar_select %p308, %s18, 1
        %s310 = smul.addr %s309, 128
        %s311 = smul.addr %s310, 8
        %s312 = scalar_lea.vmem %s0, %s311
      $region56: #{_convlstm_forward.1} parent=51 // pred_fallthru
        _
    $region52: #{_convlstm_forward.1} parent=5 // pred_fallthru
      _
    %p313 = scmp.le.s32.totalorder 1, %s18
    %p314 = scmp.lt.s32.totalorder %s18, 3
    %p315 = pnand %p313, %p314
    %p316 = pneg %p315
    // Predicated region
    $region57: #{_convlstm_forward.1} parent=5 // pred_check
      _
    $region58: #{_convlstm_forward.1} parent=5 // pred_check_branch
      %318 = sbr.rel (%p315) target = $region60
    $region59: #{_convlstm_forward.1} parent=5 // pred_region
      %s319 = ssub.s32 %s18, 1
      %p320 = scmp.lt.s32.totalorder %s23, 1
      %s321 = scalar_select %p320, %s23, 1
      %s322 = smul.addr %s321, 128
      %s323 = smul.addr %s322, 8
      %s324 = scalar_lea.vmem %s0, %s323
      %p325 = pneg %p44
      %p326 = pneg %p41
      %p327 = pneg %p65
      %p328 = pneg %p62
      %p329 = pneg %p86
      %p330 = pneg %p83
      %p331 = pneg %p107
      %p332 = pneg %p104
      %p333 = pneg %p128
      %p334 = pneg %p125
      %p335 = pneg %p149
      %p336 = pneg %p146
      %p337 = pneg %p170
      %p338 = pneg %p167
      %p339 = pneg %p191
      %p340 = pneg %p188
      %p341 = pneg %p212
      %p342 = pneg %p209
      %p343 = pneg %p233
      %p344 = pneg %p230
      %p345 = pneg %p259
      %p346 = pneg %p256
      %p347 = scmp.lt.s32.totalorder %s23, 1
      %s348 = scalar_select %p347, %s23, 1
      %s349 = smul.addr %s348, 2
      %s350 = scalar_lea.vmem %s10, %s349
      %p351 = scmp.lt.s32.totalorder %s23, 1
      %s352 = scalar_select %p351, %s23, 1
      %s353 = smul.addr %s352, 128
      %s354 = smul.addr %s353, 8
      %s355 = scalar_lea.vmem %s0, %s354
      %p356 = scmp.lt.s32.totalorder %s23, 1
      %s357 = scalar_select %p356, %s23, 1
      %s358 = smul.addr %s357, 2
      %s359 = scalar_lea.vmem %s10, %s358
      %361 = vst [vmem:[#allocation2] sm:$0xff] 0.0
      %362 = vst [vmem:[#allocation2 + $0x8] sm:$0xff] 0.0
      %363 = vst [vmem:[#allocation2 + $0x10] sm:$0xff] 0.0
      %364 = vst [vmem:[#allocation2 + $0x18] sm:$0xff] 0.0
      %365 = vst [vmem:[#allocation2 + $0x20] sm:$0xff] 0.0
      %366 = vst [vmem:[#allocation2 + $0x28] sm:$0xff] 0.0
      %367 = vst [vmem:[#allocation2 + $0x30] sm:$0xff] 0.0
      %368 = vst [vmem:[#allocation2 + $0x38] sm:$0xff] 0.0
      %369 = vst [vmem:[#allocation2 + $0x40] sm:$0xff] 0.0
      %370 = vst [vmem:[#allocation2 + $0x48] sm:$0xff] 0.0
      %371 = vst [vmem:[#allocation2 + $0x50] sm:$0xff] 0.0
      %372 = vst [vmem:[#allocation2 + $0x58] sm:$0xff] 0.0
      %373 = vst [vmem:[#allocation2 + $0x60] sm:$0xff] 0.0
      %374 = vst [vmem:[#allocation2 + $0x68] sm:$0xff] 0.0
      %375 = vst [vmem:[#allocation2 + $0x70] sm:$0xff] 0.0
      %376 = vst [vmem:[#allocation2 + $0x78] sm:$0xff] 0.0
      %377 = vst [vmem:[#allocation2 + $0x80] sm:$0xff] 0.0
      %378 = vst [vmem:[#allocation2 + $0x88] sm:$0xff] 0.0
      %379 = vst [vmem:[#allocation2 + $0x90] sm:$0xff] 0.0
      %380 = vst [vmem:[#allocation2 + $0x98] sm:$0xff] 0.0
      %381 = vst [vmem:[#allocation2 + $0xa0] sm:$0xff] 0.0
      %382 = vst [vmem:[#allocation2 + $0xa8] sm:$0xff] 0.0
      %383 = vst [vmem:[#allocation2 + $0xb0] sm:$0xff] 0.0
      %384 = vst [vmem:[#allocation2 + $0xb8] sm:$0xff] 0.0
      %385 = vst [vmem:[#allocation2 + $0xc0] sm:$0xff] 0.0
      %386 = vst [vmem:[#allocation2 + $0xc8] sm:$0xff] 0.0
      %387 = vst [vmem:[#allocation2 + $0xd0] sm:$0xff] 0.0
      %388 = vst [vmem:[#allocation2 + $0xd8] sm:$0xff] 0.0
      %389 = vst [vmem:[#allocation2 + $0xe0] sm:$0xff] 0.0
      %390 = vst [vmem:[#allocation2 + $0xe8] sm:$0xff] 0.0
      %391 = vst [vmem:[#allocation2 + $0xf0] sm:$0xff] 0.0
      %392 = vst [vmem:[#allocation2 + $0xf8] sm:$0xff] 0.0
      %393 = vst [vmem:[#allocation2 + $0x100] sm:$0xff] 0.0
      %394 = vst [vmem:[#allocation2 + $0x108] sm:$0xff] 0.0
      %395 = vst [vmem:[#allocation2 + $0x110] sm:$0xff] 0.0
      %396 = vst [vmem:[#allocation2 + $0x118] sm:$0xff] 0.0
      %397 = vst [vmem:[#allocation3] sm:$0xff] 0.0
      %398 = vst [vmem:[#allocation3 + $0x8] sm:$0xff] 0.0
      %399 = vst [vmem:[#allocation3 + $0x10] sm:$0xff] 0.0
      %400 = vst [vmem:[#allocation3 + $0x18] sm:$0xff] 0.0
      %401 = vst [vmem:[#allocation3 + $0x20] sm:$0xff] 0.0
      %402 = vst [vmem:[#allocation3 + $0x28] sm:$0xff] 0.0
      %403 = vst [vmem:[#allocation3 + $0x30] sm:$0xff] 0.0
      %404 = vst [vmem:[#allocation3 + $0x38] sm:$0xff] 0.0
      %405 = vst [vmem:[#allocation3 + $0x40] sm:$0xff] 0.0
      %406 = vst [vmem:[#allocation3 + $0x48] sm:$0xff] 0.0
      %407 = vst [vmem:[#allocation3 + $0x50] sm:$0xff] 0.0
      %408 = vst [vmem:[#allocation3 + $0x58] sm:$0xff] 0.0
      %409 = vst [vmem:[#allocation3 + $0x60] sm:$0xff] 0.0
      %410 = vst [vmem:[#allocation3 + $0x68] sm:$0xff] 0.0
      %411 = vst [vmem:[#allocation3 + $0x70] sm:$0xff] 0.0
      %412 = vst [vmem:[#allocation3 + $0x78] sm:$0xff] 0.0
      %413 = vst [vmem:[#allocation3 + $0x80] sm:$0xff] 0.0
      %414 = vst [vmem:[#allocation3 + $0x88] sm:$0xff] 0.0
      %415 = vst [vmem:[#allocation3 + $0x90] sm:$0xff] 0.0
      %416 = vst [vmem:[#allocation3 + $0x98] sm:$0xff] 0.0
      %417 = vst [vmem:[#allocation3 + $0xa0] sm:$0xff] 0.0
      %418 = vst [vmem:[#allocation3 + $0xa8] sm:$0xff] 0.0
      %419 = vst [vmem:[#allocation3 + $0xb0] sm:$0xff] 0.0
      %420 = vst [vmem:[#allocation3 + $0xb8] sm:$0xff] 0.0
      %421 = vst [vmem:[#allocation3 + $0xc0] sm:$0xff] 0.0
      %422 = vst [vmem:[#allocation3 + $0xc8] sm:$0xff] 0.0
      %423 = vst [vmem:[#allocation3 + $0xd0] sm:$0xff] 0.0
      %424 = vst [vmem:[#allocation3 + $0xd8] sm:$0xff] 0.0
      %425 = vst [vmem:[#allocation3 + $0xe0] sm:$0xff] 0.0
      %426 = vst [vmem:[#allocation3 + $0xe8] sm:$0xff] 0.0
      %427 = vst [vmem:[#allocation3 + $0xf0] sm:$0xff] 0.0
      %428 = vst [vmem:[#allocation3 + $0xf8] sm:$0xff] 0.0
      %429 = vst [vmem:[#allocation3 + $0x100] sm:$0xff] 0.0
      %430 = vst [vmem:[#allocation3 + $0x108] sm:$0xff] 0.0
      %431 = vst [vmem:[#allocation3 + $0x110] sm:$0xff] 0.0
      %432 = vst [vmem:[#allocation3 + $0x118] sm:$0xff] 0.0
      %vm433 = vcmask 261120
      %434 = vst.msk [vmem:[#allocation4] sm:$0xff] %vm433, 0.0
      %435 = vst.msk [vmem:[#allocation4 + $0x8] sm:$0xff] %vm433, 0.0
      %436 = vst.msk [vmem:[#allocation4 + $0x10] sm:$0xff] %vm433, 0.0
      %437 = vst.msk [vmem:[#allocation4 + $0x18] sm:$0xff] %vm433, 0.0
      %438 = vst.msk [vmem:[#allocation4 + $0x20] sm:$0xff] %vm433, 0.0
      %439 = vst.msk [vmem:[#allocation4 + $0x28] sm:$0xff] %vm433, 0.0
      %440 = vst.msk [vmem:[#allocation4 + $0x30] sm:$0xff] %vm433, 0.0
      %441 = vst.msk [vmem:[#allocation4 + $0x38] sm:$0xff] %vm433, 0.0
      %442 = vst.msk [vmem:[#allocation4 + $0x40] sm:$0xff] %vm433, 0.0
      %443 = vst.msk [vmem:[#allocation4 + $0x48] sm:$0xff] %vm433, 0.0
      %444 = vst.msk [vmem:[#allocation4 + $0x50] sm:$0xff] %vm433, 0.0
      %445 = vst.msk [vmem:[#allocation4 + $0x58] sm:$0xff] %vm433, 0.0
      %446 = vst.msk [vmem:[#allocation4 + $0x60] sm:$0xff] %vm433, 0.0
      %447 = vst.msk [vmem:[#allocation4 + $0x68] sm:$0xff] %vm433, 0.0
      %448 = vst.msk [vmem:[#allocation4 + $0x70] sm:$0xff] %vm433, 0.0
      %449 = vst.msk [vmem:[#allocation4 + $0x78] sm:$0xff] %vm433, 0.0
      %450 = vst.msk [vmem:[#allocation4 + $0x80] sm:$0xff] %vm433, 0.0
      %451 = vst.msk [vmem:[#allocation4 + $0x88] sm:$0xff] %vm433, 0.0
      %452 = vst.msk [vmem:[#allocation4 + $0x90] sm:$0xff] %vm433, 0.0
      %453 = vst.msk [vmem:[#allocation4 + $0x98] sm:$0xff] %vm433, 0.0
      %454 = vst.msk [vmem:[#allocation4 + $0xa0] sm:$0xff] %vm433, 0.0
      %455 = vst.msk [vmem:[#allocation4 + $0xa8] sm:$0xff] %vm433, 0.0
      %456 = vst.msk [vmem:[#allocation4 + $0xb0] sm:$0xff] %vm433, 0.0
      %457 = vst.msk [vmem:[#allocation4 + $0xb8] sm:$0xff] %vm433, 0.0
      %458 = vst.msk [vmem:[#allocation4 + $0xc0] sm:$0xff] %vm433, 0.0
      %459 = vst.msk [vmem:[#allocation4 + $0xc8] sm:$0xff] %vm433, 0.0
      %460 = vst.msk [vmem:[#allocation4 + $0xd0] sm:$0xff] %vm433, 0.0
      %461 = vst.msk [vmem:[#allocation4 + $0xd8] sm:$0xff] %vm433, 0.0
      %462 = vst.msk [vmem:[#allocation4 + $0xe0] sm:$0xff] %vm433, 0.0
      %463 = vst.msk [vmem:[#allocation4 + $0xe8] sm:$0xff] %vm433, 0.0
      %464 = vst.msk [vmem:[#allocation4 + $0xf0] sm:$0xff] %vm433, 0.0
      %465 = vst.msk [vmem:[#allocation4 + $0xf8] sm:$0xff] %vm433, 0.0
      %vm466 = vcmask 523264
      %467 = vst.msk [vmem:[#allocation5] sm:$0xff] %vm466, 0.0
      %468 = vst.msk [vmem:[#allocation5 + $0x8] sm:$0xff] %vm466, 0.0
      %469 = vst.msk [vmem:[#allocation5 + $0x10] sm:$0xff] %vm466, 0.0
      %470 = vst.msk [vmem:[#allocation5 + $0x18] sm:$0xff] %vm466, 0.0
      %471 = vst.msk [vmem:[#allocation5 + $0x20] sm:$0xff] %vm466, 0.0
      %472 = vst.msk [vmem:[#allocation5 + $0x28] sm:$0xff] %vm466, 0.0
      %473 = vst.msk [vmem:[#allocation5 + $0x30] sm:$0xff] %vm466, 0.0
      %474 = vst.msk [vmem:[#allocation5 + $0x38] sm:$0xff] %vm466, 0.0
      %475 = vst.msk [vmem:[#allocation5 + $0x40] sm:$0xff] %vm466, 0.0
      %476 = vst.msk [vmem:[#allocation5 + $0x48] sm:$0xff] %vm466, 0.0
      %477 = vst.msk [vmem:[#allocation5 + $0x50] sm:$0xff] %vm466, 0.0
      %478 = vst.msk [vmem:[#allocation5 + $0x58] sm:$0xff] %vm466, 0.0
      %479 = vst.msk [vmem:[#allocation5 + $0x60] sm:$0xff] %vm466, 0.0
      %480 = vst.msk [vmem:[#allocation5 + $0x68] sm:$0xff] %vm466, 0.0
      %481 = vst.msk [vmem:[#allocation5 + $0x70] sm:$0xff] %vm466, 0.0
      %482 = vst.msk [vmem:[#allocation5 + $0x78] sm:$0xff] %vm466, 0.0
      %483 = vst.msk [vmem:[#allocation5 + $0x80] sm:$0xff] %vm466, 0.0
      %484 = vst.msk [vmem:[#allocation5 + $0x88] sm:$0xff] %vm466, 0.0
      %485 = vst.msk [vmem:[#allocation5 + $0x90] sm:$0xff] %vm466, 0.0
      %486 = vst.msk [vmem:[#allocation5 + $0x98] sm:$0xff] %vm466, 0.0
      %487 = vst.msk [vmem:[#allocation5 + $0xa0] sm:$0xff] %vm466, 0.0
      %488 = vst.msk [vmem:[#allocation5 + $0xa8] sm:$0xff] %vm466, 0.0
      %489 = vst.msk [vmem:[#allocation5 + $0xb0] sm:$0xff] %vm466, 0.0
      %490 = vst.msk [vmem:[#allocation5 + $0xb8] sm:$0xff] %vm466, 0.0
      %491 = vst.msk [vmem:[#allocation5 + $0xc0] sm:$0xff] %vm466, 0.0
      %492 = vst.msk [vmem:[#allocation5 + $0xc8] sm:$0xff] %vm466, 0.0
      %493 = vst.msk [vmem:[#allocation5 + $0xd0] sm:$0xff] %vm466, 0.0
      %494 = vst.msk [vmem:[#allocation5 + $0xd8] sm:$0xff] %vm466, 0.0
      %495 = vst.msk [vmem:[#allocation5 + $0xe0] sm:$0xff] %vm466, 0.0
      %496 = vst.msk [vmem:[#allocation5 + $0xe8] sm:$0xff] %vm466, 0.0
      %497 = vst.msk [vmem:[#allocation5 + $0xf0] sm:$0xff] %vm466, 0.0
      %498 = vst.msk [vmem:[#allocation5 + $0xf8] sm:$0xff] %vm466, 0.0
      %v499 = vlaneseq
      %v500 = vshrl.u32 %v499, 7
      %v501 = vadd.s32 %v500, 8
      %v502 = vadd.s32 %v500, 16
      %v503 = vadd.s32 %v500, 24
      %v504 = vadd.s32 %v500, 32
      %v505 = vadd.s32 %v500, 40
      %v506 = vadd.s32 %v500, 48
      %v507 = vadd.s32 %v500, 56
      %v508 = vadd.s32 %v500, 64
      %v509 = vadd.s32 %v500, 72
      %v510 = vadd.s32 %v500, 80
      %v511 = vadd.s32 %v500, 88
      %v512 = vadd.s32 %v500, 96
      %v513 = vadd.s32 %v500, 104
      %v514 = vadd.s32 %v500, 112
      %v515 = vadd.s32 %v500, 120
      %v516 = vadd.s32 %v500, 128
      %v517 = vadd.s32 %v500, 136
      %v518 = vadd.s32 %v500, 144
      %v519 = vadd.s32 %v500, 152
      %v520 = vadd.s32 %v500, 160
      %v521 = vadd.s32 %v500, 168
      %v522 = vadd.s32 %v500, 176
      %v523 = vadd.s32 %v500, 184
      %v524 = vadd.s32 %v500, 192
      %v525 = vadd.s32 %v500, 200
      %v526 = vadd.s32 %v500, 208
      %v527 = vadd.s32 %v500, 216
      %v528 = vadd.s32 %v500, 224
      %v529 = vadd.s32 %v500, 232
      %v530 = vadd.s32 %v500, 240
      %v531 = vadd.s32 %v500, 248
      %v532 = vadd.s32 %v500, 256
      %v533 = vadd.s32 %v500, 264
      %v534 = vadd.s32 %v500, 272
      %v535 = vadd.s32 %v500, 280
      %vm536 = vcmp.lt.s32.totalorder %v500, 0
      %v537 = vsub.s32 0, %v500
      %v538 = vsel %vm536, %v537, %v500
      %v539 = vshrl.u32 %v538, 4
      %v540 = vand.u32 %v538, 15
      %v541 = vsub.s32 0, %v540
      %v542 = vsel %vm536, %v541, %v540
      %vm543 = vcmp.lt.s32.totalorder %v501, 0
      %v544 = vsub.s32 0, %v501
      %v545 = vsel %vm543, %v544, %v501
      %v546 = vshrl.u32 %v545, 4
      %v547 = vand.u32 %v545, 15
      %v548 = vsub.s32 0, %v547
      %v549 = vsel %vm543, %v548, %v547
      %vm550 = vcmp.lt.s32.totalorder %v502, 0
      %v551 = vsub.s32 0, %v502
      %v552 = vsel %vm550, %v551, %v502
      %v553 = vshrl.u32 %v552, 4
      %v554 = vand.u32 %v552, 15
      %v555 = vsub.s32 0, %v554
      %v556 = vsel %vm550, %v555, %v554
      %vm557 = vcmp.lt.s32.totalorder %v503, 0
      %v558 = vsub.s32 0, %v503
      %v559 = vsel %vm557, %v558, %v503
      %v560 = vshrl.u32 %v559, 4
      %v561 = vand.u32 %v559, 15
      %v562 = vsub.s32 0, %v561
      %v563 = vsel %vm557, %v562, %v561
      %vm564 = vcmp.lt.s32.totalorder %v504, 0
      %v565 = vsub.s32 0, %v504
      %v566 = vsel %vm564, %v565, %v504
      %v567 = vshrl.u32 %v566, 4
      %v568 = vand.u32 %v566, 15
      %v569 = vsub.s32 0, %v568
      %v570 = vsel %vm564, %v569, %v568
      %vm571 = vcmp.lt.s32.totalorder %v505, 0
      %v572 = vsub.s32 0, %v505
      %v573 = vsel %vm571, %v572, %v505
      %v574 = vshrl.u32 %v573, 4
      %v575 = vand.u32 %v573, 15
      %v576 = vsub.s32 0, %v575
      %v577 = vsel %vm571, %v576, %v575
      %vm578 = vcmp.lt.s32.totalorder %v506, 0
      %v579 = vsub.s32 0, %v506
      %v580 = vsel %vm578, %v579, %v506
      %v581 = vshrl.u32 %v580, 4
      %v582 = vand.u32 %v580, 15
      %v583 = vsub.s32 0, %v582
      %v584 = vsel %vm578, %v583, %v582
      %vm585 = vcmp.lt.s32.totalorder %v507, 0
      %v586 = vsub.s32 0, %v507
      %v587 = vsel %vm585, %v586, %v507
      %v588 = vshrl.u32 %v587, 4
      %v589 = vand.u32 %v587, 15
      %v590 = vsub.s32 0, %v589
      %v591 = vsel %vm585, %v590, %v589
      %vm592 = vcmp.lt.s32.totalorder %v508, 0
      %v593 = vsub.s32 0, %v508
      %v594 = vsel %vm592, %v593, %v508
      %v595 = vshrl.u32 %v594, 4
      %v596 = vand.u32 %v594, 15
      %v597 = vsub.s32 0, %v596
      %v598 = vsel %vm592, %v597, %v596
      %vm599 = vcmp.lt.s32.totalorder %v509, 0
      %v600 = vsub.s32 0, %v509
      %v601 = vsel %vm599, %v600, %v509
      %v602 = vshrl.u32 %v601, 4
      %v603 = vand.u32 %v601, 15
      %v604 = vsub.s32 0, %v603
      %v605 = vsel %vm599, %v604, %v603
      %vm606 = vcmp.lt.s32.totalorder %v510, 0
      %v607 = vsub.s32 0, %v510
      %v608 = vsel %vm606, %v607, %v510
      %v609 = vshrl.u32 %v608, 4
      %v610 = vand.u32 %v608, 15
      %v611 = vsub.s32 0, %v610
      %v612 = vsel %vm606, %v611, %v610
      %vm613 = vcmp.lt.s32.totalorder %v511, 0
      %v614 = vsub.s32 0, %v511
      %v615 = vsel %vm613, %v614, %v511
      %v616 = vshrl.u32 %v615, 4
      %v617 = vand.u32 %v615, 15
      %v618 = vsub.s32 0, %v617
      %v619 = vsel %vm613, %v618, %v617
      %vm620 = vcmp.lt.s32.totalorder %v512, 0
      %v621 = vsub.s32 0, %v512
      %v622 = vsel %vm620, %v621, %v512
      %v623 = vshrl.u32 %v622, 4
      %v624 = vand.u32 %v622, 15
      %v625 = vsub.s32 0, %v624
      %v626 = vsel %vm620, %v625, %v624
      %vm627 = vcmp.lt.s32.totalorder %v513, 0
      %v628 = vsub.s32 0, %v513
      %v629 = vsel %vm627, %v628, %v513
      %v630 = vshrl.u32 %v629, 4
      %v631 = vand.u32 %v629, 15
      %v632 = vsub.s32 0, %v631
      %v633 = vsel %vm627, %v632, %v631
      %vm634 = vcmp.lt.s32.totalorder %v514, 0
      %v635 = vsub.s32 0, %v514
      %v636 = vsel %vm634, %v635, %v514
      %v637 = vshrl.u32 %v636, 4
      %v638 = vand.u32 %v636, 15
      %v639 = vsub.s32 0, %v638
      %v640 = vsel %vm634, %v639, %v638
      %vm641 = vcmp.lt.s32.totalorder %v515, 0
      %v642 = vsub.s32 0, %v515
      %v643 = vsel %vm641, %v642, %v515
      %v644 = vshrl.u32 %v643, 4
      %v645 = vand.u32 %v643, 15
      %v646 = vsub.s32 0, %v645
      %v647 = vsel %vm641, %v646, %v645
      %vm648 = vcmp.lt.s32.totalorder %v516, 0
      %v649 = vsub.s32 0, %v516
      %v650 = vsel %vm648, %v649, %v516
      %v651 = vshrl.u32 %v650, 4
      %v652 = vand.u32 %v650, 15
      %v653 = vsub.s32 0, %v652
      %v654 = vsel %vm648, %v653, %v652
      %vm655 = vcmp.lt.s32.totalorder %v517, 0
      %v656 = vsub.s32 0, %v517
      %v657 = vsel %vm655, %v656, %v517
      %v658 = vshrl.u32 %v657, 4
      %v659 = vand.u32 %v657, 15
      %v660 = vsub.s32 0, %v659
      %v661 = vsel %vm655, %v660, %v659
      %vm662 = vcmp.lt.s32.totalorder %v518, 0
      %v663 = vsub.s32 0, %v518
      %v664 = vsel %vm662, %v663, %v518
      %v665 = vshrl.u32 %v664, 4
      %v666 = vand.u32 %v664, 15
      %v667 = vsub.s32 0, %v666
      %v668 = vsel %vm662, %v667, %v666
      %vm669 = vcmp.lt.s32.totalorder %v519, 0
      %v670 = vsub.s32 0, %v519
      %v671 = vsel %vm669, %v670, %v519
      %v672 = vshrl.u32 %v671, 4
      %v673 = vand.u32 %v671, 15
      %v674 = vsub.s32 0, %v673
      %v675 = vsel %vm669, %v674, %v673
      %vm676 = vcmp.lt.s32.totalorder %v520, 0
      %v677 = vsub.s32 0, %v520
      %v678 = vsel %vm676, %v677, %v520
      %v679 = vshrl.u32 %v678, 4
      %v680 = vand.u32 %v678, 15
      %v681 = vsub.s32 0, %v680
      %v682 = vsel %vm676, %v681, %v680
      %vm683 = vcmp.lt.s32.totalorder %v521, 0
      %v684 = vsub.s32 0, %v521
      %v685 = vsel %vm683, %v684, %v521
      %v686 = vshrl.u32 %v685, 4
      %v687 = vand.u32 %v685, 15
      %v688 = vsub.s32 0, %v687
      %v689 = vsel %vm683, %v688, %v687
      %vm690 = vcmp.lt.s32.totalorder %v522, 0
      %v691 = vsub.s32 0, %v522
      %v692 = vsel %vm690, %v691, %v522
      %v693 = vshrl.u32 %v692, 4
      %v694 = vand.u32 %v692, 15
      %v695 = vsub.s32 0, %v694
      %v696 = vsel %vm690, %v695, %v694
      %vm697 = vcmp.lt.s32.totalorder %v523, 0
      %v698 = vsub.s32 0, %v523
      %v699 = vsel %vm697, %v698, %v523
      %v700 = vshrl.u32 %v699, 4
      %v701 = vand.u32 %v699, 15
      %v702 = vsub.s32 0, %v701
      %v703 = vsel %vm697, %v702, %v701
      %vm704 = vcmp.lt.s32.totalorder %v524, 0
      %v705 = vsub.s32 0, %v524
      %v706 = vsel %vm704, %v705, %v524
      %v707 = vshrl.u32 %v706, 4
      %v708 = vand.u32 %v706, 15
      %v709 = vsub.s32 0, %v708
      %v710 = vsel %vm704, %v709, %v708
      %vm711 = vcmp.lt.s32.totalorder %v525, 0
      %v712 = vsub.s32 0, %v525
      %v713 = vsel %vm711, %v712, %v525
      %v714 = vshrl.u32 %v713, 4
      %v715 = vand.u32 %v713, 15
      %v716 = vsub.s32 0, %v715
      %v717 = vsel %vm711, %v716, %v715
      %vm718 = vcmp.lt.s32.totalorder %v526, 0
      %v719 = vsub.s32 0, %v526
      %v720 = vsel %vm718, %v719, %v526
      %v721 = vshrl.u32 %v720, 4
      %v722 = vand.u32 %v720, 15
      %v723 = vsub.s32 0, %v722
      %v724 = vsel %vm718, %v723, %v722
      %vm725 = vcmp.lt.s32.totalorder %v527, 0
      %v726 = vsub.s32 0, %v527
      %v727 = vsel %vm725, %v726, %v527
      %v728 = vshrl.u32 %v727, 4
      %v729 = vand.u32 %v727, 15
      %v730 = vsub.s32 0, %v729
      %v731 = vsel %vm725, %v730, %v729
      %vm732 = vcmp.lt.s32.totalorder %v528, 0
      %v733 = vsub.s32 0, %v528
      %v734 = vsel %vm732, %v733, %v528
      %v735 = vshrl.u32 %v734, 4
      %v736 = vand.u32 %v734, 15
      %v737 = vsub.s32 0, %v736
      %v738 = vsel %vm732, %v737, %v736
      %vm739 = vcmp.lt.s32.totalorder %v529, 0
      %v740 = vsub.s32 0, %v529
      %v741 = vsel %vm739, %v740, %v529
      %v742 = vshrl.u32 %v741, 4
      %v743 = vand.u32 %v741, 15
      %v744 = vsub.s32 0, %v743
      %v745 = vsel %vm739, %v744, %v743
      %vm746 = vcmp.lt.s32.totalorder %v530, 0
      %v747 = vsub.s32 0, %v530
      %v748 = vsel %vm746, %v747, %v530
      %v749 = vshrl.u32 %v748, 4
      %v750 = vand.u32 %v748, 15
      %v751 = vsub.s32 0, %v750
      %v752 = vsel %vm746, %v751, %v750
      %vm753 = vcmp.lt.s32.totalorder %v531, 0
      %v754 = vsub.s32 0, %v531
      %v755 = vsel %vm753, %v754, %v531
      %v756 = vshrl.u32 %v755, 4
      %v757 = vand.u32 %v755, 15
      %v758 = vsub.s32 0, %v757
      %v759 = vsel %vm753, %v758, %v757
      %vm760 = vcmp.lt.s32.totalorder %v532, 0
      %v761 = vsub.s32 0, %v532
      %v762 = vsel %vm760, %v761, %v532
      %v763 = vshrl.u32 %v762, 4
      %v764 = vand.u32 %v762, 15
      %v765 = vsub.s32 0, %v764
      %v766 = vsel %vm760, %v765, %v764
      %vm767 = vcmp.lt.s32.totalorder %v533, 0
      %v768 = vsub.s32 0, %v533
      %v769 = vsel %vm767, %v768, %v533
      %v770 = vshrl.u32 %v769, 4
      %v771 = vand.u32 %v769, 15
      %v772 = vsub.s32 0, %v771
      %v773 = vsel %vm767, %v772, %v771
      %vm774 = vcmp.lt.s32.totalorder %v534, 0
      %v775 = vsub.s32 0, %v534
      %v776 = vsel %vm774, %v775, %v534
      %v777 = vshrl.u32 %v776, 4
      %v778 = vand.u32 %v776, 15
      %v779 = vsub.s32 0, %v778
      %v780 = vsel %vm774, %v779, %v778
      %vm781 = vcmp.lt.s32.totalorder %v535, 0
      %v782 = vsub.s32 0, %v535
      %v783 = vsel %vm781, %v782, %v535
      %v784 = vshrl.u32 %v783, 4
      %v785 = vand.u32 %v783, 15
      %v786 = vsub.s32 0, %v785
      %v787 = vsel %vm781, %v786, %v785
      %vm788 = vcmp.ne.s32.totalorder %v542, 0
      %vm789 = vcmp.ne.s32.totalorder %v549, 0
      %vm790 = vcmp.ne.s32.totalorder %v556, 0
      %vm791 = vcmp.ne.s32.totalorder %v563, 0
      %vm792 = vcmp.ne.s32.totalorder %v570, 0
      %vm793 = vcmp.ne.s32.totalorder %v577, 0
      %vm794 = vcmp.ne.s32.totalorder %v584, 0
      %vm795 = vcmp.ne.s32.totalorder %v591, 0
      %vm796 = vcmp.ne.s32.totalorder %v598, 0
      %vm797 = vcmp.ne.s32.totalorder %v605, 0
      %vm798 = vcmp.ne.s32.totalorder %v612, 0
      %vm799 = vcmp.ne.s32.totalorder %v619, 0
      %vm800 = vcmp.ne.s32.totalorder %v626, 0
      %vm801 = vcmp.ne.s32.totalorder %v633, 0
      %vm802 = vcmp.ne.s32.totalorder %v640, 0
      %vm803 = vcmp.ne.s32.totalorder %v647, 0
      %vm804 = vcmp.ne.s32.totalorder %v654, 0
      %vm805 = vcmp.ne.s32.totalorder %v661, 0
      %vm806 = vcmp.ne.s32.totalorder %v668, 0
      %vm807 = vcmp.ne.s32.totalorder %v675, 0
      %vm808 = vcmp.ne.s32.totalorder %v682, 0
      %vm809 = vcmp.ne.s32.totalorder %v689, 0
      %vm810 = vcmp.ne.s32.totalorder %v696, 0
      %vm811 = vcmp.ne.s32.totalorder %v703, 0
      %vm812 = vcmp.ne.s32.totalorder %v710, 0
      %vm813 = vcmp.ne.s32.totalorder %v717, 0
      %vm814 = vcmp.ne.s32.totalorder %v724, 0
      %vm815 = vcmp.ne.s32.totalorder %v731, 0
      %vm816 = vcmp.ne.s32.totalorder %v738, 0
      %vm817 = vcmp.ne.s32.totalorder %v745, 0
      %vm818 = vcmp.ne.s32.totalorder %v752, 0
      %vm819 = vcmp.ne.s32.totalorder %v759, 0
      %vm820 = vcmp.ne.s32.totalorder %v766, 0
      %vm821 = vcmp.ne.s32.totalorder %v773, 0
      %vm822 = vcmp.ne.s32.totalorder %v780, 0
      %vm823 = vcmp.ne.s32.totalorder %v787, 0
      %vm824 = vcmp.lt.s32.totalorder %v542, 0
      %vm825 = vcmp.lt.s32.totalorder %v549, 0
      %vm826 = vcmp.lt.s32.totalorder %v556, 0
      %vm827 = vcmp.lt.s32.totalorder %v563, 0
      %vm828 = vcmp.lt.s32.totalorder %v570, 0
      %vm829 = vcmp.lt.s32.totalorder %v577, 0
      %vm830 = vcmp.lt.s32.totalorder %v584, 0
      %vm831 = vcmp.lt.s32.totalorder %v591, 0
      %vm832 = vcmp.lt.s32.totalorder %v598, 0
      %vm833 = vcmp.lt.s32.totalorder %v605, 0
      %vm834 = vcmp.lt.s32.totalorder %v612, 0
      %vm835 = vcmp.lt.s32.totalorder %v619, 0
      %vm836 = vcmp.lt.s32.totalorder %v626, 0
      %vm837 = vcmp.lt.s32.totalorder %v633, 0
      %vm838 = vcmp.lt.s32.totalorder %v640, 0
      %vm839 = vcmp.lt.s32.totalorder %v647, 0
      %vm840 = vcmp.lt.s32.totalorder %v654, 0
      %vm841 = vcmp.lt.s32.totalorder %v661, 0
      %vm842 = vcmp.lt.s32.totalorder %v668, 0
      %vm843 = vcmp.lt.s32.totalorder %v675, 0
      %vm844 = vcmp.lt.s32.totalorder %v682, 0
      %vm845 = vcmp.lt.s32.totalorder %v689, 0
      %vm846 = vcmp.lt.s32.totalorder %v696, 0
      %vm847 = vcmp.lt.s32.totalorder %v703, 0
      %vm848 = vcmp.lt.s32.totalorder %v710, 0
      %vm849 = vcmp.lt.s32.totalorder %v717, 0
      %vm850 = vcmp.lt.s32.totalorder %v724, 0
      %vm851 = vcmp.lt.s32.totalorder %v731, 0
      %vm852 = vcmp.lt.s32.totalorder %v738, 0
      %vm853 = vcmp.lt.s32.totalorder %v745, 0
      %vm854 = vcmp.lt.s32.totalorder %v752, 0
      %vm855 = vcmp.lt.s32.totalorder %v759, 0
      %vm856 = vcmp.lt.s32.totalorder %v766, 0
      %vm857 = vcmp.lt.s32.totalorder %v773, 0
      %vm858 = vcmp.lt.s32.totalorder %v780, 0
      %vm859 = vcmp.lt.s32.totalorder %v787, 0
      %vm860 = vmand %vm824, %vm788
      %vm861 = vmand %vm825, %vm789
      %vm862 = vmand %vm826, %vm790
      %vm863 = vmand %vm827, %vm791
      %vm864 = vmand %vm828, %vm792
      %vm865 = vmand %vm829, %vm793
      %vm866 = vmand %vm830, %vm794
      %vm867 = vmand %vm831, %vm795
      %vm868 = vmand %vm832, %vm796
      %vm869 = vmand %vm833, %vm797
      %vm870 = vmand %vm834, %vm798
      %vm871 = vmand %vm835, %vm799
      %vm872 = vmand %vm836, %vm800
      %vm873 = vmand %vm837, %vm801
      %vm874 = vmand %vm838, %vm802
      %vm875 = vmand %vm839, %vm803
      %vm876 = vmand %vm840, %vm804
      %vm877 = vmand %vm841, %vm805
      %vm878 = vmand %vm842, %vm806
      %vm879 = vmand %vm843, %vm807
      %vm880 = vmand %vm844, %vm808
      %vm881 = vmand %vm845, %vm809
      %vm882 = vmand %vm846, %vm810
      %vm883 = vmand %vm847, %vm811
      %vm884 = vmand %vm848, %vm812
      %vm885 = vmand %vm849, %vm813
      %vm886 = vmand %vm850, %vm814
      %vm887 = vmand %vm851, %vm815
      %vm888 = vmand %vm852, %vm816
      %vm889 = vmand %vm853, %vm817
      %vm890 = vmand %vm854, %vm818
      %vm891 = vmand %vm855, %vm819
      %vm892 = vmand %vm856, %vm820
      %vm893 = vmand %vm857, %vm821
      %vm894 = vmand %vm858, %vm822
      %vm895 = vmand %vm859, %vm823
      %v896 = vadd.s32 %v542, 16
      %v897 = vadd.s32 %v549, 16
      %v898 = vadd.s32 %v556, 16
      %v899 = vadd.s32 %v563, 16
      %v900 = vadd.s32 %v570, 16
      %v901 = vadd.s32 %v577, 16
      %v902 = vadd.s32 %v584, 16
      %v903 = vadd.s32 %v591, 16
      %v904 = vadd.s32 %v598, 16
      %v905 = vadd.s32 %v605, 16
      %v906 = vadd.s32 %v612, 16
      %v907 = vadd.s32 %v619, 16
      %v908 = vadd.s32 %v626, 16
      %v909 = vadd.s32 %v633, 16
      %v910 = vadd.s32 %v640, 16
      %v911 = vadd.s32 %v647, 16
      %v912 = vadd.s32 %v654, 16
      %v913 = vadd.s32 %v661, 16
      %v914 = vadd.s32 %v668, 16
      %v915 = vadd.s32 %v675, 16
      %v916 = vadd.s32 %v682, 16
      %v917 = vadd.s32 %v689, 16
      %v918 = vadd.s32 %v696, 16
      %v919 = vadd.s32 %v703, 16
      %v920 = vadd.s32 %v710, 16
      %v921 = vadd.s32 %v717, 16
      %v922 = vadd.s32 %v724, 16
      %v923 = vadd.s32 %v731, 16
      %v924 = vadd.s32 %v738, 16
      %v925 = vadd.s32 %v745, 16
      %v926 = vadd.s32 %v752, 16
      %v927 = vadd.s32 %v759, 16
      %v928 = vadd.s32 %v766, 16
      %v929 = vadd.s32 %v773, 16
      %v930 = vadd.s32 %v780, 16
      %v931 = vadd.s32 %v787, 16
      %v932 = vsel %vm860, %v896, %v542
      %v933 = vsel %vm861, %v897, %v549
      %v934 = vsel %vm862, %v898, %v556
      %v935 = vsel %vm863, %v899, %v563
      %v936 = vsel %vm864, %v900, %v570
      %v937 = vsel %vm865, %v901, %v577
      %v938 = vsel %vm866, %v902, %v584
      %v939 = vsel %vm867, %v903, %v591
      %v940 = vsel %vm868, %v904, %v598
      %v941 = vsel %vm869, %v905, %v605
      %v942 = vsel %vm870, %v906, %v612
      %v943 = vsel %vm871, %v907, %v619
      %v944 = vsel %vm872, %v908, %v626
      %v945 = vsel %vm873, %v909, %v633
      %v946 = vsel %vm874, %v910, %v640
      %v947 = vsel %vm875, %v911, %v647
      %v948 = vsel %vm876, %v912, %v654
      %v949 = vsel %vm877, %v913, %v661
      %v950 = vsel %vm878, %v914, %v668
      %v951 = vsel %vm879, %v915, %v675
      %v952 = vsel %vm880, %v916, %v682
      %v953 = vsel %vm881, %v917, %v689
      %v954 = vsel %vm882, %v918, %v696
      %v955 = vsel %vm883, %v919, %v703
      %v956 = vsel %vm884, %v920, %v710
      %v957 = vsel %vm885, %v921, %v717
      %v958 = vsel %vm886, %v922, %v724
      %v959 = vsel %vm887, %v923, %v731
      %v960 = vsel %vm888, %v924, %v738
      %v961 = vsel %vm889, %v925, %v745
      %v962 = vsel %vm890, %v926, %v752
      %v963 = vsel %vm891, %v927, %v759
      %v964 = vsel %vm892, %v928, %v766
      %v965 = vsel %vm893, %v929, %v773
      %v966 = vsel %vm894, %v930, %v780
      %v967 = vsel %vm895, %v931, %v787
      %vm968 = vcmp.ne.s32.totalorder %v932, 0
      %vm969 = vcmp.ne.s32.totalorder %v933, 0
      %vm970 = vcmp.ne.s32.totalorder %v934, 0
      %vm971 = vcmp.ne.s32.totalorder %v935, 0
      %vm972 = vcmp.ne.s32.totalorder %v936, 0
      %vm973 = vcmp.ne.s32.totalorder %v937, 0
      %vm974 = vcmp.ne.s32.totalorder %v938, 0
      %vm975 = vcmp.ne.s32.totalorder %v939, 0
      %vm976 = vcmp.ne.s32.totalorder %v940, 0
      %vm977 = vcmp.ne.s32.totalorder %v941, 0
      %vm978 = vcmp.ne.s32.totalorder %v942, 0
      %vm979 = vcmp.ne.s32.totalorder %v943, 0
      %vm980 = vcmp.ne.s32.totalorder %v944, 0
      %vm981 = vcmp.ne.s32.totalorder %v945, 0
      %vm982 = vcmp.ne.s32.totalorder %v946, 0
      %vm983 = vcmp.ne.s32.totalorder %v947, 0
      %vm984 = vcmp.ne.s32.totalorder %v948, 0
      %vm985 = vcmp.ne.s32.totalorder %v949, 0
      %vm986 = vcmp.ne.s32.totalorder %v950, 0
      %vm987 = vcmp.ne.s32.totalorder %v951, 0
      %vm988 = vcmp.ne.s32.totalorder %v952, 0
      %vm989 = vcmp.ne.s32.totalorder %v953, 0
      %vm990 = vcmp.ne.s32.totalorder %v954, 0
      %vm991 = vcmp.ne.s32.totalorder %v955, 0
      %vm992 = vcmp.ne.s32.totalorder %v956, 0
      %vm993 = vcmp.ne.s32.totalorder %v957, 0
      %vm994 = vcmp.ne.s32.totalorder %v958, 0
      %vm995 = vcmp.ne.s32.totalorder %v959, 0
      %vm996 = vcmp.ne.s32.totalorder %v960, 0
      %vm997 = vcmp.ne.s32.totalorder %v961, 0
      %vm998 = vcmp.ne.s32.totalorder %v962, 0
      %vm999 = vcmp.ne.s32.totalorder %v963, 0
      %vm1000 = vcmp.ne.s32.totalorder %v964, 0
      %vm1001 = vcmp.ne.s32.totalorder %v965, 0
      %vm1002 = vcmp.ne.s32.totalorder %v966, 0
      %vm1003 = vcmp.ne.s32.totalorder %v967, 0
      %vm1004 = vcmp.ne.s32.totalorder %v932, 15
      %vm1005 = vcmp.ne.s32.totalorder %v933, 15
      %vm1006 = vcmp.ne.s32.totalorder %v934, 15
      %vm1007 = vcmp.ne.s32.totalorder %v935, 15
      %vm1008 = vcmp.ne.s32.totalorder %v936, 15
      %vm1009 = vcmp.ne.s32.totalorder %v937, 15
      %vm1010 = vcmp.ne.s32.totalorder %v938, 15
      %vm1011 = vcmp.ne.s32.totalorder %v939, 15
      %vm1012 = vcmp.ne.s32.totalorder %v940, 15
      %vm1013 = vcmp.ne.s32.totalorder %v941, 15
      %vm1014 = vcmp.ne.s32.totalorder %v942, 15
      %vm1015 = vcmp.ne.s32.totalorder %v943, 15
      %vm1016 = vcmp.ne.s32.totalorder %v944, 15
      %vm1017 = vcmp.ne.s32.totalorder %v945, 15
      %vm1018 = vcmp.ne.s32.totalorder %v946, 15
      %vm1019 = vcmp.ne.s32.totalorder %v947, 15
      %vm1020 = vcmp.ne.s32.totalorder %v948, 15
      %vm1021 = vcmp.ne.s32.totalorder %v949, 15
      %vm1022 = vcmp.ne.s32.totalorder %v950, 15
      %vm1023 = vcmp.ne.s32.totalorder %v951, 15
      %vm1024 = vcmp.ne.s32.totalorder %v952, 15
      %vm1025 = vcmp.ne.s32.totalorder %v953, 15
      %vm1026 = vcmp.ne.s32.totalorder %v954, 15
      %vm1027 = vcmp.ne.s32.totalorder %v955, 15
      %vm1028 = vcmp.ne.s32.totalorder %v956, 15
      %vm1029 = vcmp.ne.s32.totalorder %v957, 15
      %vm1030 = vcmp.ne.s32.totalorder %v958, 15
      %vm1031 = vcmp.ne.s32.totalorder %v959, 15
      %vm1032 = vcmp.ne.s32.totalorder %v960, 15
      %vm1033 = vcmp.ne.s32.totalorder %v961, 15
      %vm1034 = vcmp.ne.s32.totalorder %v962, 15
      %vm1035 = vcmp.ne.s32.totalorder %v963, 15
      %vm1036 = vcmp.ne.s32.totalorder %v964, 15
      %vm1037 = vcmp.ne.s32.totalorder %v965, 15
      %vm1038 = vcmp.ne.s32.totalorder %v966, 15
      %vm1039 = vcmp.ne.s32.totalorder %v967, 15
      %v1040 = vld [vmem:[%s3] sm:$0x1]
      %v1041 = vld [vmem:[%s5] sm:$0x3]
      loop: start=0, step=1, limit=4
      $region61: #{_convlstm_forward.1} parent=59 // loop_pre_header
        _
      $region62: #{_convlstm_forward.1} parent=59 // loop_header
        %s1043 = sphi 0, %s1047
        %p1044 = scmp.ge.s32.totalorder %s1043, 4
      $region63: #{_convlstm_forward.1} parent=59 // loop_header_branch
        %1046 = sbr.rel (%p1044) target = $region67
      $region64: #{_convlstm_forward.1} parent=59 // loop_body
        %s1048 = smul.u32 %s1043, 256
        %s1049 = scalar_lea.vmem %s355, %s1048
        %v1050 = vld [vmem:[%s1049] sm:$0xff]
        %v1051 = vld [vmem:[%s1049 + $0x8] sm:$0xff]
        %v1052 = vld [vmem:[%s1049 + $0x10] sm:$0xff]
        %v1053 = vld [vmem:[%s1049 + $0x18] sm:$0xff]
        %v1054 = vld [vmem:[%s1049 + $0x20] sm:$0xff]
        %v1055 = vld [vmem:[%s1049 + $0x28] sm:$0xff]
        %v1056 = vld [vmem:[%s1049 + $0x30] sm:$0xff]
        %v1057 = vld [vmem:[%s1049 + $0x38] sm:$0xff]
        %v1058 = vld [vmem:[%s1049 + $0x40] sm:$0xff]
        %v1059 = vld [vmem:[%s1049 + $0x48] sm:$0xff]
        %v1060 = vld [vmem:[%s1049 + $0x50] sm:$0xff]
        %v1061 = vld [vmem:[%s1049 + $0x58] sm:$0xff]
        %v1062 = vld [vmem:[%s1049 + $0x60] sm:$0xff]
        %v1063 = vld [vmem:[%s1049 + $0x68] sm:$0xff]
        %v1064 = vld [vmem:[%s1049 + $0x70] sm:$0xff]
        %v1065 = vld [vmem:[%s1049 + $0x78] sm:$0xff]
        %v1066 = vld [vmem:[%s1049 + $0x80] sm:$0xff]
        %v1067 = vld [vmem:[%s1049 + $0x88] sm:$0xff]
        %v1068 = vld [vmem:[%s1049 + $0x90] sm:$0xff]
        %v1069 = vld [vmem:[%s1049 + $0x98] sm:$0xff]
        %v1070 = vld [vmem:[%s1049 + $0xa0] sm:$0xff]
        %v1071 = vld [vmem:[%s1049 + $0xa8] sm:$0xff]
        %v1072 = vld [vmem:[%s1049 + $0xb0] sm:$0xff]
        %v1073 = vld [vmem:[%s1049 + $0xb8] sm:$0xff]
        %v1074 = vld [vmem:[%s1049 + $0xc0] sm:$0xff]
        %v1075 = vld [vmem:[%s1049 + $0xc8] sm:$0xff]
        %v1076 = vld [vmem:[%s1049 + $0xd0] sm:$0xff]
        %v1077 = vld [vmem:[%s1049 + $0xd8] sm:$0xff]
        %v1078 = vld [vmem:[%s1049 + $0xe0] sm:$0xff]
        %v1079 = vld [vmem:[%s1049 + $0xe8] sm:$0xff]
        %v1080 = vld [vmem:[%s1049 + $0xf0] sm:$0xff]
        %v1081 = vld [vmem:[%s1049 + $0xf8] sm:$0xff]
        %v1082 = vpack.c.bf16 %v1051, %v1050
        %v1083 = vpack.c.bf16 %v1053, %v1052
        %v1084 = vpack.c.bf16 %v1055, %v1054
        %v1085 = vpack.c.bf16 %v1057, %v1056
        %v1086 = vpack.c.bf16 %v1059, %v1058
        %v1087 = vpack.c.bf16 %v1061, %v1060
        %v1088 = vpack.c.bf16 %v1063, %v1062
        %v1089 = vpack.c.bf16 %v1065, %v1064
        %v1090 = vpack.c.bf16 %v1067, %v1066
        %v1091 = vpack.c.bf16 %v1069, %v1068
        %v1092 = vpack.c.bf16 %v1071, %v1070
        %v1093 = vpack.c.bf16 %v1073, %v1072
        %v1094 = vpack.c.bf16 %v1075, %v1074
        %v1095 = vpack.c.bf16 %v1077, %v1076
        %v1096 = vpack.c.bf16 %v1079, %v1078
        %v1097 = vpack.c.bf16 %v1081, %v1080
        %v1098 = vld [vmem:[#allocation2] sm:$0xff]
        %v1099 = vld [vmem:[#allocation2 + $0x8] sm:$0xff]
        %v1100 = vld [vmem:[#allocation2 + $0x10] sm:$0xff]
        %v1101 = vld [vmem:[#allocation2 + $0x18] sm:$0xff]
        %v1102 = vld [vmem:[#allocation2 + $0x20] sm:$0xff]
        %v1103 = vld [vmem:[#allocation2 + $0x28] sm:$0xff]
        %v1104 = vld [vmem:[#allocation2 + $0x30] sm:$0xff]
        %v1105 = vld [vmem:[#allocation2 + $0x38] sm:$0xff]
        %v1106 = vld [vmem:[#allocation2 + $0x40] sm:$0xff]
        %v1107 = vld [vmem:[#allocation2 + $0x48] sm:$0xff]
        %v1108 = vld [vmem:[#allocation2 + $0x50] sm:$0xff]
        %v1109 = vld [vmem:[#allocation2 + $0x58] sm:$0xff]
        %v1110 = vld [vmem:[#allocation2 + $0x60] sm:$0xff]
        %v1111 = vld [vmem:[#allocation2 + $0x68] sm:$0xff]
        %v1112 = vld [vmem:[#allocation2 + $0x70] sm:$0xff]
        %v1113 = vld [vmem:[#allocation2 + $0x78] sm:$0xff]
        %v1114 = vld [vmem:[#allocation2 + $0x80] sm:$0xff]
        %v1115 = vld [vmem:[#allocation2 + $0x88] sm:$0xff]
        %v1116 = vld [vmem:[#allocation2 + $0x90] sm:$0xff]
        %v1117 = vld [vmem:[#allocation2 + $0x98] sm:$0xff]
        %v1118 = vld [vmem:[#allocation2 + $0xa0] sm:$0xff]
        %v1119 = vld [vmem:[#allocation2 + $0xa8] sm:$0xff]
        %v1120 = vld [vmem:[#allocation2 + $0xb0] sm:$0xff]
        %v1121 = vld [vmem:[#allocation2 + $0xb8] sm:$0xff]
        %v1122 = vld [vmem:[#allocation2 + $0xc0] sm:$0xff]
        %v1123 = vld [vmem:[#allocation2 + $0xc8] sm:$0xff]
        %v1124 = vld [vmem:[#allocation2 + $0xd0] sm:$0xff]
        %v1125 = vld [vmem:[#allocation2 + $0xd8] sm:$0xff]
        %v1126 = vld [vmem:[#allocation2 + $0xe0] sm:$0xff]
        %v1127 = vld [vmem:[#allocation2 + $0xe8] sm:$0xff]
        %v1128 = vld [vmem:[#allocation2 + $0xf0] sm:$0xff]
        %v1129 = vld [vmem:[#allocation2 + $0xf8] sm:$0xff]
        %v1130 = vld [vmem:[#allocation2 + $0x100] sm:$0xff]
        %v1131 = vld [vmem:[#allocation2 + $0x108] sm:$0xff]
        %v1132 = vld [vmem:[#allocation2 + $0x110] sm:$0xff]
        %v1133 = vld [vmem:[#allocation2 + $0x118] sm:$0xff]
        %v1135 = vrot.slane %v1133, 7
        %vm1172 = vcmask 1040384
        %v1173 = vrot.slane %v1098, 7
        %v1174 = vrot.slane %v1099, 7
        %v1175 = vsel %vm1172, %v1173, %v1174
        %v1176 = vrot.slane %v1100, 7
        %v1177 = vsel %vm1172, %v1174, %v1176
        %v1178 = vrot.slane %v1101, 7
        %v1179 = vsel %vm1172, %v1176, %v1178
        %v1180 = vrot.slane %v1102, 7
        %v1181 = vsel %vm1172, %v1178, %v1180
        %v1182 = vrot.slane %v1103, 7
        %v1183 = vsel %vm1172, %v1180, %v1182
        %v1184 = vrot.slane %v1104, 7
        %v1185 = vsel %vm1172, %v1182, %v1184
        %v1186 = vrot.slane %v1105, 7
        %v1187 = vsel %vm1172, %v1184, %v1186
        %v1188 = vrot.slane %v1106, 7
        %v1189 = vsel %vm1172, %v1186, %v1188
        %v1190 = vrot.slane %v1107, 7
        %v1191 = vsel %vm1172, %v1188, %v1190
        %v1192 = vrot.slane %v1108, 7
        %v1193 = vsel %vm1172, %v1190, %v1192
        %v1194 = vrot.slane %v1109, 7
        %v1195 = vsel %vm1172, %v1192, %v1194
        %v1196 = vrot.slane %v1110, 7
        %v1197 = vsel %vm1172, %v1194, %v1196
        %v1198 = vrot.slane %v1111, 7
        %v1199 = vsel %vm1172, %v1196, %v1198
        %v1200 = vrot.slane %v1112, 7
        %v1201 = vsel %vm1172, %v1198, %v1200
        %v1202 = vrot.slane %v1113, 7
        %v1203 = vsel %vm1172, %v1200, %v1202
        %v1204 = vrot.slane %v1114, 7
        %v1205 = vsel %vm1172, %v1202, %v1204
        %v1206 = vrot.slane %v1115, 7
        %v1207 = vsel %vm1172, %v1204, %v1206
        %v1208 = vrot.slane %v1116, 7
        %v1209 = vsel %vm1172, %v1206, %v1208
        %v1210 = vrot.slane %v1117, 7
        %v1211 = vsel %vm1172, %v1208, %v1210
        %v1212 = vrot.slane %v1118, 7
        %v1213 = vsel %vm1172, %v1210, %v1212
        %v1214 = vrot.slane %v1119, 7
        %v1215 = vsel %vm1172, %v1212, %v1214
        %v1216 = vrot.slane %v1120, 7
        %v1217 = vsel %vm1172, %v1214, %v1216
        %v1218 = vrot.slane %v1121, 7
        %v1219 = vsel %vm1172, %v1216, %v1218
        %v1220 = vrot.slane %v1122, 7
        %v1221 = vsel %vm1172, %v1218, %v1220
        %v1222 = vrot.slane %v1123, 7
        %v1223 = vsel %vm1172, %v1220, %v1222
        %v1224 = vrot.slane %v1124, 7
        %v1225 = vsel %vm1172, %v1222, %v1224
        %v1226 = vrot.slane %v1125, 7
        %v1227 = vsel %vm1172, %v1224, %v1226
        %v1228 = vrot.slane %v1126, 7
        %v1229 = vsel %vm1172, %v1226, %v1228
        %v1230 = vrot.slane %v1127, 7
        %v1231 = vsel %vm1172, %v1228, %v1230
        %v1232 = vrot.slane %v1128, 7
        %v1233 = vsel %vm1172, %v1230, %v1232
        %v1234 = vrot.slane %v1129, 7
        %v1235 = vsel %vm1172, %v1232, %v1234
        %v1236 = vrot.slane %v1130, 7
        %v1237 = vsel %vm1172, %v1234, %v1236
        %v1238 = vrot.slane %v1131, 7
        %v1239 = vsel %vm1172, %v1236, %v1238
        %v1240 = vrot.slane %v1132, 7
        %v1241 = vsel %vm1172, %v1238, %v1240
        %v1242 = vsel %vm1172, %v1240, %v1135
        %v1279 = vsel %vm1172, %v1135, %v1173
        %v1280 = vsel %vm968, 1, 0
        %v1281 = vsel %vm969, 1, 0
        %v1282 = vsel %vm970, 1, 0
        %v1283 = vsel %vm971, 1, 0
        %v1284 = vsel %vm972, 1, 0
        %v1285 = vsel %vm973, 1, 0
        %v1286 = vsel %vm974, 1, 0
        %v1287 = vsel %vm975, 1, 0
        %v1288 = vsel %vm976, 1, 0
        %v1289 = vsel %vm977, 1, 0
        %v1290 = vsel %vm978, 1, 0
        %v1291 = vsel %vm979, 1, 0
        %v1292 = vsel %vm980, 1, 0
        %v1293 = vsel %vm981, 1, 0
        %v1294 = vsel %vm982, 1, 0
        %v1295 = vsel %vm983, 1, 0
        %v1296 = vsel %vm984, 1, 0
        %v1297 = vsel %vm985, 1, 0
        %v1298 = vsel %vm986, 1, 0
        %v1299 = vsel %vm987, 1, 0
        %v1300 = vsel %vm988, 1, 0
        %v1301 = vsel %vm989, 1, 0
        %v1302 = vsel %vm990, 1, 0
        %v1303 = vsel %vm991, 1, 0
        %v1304 = vsel %vm992, 1, 0
        %v1305 = vsel %vm993, 1, 0
        %v1306 = vsel %vm994, 1, 0
        %v1307 = vsel %vm995, 1, 0
        %v1308 = vsel %vm996, 1, 0
        %v1309 = vsel %vm997, 1, 0
        %v1310 = vsel %vm998, 1, 0
        %v1311 = vsel %vm999, 1, 0
        %v1312 = vsel %vm1000, 1, 0
        %v1313 = vsel %vm1001, 1, 0
        %v1314 = vsel %vm1002, 1, 0
        %v1315 = vsel %vm1003, 1, 0
        %vm1316 = vcmp.eq.s32.totalorder %v1280, 1
        %vm1317 = vcmp.eq.s32.totalorder %v1281, 1
        %vm1318 = vcmp.eq.s32.totalorder %v1282, 1
        %vm1319 = vcmp.eq.s32.totalorder %v1283, 1
        %vm1320 = vcmp.eq.s32.totalorder %v1284, 1
        %vm1321 = vcmp.eq.s32.totalorder %v1285, 1
        %vm1322 = vcmp.eq.s32.totalorder %v1286, 1
        %vm1323 = vcmp.eq.s32.totalorder %v1287, 1
        %vm1324 = vcmp.eq.s32.totalorder %v1288, 1
        %vm1325 = vcmp.eq.s32.totalorder %v1289, 1
        %vm1326 = vcmp.eq.s32.totalorder %v1290, 1
        %vm1327 = vcmp.eq.s32.totalorder %v1291, 1
        %vm1328 = vcmp.eq.s32.totalorder %v1292, 1
        %vm1329 = vcmp.eq.s32.totalorder %v1293, 1
        %vm1330 = vcmp.eq.s32.totalorder %v1294, 1
        %vm1331 = vcmp.eq.s32.totalorder %v1295, 1
        %vm1332 = vcmp.eq.s32.totalorder %v1296, 1
        %vm1333 = vcmp.eq.s32.totalorder %v1297, 1
        %vm1334 = vcmp.eq.s32.totalorder %v1298, 1
        %vm1335 = vcmp.eq.s32.totalorder %v1299, 1
        %vm1336 = vcmp.eq.s32.totalorder %v1300, 1
        %vm1337 = vcmp.eq.s32.totalorder %v1301, 1
        %vm1338 = vcmp.eq.s32.totalorder %v1302, 1
        %vm1339 = vcmp.eq.s32.totalorder %v1303, 1
        %vm1340 = vcmp.eq.s32.totalorder %v1304, 1
        %vm1341 = vcmp.eq.s32.totalorder %v1305, 1
        %vm1342 = vcmp.eq.s32.totalorder %v1306, 1
        %vm1343 = vcmp.eq.s32.totalorder %v1307, 1
        %vm1344 = vcmp.eq.s32.totalorder %v1308, 1
        %vm1345 = vcmp.eq.s32.totalorder %v1309, 1
        %vm1346 = vcmp.eq.s32.totalorder %v1310, 1
        %vm1347 = vcmp.eq.s32.totalorder %v1311, 1
        %vm1348 = vcmp.eq.s32.totalorder %v1312, 1
        %vm1349 = vcmp.eq.s32.totalorder %v1313, 1
        %vm1350 = vcmp.eq.s32.totalorder %v1314, 1
        %vm1351 = vcmp.eq.s32.totalorder %v1315, 1
        %v1352 = vsel %vm1316, %v1279, 0.0
        %v1353 = vsel %vm1317, %v1175, 0.0
        %v1354 = vsel %vm1318, %v1177, 0.0
        %v1355 = vsel %vm1319, %v1179, 0.0
        %v1356 = vsel %vm1320, %v1181, 0.0
        %v1357 = vsel %vm1321, %v1183, 0.0
        %v1358 = vsel %vm1322, %v1185, 0.0
        %v1359 = vsel %vm1323, %v1187, 0.0
        %v1360 = vsel %vm1324, %v1189, 0.0
        %v1361 = vsel %vm1325, %v1191, 0.0
        %v1362 = vsel %vm1326, %v1193, 0.0
        %v1363 = vsel %vm1327, %v1195, 0.0
        %v1364 = vsel %vm1328, %v1197, 0.0
        %v1365 = vsel %vm1329, %v1199, 0.0
        %v1366 = vsel %vm1330, %v1201, 0.0
        %v1367 = vsel %vm1331, %v1203, 0.0
        %v1368 = vsel %vm1332, %v1205, 0.0
        %v1369 = vsel %vm1333, %v1207, 0.0
        %v1370 = vsel %vm1334, %v1209, 0.0
        %v1371 = vsel %vm1335, %v1211, 0.0
        %v1372 = vsel %vm1336, %v1213, 0.0
        %v1373 = vsel %vm1337, %v1215, 0.0
        %v1374 = vsel %vm1338, %v1217, 0.0
        %v1375 = vsel %vm1339, %v1219, 0.0
        %v1376 = vsel %vm1340, %v1221, 0.0
        %v1377 = vsel %vm1341, %v1223, 0.0
        %v1378 = vsel %vm1342, %v1225, 0.0
        %v1379 = vsel %vm1343, %v1227, 0.0
        %v1380 = vsel %vm1344, %v1229, 0.0
        %v1381 = vsel %vm1345, %v1231, 0.0
        %v1382 = vsel %vm1346, %v1233, 0.0
        %v1383 = vsel %vm1347, %v1235, 0.0
        %v1384 = vsel %vm1348, %v1237, 0.0
        %v1385 = vsel %vm1349, %v1239, 0.0
        %v1386 = vsel %vm1350, %v1241, 0.0
        %v1387 = vsel %vm1351, %v1242, 0.0
        %vm1388 = vcmask 1046528
        %v1389 = vrot.slane %v1098, 1
        %v1390 = vrot.slane %v1099, 1
        %v1391 = vsel %vm1388, %v1389, %v1390
        %v1392 = vrot.slane %v1100, 1
        %v1393 = vsel %vm1388, %v1390, %v1392
        %v1394 = vrot.slane %v1101, 1
        %v1395 = vsel %vm1388, %v1392, %v1394
        %v1396 = vrot.slane %v1102, 1
        %v1397 = vsel %vm1388, %v1394, %v1396
        %v1398 = vrot.slane %v1103, 1
        %v1399 = vsel %vm1388, %v1396, %v1398
        %v1400 = vrot.slane %v1104, 1
        %v1401 = vsel %vm1388, %v1398, %v1400
        %v1402 = vrot.slane %v1105, 1
        %v1403 = vsel %vm1388, %v1400, %v1402
        %v1404 = vrot.slane %v1106, 1
        %v1405 = vsel %vm1388, %v1402, %v1404
        %v1406 = vrot.slane %v1107, 1
        %v1407 = vsel %vm1388, %v1404, %v1406
        %v1408 = vrot.slane %v1108, 1
        %v1409 = vsel %vm1388, %v1406, %v1408
        %v1410 = vrot.slane %v1109, 1
        %v1411 = vsel %vm1388, %v1408, %v1410
        %v1412 = vrot.slane %v1110, 1
        %v1413 = vsel %vm1388, %v1410, %v1412
        %v1414 = vrot.slane %v1111, 1
        %v1415 = vsel %vm1388, %v1412, %v1414
        %v1416 = vrot.slane %v1112, 1
        %v1417 = vsel %vm1388, %v1414, %v1416
        %v1418 = vrot.slane %v1113, 1
        %v1419 = vsel %vm1388, %v1416, %v1418
        %v1420 = vrot.slane %v1114, 1
        %v1421 = vsel %vm1388, %v1418, %v1420
        %v1422 = vrot.slane %v1115, 1
        %v1423 = vsel %vm1388, %v1420, %v1422
        %v1424 = vrot.slane %v1116, 1
        %v1425 = vsel %vm1388, %v1422, %v1424
        %v1426 = vrot.slane %v1117, 1
        %v1427 = vsel %vm1388, %v1424, %v1426
        %v1428 = vrot.slane %v1118, 1
        %v1429 = vsel %vm1388, %v1426, %v1428
        %v1430 = vrot.slane %v1119, 1
        %v1431 = vsel %vm1388, %v1428, %v1430
        %v1432 = vrot.slane %v1120, 1
        %v1433 = vsel %vm1388, %v1430, %v1432
        %v1434 = vrot.slane %v1121, 1
        %v1435 = vsel %vm1388, %v1432, %v1434
        %v1436 = vrot.slane %v1122, 1
        %v1437 = vsel %vm1388, %v1434, %v1436
        %v1438 = vrot.slane %v1123, 1
        %v1439 = vsel %vm1388, %v1436, %v1438
        %v1440 = vrot.slane %v1124, 1
        %v1441 = vsel %vm1388, %v1438, %v1440
        %v1442 = vrot.slane %v1125, 1
        %v1443 = vsel %vm1388, %v1440, %v1442
        %v1444 = vrot.slane %v1126, 1
        %v1445 = vsel %vm1388, %v1442, %v1444
        %v1446 = vrot.slane %v1127, 1
        %v1447 = vsel %vm1388, %v1444, %v1446
        %v1448 = vrot.slane %v1128, 1
        %v1449 = vsel %vm1388, %v1446, %v1448
        %v1450 = vrot.slane %v1129, 1
        %v1451 = vsel %vm1388, %v1448, %v1450
        %v1452 = vrot.slane %v1130, 1
        %v1453 = vsel %vm1388, %v1450, %v1452
        %v1454 = vrot.slane %v1131, 1
        %v1455 = vsel %vm1388, %v1452, %v1454
        %v1456 = vrot.slane %v1132, 1
        %v1457 = vsel %vm1388, %v1454, %v1456
        %v1458 = vrot.slane %v1133, 1
        %v1459 = vsel %vm1388, %v1456, %v1458
        %v1497 = vsel %vm1388, %v1458, %v1389
        %v1498 = vsel %vm1004, 1, 0
        %v1499 = vsel %vm1005, 1, 0
        %v1500 = vsel %vm1006, 1, 0
        %v1501 = vsel %vm1007, 1, 0
        %v1502 = vsel %vm1008, 1, 0
        %v1503 = vsel %vm1009, 1, 0
        %v1504 = vsel %vm1010, 1, 0
        %v1505 = vsel %vm1011, 1, 0
        %v1506 = vsel %vm1012, 1, 0
        %v1507 = vsel %vm1013, 1, 0
        %v1508 = vsel %vm1014, 1, 0
        %v1509 = vsel %vm1015, 1, 0
        %v1510 = vsel %vm1016, 1, 0
        %v1511 = vsel %vm1017, 1, 0
        %v1512 = vsel %vm1018, 1, 0
        %v1513 = vsel %vm1019, 1, 0
        %v1514 = vsel %vm1020, 1, 0
        %v1515 = vsel %vm1021, 1, 0
        %v1516 = vsel %vm1022, 1, 0
        %v1517 = vsel %vm1023, 1, 0
        %v1518 = vsel %vm1024, 1, 0
        %v1519 = vsel %vm1025, 1, 0
        %v1520 = vsel %vm1026, 1, 0
        %v1521 = vsel %vm1027, 1, 0
        %v1522 = vsel %vm1028, 1, 0
        %v1523 = vsel %vm1029, 1, 0
        %v1524 = vsel %vm1030, 1, 0
        %v1525 = vsel %vm1031, 1, 0
        %v1526 = vsel %vm1032, 1, 0
        %v1527 = vsel %vm1033, 1, 0
        %v1528 = vsel %vm1034, 1, 0
        %v1529 = vsel %vm1035, 1, 0
        %v1530 = vsel %vm1036, 1, 0
        %v1531 = vsel %vm1037, 1, 0
        %v1532 = vsel %vm1038, 1, 0
        %v1533 = vsel %vm1039, 1, 0
        %vm1534 = vcmp.eq.s32.totalorder %v1498, 1
        %vm1535 = vcmp.eq.s32.totalorder %v1499, 1
        %vm1536 = vcmp.eq.s32.totalorder %v1500, 1
        %vm1537 = vcmp.eq.s32.totalorder %v1501, 1
        %vm1538 = vcmp.eq.s32.totalorder %v1502, 1
        %vm1539 = vcmp.eq.s32.totalorder %v1503, 1
        %vm1540 = vcmp.eq.s32.totalorder %v1504, 1
        %vm1541 = vcmp.eq.s32.totalorder %v1505, 1
        %vm1542 = vcmp.eq.s32.totalorder %v1506, 1
        %vm1543 = vcmp.eq.s32.totalorder %v1507, 1
        %vm1544 = vcmp.eq.s32.totalorder %v1508, 1
        %vm1545 = vcmp.eq.s32.totalorder %v1509, 1
        %vm1546 = vcmp.eq.s32.totalorder %v1510, 1
        %vm1547 = vcmp.eq.s32.totalorder %v1511, 1
        %vm1548 = vcmp.eq.s32.totalorder %v1512, 1
        %vm1549 = vcmp.eq.s32.totalorder %v1513, 1
        %vm1550 = vcmp.eq.s32.totalorder %v1514, 1
        %vm1551 = vcmp.eq.s32.totalorder %v1515, 1
        %vm1552 = vcmp.eq.s32.totalorder %v1516, 1
        %vm1553 = vcmp.eq.s32.totalorder %v1517, 1
        %vm1554 = vcmp.eq.s32.totalorder %v1518, 1
        %vm1555 = vcmp.eq.s32.totalorder %v1519, 1
        %vm1556 = vcmp.eq.s32.totalorder %v1520, 1
        %vm1557 = vcmp.eq.s32.totalorder %v1521, 1
        %vm1558 = vcmp.eq.s32.totalorder %v1522, 1
        %vm1559 = vcmp.eq.s32.totalorder %v1523, 1
        %vm1560 = vcmp.eq.s32.totalorder %v1524, 1
        %vm1561 = vcmp.eq.s32.totalorder %v1525, 1
        %vm1562 = vcmp.eq.s32.totalorder %v1526, 1
        %vm1563 = vcmp.eq.s32.totalorder %v1527, 1
        %vm1564 = vcmp.eq.s32.totalorder %v1528, 1
        %vm1565 = vcmp.eq.s32.totalorder %v1529, 1
        %vm1566 = vcmp.eq.s32.totalorder %v1530, 1
        %vm1567 = vcmp.eq.s32.totalorder %v1531, 1
        %vm1568 = vcmp.eq.s32.totalorder %v1532, 1
        %vm1569 = vcmp.eq.s32.totalorder %v1533, 1
        %v1570 = vsel %vm1534, %v1391, 0.0
        %v1571 = vsel %vm1535, %v1393, 0.0
        %v1572 = vsel %vm1536, %v1395, 0.0
        %v1573 = vsel %vm1537, %v1397, 0.0
        %v1574 = vsel %vm1538, %v1399, 0.0
        %v1575 = vsel %vm1539, %v1401, 0.0
        %v1576 = vsel %vm1540, %v1403, 0.0
        %v1577 = vsel %vm1541, %v1405, 0.0
        %v1578 = vsel %vm1542, %v1407, 0.0
        %v1579 = vsel %vm1543, %v1409, 0.0
        %v1580 = vsel %vm1544, %v1411, 0.0
        %v1581 = vsel %vm1545, %v1413, 0.0
        %v1582 = vsel %vm1546, %v1415, 0.0
        %v1583 = vsel %vm1547, %v1417, 0.0
        %v1584 = vsel %vm1548, %v1419, 0.0
        %v1585 = vsel %vm1549, %v1421, 0.0
        %v1586 = vsel %vm1550, %v1423, 0.0
        %v1587 = vsel %vm1551, %v1425, 0.0
        %v1588 = vsel %vm1552, %v1427, 0.0
        %v1589 = vsel %vm1553, %v1429, 0.0
        %v1590 = vsel %vm1554, %v1431, 0.0
        %v1591 = vsel %vm1555, %v1433, 0.0
        %v1592 = vsel %vm1556, %v1435, 0.0
        %v1593 = vsel %vm1557, %v1437, 0.0
        %v1594 = vsel %vm1558, %v1439, 0.0
        %v1595 = vsel %vm1559, %v1441, 0.0
        %v1596 = vsel %vm1560, %v1443, 0.0
        %v1597 = vsel %vm1561, %v1445, 0.0
        %v1598 = vsel %vm1562, %v1447, 0.0
        %v1599 = vsel %vm1563, %v1449, 0.0
        %v1600 = vsel %vm1564, %v1451, 0.0
        %v1601 = vsel %vm1565, %v1453, 0.0
        %v1602 = vsel %vm1566, %v1455, 0.0
        %v1603 = vsel %vm1567, %v1457, 0.0
        %v1604 = vsel %vm1568, %v1459, 0.0
        %v1605 = vsel %vm1569, %v1497, 0.0
        %v1606 = vpack.c.bf16 %v1353, %v1352
        %v1607 = vpack.c.bf16 %v1355, %v1354
        %v1608 = vpack.c.bf16 %v1357, %v1356
        %v1609 = vpack.c.bf16 %v1359, %v1358
        %v1610 = vpack.c.bf16 %v1361, %v1360
        %v1611 = vpack.c.bf16 %v1363, %v1362
        %v1612 = vpack.c.bf16 %v1365, %v1364
        %v1613 = vpack.c.bf16 %v1367, %v1366
        %v1614 = vpack.c.bf16 %v1369, %v1368
        %v1615 = vpack.c.bf16 %v1371, %v1370
        %v1616 = vpack.c.bf16 %v1373, %v1372
        %v1617 = vpack.c.bf16 %v1375, %v1374
        %v1618 = vpack.c.bf16 %v1377, %v1376
        %v1619 = vpack.c.bf16 %v1379, %v1378
        %v1620 = vpack.c.bf16 %v1381, %v1380
        %v1621 = vpack.c.bf16 %v1383, %v1382
        %v1622 = vpack.c.bf16 %v1385, %v1384
        %v1623 = vpack.c.bf16 %v1387, %v1386
        %v1624 = vpack.c.bf16 %v1099, %v1098
        %v1625 = vpack.c.bf16 %v1101, %v1100
        %v1626 = vpack.c.bf16 %v1103, %v1102
        %v1627 = vpack.c.bf16 %v1105, %v1104
        %v1628 = vpack.c.bf16 %v1107, %v1106
        %v1629 = vpack.c.bf16 %v1109, %v1108
        %v1630 = vpack.c.bf16 %v1111, %v1110
        %v1631 = vpack.c.bf16 %v1113, %v1112
        %v1632 = vpack.c.bf16 %v1115, %v1114
        %v1633 = vpack.c.bf16 %v1117, %v1116
        %v1634 = vpack.c.bf16 %v1119, %v1118
        %v1635 = vpack.c.bf16 %v1121, %v1120
        %v1636 = vpack.c.bf16 %v1123, %v1122
        %v1637 = vpack.c.bf16 %v1125, %v1124
        %v1638 = vpack.c.bf16 %v1127, %v1126
        %v1639 = vpack.c.bf16 %v1129, %v1128
        %v1640 = vpack.c.bf16 %v1131, %v1130
        %v1641 = vpack.c.bf16 %v1133, %v1132
        %v1642 = vpack.c.bf16 %v1571, %v1570
        %v1643 = vpack.c.bf16 %v1573, %v1572
        %v1644 = vpack.c.bf16 %v1575, %v1574
        %v1645 = vpack.c.bf16 %v1577, %v1576
        %v1646 = vpack.c.bf16 %v1579, %v1578
        %v1647 = vpack.c.bf16 %v1581, %v1580
        %v1648 = vpack.c.bf16 %v1583, %v1582
        %v1649 = vpack.c.bf16 %v1585, %v1584
        %v1650 = vpack.c.bf16 %v1587, %v1586
        %v1651 = vpack.c.bf16 %v1589, %v1588
        %v1652 = vpack.c.bf16 %v1591, %v1590
        %v1653 = vpack.c.bf16 %v1593, %v1592
        %v1654 = vpack.c.bf16 %v1595, %v1594
        %v1655 = vpack.c.bf16 %v1597, %v1596
        %v1656 = vpack.c.bf16 %v1599, %v1598
        %v1657 = vpack.c.bf16 %v1601, %v1600
        %v1658 = vpack.c.bf16 %v1603, %v1602
        %v1659 = vpack.c.bf16 %v1605, %v1604
        %v1660 = vld [vmem:[%s2] sm:$0xf]
        %v1661 = vld [vmem:[%s2 + $0x4] sm:$0xf]
        %v1662 = vld [vmem:[%s2 + $0x8] sm:$0xf]
        %v1663 = vld [vmem:[%s2 + $0xc] sm:$0xf]
        %v1664 = vld [vmem:[%s2 + $0x10] sm:$0xf]
        %v1665 = vld [vmem:[%s2 + $0x14] sm:$0xf]
        %v1666 = vld [vmem:[%s2 + $0x18] sm:$0xf]
        %v1667 = vld [vmem:[%s2 + $0x1c] sm:$0xf]
        %v1668 = vld [vmem:[%s2 + $0x20] sm:$0xf]
        %v1669 = vld [vmem:[%s2 + $0x24] sm:$0xf]
        %v1670 = vld [vmem:[%s2 + $0x28] sm:$0xf]
        %v1671 = vld [vmem:[%s2 + $0x2c] sm:$0xf]
        %v1672 = vld [vmem:[%s2 + $0x30] sm:$0xf]
        %v1673 = vld [vmem:[%s2 + $0x34] sm:$0xf]
        %v1674 = vld [vmem:[%s2 + $0x38] sm:$0xf]
        %v1675 = vld [vmem:[%s2 + $0x3c] sm:$0xf]
        %v1676 = vld [vmem:[%s2 + $0x40] sm:$0xf]
        %v1677 = vld [vmem:[%s2 + $0x44] sm:$0xf]
        %v1678 = vld [vmem:[%s2 + $0x48] sm:$0xf]
        %v1679 = vld [vmem:[%s2 + $0x4c] sm:$0xf]
        %v1680 = vld [vmem:[%s2 + $0x50] sm:$0xf]
        %v1681 = vld [vmem:[%s2 + $0x54] sm:$0xf]
        %v1682 = vld [vmem:[%s2 + $0x58] sm:$0xf]
        %v1683 = vld [vmem:[%s2 + $0x5c] sm:$0xf]
        %v1684 = vld [vmem:[%s2 + $0x60] sm:$0xf]
        %v1685 = vld [vmem:[%s2 + $0x64] sm:$0xf]
        %v1686 = vld [vmem:[%s2 + $0x68] sm:$0xf]
        %v1687 = vld [vmem:[%s2 + $0x6c] sm:$0xf]
        %v1688 = vld [vmem:[%s2 + $0x70] sm:$0xf]
        %v1689 = vld [vmem:[%s2 + $0x74] sm:$0xf]
        %v1690 = vld [vmem:[%s2 + $0x78] sm:$0xf]
        %v1691 = vld [vmem:[%s2 + $0x7c] sm:$0xf]
        %v1692 = vld [vmem:[%s2 + $0x80] sm:$0xf]
        %v1693 = vld [vmem:[%s2 + $0x84] sm:$0xf]
        %v1694 = vld [vmem:[%s2 + $0x88] sm:$0xf]
        %v1695 = vld [vmem:[%s2 + $0x8c] sm:$0xf]
        %v1696 = vld [vmem:[%s2 + $0x90] sm:$0xf]
        %v1697 = vld [vmem:[%s2 + $0x94] sm:$0xf]
        %v1698 = vld [vmem:[%s2 + $0x98] sm:$0xf]
        %v1699 = vld [vmem:[%s2 + $0x9c] sm:$0xf]
        %v1700 = vld [vmem:[%s2 + $0xa0] sm:$0xf]
        %v1701 = vld [vmem:[%s2 + $0xa4] sm:$0xf]
        %v1702 = vld [vmem:[%s2 + $0xa8] sm:$0xf]
        %v1703 = vld [vmem:[%s2 + $0xac] sm:$0xf]
        %v1704 = vld [vmem:[%s2 + $0xb0] sm:$0xf]
        %v1705 = vld [vmem:[%s2 + $0xb4] sm:$0xf]
        %v1706 = vld [vmem:[%s2 + $0xb8] sm:$0xf]
        %v1707 = vld [vmem:[%s2 + $0xbc] sm:$0xf]
        %v1708 = vld [vmem:[%s2 + $0xc0] sm:$0xf]
        %v1709 = vld [vmem:[%s2 + $0xc4] sm:$0xf]
        %v1710 = vld [vmem:[%s2 + $0xc8] sm:$0xf]
        %v1711 = vld [vmem:[%s2 + $0xcc] sm:$0xf]
        %v1712 = vld [vmem:[%s2 + $0xd0] sm:$0xf]
        %v1713 = vld [vmem:[%s2 + $0xd4] sm:$0xf]
        %v1714 = vld [vmem:[%s2 + $0xd8] sm:$0xf]
        %v1715 = vld [vmem:[%s2 + $0xdc] sm:$0xf]
        %v1716 = vld [vmem:[%s2 + $0xe0] sm:$0xf]
        %v1717 = vld [vmem:[%s2 + $0xe4] sm:$0xf]
        %v1718 = vld [vmem:[%s2 + $0xe8] sm:$0xf]
        %v1719 = vld [vmem:[%s2 + $0xec] sm:$0xf]
        %v1720 = vld [vmem:[%s2 + $0xf0] sm:$0xf]
        %v1721 = vld [vmem:[%s2 + $0xf4] sm:$0xf]
        %v1722 = vld [vmem:[%s2 + $0xf8] sm:$0xf]
        %v1723 = vld [vmem:[%s2 + $0xfc] sm:$0xf]
        %v1724 = vld [vmem:[%s2 + $0x100] sm:$0xf]
        %v1725 = vld [vmem:[%s2 + $0x104] sm:$0xf]
        %v1726 = vld [vmem:[%s2 + $0x108] sm:$0xf]
        %v1727 = vld [vmem:[%s2 + $0x10c] sm:$0xf]
        %v1728 = vld [vmem:[%s2 + $0x110] sm:$0xf]
        %v1729 = vld [vmem:[%s2 + $0x114] sm:$0xf]
        %v1730 = vld [vmem:[%s2 + $0x118] sm:$0xf]
        %v1731 = vld [vmem:[%s2 + $0x11c] sm:$0xf]
        %v1732 = vld [vmem:[%s2 + $0x120] sm:$0xf]
        %v1733 = vld [vmem:[%s2 + $0x124] sm:$0xf]
        %v1734 = vld [vmem:[%s2 + $0x128] sm:$0xf]
        %v1735 = vld [vmem:[%s2 + $0x12c] sm:$0xf]
        %v1736 = vld [vmem:[%s2 + $0x130] sm:$0xf]
        %v1737 = vld [vmem:[%s2 + $0x134] sm:$0xf]
        %v1738 = vld [vmem:[%s2 + $0x138] sm:$0xf]
        %v1739 = vld [vmem:[%s2 + $0x13c] sm:$0xf]
        %v1740 = vld [vmem:[%s2 + $0x140] sm:$0xf]
        %v1741 = vld [vmem:[%s2 + $0x144] sm:$0xf]
        %v1742 = vld [vmem:[%s2 + $0x148] sm:$0xf]
        %v1743 = vld [vmem:[%s2 + $0x14c] sm:$0xf]
        %v1744 = vld [vmem:[%s2 + $0x150] sm:$0xf]
        %v1745 = vld [vmem:[%s2 + $0x154] sm:$0xf]
        %v1746 = vld [vmem:[%s2 + $0x158] sm:$0xf]
        %v1747 = vld [vmem:[%s2 + $0x15c] sm:$0xf]
        %v1748 = vld [vmem:[%s2 + $0x160] sm:$0xf]
        %v1749 = vld [vmem:[%s2 + $0x164] sm:$0xf]
        %v1750 = vld [vmem:[%s2 + $0x168] sm:$0xf]
        %v1751 = vld [vmem:[%s2 + $0x16c] sm:$0xf]
        %v1752 = vld [vmem:[%s2 + $0x170] sm:$0xf]
        %v1753 = vld [vmem:[%s2 + $0x174] sm:$0xf]
        %v1754 = vld [vmem:[%s2 + $0x178] sm:$0xf]
        %v1755 = vld [vmem:[%s2 + $0x17c] sm:$0xf]
        %v1756 = vld [vmem:[%s2 + $0x180] sm:$0xf]
        %v1757 = vld [vmem:[%s2 + $0x184] sm:$0xf]
        %v1758 = vld [vmem:[%s2 + $0x188] sm:$0xf]
        %v1759 = vld [vmem:[%s2 + $0x18c] sm:$0xf]
        %v1760 = vld [vmem:[%s2 + $0x190] sm:$0xf]
        %v1761 = vld [vmem:[%s2 + $0x194] sm:$0xf]
        %v1762 = vld [vmem:[%s2 + $0x198] sm:$0xf]
        %v1763 = vld [vmem:[%s2 + $0x19c] sm:$0xf]
        %v1764 = vld [vmem:[%s2 + $0x1a0] sm:$0xf]
        %v1765 = vld [vmem:[%s2 + $0x1a4] sm:$0xf]
        %v1766 = vld [vmem:[%s2 + $0x1a8] sm:$0xf]
        %v1767 = vld [vmem:[%s2 + $0x1ac] sm:$0xf]
        %v1768 = vld [vmem:[%s2 + $0x1b0] sm:$0xf]
        %v1769 = vld [vmem:[%s2 + $0x1b4] sm:$0xf]
        %v1770 = vld [vmem:[%s2 + $0x1b8] sm:$0xf]
        %v1771 = vld [vmem:[%s2 + $0x1bc] sm:$0xf]
        %v1772 = vld [vmem:[%s2 + $0x1c0] sm:$0xf]
        %v1773 = vld [vmem:[%s2 + $0x1c4] sm:$0xf]
        %v1774 = vld [vmem:[%s2 + $0x1c8] sm:$0xf]
        %v1775 = vld [vmem:[%s2 + $0x1cc] sm:$0xf]
        %v1776 = vld [vmem:[%s2 + $0x1d0] sm:$0xf]
        %v1777 = vld [vmem:[%s2 + $0x1d4] sm:$0xf]
        %v1778 = vld [vmem:[%s2 + $0x1d8] sm:$0xf]
        %v1779 = vld [vmem:[%s2 + $0x1dc] sm:$0xf]
        %v1780 = vld [vmem:[%s2 + $0x1e0] sm:$0xf]
        %v1781 = vld [vmem:[%s2 + $0x1e4] sm:$0xf]
        %v1782 = vld [vmem:[%s2 + $0x1e8] sm:$0xf]
        %v1783 = vld [vmem:[%s2 + $0x1ec] sm:$0xf]
        %v1784 = vld [vmem:[%s2 + $0x1f0] sm:$0xf]
        %v1785 = vld [vmem:[%s2 + $0x1f4] sm:$0xf]
        %v1786 = vld [vmem:[%s2 + $0x1f8] sm:$0xf]
        %v1787 = vld [vmem:[%s2 + $0x1fc] sm:$0xf]
        %v1788 = vld [vmem:[%s2 + $0x200] sm:$0xf]
        %v1789 = vld [vmem:[%s2 + $0x204] sm:$0xf]
        %v1790 = vld [vmem:[%s2 + $0x208] sm:$0xf]
        %v1791 = vld [vmem:[%s2 + $0x20c] sm:$0xf]
        %v1792 = vld [vmem:[%s2 + $0x210] sm:$0xf]
        %v1793 = vld [vmem:[%s2 + $0x214] sm:$0xf]
        %v1794 = vld [vmem:[%s2 + $0x218] sm:$0xf]
        %v1795 = vld [vmem:[%s2 + $0x21c] sm:$0xf]
        %v1796 = vld [vmem:[%s2 + $0x220] sm:$0xf]
        %v1797 = vld [vmem:[%s2 + $0x224] sm:$0xf]
        %v1798 = vld [vmem:[%s2 + $0x228] sm:$0xf]
        %v1799 = vld [vmem:[%s2 + $0x22c] sm:$0xf]
        %v1800 = vld [vmem:[%s2 + $0x230] sm:$0xf]
        %v1801 = vld [vmem:[%s2 + $0x234] sm:$0xf]
        %v1802 = vld [vmem:[%s2 + $0x238] sm:$0xf]
        %v1803 = vld [vmem:[%s2 + $0x23c] sm:$0xf]
        %v1804 = vld [vmem:[%s1] sm:$0xf]
        %v1805 = vld [vmem:[%s1 + $0x4] sm:$0x1]
        %v1808 = vunpack.c.l.b16 %v1804
        %v1809 = vunpack.c.l.b16 %v1805
        %v1810 = vpack.c.b16 %v1809, %v1808
        %vm1811 = vcmask 72704
        %v1813 = vsel %vm1811, %v1082, 0
        %v1816 = vsel %vm1811, %v1083, 0
        %v1819 = vsel %vm1811, %v1084, 0
        %v1822 = vsel %vm1811, %v1085, 0
        %v1825 = vsel %vm1811, %v1086, 0
        %v1828 = vsel %vm1811, %v1087, 0
        %v1831 = vsel %vm1811, %v1088, 0
        %v1834 = vsel %vm1811, %v1089, 0
        %v1837 = vsel %vm1811, %v1090, 0
        %v1840 = vsel %vm1811, %v1091, 0
        %v1843 = vsel %vm1811, %v1092, 0
        %v1846 = vsel %vm1811, %v1093, 0
        %v1849 = vsel %vm1811, %v1094, 0
        %v1852 = vsel %vm1811, %v1095, 0
        %v1855 = vsel %vm1811, %v1096, 0
        %v1858 = vsel %vm1811, %v1097, 0
        %vm1860 = vcmask 1043456
        %vm1861 = vcmask 1044480
        %v1862 = vsel %vm1860, 4294967295, 65535
        %v1863 = vsel %vm1861, %v1862, 0
        %v1865 = vand.u32 %v1810, %v1863
        %1867 = vmatprep.subr.bf16.mxu0 0
        %1868 = vmatpush1.bf16.msra.mxu0 %v1865
        %1869 = vmatprep.subr.bf16.mxu0 0
        %1870 = vmatpush1.bf16.msra.mxu0 0
        %1871 = vmatprep.subr.bf16.mxu0 0
        %1872 = vmatpush1.bf16.msra.mxu0 0
        %1873 = vmatprep.subr.bf16.mxu0 0
        %1874 = vmatpush1.bf16.msra.mxu0 0
        %1875 = vmatprep.subr.bf16.mxu0 0
        %1876 = vmatpush1.bf16.msra.mxu0 0
        %1877 = vmatprep.subr.bf16.mxu0 0
        %1878 = vmatpush1.bf16.msra.mxu0 0
        %1879 = vmatprep.subr.bf16.mxu0 0
        %1880 = vmatpush1.bf16.msra.mxu0 0
        %1881 = vmatprep.subr.bf16.mxu0 0
        %1882 = vmatpush1.bf16.msra.mxu0 0
        %1883 = vmatprep.subr.bf16.mxu0 0
        %1884 = vmatpush1.bf16.msra.mxu0 0
        %1885 = vmatprep.subr.bf16.mxu0 0
        %1886 = vmatpush1.bf16.msra.mxu0 0
        %1887 = vmatprep.subr.bf16.mxu0 0
        %1888 = vmatpush1.bf16.msra.mxu0 0
        %1889 = vmatprep.subr.bf16.mxu0 0
        %1890 = vmatpush1.bf16.msra.mxu0 0
        %1891 = vmatprep.subr.bf16.mxu0 0
        %1892 = vmatpush1.bf16.msra.mxu0 0
        %1893 = vmatprep.subr.bf16.mxu0 0
        %1894 = vmatpush1.bf16.msra.mxu0 0
        %1895 = vmatprep.subr.bf16.mxu0 0
        %1896 = vmatpush1.bf16.msra.mxu0 0
        %1897 = vmatprep.subr.bf16.mxu0 0
        %1898 = vmatpush1.bf16.msra.mxu0 0
        %1899 = vmatprep.mubr.bf16.mxu0 0
        %1900 = vmatmul.mubr.bf16.gmra.mrb[0].mxu0 %v1813
        %v1901 = vpop.f32.mrb[0].mxu0
        %v1902 = vadd.f32 0.0, %v1901
        %v1903 = vpop.f32.mrb[0].mxu0
        %v1904 = vpop.f32.mrb[0].mxu0
        %v1905 = vadd.f32 0.0, %v1904
        %v1906 = vpop.f32.mrb[0].mxu0
        %1907 = vmatprep.mubr.bf16.mxu0 0
        %1908 = vmatmul.mubr.bf16.gmra.mrb[0].mxu0 %v1816
        %v1909 = vpop.f32.mrb[0].mxu0
        %v1910 = vadd.f32 0.0, %v1909
        %v1911 = vpop.f32.mrb[0].mxu0
        %v1912 = vpop.f32.mrb[0].mxu0
        %v1913 = vadd.f32 0.0, %v1912
        %v1914 = vpop.f32.mrb[0].mxu0
        %1915 = vmatprep.mubr.bf16.mxu0 0
        %1916 = vmatmul.mubr.bf16.gmra.mrb[0].mxu0 %v1819
        %v1917 = vpop.f32.mrb[0].mxu0
        %v1918 = vadd.f32 0.0, %v1917
        %v1919 = vpop.f32.mrb[0].mxu0
        %v1920 = vpop.f32.mrb[0].mxu0
        %v1921 = vadd.f32 0.0, %v1920
        %v1922 = vpop.f32.mrb[0].mxu0
        %1923 = vmatprep.mubr.bf16.mxu0 0
        %1924 = vmatmul.mubr.bf16.gmra.mrb[0].mxu0 %v1822
        %v1925 = vpop.f32.mrb[0].mxu0
        %v1926 = vadd.f32 0.0, %v1925
        %v1927 = vpop.f32.mrb[0].mxu0
        %v1928 = vpop.f32.mrb[0].mxu0
        %v1929 = vadd.f32 0.0, %v1928
        %v1930 = vpop.f32.mrb[0].mxu0
        %1931 = vmatprep.mubr.bf16.mxu0 0
        %1932 = vmatmul.mubr.bf16.gmra.mrb[0].mxu0 %v1825
        %v1933 = vpop.f32.mrb[0].mxu0
        %v1934 = vadd.f32 0.0, %v1933
        %v1935 = vpop.f32.mrb[0].mxu0
        %v1936 = vpop.f32.mrb[0].mxu0
        %v1937 = vadd.f32 0.0, %v1936
        %v1938 = vpop.f32.mrb[0].mxu0
        %1939 = vmatprep.mubr.bf16.mxu0 0
        %1940 = vmatmul.mubr.bf16.gmra.mrb[0].mxu0 %v1828
        %v1941 = vpop.f32.mrb[0].mxu0
        %v1942 = vadd.f32 0.0, %v1941
        %v1943 = vpop.f32.mrb[0].mxu0
        %v1944 = vpop.f32.mrb[0].mxu0
        %v1945 = vadd.f32 0.0, %v1944
        %v1946 = vpop.f32.mrb[0].mxu0
        %1947 = vmatprep.mubr.bf16.mxu0 0
        %1948 = vmatmul.mubr.bf16.gmra.mrb[0].mxu0 %v1831
        %v1949 = vpop.f32.mrb[0].mxu0
        %v1950 = vadd.f32 0.0, %v1949
        %v1951 = vpop.f32.mrb[0].mxu0
        %v1952 = vpop.f32.mrb[0].mxu0
        %v1953 = vadd.f32 0.0, %v1952
        %v1954 = vpop.f32.mrb[0].mxu0
        %1955 = vmatprep.mubr.bf16.mxu0 0
        %1956 = vmatmul.mubr.bf16.gmra.mrb[0].mxu0 %v1834
        %v1957 = vpop.f32.mrb[0].mxu0
        %v1958 = vadd.f32 0.0, %v1957
        %v1959 = vpop.f32.mrb[0].mxu0
        %v1960 = vpop.f32.mrb[0].mxu0
        %v1961 = vadd.f32 0.0, %v1960
        %v1962 = vpop.f32.mrb[0].mxu0
        %1963 = vmatprep.mubr.bf16.mxu0 0
        %1964 = vmatmul.mubr.bf16.gmra.mrb[0].mxu0 %v1837
        %v1965 = vpop.f32.mrb[0].mxu0
        %v1966 = vadd.f32 0.0, %v1965
        %v1967 = vpop.f32.mrb[0].mxu0
        %v1968 = vpop.f32.mrb[0].mxu0
        %v1969 = vadd.f32 0.0, %v1968
        %v1970 = vpop.f32.mrb[0].mxu0
        %1971 = vmatprep.mubr.bf16.mxu0 0
        %1972 = vmatmul.mubr.bf16.gmra.mrb[0].mxu0 %v1840
        %v1973 = vpop.f32.mrb[0].mxu0
        %v1974 = vadd.f32 0.0, %v1973
        %v1975 = vpop.f32.mrb[0].mxu0
        %v1976 = vpop.f32.mrb[0].mxu0
        %v1977 = vadd.f32 0.0, %v1976
        %v1978 = vpop.f32.mrb[0].mxu0
        %1979 = vmatprep.mubr.bf16.mxu0 0
        %1980 = vmatmul.mubr.bf16.gmra.mrb[0].mxu0 %v1843
        %v1981 = vpop.f32.mrb[0].mxu0
        %v1982 = vadd.f32 0.0, %v1981
        %v1983 = vpop.f32.mrb[0].mxu0
        %v1984 = vpop.f32.mrb[0].mxu0
        %v1985 = vadd.f32 0.0, %v1984
        %v1986 = vpop.f32.mrb[0].mxu0
        %1987 = vmatprep.mubr.bf16.mxu0 0
        %1988 = vmatmul.mubr.bf16.gmra.mrb[0].mxu0 %v1846
        %v1989 = vpop.f32.mrb[0].mxu0
        %v1990 = vadd.f32 0.0, %v1989
        %v1991 = vpop.f32.mrb[0].mxu0
        %v1992 = vpop.f32.mrb[0].mxu0
        %v1993 = vadd.f32 0.0, %v1992
        %v1994 = vpop.f32.mrb[0].mxu0
        %1995 = vmatprep.mubr.bf16.mxu0 0
        %1996 = vmatmul.mubr.bf16.gmra.mrb[0].mxu0 %v1849
        %v1997 = vpop.f32.mrb[0].mxu0
        %v1998 = vadd.f32 0.0, %v1997
        %v1999 = vpop.f32.mrb[0].mxu0
        %v2000 = vpop.f32.mrb[0].mxu0
        %v2001 = vadd.f32 0.0, %v2000
        %v2002 = vpop.f32.mrb[0].mxu0
        %2003 = vmatprep.mubr.bf16.mxu0 0
        %2004 = vmatmul.mubr.bf16.gmra.mrb[0].mxu0 %v1852
        %v2005 = vpop.f32.mrb[0].mxu0
        %v2006 = vadd.f32 0.0, %v2005
        %v2007 = vpop.f32.mrb[0].mxu0
        %v2008 = vpop.f32.mrb[0].mxu0
        %v2009 = vadd.f32 0.0, %v2008
        %v2010 = vpop.f32.mrb[0].mxu0
        %2011 = vmatprep.mubr.bf16.mxu0 0
        %2012 = vmatmul.mubr.bf16.gmra.mrb[0].mxu0 %v1855
        %v2013 = vpop.f32.mrb[0].mxu0
        %v2014 = vadd.f32 0.0, %v2013
        %v2015 = vpop.f32.mrb[0].mxu0
        %v2016 = vpop.f32.mrb[0].mxu0
        %v2017 = vadd.f32 0.0, %v2016
        %v2018 = vpop.f32.mrb[0].mxu0
        %2019 = vmatprep.mubr.bf16.mxu0 0
        %2020 = vmatmul.mubr.bf16.gmra.mrb[0].mxu0 %v1858
        %v2021 = vpop.f32.mrb[0].mxu0
        %v2022 = vadd.f32 0.0, %v2021
        %v2023 = vpop.f32.mrb[0].mxu0
        %v2024 = vpop.f32.mrb[0].mxu0
        %v2025 = vadd.f32 0.0, %v2024
        %v2026 = vpop.f32.mrb[0].mxu0
        %2027 = vdwg.mxu0
        %v2172 = vunpack.c.l.b16 %v1660
        %v2173 = vunpack.c.l.b16 %v1661
        %v2174 = vunpack.c.l.b16 %v1662
        %v2175 = vunpack.c.l.b16 %v1663
        %v2176 = vunpack.c.l.b16 %v1664
        %v2177 = vunpack.c.l.b16 %v1665
        %v2178 = vunpack.c.l.b16 %v1666
        %v2179 = vunpack.c.l.b16 %v1667
        %v2180 = vunpack.c.l.b16 %v1668
        %v2181 = vunpack.c.l.b16 %v1669
        %v2182 = vunpack.c.l.b16 %v1670
        %v2183 = vunpack.c.l.b16 %v1671
        %v2184 = vunpack.c.l.b16 %v1672
        %v2185 = vunpack.c.l.b16 %v1673
        %v2186 = vunpack.c.l.b16 %v1674
        %v2187 = vunpack.c.l.b16 %v1675
        %v2188 = vunpack.c.l.b16 %v1676
        %v2189 = vunpack.c.l.b16 %v1677
        %v2190 = vunpack.c.l.b16 %v1678
        %v2191 = vunpack.c.l.b16 %v1679
        %v2192 = vunpack.c.l.b16 %v1680
        %v2193 = vunpack.c.l.b16 %v1681
        %v2194 = vunpack.c.l.b16 %v1682
        %v2195 = vunpack.c.l.b16 %v1683
        %v2196 = vunpack.c.l.b16 %v1684
        %v2197 = vunpack.c.l.b16 %v1685
        %v2198 = vunpack.c.l.b16 %v1686
        %v2199 = vunpack.c.l.b16 %v1687
        %v2200 = vunpack.c.l.b16 %v1688
        %v2201 = vunpack.c.l.b16 %v1689
        %v2202 = vunpack.c.l.b16 %v1690
        %v2203 = vunpack.c.l.b16 %v1691
        %v2204 = vunpack.c.l.b16 %v1692
        %v2205 = vunpack.c.l.b16 %v1693
        %v2206 = vunpack.c.l.b16 %v1694
        %v2207 = vunpack.c.l.b16 %v1695
        %v2208 = vunpack.c.l.b16 %v1696
        %v2209 = vunpack.c.l.b16 %v1697
        %v2210 = vunpack.c.l.b16 %v1698
        %v2211 = vunpack.c.l.b16 %v1699
        %v2212 = vunpack.c.l.b16 %v1700
        %v2213 = vunpack.c.l.b16 %v1701
        %v2214 = vunpack.c.l.b16 %v1702
        %v2215 = vunpack.c.l.b16 %v1703
        %v2216 = vunpack.c.l.b16 %v1704
        %v2217 = vunpack.c.l.b16 %v1705
        %v2218 = vunpack.c.l.b16 %v1706
        %v2219 = vunpack.c.l.b16 %v1707
        %v2220 = vunpack.c.l.b16 %v1708
        %v2221 = vunpack.c.l.b16 %v1709
        %v2222 = vunpack.c.l.b16 %v1710
        %v2223 = vunpack.c.l.b16 %v1711
        %v2224 = vunpack.c.l.b16 %v1712
        %v2225 = vunpack.c.l.b16 %v1713
        %v2226 = vunpack.c.l.b16 %v1714
        %v2227 = vunpack.c.l.b16 %v1715
        %v2228 = vunpack.c.l.b16 %v1716
        %v2229 = vunpack.c.l.b16 %v1717
        %v2230 = vunpack.c.l.b16 %v1718
        %v2231 = vunpack.c.l.b16 %v1719
        %v2232 = vunpack.c.l.b16 %v1720
        %v2233 = vunpack.c.l.b16 %v1721
        %v2234 = vunpack.c.l.b16 %v1722
        %v2235 = vunpack.c.l.b16 %v1723
        %v2236 = vunpack.c.l.b16 %v1724
        %v2237 = vunpack.c.l.b16 %v1725
        %v2238 = vunpack.c.l.b16 %v1726
        %v2239 = vunpack.c.l.b16 %v1727
        %v2240 = vunpack.c.l.b16 %v1728
        %v2241 = vunpack.c.l.b16 %v1729
        %v2242 = vunpack.c.l.b16 %v1730
        %v2243 = vunpack.c.l.b16 %v1731
        %v2244 = vunpack.c.l.b16 %v1732
        %v2245 = vunpack.c.l.b16 %v1733
        %v2246 = vunpack.c.l.b16 %v1734
        %v2247 = vunpack.c.l.b16 %v1735
        %v2248 = vunpack.c.l.b16 %v1736
        %v2249 = vunpack.c.l.b16 %v1737
        %v2250 = vunpack.c.l.b16 %v1738
        %v2251 = vunpack.c.l.b16 %v1739
        %v2252 = vunpack.c.l.b16 %v1740
        %v2253 = vunpack.c.l.b16 %v1741
        %v2254 = vunpack.c.l.b16 %v1742
        %v2255 = vunpack.c.l.b16 %v1743
        %v2256 = vunpack.c.l.b16 %v1744
        %v2257 = vunpack.c.l.b16 %v1745
        %v2258 = vunpack.c.l.b16 %v1746
        %v2259 = vunpack.c.l.b16 %v1747
        %v2260 = vunpack.c.l.b16 %v1748
        %v2261 = vunpack.c.l.b16 %v1749
        %v2262 = vunpack.c.l.b16 %v1750
        %v2263 = vunpack.c.l.b16 %v1751
        %v2264 = vunpack.c.l.b16 %v1752
        %v2265 = vunpack.c.l.b16 %v1753
        %v2266 = vunpack.c.l.b16 %v1754
        %v2267 = vunpack.c.l.b16 %v1755
        %v2268 = vunpack.c.l.b16 %v1756
        %v2269 = vunpack.c.l.b16 %v1757
        %v2270 = vunpack.c.l.b16 %v1758
        %v2271 = vunpack.c.l.b16 %v1759
        %v2272 = vunpack.c.l.b16 %v1760
        %v2273 = vunpack.c.l.b16 %v1761
        %v2274 = vunpack.c.l.b16 %v1762
        %v2275 = vunpack.c.l.b16 %v1763
        %v2276 = vunpack.c.l.b16 %v1764
        %v2277 = vunpack.c.l.b16 %v1765
        %v2278 = vunpack.c.l.b16 %v1766
        %v2279 = vunpack.c.l.b16 %v1767
        %v2280 = vunpack.c.l.b16 %v1768
        %v2281 = vunpack.c.l.b16 %v1769
        %v2282 = vunpack.c.l.b16 %v1770
        %v2283 = vunpack.c.l.b16 %v1771
        %v2284 = vunpack.c.l.b16 %v1772
        %v2285 = vunpack.c.l.b16 %v1773
        %v2286 = vunpack.c.l.b16 %v1774
        %v2287 = vunpack.c.l.b16 %v1775
        %v2288 = vunpack.c.l.b16 %v1776
        %v2289 = vunpack.c.l.b16 %v1777
        %v2290 = vunpack.c.l.b16 %v1778
        %v2291 = vunpack.c.l.b16 %v1779
        %v2292 = vunpack.c.l.b16 %v1780
        %v2293 = vunpack.c.l.b16 %v1781
        %v2294 = vunpack.c.l.b16 %v1782
        %v2295 = vunpack.c.l.b16 %v1783
        %v2296 = vunpack.c.l.b16 %v1784
        %v2297 = vunpack.c.l.b16 %v1785
        %v2298 = vunpack.c.l.b16 %v1786
        %v2299 = vunpack.c.l.b16 %v1787
        %v2300 = vunpack.c.l.b16 %v1788
        %v2301 = vunpack.c.l.b16 %v1789
        %v2302 = vunpack.c.l.b16 %v1790
        %v2303 = vunpack.c.l.b16 %v1791
        %v2304 = vunpack.c.l.b16 %v1792
        %v2305 = vunpack.c.l.b16 %v1793
        %v2306 = vunpack.c.l.b16 %v1794
        %v2307 = vunpack.c.l.b16 %v1795
        %v2308 = vunpack.c.l.b16 %v1796
        %v2309 = vunpack.c.l.b16 %v1797
        %v2310 = vunpack.c.l.b16 %v1798
        %v2311 = vunpack.c.l.b16 %v1799
        %v2312 = vunpack.c.l.b16 %v1800
        %v2313 = vunpack.c.l.b16 %v1801
        %v2314 = vunpack.c.l.b16 %v1802
        %v2315 = vunpack.c.l.b16 %v1803
        %v2316 = vpack.c.b16 %v2173, %v2172
        %v2317 = vpack.c.b16 %v2175, %v2174
        %v2318 = vpack.c.b16 %v2177, %v2176
        %v2319 = vpack.c.b16 %v2179, %v2178
        %v2320 = vpack.c.b16 %v2181, %v2180
        %v2321 = vpack.c.b16 %v2183, %v2182
        %v2322 = vpack.c.b16 %v2185, %v2184
        %v2323 = vpack.c.b16 %v2187, %v2186
        %v2324 = vpack.c.b16 %v2189, %v2188
        %v2325 = vpack.c.b16 %v2191, %v2190
        %v2326 = vpack.c.b16 %v2193, %v2192
        %v2327 = vpack.c.b16 %v2195, %v2194
        %v2328 = vpack.c.b16 %v2197, %v2196
        %v2329 = vpack.c.b16 %v2199, %v2198
        %v2330 = vpack.c.b16 %v2201, %v2200
        %v2331 = vpack.c.b16 %v2203, %v2202
        %v2332 = vpack.c.b16 %v2205, %v2204
        %v2333 = vpack.c.b16 %v2207, %v2206
        %v2334 = vpack.c.b16 %v2209, %v2208
        %v2335 = vpack.c.b16 %v2211, %v2210
        %v2336 = vpack.c.b16 %v2213, %v2212
        %v2337 = vpack.c.b16 %v2215, %v2214
        %v2338 = vpack.c.b16 %v2217, %v2216
        %v2339 = vpack.c.b16 %v2219, %v2218
        %v2340 = vpack.c.b16 %v2221, %v2220
        %v2341 = vpack.c.b16 %v2223, %v2222
        %v2342 = vpack.c.b16 %v2225, %v2224
        %v2343 = vpack.c.b16 %v2227, %v2226
        %v2344 = vpack.c.b16 %v2229, %v2228
        %v2345 = vpack.c.b16 %v2231, %v2230
        %v2346 = vpack.c.b16 %v2233, %v2232
        %v2347 = vpack.c.b16 %v2235, %v2234
        %v2348 = vpack.c.b16 %v2237, %v2236
        %v2349 = vpack.c.b16 %v2239, %v2238
        %v2350 = vpack.c.b16 %v2241, %v2240
        %v2351 = vpack.c.b16 %v2243, %v2242
        %v2352 = vpack.c.b16 %v2245, %v2244
        %v2353 = vpack.c.b16 %v2247, %v2246
        %v2354 = vpack.c.b16 %v2249, %v2248
        %v2355 = vpack.c.b16 %v2251, %v2250
        %v2356 = vpack.c.b16 %v2253, %v2252
        %v2357 = vpack.c.b16 %v2255, %v2254
        %v2358 = vpack.c.b16 %v2257, %v2256
        %v2359 = vpack.c.b16 %v2259, %v2258
        %v2360 = vpack.c.b16 %v2261, %v2260
        %v2361 = vpack.c.b16 %v2263, %v2262
        %v2362 = vpack.c.b16 %v2265, %v2264
        %v2363 = vpack.c.b16 %v2267, %v2266
        %v2364 = vpack.c.b16 %v2269, %v2268
        %v2365 = vpack.c.b16 %v2271, %v2270
        %v2366 = vpack.c.b16 %v2273, %v2272
        %v2367 = vpack.c.b16 %v2275, %v2274
        %v2368 = vpack.c.b16 %v2277, %v2276
        %v2369 = vpack.c.b16 %v2279, %v2278
        %v2370 = vpack.c.b16 %v2281, %v2280
        %v2371 = vpack.c.b16 %v2283, %v2282
        %v2372 = vpack.c.b16 %v2285, %v2284
        %v2373 = vpack.c.b16 %v2287, %v2286
        %v2374 = vpack.c.b16 %v2289, %v2288
        %v2375 = vpack.c.b16 %v2291, %v2290
        %v2376 = vpack.c.b16 %v2293, %v2292
        %v2377 = vpack.c.b16 %v2295, %v2294
        %v2378 = vpack.c.b16 %v2297, %v2296
        %v2379 = vpack.c.b16 %v2299, %v2298
        %v2380 = vpack.c.b16 %v2301, %v2300
        %v2381 = vpack.c.b16 %v2303, %v2302
        %v2382 = vpack.c.b16 %v2305, %v2304
        %v2383 = vpack.c.b16 %v2307, %v2306
        %v2384 = vpack.c.b16 %v2309, %v2308
        %v2385 = vpack.c.b16 %v2311, %v2310
        %v2386 = vpack.c.b16 %v2313, %v2312
        %v2387 = vpack.c.b16 %v2315, %v2314
        %2460 = vmatprep.subr.bf16.mxu0 0
        %2461 = vmatpush1.bf16.msra.mxu0 %v2316
        %2462 = vmatprep.subr.bf16.mxu0 0
        %2463 = vmatpush1.bf16.msra.mxu0 %v2317
        %2464 = vmatprep.subr.bf16.mxu0 0
        %2465 = vmatpush1.bf16.msra.mxu0 %v2318
        %2466 = vmatprep.subr.bf16.mxu0 0
        %2467 = vmatpush1.bf16.msra.mxu0 %v2319
        %2468 = vmatprep.subr.bf16.mxu0 0
        %2469 = vmatpush1.bf16.msra.mxu0 %v2320
        %2470 = vmatprep.subr.bf16.mxu0 0
        %2471 = vmatpush1.bf16.msra.mxu0 %v2321
        %2472 = vmatprep.subr.bf16.mxu0 0
        %2473 = vmatpush1.bf16.msra.mxu0 %v2322
        %2474 = vmatprep.subr.bf16.mxu0 0
        %2475 = vmatpush1.bf16.msra.mxu0 %v2323
        %2476 = vmatprep.subr.bf16.mxu0 0
        %2477 = vmatpush1.bf16.msra.mxu0 %v2324
        %2478 = vmatprep.subr.bf16.mxu0 0
        %2479 = vmatpush1.bf16.msra.mxu0 %v2325
        %2480 = vmatprep.subr.bf16.mxu0 0
        %2481 = vmatpush1.bf16.msra.mxu0 %v2326
        %2482 = vmatprep.subr.bf16.mxu0 0
        %2483 = vmatpush1.bf16.msra.mxu0 %v2327
        %2484 = vmatprep.subr.bf16.mxu0 0
        %2485 = vmatpush1.bf16.msra.mxu0 %v2328
        %2486 = vmatprep.subr.bf16.mxu0 0
        %2487 = vmatpush1.bf16.msra.mxu0 %v2329
        %2488 = vmatprep.subr.bf16.mxu0 0
        %2489 = vmatpush1.bf16.msra.mxu0 %v2330
        %2490 = vmatprep.subr.bf16.mxu0 0
        %2491 = vmatpush1.bf16.msra.mxu0 %v2331
        %2492 = vmatprep.mubr.bf16.mxu0 %v1624
        %2493 = vmatmul.mubr.bf16.gmra.mrb[0].mxu0 %v1606
        %v2494 = vpop.f32.mrb[0].mxu0
        %v2495 = vadd.f32 %v1902, %v2494
        %v2496 = vpop.f32.mrb[0].mxu0
        %v2497 = vpop.f32.mrb[0].mxu0
        %v2498 = vadd.f32 %v1905, %v2497
        %v2499 = vpop.f32.mrb[0].mxu0
        %2500 = vmatprep.mubr.bf16.mxu0 %v1625
        %2501 = vmatmul.mubr.bf16.gmra.mrb[0].mxu0 %v1607
        %v2502 = vpop.f32.mrb[0].mxu0
        %v2503 = vadd.f32 %v1910, %v2502
        %v2504 = vpop.f32.mrb[0].mxu0
        %v2505 = vpop.f32.mrb[0].mxu0
        %v2506 = vadd.f32 %v1913, %v2505
        %v2507 = vpop.f32.mrb[0].mxu0
        %2508 = vmatprep.mubr.bf16.mxu0 %v1626
        %2509 = vmatmul.mubr.bf16.gmra.mrb[0].mxu0 %v1608
        %v2510 = vpop.f32.mrb[0].mxu0
        %v2511 = vadd.f32 %v1918, %v2510
        %v2512 = vpop.f32.mrb[0].mxu0
        %v2513 = vpop.f32.mrb[0].mxu0
        %v2514 = vadd.f32 %v1921, %v2513
        %v2515 = vpop.f32.mrb[0].mxu0
        %2516 = vmatprep.mubr.bf16.mxu0 %v1627
        %2517 = vmatmul.mubr.bf16.gmra.mrb[0].mxu0 %v1609
        %v2518 = vpop.f32.mrb[0].mxu0
        %v2519 = vadd.f32 %v1926, %v2518
        %v2520 = vpop.f32.mrb[0].mxu0
        %v2521 = vpop.f32.mrb[0].mxu0
        %v2522 = vadd.f32 %v1929, %v2521
        %v2523 = vpop.f32.mrb[0].mxu0
        %2524 = vmatprep.mubr.bf16.mxu0 %v1628
        %2525 = vmatmul.mubr.bf16.gmra.mrb[0].mxu0 %v1610
        %v2526 = vpop.f32.mrb[0].mxu0
        %v2527 = vadd.f32 %v1934, %v2526
        %v2528 = vpop.f32.mrb[0].mxu0
        %v2529 = vpop.f32.mrb[0].mxu0
        %v2530 = vadd.f32 %v1937, %v2529
        %v2531 = vpop.f32.mrb[0].mxu0
        %2532 = vmatprep.mubr.bf16.mxu0 %v1629
        %2533 = vmatmul.mubr.bf16.gmra.mrb[0].mxu0 %v1611
        %v2534 = vpop.f32.mrb[0].mxu0
        %v2535 = vadd.f32 %v1942, %v2534
        %v2536 = vpop.f32.mrb[0].mxu0
        %v2537 = vpop.f32.mrb[0].mxu0
        %v2538 = vadd.f32 %v1945, %v2537
        %v2539 = vpop.f32.mrb[0].mxu0
        %2540 = vmatprep.mubr.bf16.mxu0 %v1630
        %2541 = vmatmul.mubr.bf16.gmra.mrb[0].mxu0 %v1612
        %v2542 = vpop.f32.mrb[0].mxu0
        %v2543 = vadd.f32 %v1950, %v2542
        %v2544 = vpop.f32.mrb[0].mxu0
        %v2545 = vpop.f32.mrb[0].mxu0
        %v2546 = vadd.f32 %v1953, %v2545
        %v2547 = vpop.f32.mrb[0].mxu0
        %2548 = vmatprep.mubr.bf16.mxu0 %v1631
        %2549 = vmatmul.mubr.bf16.gmra.mrb[0].mxu0 %v1613
        %v2550 = vpop.f32.mrb[0].mxu0
        %v2551 = vadd.f32 %v1958, %v2550
        %v2552 = vpop.f32.mrb[0].mxu0
        %v2553 = vpop.f32.mrb[0].mxu0
        %v2554 = vadd.f32 %v1961, %v2553
        %v2555 = vpop.f32.mrb[0].mxu0
        %2556 = vmatprep.mubr.bf16.mxu0 %v1632
        %2557 = vmatmul.mubr.bf16.gmra.mrb[0].mxu0 %v1614
        %v2558 = vpop.f32.mrb[0].mxu0
        %v2559 = vadd.f32 %v1966, %v2558
        %v2560 = vpop.f32.mrb[0].mxu0
        %v2561 = vpop.f32.mrb[0].mxu0
        %v2562 = vadd.f32 %v1969, %v2561
        %v2563 = vpop.f32.mrb[0].mxu0
        %2564 = vmatprep.mubr.bf16.mxu0 %v1633
        %2565 = vmatmul.mubr.bf16.gmra.mrb[0].mxu0 %v1615
        %v2566 = vpop.f32.mrb[0].mxu0
        %v2567 = vadd.f32 %v1974, %v2566
        %v2568 = vpop.f32.mrb[0].mxu0
        %v2569 = vpop.f32.mrb[0].mxu0
        %v2570 = vadd.f32 %v1977, %v2569
        %v2571 = vpop.f32.mrb[0].mxu0
        %2572 = vmatprep.mubr.bf16.mxu0 %v1634
        %2573 = vmatmul.mubr.bf16.gmra.mrb[0].mxu0 %v1616
        %v2574 = vpop.f32.mrb[0].mxu0
        %v2575 = vadd.f32 %v1982, %v2574
        %v2576 = vpop.f32.mrb[0].mxu0
        %v2577 = vpop.f32.mrb[0].mxu0
        %v2578 = vadd.f32 %v1985, %v2577
        %v2579 = vpop.f32.mrb[0].mxu0
        %2580 = vmatprep.mubr.bf16.mxu0 %v1635
        %2581 = vmatmul.mubr.bf16.gmra.mrb[0].mxu0 %v1617
        %v2582 = vpop.f32.mrb[0].mxu0
        %v2583 = vadd.f32 %v1990, %v2582
        %v2584 = vpop.f32.mrb[0].mxu0
        %v2585 = vpop.f32.mrb[0].mxu0
        %v2586 = vadd.f32 %v1993, %v2585
        %v2587 = vpop.f32.mrb[0].mxu0
        %2588 = vmatprep.mubr.bf16.mxu0 %v1636
        %2589 = vmatmul.mubr.bf16.gmra.mrb[0].mxu0 %v1618
        %v2590 = vpop.f32.mrb[0].mxu0
        %v2591 = vadd.f32 %v1998, %v2590
        %v2592 = vpop.f32.mrb[0].mxu0
        %v2593 = vpop.f32.mrb[0].mxu0
        %v2594 = vadd.f32 %v2001, %v2593
        %v2595 = vpop.f32.mrb[0].mxu0
        %2596 = vmatprep.mubr.bf16.mxu0 %v1637
        %2597 = vmatmul.mubr.bf16.gmra.mrb[0].mxu0 %v1619
        %v2598 = vpop.f32.mrb[0].mxu0
        %v2599 = vadd.f32 %v2006, %v2598
        %v2600 = vpop.f32.mrb[0].mxu0
        %v2601 = vpop.f32.mrb[0].mxu0
        %v2602 = vadd.f32 %v2009, %v2601
        %v2603 = vpop.f32.mrb[0].mxu0
        %2604 = vmatprep.mubr.bf16.mxu0 %v1638
        %2605 = vmatmul.mubr.bf16.gmra.mrb[0].mxu0 %v1620
        %v2606 = vpop.f32.mrb[0].mxu0
        %v2607 = vadd.f32 %v2014, %v2606
        %v2608 = vpop.f32.mrb[0].mxu0
        %v2609 = vpop.f32.mrb[0].mxu0
        %v2610 = vadd.f32 %v2017, %v2609
        %v2611 = vpop.f32.mrb[0].mxu0
        %2612 = vmatprep.mubr.bf16.mxu0 %v1639
        %2613 = vmatmul.mubr.bf16.gmra.mrb[0].mxu0 %v1621
        %v2614 = vpop.f32.mrb[0].mxu0
        %v2615 = vadd.f32 %v2022, %v2614
        %v2616 = vpop.f32.mrb[0].mxu0
        %v2617 = vpop.f32.mrb[0].mxu0
        %v2618 = vadd.f32 %v2025, %v2617
        %v2619 = vpop.f32.mrb[0].mxu0
        %2620 = vdwg.mxu0
        %2621 = vmatprep.subr.bf16.mxu0 0
        %2622 = vmatpush1.bf16.msra.mxu0 %v2332
        %2623 = vmatprep.subr.bf16.mxu0 0
        %2624 = vmatpush1.bf16.msra.mxu0 %v2333
        %2625 = vmatprep.subr.bf16.mxu0 0
        %2626 = vmatpush1.bf16.msra.mxu0 %v2334
        %2627 = vmatprep.subr.bf16.mxu0 0
        %2628 = vmatpush1.bf16.msra.mxu0 %v2335
        %2629 = vmatprep.subr.bf16.mxu0 0
        %2630 = vmatpush1.bf16.msra.mxu0 %v2336
        %2631 = vmatprep.subr.bf16.mxu0 0
        %2632 = vmatpush1.bf16.msra.mxu0 %v2337
        %2633 = vmatprep.subr.bf16.mxu0 0
        %2634 = vmatpush1.bf16.msra.mxu0 %v2338
        %2635 = vmatprep.subr.bf16.mxu0 0
        %2636 = vmatpush1.bf16.msra.mxu0 %v2339
        %2637 = vmatprep.subr.bf16.mxu0 0
        %2638 = vmatpush1.bf16.msra.mxu0 %v2340
        %2639 = vmatprep.subr.bf16.mxu0 0
        %2640 = vmatpush1.bf16.msra.mxu0 %v2341
        %2641 = vmatprep.subr.bf16.mxu0 0
        %2642 = vmatpush1.bf16.msra.mxu0 %v2342
        %2643 = vmatprep.subr.bf16.mxu0 0
        %2644 = vmatpush1.bf16.msra.mxu0 %v2343
        %2645 = vmatprep.subr.bf16.mxu0 0
        %2646 = vmatpush1.bf16.msra.mxu0 %v2344
        %2647 = vmatprep.subr.bf16.mxu0 0
        %2648 = vmatpush1.bf16.msra.mxu0 %v2345
        %2649 = vmatprep.subr.bf16.mxu0 0
        %2650 = vmatpush1.bf16.msra.mxu0 %v2346
        %2651 = vmatprep.subr.bf16.mxu0 0
        %2652 = vmatpush1.bf16.msra.mxu0 %v2347
        %2653 = vmatprep.mubr.bf16.mxu0 %v1607
        %2654 = vmatmul.mubr.bf16.gmra.mrb[0].mxu0 %v1642
        %v2655 = vpop.f32.mrb[0].mxu0
        %v2656 = vadd.f32 %v2495, %v2655
        %v2657 = vpop.f32.mrb[0].mxu0
        %v2658 = vpop.f32.mrb[0].mxu0
        %v2659 = vadd.f32 %v2498, %v2658
        %v2660 = vpop.f32.mrb[0].mxu0
        %2661 = vmatprep.mubr.bf16.mxu0 %v1608
        %2662 = vmatmul.mubr.bf16.gmra.mrb[0].mxu0 %v1643
        %v2663 = vpop.f32.mrb[0].mxu0
        %v2664 = vadd.f32 %v2503, %v2663
        %v2665 = vpop.f32.mrb[0].mxu0
        %v2666 = vpop.f32.mrb[0].mxu0
        %v2667 = vadd.f32 %v2506, %v2666
        %v2668 = vpop.f32.mrb[0].mxu0
        %2669 = vmatprep.mubr.bf16.mxu0 %v1609
        %2670 = vmatmul.mubr.bf16.gmra.mrb[0].mxu0 %v1644
        %v2671 = vpop.f32.mrb[0].mxu0
        %v2672 = vadd.f32 %v2511, %v2671
        %v2673 = vpop.f32.mrb[0].mxu0
        %v2674 = vpop.f32.mrb[0].mxu0
        %v2675 = vadd.f32 %v2514, %v2674
        %v2676 = vpop.f32.mrb[0].mxu0
        %2677 = vmatprep.mubr.bf16.mxu0 %v1610
        %2678 = vmatmul.mubr.bf16.gmra.mrb[0].mxu0 %v1645
        %v2679 = vpop.f32.mrb[0].mxu0
        %v2680 = vadd.f32 %v2519, %v2679
        %v2681 = vpop.f32.mrb[0].mxu0
        %v2682 = vpop.f32.mrb[0].mxu0
        %v2683 = vadd.f32 %v2522, %v2682
        %v2684 = vpop.f32.mrb[0].mxu0
        %2685 = vmatprep.mubr.bf16.mxu0 %v1611
        %2686 = vmatmul.mubr.bf16.gmra.mrb[0].mxu0 %v1646
        %v2687 = vpop.f32.mrb[0].mxu0
        %v2688 = vadd.f32 %v2527, %v2687
        %v2689 = vpop.f32.mrb[0].mxu0
        %v2690 = vpop.f32.mrb[0].mxu0
        %v2691 = vadd.f32 %v2530, %v2690
        %v2692 = vpop.f32.mrb[0].mxu0
        %2693 = vmatprep.mubr.bf16.mxu0 %v1612
        %2694 = vmatmul.mubr.bf16.gmra.mrb[0].mxu0 %v1647
        %v2695 = vpop.f32.mrb[0].mxu0
        %v2696 = vadd.f32 %v2535, %v2695
        %v2697 = vpop.f32.mrb[0].mxu0
        %v2698 = vpop.f32.mrb[0].mxu0
        %v2699 = vadd.f32 %v2538, %v2698
        %v2700 = vpop.f32.mrb[0].mxu0
        %2701 = vmatprep.mubr.bf16.mxu0 %v1613
        %2702 = vmatmul.mubr.bf16.gmra.mrb[0].mxu0 %v1648
        %v2703 = vpop.f32.mrb[0].mxu0
        %v2704 = vadd.f32 %v2543, %v2703
        %v2705 = vpop.f32.mrb[0].mxu0
        %v2706 = vpop.f32.mrb[0].mxu0
        %v2707 = vadd.f32 %v2546, %v2706
        %v2708 = vpop.f32.mrb[0].mxu0
        %2709 = vmatprep.mubr.bf16.mxu0 %v1614
        %2710 = vmatmul.mubr.bf16.gmra.mrb[0].mxu0 %v1649
        %v2711 = vpop.f32.mrb[0].mxu0
        %v2712 = vadd.f32 %v2551, %v2711
        %v2713 = vpop.f32.mrb[0].mxu0
        %v2714 = vpop.f32.mrb[0].mxu0
        %v2715 = vadd.f32 %v2554, %v2714
        %v2716 = vpop.f32.mrb[0].mxu0
        %2717 = vmatprep.mubr.bf16.mxu0 %v1615
        %2718 = vmatmul.mubr.bf16.gmra.mrb[0].mxu0 %v1650
        %v2719 = vpop.f32.mrb[0].mxu0
        %v2720 = vadd.f32 %v2559, %v2719
        %v2721 = vpop.f32.mrb[0].mxu0
        %v2722 = vpop.f32.mrb[0].mxu0
        %v2723 = vadd.f32 %v2562, %v2722
        %v2724 = vpop.f32.mrb[0].mxu0
        %2725 = vmatprep.mubr.bf16.mxu0 %v1616
        %2726 = vmatmul.mubr.bf16.gmra.mrb[0].mxu0 %v1651
        %v2727 = vpop.f32.mrb[0].mxu0
        %v2728 = vadd.f32 %v2567, %v2727
        %v2729 = vpop.f32.mrb[0].mxu0
        %v2730 = vpop.f32.mrb[0].mxu0
        %v2731 = vadd.f32 %v2570, %v2730
        %v2732 = vpop.f32.mrb[0].mxu0
        %2733 = vmatprep.mubr.bf16.mxu0 %v1617
        %2734 = vmatmul.mubr.bf16.gmra.mrb[0].mxu0 %v1652
        %v2735 = vpop.f32.mrb[0].mxu0
        %v2736 = vadd.f32 %v2575, %v2735
        %v2737 = vpop.f32.mrb[0].mxu0
        %v2738 = vpop.f32.mrb[0].mxu0
        %v2739 = vadd.f32 %v2578, %v2738
        %v2740 = vpop.f32.mrb[0].mxu0
        %2741 = vmatprep.mubr.bf16.mxu0 %v1618
        %2742 = vmatmul.mubr.bf16.gmra.mrb[0].mxu0 %v1653
        %v2743 = vpop.f32.mrb[0].mxu0
        %v2744 = vadd.f32 %v2583, %v2743
        %v2745 = vpop.f32.mrb[0].mxu0
        %v2746 = vpop.f32.mrb[0].mxu0
        %v2747 = vadd.f32 %v2586, %v2746
        %v2748 = vpop.f32.mrb[0].mxu0
        %2749 = vmatprep.mubr.bf16.mxu0 %v1619
        %2750 = vmatmul.mubr.bf16.gmra.mrb[0].mxu0 %v1654
        %v2751 = vpop.f32.mrb[0].mxu0
        %v2752 = vadd.f32 %v2591, %v2751
        %v2753 = vpop.f32.mrb[0].mxu0
        %v2754 = vpop.f32.mrb[0].mxu0
        %v2755 = vadd.f32 %v2594, %v2754
        %v2756 = vpop.f32.mrb[0].mxu0
        %2757 = vmatprep.mubr.bf16.mxu0 %v1620
        %2758 = vmatmul.mubr.bf16.gmra.mrb[0].mxu0 %v1655
        %v2759 = vpop.f32.mrb[0].mxu0
        %v2760 = vadd.f32 %v2599, %v2759
        %v2761 = vpop.f32.mrb[0].mxu0
        %v2762 = vpop.f32.mrb[0].mxu0
        %v2763 = vadd.f32 %v2602, %v2762
        %v2764 = vpop.f32.mrb[0].mxu0
        %2765 = vmatprep.mubr.bf16.mxu0 %v1621
        %2766 = vmatmul.mubr.bf16.gmra.mrb[0].mxu0 %v1656
        %v2767 = vpop.f32.mrb[0].mxu0
        %v2768 = vadd.f32 %v2607, %v2767
        %v2769 = vpop.f32.mrb[0].mxu0
        %v2770 = vpop.f32.mrb[0].mxu0
        %v2771 = vadd.f32 %v2610, %v2770
        %v2772 = vpop.f32.mrb[0].mxu0
        %2773 = vmatprep.mubr.bf16.mxu0 %v1622
        %2774 = vmatmul.mubr.bf16.gmra.mrb[0].mxu0 %v1657
        %v2775 = vpop.f32.mrb[0].mxu0
        %v2776 = vadd.f32 %v2615, %v2775
        %v2777 = vpop.f32.mrb[0].mxu0
        %v2778 = vpop.f32.mrb[0].mxu0
        %v2779 = vadd.f32 %v2618, %v2778
        %v2780 = vpop.f32.mrb[0].mxu0
        %2781 = vdwg.mxu0
        %2782 = vmatprep.subr.bf16.mxu0 0
        %2783 = vmatpush1.bf16.msra.mxu0 %v2348
        %2784 = vmatprep.subr.bf16.mxu0 0
        %2785 = vmatpush1.bf16.msra.mxu0 %v2349
        %2786 = vmatprep.subr.bf16.mxu0 0
        %2787 = vmatpush1.bf16.msra.mxu0 %v2350
        %2788 = vmatprep.subr.bf16.mxu0 0
        %2789 = vmatpush1.bf16.msra.mxu0 %v2351
        %2790 = vmatprep.subr.bf16.mxu0 0
        %2791 = vmatpush1.bf16.msra.mxu0 %v2352
        %2792 = vmatprep.subr.bf16.mxu0 0
        %2793 = vmatpush1.bf16.msra.mxu0 %v2353
        %2794 = vmatprep.subr.bf16.mxu0 0
        %2795 = vmatpush1.bf16.msra.mxu0 %v2354
        %2796 = vmatprep.subr.bf16.mxu0 0
        %2797 = vmatpush1.bf16.msra.mxu0 %v2355
        %2798 = vmatprep.subr.bf16.mxu0 0
        %2799 = vmatpush1.bf16.msra.mxu0 %v2356
        %2800 = vmatprep.subr.bf16.mxu0 0
        %2801 = vmatpush1.bf16.msra.mxu0 %v2357
        %2802 = vmatprep.subr.bf16.mxu0 0
        %2803 = vmatpush1.bf16.msra.mxu0 %v2358
        %2804 = vmatprep.subr.bf16.mxu0 0
        %2805 = vmatpush1.bf16.msra.mxu0 %v2359
        %2806 = vmatprep.subr.bf16.mxu0 0
        %2807 = vmatpush1.bf16.msra.mxu0 %v2360
        %2808 = vmatprep.subr.bf16.mxu0 0
        %2809 = vmatpush1.bf16.msra.mxu0 %v2361
        %2810 = vmatprep.subr.bf16.mxu0 0
        %2811 = vmatpush1.bf16.msra.mxu0 %v2362
        %2812 = vmatprep.subr.bf16.mxu0 0
        %2813 = vmatpush1.bf16.msra.mxu0 %v2363
        %2814 = vmatprep.mubr.bf16.mxu0 %v1643
        %2815 = vmatmul.mubr.bf16.gmra.mrb[0].mxu0 %v1625
        %v2816 = vpop.f32.mrb[0].mxu0
        %v2817 = vadd.f32 %v2656, %v2816
        %v2818 = vpop.f32.mrb[0].mxu0
        %v2819 = vpop.f32.mrb[0].mxu0
        %v2820 = vadd.f32 %v2659, %v2819
        %v2821 = vpop.f32.mrb[0].mxu0
        %2822 = vmatprep.mubr.bf16.mxu0 %v1644
        %2823 = vmatmul.mubr.bf16.gmra.mrb[0].mxu0 %v1626
        %v2824 = vpop.f32.mrb[0].mxu0
        %v2825 = vadd.f32 %v2664, %v2824
        %v2826 = vpop.f32.mrb[0].mxu0
        %v2827 = vpop.f32.mrb[0].mxu0
        %v2828 = vadd.f32 %v2667, %v2827
        %v2829 = vpop.f32.mrb[0].mxu0
        %2830 = vmatprep.mubr.bf16.mxu0 %v1645
        %2831 = vmatmul.mubr.bf16.gmra.mrb[0].mxu0 %v1627
        %v2832 = vpop.f32.mrb[0].mxu0
        %v2833 = vadd.f32 %v2672, %v2832
        %v2834 = vpop.f32.mrb[0].mxu0
        %v2835 = vpop.f32.mrb[0].mxu0
        %v2836 = vadd.f32 %v2675, %v2835
        %v2837 = vpop.f32.mrb[0].mxu0
        %2838 = vmatprep.mubr.bf16.mxu0 %v1646
        %2839 = vmatmul.mubr.bf16.gmra.mrb[0].mxu0 %v1628
        %v2840 = vpop.f32.mrb[0].mxu0
        %v2841 = vadd.f32 %v2680, %v2840
        %v2842 = vpop.f32.mrb[0].mxu0
        %v2843 = vpop.f32.mrb[0].mxu0
        %v2844 = vadd.f32 %v2683, %v2843
        %v2845 = vpop.f32.mrb[0].mxu0
        %2846 = vmatprep.mubr.bf16.mxu0 %v1647
        %2847 = vmatmul.mubr.bf16.gmra.mrb[0].mxu0 %v1629
        %v2848 = vpop.f32.mrb[0].mxu0
        %v2849 = vadd.f32 %v2688, %v2848
        %v2850 = vpop.f32.mrb[0].mxu0
        %v2851 = vpop.f32.mrb[0].mxu0
        %v2852 = vadd.f32 %v2691, %v2851
        %v2853 = vpop.f32.mrb[0].mxu0
        %2854 = vmatprep.mubr.bf16.mxu0 %v1648
        %2855 = vmatmul.mubr.bf16.gmra.mrb[0].mxu0 %v1630
        %v2856 = vpop.f32.mrb[0].mxu0
        %v2857 = vadd.f32 %v2696, %v2856
        %v2858 = vpop.f32.mrb[0].mxu0
        %v2859 = vpop.f32.mrb[0].mxu0
        %v2860 = vadd.f32 %v2699, %v2859
        %v2861 = vpop.f32.mrb[0].mxu0
        %2862 = vmatprep.mubr.bf16.mxu0 %v1649
        %2863 = vmatmul.mubr.bf16.gmra.mrb[0].mxu0 %v1631
        %v2864 = vpop.f32.mrb[0].mxu0
        %v2865 = vadd.f32 %v2704, %v2864
        %v2866 = vpop.f32.mrb[0].mxu0
        %v2867 = vpop.f32.mrb[0].mxu0
        %v2868 = vadd.f32 %v2707, %v2867
        %v2869 = vpop.f32.mrb[0].mxu0
        %2870 = vmatprep.mubr.bf16.mxu0 %v1650
        %2871 = vmatmul.mubr.bf16.gmra.mrb[0].mxu0 %v1632
        %v2872 = vpop.f32.mrb[0].mxu0
        %v2873 = vadd.f32 %v2712, %v2872
        %v2874 = vpop.f32.mrb[0].mxu0
        %v2875 = vpop.f32.mrb[0].mxu0
        %v2876 = vadd.f32 %v2715, %v2875
        %v2877 = vpop.f32.mrb[0].mxu0
        %2878 = vmatprep.mubr.bf16.mxu0 %v1651
        %2879 = vmatmul.mubr.bf16.gmra.mrb[0].mxu0 %v1633
        %v2880 = vpop.f32.mrb[0].mxu0
        %v2881 = vadd.f32 %v2720, %v2880
        %v2882 = vpop.f32.mrb[0].mxu0
        %v2883 = vpop.f32.mrb[0].mxu0
        %v2884 = vadd.f32 %v2723, %v2883
        %v2885 = vpop.f32.mrb[0].mxu0
        %2886 = vmatprep.mubr.bf16.mxu0 %v1652
        %2887 = vmatmul.mubr.bf16.gmra.mrb[0].mxu0 %v1634
        %v2888 = vpop.f32.mrb[0].mxu0
        %v2889 = vadd.f32 %v2728, %v2888
        %v2890 = vpop.f32.mrb[0].mxu0
        %v2891 = vpop.f32.mrb[0].mxu0
        %v2892 = vadd.f32 %v2731, %v2891
        %v2893 = vpop.f32.mrb[0].mxu0
        %2894 = vmatprep.mubr.bf16.mxu0 %v1653
        %2895 = vmatmul.mubr.bf16.gmra.mrb[0].mxu0 %v1635
        %v2896 = vpop.f32.mrb[0].mxu0
        %v2897 = vadd.f32 %v2736, %v2896
        %v2898 = vpop.f32.mrb[0].mxu0
        %v2899 = vpop.f32.mrb[0].mxu0
        %v2900 = vadd.f32 %v2739, %v2899
        %v2901 = vpop.f32.mrb[0].mxu0
        %2902 = vmatprep.mubr.bf16.mxu0 %v1654
        %2903 = vmatmul.mubr.bf16.gmra.mrb[0].mxu0 %v1636
        %v2904 = vpop.f32.mrb[0].mxu0
        %v2905 = vadd.f32 %v2744, %v2904
        %v2906 = vpop.f32.mrb[0].mxu0
        %v2907 = vpop.f32.mrb[0].mxu0
        %v2908 = vadd.f32 %v2747, %v2907
        %v2909 = vpop.f32.mrb[0].mxu0
        %2910 = vmatprep.mubr.bf16.mxu0 %v1655
        %2911 = vmatmul.mubr.bf16.gmra.mrb[0].mxu0 %v1637
        %v2912 = vpop.f32.mrb[0].mxu0
        %v2913 = vadd.f32 %v2752, %v2912
        %v2914 = vpop.f32.mrb[0].mxu0
        %v2915 = vpop.f32.mrb[0].mxu0
        %v2916 = vadd.f32 %v2755, %v2915
        %v2917 = vpop.f32.mrb[0].mxu0
        %2918 = vmatprep.mubr.bf16.mxu0 %v1656
        %2919 = vmatmul.mubr.bf16.gmra.mrb[0].mxu0 %v1638
        %v2920 = vpop.f32.mrb[0].mxu0
        %v2921 = vadd.f32 %v2760, %v2920
        %v2922 = vpop.f32.mrb[0].mxu0
        %v2923 = vpop.f32.mrb[0].mxu0
        %v2924 = vadd.f32 %v2763, %v2923
        %v2925 = vpop.f32.mrb[0].mxu0
        %2926 = vmatprep.mubr.bf16.mxu0 %v1657
        %2927 = vmatmul.mubr.bf16.gmra.mrb[0].mxu0 %v1639
        %v2928 = vpop.f32.mrb[0].mxu0
        %v2929 = vadd.f32 %v2768, %v2928
        %v2930 = vpop.f32.mrb[0].mxu0
        %v2931 = vpop.f32.mrb[0].mxu0
        %v2932 = vadd.f32 %v2771, %v2931
        %v2933 = vpop.f32.mrb[0].mxu0
        %2934 = vmatprep.mubr.bf16.mxu0 %v1658
        %2935 = vmatmul.mubr.bf16.gmra.mrb[0].mxu0 %v1640
        %v2936 = vpop.f32.mrb[0].mxu0
        %v2937 = vadd.f32 %v2776, %v2936
        %v2938 = vpop.f32.mrb[0].mxu0
        %v2939 = vpop.f32.mrb[0].mxu0
        %v2940 = vadd.f32 %v2779, %v2939
        %v2941 = vpop.f32.mrb[0].mxu0
        %2942 = vdwg.mxu0
        %2943 = vmatprep.subr.bf16.mxu0 0
        %2944 = vmatpush1.bf16.msra.mxu0 %v2364
        %2945 = vmatprep.subr.bf16.mxu0 0
        %2946 = vmatpush1.bf16.msra.mxu0 %v2365
        %2947 = vmatprep.subr.bf16.mxu0 0
        %2948 = vmatpush1.bf16.msra.mxu0 %v2366
        %2949 = vmatprep.subr.bf16.mxu0 0
        %2950 = vmatpush1.bf16.msra.mxu0 %v2367
        %2951 = vmatprep.subr.bf16.mxu0 0
        %2952 = vmatpush1.bf16.msra.mxu0 %v2368
        %2953 = vmatprep.subr.bf16.mxu0 0
        %2954 = vmatpush1.bf16.msra.mxu0 %v2369
        %2955 = vmatprep.subr.bf16.mxu0 0
        %2956 = vmatpush1.bf16.msra.mxu0 %v2370
        %2957 = vmatprep.subr.bf16.mxu0 0
        %2958 = vmatpush1.bf16.msra.mxu0 %v2371
        %2959 = vmatprep.subr.bf16.mxu0 0
        %2960 = vmatpush1.bf16.msra.mxu0 %v2372
        %2961 = vmatprep.subr.bf16.mxu0 0
        %2962 = vmatpush1.bf16.msra.mxu0 %v2373
        %2963 = vmatprep.subr.bf16.mxu0 0
        %2964 = vmatpush1.bf16.msra.mxu0 %v2374
        %2965 = vmatprep.subr.bf16.mxu0 0
        %2966 = vmatpush1.bf16.msra.mxu0 %v2375
        %2967 = vmatprep.subr.bf16.mxu0 0
        %2968 = vmatpush1.bf16.msra.mxu0 %v2376
        %2969 = vmatprep.subr.bf16.mxu0 0
        %2970 = vmatpush1.bf16.msra.mxu0 %v2377
        %2971 = vmatprep.subr.bf16.mxu0 0
        %2972 = vmatpush1.bf16.msra.mxu0 %v2378
        %2973 = vmatprep.subr.bf16.mxu0 0
        %2974 = vmatpush1.bf16.msra.mxu0 %v2379
        %2975 = vmatprep.mubr.bf16.mxu0 %v1626
        %2976 = vmatmul.mubr.bf16.gmra.mrb[0].mxu0 %v1608
        %v2977 = vpop.f32.mrb[0].mxu0
        %v2978 = vadd.f32 %v2817, %v2977
        %v2979 = vpop.f32.mrb[0].mxu0
        %v2980 = vpop.f32.mrb[0].mxu0
        %v2981 = vadd.f32 %v2820, %v2980
        %v2982 = vpop.f32.mrb[0].mxu0
        %2983 = vmatprep.mubr.bf16.mxu0 %v1627
        %2984 = vmatmul.mubr.bf16.gmra.mrb[0].mxu0 %v1609
        %v2985 = vpop.f32.mrb[0].mxu0
        %v2986 = vadd.f32 %v2825, %v2985
        %v2987 = vpop.f32.mrb[0].mxu0
        %v2988 = vpop.f32.mrb[0].mxu0
        %v2989 = vadd.f32 %v2828, %v2988
        %v2990 = vpop.f32.mrb[0].mxu0
        %2991 = vmatprep.mubr.bf16.mxu0 %v1628
        %2992 = vmatmul.mubr.bf16.gmra.mrb[0].mxu0 %v1610
        %v2993 = vpop.f32.mrb[0].mxu0
        %v2994 = vadd.f32 %v2833, %v2993
        %v2995 = vpop.f32.mrb[0].mxu0
        %v2996 = vpop.f32.mrb[0].mxu0
        %v2997 = vadd.f32 %v2836, %v2996
        %v2998 = vpop.f32.mrb[0].mxu0
        %2999 = vmatprep.mubr.bf16.mxu0 %v1629
        %3000 = vmatmul.mubr.bf16.gmra.mrb[0].mxu0 %v1611
        %v3001 = vpop.f32.mrb[0].mxu0
        %v3002 = vadd.f32 %v2841, %v3001
        %v3003 = vpop.f32.mrb[0].mxu0
        %v3004 = vpop.f32.mrb[0].mxu0
        %v3005 = vadd.f32 %v2844, %v3004
        %v3006 = vpop.f32.mrb[0].mxu0
        %3007 = vmatprep.mubr.bf16.mxu0 %v1630
        %3008 = vmatmul.mubr.bf16.gmra.mrb[0].mxu0 %v1612
        %v3009 = vpop.f32.mrb[0].mxu0
        %v3010 = vadd.f32 %v2849, %v3009
        %v3011 = vpop.f32.mrb[0].mxu0
        %v3012 = vpop.f32.mrb[0].mxu0
        %v3013 = vadd.f32 %v2852, %v3012
        %v3014 = vpop.f32.mrb[0].mxu0
        %3015 = vmatprep.mubr.bf16.mxu0 %v1631
        %3016 = vmatmul.mubr.bf16.gmra.mrb[0].mxu0 %v1613
        %v3017 = vpop.f32.mrb[0].mxu0
        %v3018 = vadd.f32 %v2857, %v3017
        %v3019 = vpop.f32.mrb[0].mxu0
        %v3020 = vpop.f32.mrb[0].mxu0
        %v3021 = vadd.f32 %v2860, %v3020
        %v3022 = vpop.f32.mrb[0].mxu0
        %3023 = vmatprep.mubr.bf16.mxu0 %v1632
        %3024 = vmatmul.mubr.bf16.gmra.mrb[0].mxu0 %v1614
        %v3025 = vpop.f32.mrb[0].mxu0
        %v3026 = vadd.f32 %v2865, %v3025
        %v3027 = vpop.f32.mrb[0].mxu0
        %v3028 = vpop.f32.mrb[0].mxu0
        %v3029 = vadd.f32 %v2868, %v3028
        %v3030 = vpop.f32.mrb[0].mxu0
        %3031 = vmatprep.mubr.bf16.mxu0 %v1633
        %3032 = vmatmul.mubr.bf16.gmra.mrb[0].mxu0 %v1615
        %v3033 = vpop.f32.mrb[0].mxu0
        %v3034 = vadd.f32 %v2873, %v3033
        %v3035 = vpop.f32.mrb[0].mxu0
        %v3036 = vpop.f32.mrb[0].mxu0
        %v3037 = vadd.f32 %v2876, %v3036
        %v3038 = vpop.f32.mrb[0].mxu0
        %3039 = vmatprep.mubr.bf16.mxu0 %v1634
        %3040 = vmatmul.mubr.bf16.gmra.mrb[0].mxu0 %v1616
        %v3041 = vpop.f32.mrb[0].mxu0
        %v3042 = vadd.f32 %v2881, %v3041
        %v3043 = vpop.f32.mrb[0].mxu0
        %v3044 = vpop.f32.mrb[0].mxu0
        %v3045 = vadd.f32 %v2884, %v3044
        %v3046 = vpop.f32.mrb[0].mxu0
        %3047 = vmatprep.mubr.bf16.mxu0 %v1635
        %3048 = vmatmul.mubr.bf16.gmra.mrb[0].mxu0 %v1617
        %v3049 = vpop.f32.mrb[0].mxu0
        %v3050 = vadd.f32 %v2889, %v3049
        %v3051 = vpop.f32.mrb[0].mxu0
        %v3052 = vpop.f32.mrb[0].mxu0
        %v3053 = vadd.f32 %v2892, %v3052
        %v3054 = vpop.f32.mrb[0].mxu0
        %3055 = vmatprep.mubr.bf16.mxu0 %v1636
        %3056 = vmatmul.mubr.bf16.gmra.mrb[0].mxu0 %v1618
        %v3057 = vpop.f32.mrb[0].mxu0
        %v3058 = vadd.f32 %v2897, %v3057
        %v3059 = vpop.f32.mrb[0].mxu0
        %v3060 = vpop.f32.mrb[0].mxu0
        %v3061 = vadd.f32 %v2900, %v3060
        %v3062 = vpop.f32.mrb[0].mxu0
        %3063 = vmatprep.mubr.bf16.mxu0 %v1637
        %3064 = vmatmul.mubr.bf16.gmra.mrb[0].mxu0 %v1619
        %v3065 = vpop.f32.mrb[0].mxu0
        %v3066 = vadd.f32 %v2905, %v3065
        %v3067 = vpop.f32.mrb[0].mxu0
        %v3068 = vpop.f32.mrb[0].mxu0
        %v3069 = vadd.f32 %v2908, %v3068
        %v3070 = vpop.f32.mrb[0].mxu0
        %3071 = vmatprep.mubr.bf16.mxu0 %v1638
        %3072 = vmatmul.mubr.bf16.gmra.mrb[0].mxu0 %v1620
        %v3073 = vpop.f32.mrb[0].mxu0
        %v3074 = vadd.f32 %v2913, %v3073
        %v3075 = vpop.f32.mrb[0].mxu0
        %v3076 = vpop.f32.mrb[0].mxu0
        %v3077 = vadd.f32 %v2916, %v3076
        %v3078 = vpop.f32.mrb[0].mxu0
        %3079 = vmatprep.mubr.bf16.mxu0 %v1639
        %3080 = vmatmul.mubr.bf16.gmra.mrb[0].mxu0 %v1621
        %v3081 = vpop.f32.mrb[0].mxu0
        %v3082 = vadd.f32 %v2921, %v3081
        %v3083 = vpop.f32.mrb[0].mxu0
        %v3084 = vpop.f32.mrb[0].mxu0
        %v3085 = vadd.f32 %v2924, %v3084
        %v3086 = vpop.f32.mrb[0].mxu0
        %3087 = vmatprep.mubr.bf16.mxu0 %v1640
        %3088 = vmatmul.mubr.bf16.gmra.mrb[0].mxu0 %v1622
        %v3089 = vpop.f32.mrb[0].mxu0
        %v3090 = vadd.f32 %v2929, %v3089
        %v3091 = vpop.f32.mrb[0].mxu0
        %v3092 = vpop.f32.mrb[0].mxu0
        %v3093 = vadd.f32 %v2932, %v3092
        %v3094 = vpop.f32.mrb[0].mxu0
        %3095 = vmatprep.mubr.bf16.mxu0 %v1641
        %3096 = vmatmul.mubr.bf16.gmra.mrb[0].mxu0 %v1623
        %v3097 = vpop.f32.mrb[0].mxu0
        %v3098 = vadd.f32 %v2937, %v3097
        %v3099 = vpop.f32.mrb[0].mxu0
        %v3100 = vpop.f32.mrb[0].mxu0
        %v3101 = vadd.f32 %v2940, %v3100
        %v3102 = vpop.f32.mrb[0].mxu0
        %3103 = vdwg.mxu0
        %3104 = vmatprep.subr.bf16.mxu0 0
        %3105 = vmatpush1.bf16.msra.mxu0 %v2380
        %3106 = vmatprep.subr.bf16.mxu0 0
        %3107 = vmatpush1.bf16.msra.mxu0 %v2381
        %3108 = vmatprep.subr.bf16.mxu0 0
        %3109 = vmatpush1.bf16.msra.mxu0 %v2382
        %3110 = vmatprep.subr.bf16.mxu0 0
        %3111 = vmatpush1.bf16.msra.mxu0 %v2383
        %3112 = vmatprep.subr.bf16.mxu0 0
        %3113 = vmatpush1.bf16.msra.mxu0 %v2384
        %3114 = vmatprep.subr.bf16.mxu0 0
        %3115 = vmatpush1.bf16.msra.mxu0 %v2385
        %3116 = vmatprep.subr.bf16.mxu0 0
        %3117 = vmatpush1.bf16.msra.mxu0 %v2386
        %3118 = vmatprep.subr.bf16.mxu0 0
        %3119 = vmatpush1.bf16.msra.mxu0 %v2387
        %3120 = vmatprep.subr.bf16.mxu0 0
        %3121 = vmatpush1.bf16.msra.mxu0 0
        %3122 = vmatprep.subr.bf16.mxu0 0
        %3123 = vmatpush1.bf16.msra.mxu0 0
        %3124 = vmatprep.subr.bf16.mxu0 0
        %3125 = vmatpush1.bf16.msra.mxu0 0
        %3126 = vmatprep.subr.bf16.mxu0 0
        %3127 = vmatpush1.bf16.msra.mxu0 0
        %3128 = vmatprep.subr.bf16.mxu0 0
        %3129 = vmatpush1.bf16.msra.mxu0 0
        %3130 = vmatprep.subr.bf16.mxu0 0
        %3131 = vmatpush1.bf16.msra.mxu0 0
        %3132 = vmatprep.subr.bf16.mxu0 0
        %3133 = vmatpush1.bf16.msra.mxu0 0
        %3134 = vmatprep.subr.bf16.mxu0 0
        %3135 = vmatpush1.bf16.msra.mxu0 0
        %3136 = vmatprep.mubr.bf16.mxu0 0
        %3137 = vmatmul.mubr.bf16.gmra.mrb[0].mxu0 %v1644
        %v3138 = vpop.f32.mrb[0].mxu0
        %v3139 = vadd.f32 %v2978, %v3138
        %v3140 = vpop.f32.mrb[0].mxu0
        %v3141 = vpop.f32.mrb[0].mxu0
        %v3142 = vadd.f32 %v2981, %v3141
        %v3143 = vpop.f32.mrb[0].mxu0
        %3144 = vmatprep.mubr.bf16.mxu0 0
        %3145 = vmatmul.mubr.bf16.gmra.mrb[0].mxu0 %v1645
        %v3146 = vpop.f32.mrb[0].mxu0
        %v3147 = vadd.f32 %v2986, %v3146
        %v3148 = vpop.f32.mrb[0].mxu0
        %v3149 = vpop.f32.mrb[0].mxu0
        %v3150 = vadd.f32 %v2989, %v3149
        %v3151 = vpop.f32.mrb[0].mxu0
        %3152 = vmatprep.mubr.bf16.mxu0 0
        %3153 = vmatmul.mubr.bf16.gmra.mrb[0].mxu0 %v1646
        %v3154 = vpop.f32.mrb[0].mxu0
        %v3155 = vadd.f32 %v2994, %v3154
        %v3156 = vpop.f32.mrb[0].mxu0
        %v3157 = vpop.f32.mrb[0].mxu0
        %v3158 = vadd.f32 %v2997, %v3157
        %v3159 = vpop.f32.mrb[0].mxu0
        %3160 = vmatprep.mubr.bf16.mxu0 0
        %3161 = vmatmul.mubr.bf16.gmra.mrb[0].mxu0 %v1647
        %v3162 = vpop.f32.mrb[0].mxu0
        %v3163 = vadd.f32 %v3002, %v3162
        %v3164 = vpop.f32.mrb[0].mxu0
        %v3165 = vpop.f32.mrb[0].mxu0
        %v3166 = vadd.f32 %v3005, %v3165
        %v3167 = vpop.f32.mrb[0].mxu0
        %3168 = vmatprep.mubr.bf16.mxu0 0
        %3169 = vmatmul.mubr.bf16.gmra.mrb[0].mxu0 %v1648
        %v3170 = vpop.f32.mrb[0].mxu0
        %v3171 = vadd.f32 %v3010, %v3170
        %v3172 = vpop.f32.mrb[0].mxu0
        %v3173 = vpop.f32.mrb[0].mxu0
        %v3174 = vadd.f32 %v3013, %v3173
        %v3175 = vpop.f32.mrb[0].mxu0
        %3176 = vmatprep.mubr.bf16.mxu0 0
        %3177 = vmatmul.mubr.bf16.gmra.mrb[0].mxu0 %v1649
        %v3178 = vpop.f32.mrb[0].mxu0
        %v3179 = vadd.f32 %v3018, %v3178
        %v3180 = vpop.f32.mrb[0].mxu0
        %v3181 = vpop.f32.mrb[0].mxu0
        %v3182 = vadd.f32 %v3021, %v3181
        %v3183 = vpop.f32.mrb[0].mxu0
        %3184 = vmatprep.mubr.bf16.mxu0 0
        %3185 = vmatmul.mubr.bf16.gmra.mrb[0].mxu0 %v1650
        %v3186 = vpop.f32.mrb[0].mxu0
        %v3187 = vadd.f32 %v3026, %v3186
        %v3188 = vpop.f32.mrb[0].mxu0
        %v3189 = vpop.f32.mrb[0].mxu0
        %v3190 = vadd.f32 %v3029, %v3189
        %v3191 = vpop.f32.mrb[0].mxu0
        %3192 = vmatprep.mubr.bf16.mxu0 0
        %3193 = vmatmul.mubr.bf16.gmra.mrb[0].mxu0 %v1651
        %v3194 = vpop.f32.mrb[0].mxu0
        %v3195 = vadd.f32 %v3034, %v3194
        %v3196 = vpop.f32.mrb[0].mxu0
        %v3197 = vpop.f32.mrb[0].mxu0
        %v3198 = vadd.f32 %v3037, %v3197
        %v3199 = vpop.f32.mrb[0].mxu0
        %3200 = vmatprep.mubr.bf16.mxu0 0
        %3201 = vmatmul.mubr.bf16.gmra.mrb[0].mxu0 %v1652
        %v3202 = vpop.f32.mrb[0].mxu0
        %v3203 = vadd.f32 %v3042, %v3202
        %v3204 = vpop.f32.mrb[0].mxu0
        %v3205 = vpop.f32.mrb[0].mxu0
        %v3206 = vadd.f32 %v3045, %v3205
        %v3207 = vpop.f32.mrb[0].mxu0
        %3208 = vmatprep.mubr.bf16.mxu0 0
        %3209 = vmatmul.mubr.bf16.gmra.mrb[0].mxu0 %v1653
        %v3210 = vpop.f32.mrb[0].mxu0
        %v3211 = vadd.f32 %v3050, %v3210
        %v3212 = vpop.f32.mrb[0].mxu0
        %v3213 = vpop.f32.mrb[0].mxu0
        %v3214 = vadd.f32 %v3053, %v3213
        %v3215 = vpop.f32.mrb[0].mxu0
        %3216 = vmatprep.mubr.bf16.mxu0 0
        %3217 = vmatmul.mubr.bf16.gmra.mrb[0].mxu0 %v1654
        %v3218 = vpop.f32.mrb[0].mxu0
        %v3219 = vadd.f32 %v3058, %v3218
        %v3220 = vpop.f32.mrb[0].mxu0
        %v3221 = vpop.f32.mrb[0].mxu0
        %v3222 = vadd.f32 %v3061, %v3221
        %v3223 = vpop.f32.mrb[0].mxu0
        %3224 = vmatprep.mubr.bf16.mxu0 0
        %3225 = vmatmul.mubr.bf16.gmra.mrb[0].mxu0 %v1655
        %v3226 = vpop.f32.mrb[0].mxu0
        %v3227 = vadd.f32 %v3066, %v3226
        %v3228 = vpop.f32.mrb[0].mxu0
        %v3229 = vpop.f32.mrb[0].mxu0
        %v3230 = vadd.f32 %v3069, %v3229
        %v3231 = vpop.f32.mrb[0].mxu0
        %3232 = vmatprep.mubr.bf16.mxu0 0
        %3233 = vmatmul.mubr.bf16.gmra.mrb[0].mxu0 %v1656
        %v3234 = vpop.f32.mrb[0].mxu0
        %v3235 = vadd.f32 %v3074, %v3234
        %v3236 = vpop.f32.mrb[0].mxu0
        %v3237 = vpop.f32.mrb[0].mxu0
        %v3238 = vadd.f32 %v3077, %v3237
        %v3239 = vpop.f32.mrb[0].mxu0
        %3240 = vmatprep.mubr.bf16.mxu0 0
        %3241 = vmatmul.mubr.bf16.gmra.mrb[0].mxu0 %v1657
        %v3242 = vpop.f32.mrb[0].mxu0
        %v3243 = vadd.f32 %v3082, %v3242
        %v3244 = vpop.f32.mrb[0].mxu0
        %v3245 = vpop.f32.mrb[0].mxu0
        %v3246 = vadd.f32 %v3085, %v3245
        %v3247 = vpop.f32.mrb[0].mxu0
        %3248 = vmatprep.mubr.bf16.mxu0 0
        %3249 = vmatmul.mubr.bf16.gmra.mrb[0].mxu0 %v1658
        %v3250 = vpop.f32.mrb[0].mxu0
        %v3251 = vadd.f32 %v3090, %v3250
        %v3252 = vpop.f32.mrb[0].mxu0
        %v3253 = vpop.f32.mrb[0].mxu0
        %v3254 = vadd.f32 %v3093, %v3253
        %v3255 = vpop.f32.mrb[0].mxu0
        %3256 = vmatprep.mubr.bf16.mxu0 0
        %3257 = vmatmul.mubr.bf16.gmra.mrb[0].mxu0 %v1659
        %v3258 = vpop.f32.mrb[0].mxu0
        %v3259 = vadd.f32 %v3098, %v3258
        %v3260 = vpop.f32.mrb[0].mxu0
        %v3261 = vpop.f32.mrb[0].mxu0
        %v3262 = vadd.f32 %v3101, %v3261
        %v3263 = vpop.f32.mrb[0].mxu0
        %3264 = vdwg.mxu0
        %v3266 = vlaneseq
        %v3267 = vshrl.u32 %v3266, 7
        %v3268 = vsub.s32 0, %v3267
        %v3269 = vrot.slane %v1040, %v3268
        %v3271 = vadd.f32 %v3139, %v3269
        %v3272 = vadd.f32 %v3142, %v3269
        %v3273 = vadd.f32 %v3147, %v3269
        %v3274 = vadd.f32 %v3150, %v3269
        %v3275 = vadd.f32 %v3155, %v3269
        %v3276 = vadd.f32 %v3158, %v3269
        %v3277 = vadd.f32 %v3163, %v3269
        %v3278 = vadd.f32 %v3166, %v3269
        %v3279 = vadd.f32 %v3171, %v3269
        %v3280 = vadd.f32 %v3174, %v3269
        %v3281 = vadd.f32 %v3179, %v3269
        %v3282 = vadd.f32 %v3182, %v3269
        %v3283 = vadd.f32 %v3187, %v3269
        %v3284 = vadd.f32 %v3190, %v3269
        %v3285 = vadd.f32 %v3195, %v3269
        %v3286 = vadd.f32 %v3198, %v3269
        %v3287 = vadd.f32 %v3203, %v3269
        %v3288 = vadd.f32 %v3206, %v3269
        %v3289 = vadd.f32 %v3211, %v3269
        %v3290 = vadd.f32 %v3214, %v3269
        %v3291 = vadd.f32 %v3219, %v3269
        %v3292 = vadd.f32 %v3222, %v3269
        %v3293 = vadd.f32 %v3227, %v3269
        %v3294 = vadd.f32 %v3230, %v3269
        %v3295 = vadd.f32 %v3235, %v3269
        %v3296 = vadd.f32 %v3238, %v3269
        %v3297 = vadd.f32 %v3243, %v3269
        %v3298 = vadd.f32 %v3246, %v3269
        %v3299 = vadd.f32 %v3251, %v3269
        %v3300 = vadd.f32 %v3254, %v3269
        %v3301 = vadd.f32 %v3259, %v3269
        %v3302 = vadd.f32 %v3262, %v3269
        %v3303 = vxor.u32 %v3271, 2147483648
        %v3304 = vxor.u32 %v3272, 2147483648
        %v3305 = vxor.u32 %v3273, 2147483648
        %v3306 = vxor.u32 %v3274, 2147483648
        %v3307 = vxor.u32 %v3275, 2147483648
        %v3308 = vxor.u32 %v3276, 2147483648
        %v3309 = vxor.u32 %v3277, 2147483648
        %v3310 = vxor.u32 %v3278, 2147483648
        %v3311 = vxor.u32 %v3279, 2147483648
        %v3312 = vxor.u32 %v3280, 2147483648
        %v3313 = vxor.u32 %v3281, 2147483648
        %v3314 = vxor.u32 %v3282, 2147483648
        %v3315 = vxor.u32 %v3283, 2147483648
        %v3316 = vxor.u32 %v3284, 2147483648
        %v3317 = vxor.u32 %v3285, 2147483648
        %v3318 = vxor.u32 %v3286, 2147483648
        %v3319 = vxor.u32 %v3287, 2147483648
        %v3320 = vxor.u32 %v3288, 2147483648
        %v3321 = vxor.u32 %v3289, 2147483648
        %v3322 = vxor.u32 %v3290, 2147483648
        %v3323 = vxor.u32 %v3291, 2147483648
        %v3324 = vxor.u32 %v3292, 2147483648
        %v3325 = vxor.u32 %v3293, 2147483648
        %v3326 = vxor.u32 %v3294, 2147483648
        %v3327 = vxor.u32 %v3295, 2147483648
        %v3328 = vxor.u32 %v3296, 2147483648
        %v3329 = vxor.u32 %v3297, 2147483648
        %v3330 = vxor.u32 %v3298, 2147483648
        %v3331 = vxor.u32 %v3299, 2147483648
        %v3332 = vxor.u32 %v3300, 2147483648
        %v3333 = vxor.u32 %v3301, 2147483648
        %v3334 = vxor.u32 %v3302, 2147483648
        %v3335 = vmul.f32 %v3303, 1.442695
        %v3336 = vpow.pop %v3335
        %v3337 = vmul.f32 %v3304, 1.442695
        %v3338 = vpow.pop %v3337
        %v3339 = vmul.f32 %v3305, 1.442695
        %v3340 = vpow.pop %v3339
        %v3341 = vmul.f32 %v3306, 1.442695
        %v3342 = vpow.pop %v3341
        %v3343 = vmul.f32 %v3307, 1.442695
        %v3344 = vpow.pop %v3343
        %v3345 = vmul.f32 %v3308, 1.442695
        %v3346 = vpow.pop %v3345
        %v3347 = vmul.f32 %v3309, 1.442695
        %v3348 = vpow.pop %v3347
        %v3349 = vmul.f32 %v3310, 1.442695
        %v3350 = vpow.pop %v3349
        %v3351 = vmul.f32 %v3311, 1.442695
        %v3352 = vpow.pop %v3351
        %v3353 = vmul.f32 %v3312, 1.442695
        %v3354 = vpow.pop %v3353
        %v3355 = vmul.f32 %v3313, 1.442695
        %v3356 = vpow.pop %v3355
        %v3357 = vmul.f32 %v3314, 1.442695
        %v3358 = vpow.pop %v3357
        %v3359 = vmul.f32 %v3315, 1.442695
        %v3360 = vpow.pop %v3359
        %v3361 = vmul.f32 %v3316, 1.442695
        %v3362 = vpow.pop %v3361
        %v3363 = vmul.f32 %v3317, 1.442695
        %v3364 = vpow.pop %v3363
        %v3365 = vmul.f32 %v3318, 1.442695
        %v3366 = vpow.pop %v3365
        %v3367 = vmul.f32 %v3319, 1.442695
        %v3368 = vpow.pop %v3367
        %v3369 = vmul.f32 %v3320, 1.442695
        %v3370 = vpow.pop %v3369
        %v3371 = vmul.f32 %v3321, 1.442695
        %v3372 = vpow.pop %v3371
        %v3373 = vmul.f32 %v3322, 1.442695
        %v3374 = vpow.pop %v3373
        %v3375 = vmul.f32 %v3323, 1.442695
        %v3376 = vpow.pop %v3375
        %v3377 = vmul.f32 %v3324, 1.442695
        %v3378 = vpow.pop %v3377
        %v3379 = vmul.f32 %v3325, 1.442695
        %v3380 = vpow.pop %v3379
        %v3381 = vmul.f32 %v3326, 1.442695
        %v3382 = vpow.pop %v3381
        %v3383 = vmul.f32 %v3327, 1.442695
        %v3384 = vpow.pop %v3383
        %v3385 = vmul.f32 %v3328, 1.442695
        %v3386 = vpow.pop %v3385
        %v3387 = vmul.f32 %v3329, 1.442695
        %v3388 = vpow.pop %v3387
        %v3389 = vmul.f32 %v3330, 1.442695
        %v3390 = vpow.pop %v3389
        %v3391 = vmul.f32 %v3331, 1.442695
        %v3392 = vpow.pop %v3391
        %v3393 = vmul.f32 %v3332, 1.442695
        %v3394 = vpow.pop %v3393
        %v3395 = vmul.f32 %v3333, 1.442695
        %v3396 = vpow.pop %v3395
        %v3397 = vmul.f32 %v3334, 1.442695
        %v3398 = vpow.pop %v3397
        %v3399 = vadd.f32 %v3336, 1.0
        %v3400 = vadd.f32 %v3338, 1.0
        %v3401 = vadd.f32 %v3340, 1.0
        %v3402 = vadd.f32 %v3342, 1.0
        %v3403 = vadd.f32 %v3344, 1.0
        %v3404 = vadd.f32 %v3346, 1.0
        %v3405 = vadd.f32 %v3348, 1.0
        %v3406 = vadd.f32 %v3350, 1.0
        %v3407 = vadd.f32 %v3352, 1.0
        %v3408 = vadd.f32 %v3354, 1.0
        %v3409 = vadd.f32 %v3356, 1.0
        %v3410 = vadd.f32 %v3358, 1.0
        %v3411 = vadd.f32 %v3360, 1.0
        %v3412 = vadd.f32 %v3362, 1.0
        %v3413 = vadd.f32 %v3364, 1.0
        %v3414 = vadd.f32 %v3366, 1.0
        %v3415 = vadd.f32 %v3368, 1.0
        %v3416 = vadd.f32 %v3370, 1.0
        %v3417 = vadd.f32 %v3372, 1.0
        %v3418 = vadd.f32 %v3374, 1.0
        %v3419 = vadd.f32 %v3376, 1.0
        %v3420 = vadd.f32 %v3378, 1.0
        %v3421 = vadd.f32 %v3380, 1.0
        %v3422 = vadd.f32 %v3382, 1.0
        %v3423 = vadd.f32 %v3384, 1.0
        %v3424 = vadd.f32 %v3386, 1.0
        %v3425 = vadd.f32 %v3388, 1.0
        %v3426 = vadd.f32 %v3390, 1.0
        %v3427 = vadd.f32 %v3392, 1.0
        %v3428 = vadd.f32 %v3394, 1.0
        %v3429 = vadd.f32 %v3396, 1.0
        %v3430 = vadd.f32 %v3398, 1.0
        %v3431 = vrcp.pop %v3399
        %v3432 = vmul.f32 1.0, %v3431
        %v3433 = vrcp.pop %v3400
        %v3434 = vmul.f32 1.0, %v3433
        %v3435 = vrcp.pop %v3401
        %v3436 = vmul.f32 1.0, %v3435
        %v3437 = vrcp.pop %v3402
        %v3438 = vmul.f32 1.0, %v3437
        %v3439 = vrcp.pop %v3403
        %v3440 = vmul.f32 1.0, %v3439
        %v3441 = vrcp.pop %v3404
        %v3442 = vmul.f32 1.0, %v3441
        %v3443 = vrcp.pop %v3405
        %v3444 = vmul.f32 1.0, %v3443
        %v3445 = vrcp.pop %v3406
        %v3446 = vmul.f32 1.0, %v3445
        %v3447 = vrcp.pop %v3407
        %v3448 = vmul.f32 1.0, %v3447
        %v3449 = vrcp.pop %v3408
        %v3450 = vmul.f32 1.0, %v3449
        %v3451 = vrcp.pop %v3409
        %v3452 = vmul.f32 1.0, %v3451
        %v3453 = vrcp.pop %v3410
        %v3454 = vmul.f32 1.0, %v3453
        %v3455 = vrcp.pop %v3411
        %v3456 = vmul.f32 1.0, %v3455
        %v3457 = vrcp.pop %v3412
        %v3458 = vmul.f32 1.0, %v3457
        %v3459 = vrcp.pop %v3413
        %v3460 = vmul.f32 1.0, %v3459
        %v3461 = vrcp.pop %v3414
        %v3462 = vmul.f32 1.0, %v3461
        %v3463 = vrcp.pop %v3415
        %v3464 = vmul.f32 1.0, %v3463
        %v3465 = vrcp.pop %v3416
        %v3466 = vmul.f32 1.0, %v3465
        %v3467 = vrcp.pop %v3417
        %v3468 = vmul.f32 1.0, %v3467
        %v3469 = vrcp.pop %v3418
        %v3470 = vmul.f32 1.0, %v3469
        %v3471 = vrcp.pop %v3419
        %v3472 = vmul.f32 1.0, %v3471
        %v3473 = vrcp.pop %v3420
        %v3474 = vmul.f32 1.0, %v3473
        %v3475 = vrcp.pop %v3421
        %v3476 = vmul.f32 1.0, %v3475
        %v3477 = vrcp.pop %v3422
        %v3478 = vmul.f32 1.0, %v3477
        %v3479 = vrcp.pop %v3423
        %v3480 = vmul.f32 1.0, %v3479
        %v3481 = vrcp.pop %v3424
        %v3482 = vmul.f32 1.0, %v3481
        %v3483 = vrcp.pop %v3425
        %v3484 = vmul.f32 1.0, %v3483
        %v3485 = vrcp.pop %v3426
        %v3486 = vmul.f32 1.0, %v3485
        %v3487 = vrcp.pop %v3427
        %v3488 = vmul.f32 1.0, %v3487
        %v3489 = vrcp.pop %v3428
        %v3490 = vmul.f32 1.0, %v3489
        %v3491 = vrcp.pop %v3429
        %v3492 = vmul.f32 1.0, %v3491
        %v3493 = vrcp.pop %v3430
        %v3494 = vmul.f32 1.0, %v3493
        %v3495 = vtanh.pop %v3271
        %v3496 = vtanh.pop %v3272
        %v3497 = vtanh.pop %v3273
        %v3498 = vtanh.pop %v3274
        %v3499 = vtanh.pop %v3275
        %v3500 = vtanh.pop %v3276
        %v3501 = vtanh.pop %v3277
        %v3502 = vtanh.pop %v3278
        %v3503 = vtanh.pop %v3279
        %v3504 = vtanh.pop %v3280
        %v3505 = vtanh.pop %v3281
        %v3506 = vtanh.pop %v3282
        %v3507 = vtanh.pop %v3283
        %v3508 = vtanh.pop %v3284
        %v3509 = vtanh.pop %v3285
        %v3510 = vtanh.pop %v3286
        %v3511 = vtanh.pop %v3287
        %v3512 = vtanh.pop %v3288
        %v3513 = vtanh.pop %v3289
        %v3514 = vtanh.pop %v3290
        %v3515 = vtanh.pop %v3291
        %v3516 = vtanh.pop %v3292
        %v3517 = vtanh.pop %v3293
        %v3518 = vtanh.pop %v3294
        %v3519 = vtanh.pop %v3295
        %v3520 = vtanh.pop %v3296
        %v3521 = vtanh.pop %v3297
        %v3522 = vtanh.pop %v3298
        %v3523 = vtanh.pop %v3299
        %v3524 = vtanh.pop %v3300
        %v3525 = vtanh.pop %v3301
        %v3526 = vtanh.pop %v3302
        %v3527 = vld [vmem:[#allocation4] sm:$0xff]
        %v3528 = vld [vmem:[#allocation4 + $0x8] sm:$0xff]
        %v3529 = vld [vmem:[#allocation4 + $0x10] sm:$0xff]
        %v3530 = vld [vmem:[#allocation4 + $0x18] sm:$0xff]
        %v3531 = vld [vmem:[#allocation4 + $0x20] sm:$0xff]
        %v3532 = vld [vmem:[#allocation4 + $0x28] sm:$0xff]
        %v3533 = vld [vmem:[#allocation4 + $0x30] sm:$0xff]
        %v3534 = vld [vmem:[#allocation4 + $0x38] sm:$0xff]
        %v3535 = vld [vmem:[#allocation4 + $0x40] sm:$0xff]
        %v3536 = vld [vmem:[#allocation4 + $0x48] sm:$0xff]
        %v3537 = vld [vmem:[#allocation4 + $0x50] sm:$0xff]
        %v3538 = vld [vmem:[#allocation4 + $0x58] sm:$0xff]
        %v3539 = vld [vmem:[#allocation4 + $0x60] sm:$0xff]
        %v3540 = vld [vmem:[#allocation4 + $0x68] sm:$0xff]
        %v3541 = vld [vmem:[#allocation4 + $0x70] sm:$0xff]
        %v3542 = vld [vmem:[#allocation4 + $0x78] sm:$0xff]
        %v3543 = vld [vmem:[#allocation4 + $0x80] sm:$0xff]
        %v3544 = vld [vmem:[#allocation4 + $0x88] sm:$0xff]
        %v3545 = vld [vmem:[#allocation4 + $0x90] sm:$0xff]
        %v3546 = vld [vmem:[#allocation4 + $0x98] sm:$0xff]
        %v3547 = vld [vmem:[#allocation4 + $0xa0] sm:$0xff]
        %v3548 = vld [vmem:[#allocation4 + $0xa8] sm:$0xff]
        %v3549 = vld [vmem:[#allocation4 + $0xb0] sm:$0xff]
        %v3550 = vld [vmem:[#allocation4 + $0xb8] sm:$0xff]
        %v3551 = vld [vmem:[#allocation4 + $0xc0] sm:$0xff]
        %v3552 = vld [vmem:[#allocation4 + $0xc8] sm:$0xff]
        %v3553 = vld [vmem:[#allocation4 + $0xd0] sm:$0xff]
        %v3554 = vld [vmem:[#allocation4 + $0xd8] sm:$0xff]
        %v3555 = vld [vmem:[#allocation4 + $0xe0] sm:$0xff]
        %v3556 = vld [vmem:[#allocation4 + $0xe8] sm:$0xff]
        %v3557 = vld [vmem:[#allocation4 + $0xf0] sm:$0xff]
        %v3558 = vld [vmem:[#allocation4 + $0xf8] sm:$0xff]
        %3591 = vrot.lane.b32.xlu0 %v3527, 32
        %v3592 = vpop.permute.xlu0 %3591
        %3593 = vrot.lane.b32.xlu0 %v3528, 32
        %v3594 = vpop.permute.xlu0 %3593
        %3595 = vrot.lane.b32.xlu0 %v3529, 32
        %v3596 = vpop.permute.xlu0 %3595
        %3597 = vrot.lane.b32.xlu0 %v3530, 32
        %v3598 = vpop.permute.xlu0 %3597
        %3599 = vrot.lane.b32.xlu0 %v3531, 32
        %v3600 = vpop.permute.xlu0 %3599
        %3601 = vrot.lane.b32.xlu0 %v3532, 32
        %v3602 = vpop.permute.xlu0 %3601
        %3603 = vrot.lane.b32.xlu0 %v3533, 32
        %v3604 = vpop.permute.xlu0 %3603
        %3605 = vrot.lane.b32.xlu0 %v3534, 32
        %v3606 = vpop.permute.xlu0 %3605
        %3607 = vrot.lane.b32.xlu0 %v3535, 32
        %v3608 = vpop.permute.xlu0 %3607
        %3609 = vrot.lane.b32.xlu0 %v3536, 32
        %v3610 = vpop.permute.xlu0 %3609
        %3611 = vrot.lane.b32.xlu0 %v3537, 32
        %v3612 = vpop.permute.xlu0 %3611
        %3613 = vrot.lane.b32.xlu0 %v3538, 32
        %v3614 = vpop.permute.xlu0 %3613
        %3615 = vrot.lane.b32.xlu0 %v3539, 32
        %v3616 = vpop.permute.xlu0 %3615
        %3617 = vrot.lane.b32.xlu0 %v3540, 32
        %v3618 = vpop.permute.xlu0 %3617
        %3619 = vrot.lane.b32.xlu0 %v3541, 32
        %v3620 = vpop.permute.xlu0 %3619
        %3621 = vrot.lane.b32.xlu0 %v3542, 32
        %v3622 = vpop.permute.xlu0 %3621
        %3623 = vrot.lane.b32.xlu0 %v3543, 32
        %v3624 = vpop.permute.xlu0 %3623
        %3625 = vrot.lane.b32.xlu0 %v3544, 32
        %v3626 = vpop.permute.xlu0 %3625
        %3627 = vrot.lane.b32.xlu0 %v3545, 32
        %v3628 = vpop.permute.xlu0 %3627
        %3629 = vrot.lane.b32.xlu0 %v3546, 32
        %v3630 = vpop.permute.xlu0 %3629
        %3631 = vrot.lane.b32.xlu0 %v3547, 32
        %v3632 = vpop.permute.xlu0 %3631
        %3633 = vrot.lane.b32.xlu0 %v3548, 32
        %v3634 = vpop.permute.xlu0 %3633
        %3635 = vrot.lane.b32.xlu0 %v3549, 32
        %v3636 = vpop.permute.xlu0 %3635
        %3637 = vrot.lane.b32.xlu0 %v3550, 32
        %v3638 = vpop.permute.xlu0 %3637
        %3639 = vrot.lane.b32.xlu0 %v3551, 32
        %v3640 = vpop.permute.xlu0 %3639
        %3641 = vrot.lane.b32.xlu0 %v3552, 32
        %v3642 = vpop.permute.xlu0 %3641
        %3643 = vrot.lane.b32.xlu0 %v3553, 32
        %v3644 = vpop.permute.xlu0 %3643
        %3645 = vrot.lane.b32.xlu0 %v3554, 32
        %v3646 = vpop.permute.xlu0 %3645
        %3647 = vrot.lane.b32.xlu0 %v3555, 32
        %v3648 = vpop.permute.xlu0 %3647
        %3649 = vrot.lane.b32.xlu0 %v3556, 32
        %v3650 = vpop.permute.xlu0 %3649
        %3651 = vrot.lane.b32.xlu0 %v3557, 32
        %v3652 = vpop.permute.xlu0 %3651
        %3653 = vrot.lane.b32.xlu0 %v3558, 32
        %v3654 = vpop.permute.xlu0 %3653
        %v3687 = vmul.f32 %v3432, %v3592
        %v3688 = vmul.f32 %v3434, %v3594
        %v3689 = vmul.f32 %v3436, %v3596
        %v3690 = vmul.f32 %v3438, %v3598
        %v3691 = vmul.f32 %v3440, %v3600
        %v3692 = vmul.f32 %v3442, %v3602
        %v3693 = vmul.f32 %v3444, %v3604
        %v3694 = vmul.f32 %v3446, %v3606
        %v3695 = vmul.f32 %v3448, %v3608
        %v3696 = vmul.f32 %v3450, %v3610
        %v3697 = vmul.f32 %v3452, %v3612
        %v3698 = vmul.f32 %v3454, %v3614
        %v3699 = vmul.f32 %v3456, %v3616
        %v3700 = vmul.f32 %v3458, %v3618
        %v3701 = vmul.f32 %v3460, %v3620
        %v3702 = vmul.f32 %v3462, %v3622
        %v3703 = vmul.f32 %v3464, %v3624
        %v3704 = vmul.f32 %v3466, %v3626
        %v3705 = vmul.f32 %v3468, %v3628
        %v3706 = vmul.f32 %v3470, %v3630
        %v3707 = vmul.f32 %v3472, %v3632
        %v3708 = vmul.f32 %v3474, %v3634
        %v3709 = vmul.f32 %v3476, %v3636
        %v3710 = vmul.f32 %v3478, %v3638
        %v3711 = vmul.f32 %v3480, %v3640
        %v3712 = vmul.f32 %v3482, %v3642
        %v3713 = vmul.f32 %v3484, %v3644
        %v3714 = vmul.f32 %v3486, %v3646
        %v3715 = vmul.f32 %v3488, %v3648
        %v3716 = vmul.f32 %v3490, %v3650
        %v3717 = vmul.f32 %v3492, %v3652
        %v3718 = vmul.f32 %v3494, %v3654
        %3751 = vrot.lane.b32.xlu0 %v3495, 32
        %v3752 = vpop.permute.xlu0 %3751
        %3753 = vrot.lane.b32.xlu0 %v3496, 32
        %v3754 = vpop.permute.xlu0 %3753
        %3755 = vrot.lane.b32.xlu0 %v3497, 32
        %v3756 = vpop.permute.xlu0 %3755
        %3757 = vrot.lane.b32.xlu0 %v3498, 32
        %v3758 = vpop.permute.xlu0 %3757
        %3759 = vrot.lane.b32.xlu0 %v3499, 32
        %v3760 = vpop.permute.xlu0 %3759
        %3761 = vrot.lane.b32.xlu0 %v3500, 32
        %v3762 = vpop.permute.xlu0 %3761
        %3763 = vrot.lane.b32.xlu0 %v3501, 32
        %v3764 = vpop.permute.xlu0 %3763
        %3765 = vrot.lane.b32.xlu0 %v3502, 32
        %v3766 = vpop.permute.xlu0 %3765
        %3767 = vrot.lane.b32.xlu0 %v3503, 32
        %v3768 = vpop.permute.xlu0 %3767
        %3769 = vrot.lane.b32.xlu0 %v3504, 32
        %v3770 = vpop.permute.xlu0 %3769
        %3771 = vrot.lane.b32.xlu0 %v3505, 32
        %v3772 = vpop.permute.xlu0 %3771
        %3773 = vrot.lane.b32.xlu0 %v3506, 32
        %v3774 = vpop.permute.xlu0 %3773
        %3775 = vrot.lane.b32.xlu0 %v3507, 32
        %v3776 = vpop.permute.xlu0 %3775
        %3777 = vrot.lane.b32.xlu0 %v3508, 32
        %v3778 = vpop.permute.xlu0 %3777
        %3779 = vrot.lane.b32.xlu0 %v3509, 32
        %v3780 = vpop.permute.xlu0 %3779
        %3781 = vrot.lane.b32.xlu0 %v3510, 32
        %v3782 = vpop.permute.xlu0 %3781
        %3783 = vrot.lane.b32.xlu0 %v3511, 32
        %v3784 = vpop.permute.xlu0 %3783
        %3785 = vrot.lane.b32.xlu0 %v3512, 32
        %v3786 = vpop.permute.xlu0 %3785
        %3787 = vrot.lane.b32.xlu0 %v3513, 32
        %v3788 = vpop.permute.xlu0 %3787
        %3789 = vrot.lane.b32.xlu0 %v3514, 32
        %v3790 = vpop.permute.xlu0 %3789
        %3791 = vrot.lane.b32.xlu0 %v3515, 32
        %v3792 = vpop.permute.xlu0 %3791
        %3793 = vrot.lane.b32.xlu0 %v3516, 32
        %v3794 = vpop.permute.xlu0 %3793
        %3795 = vrot.lane.b32.xlu0 %v3517, 32
        %v3796 = vpop.permute.xlu0 %3795
        %3797 = vrot.lane.b32.xlu0 %v3518, 32
        %v3798 = vpop.permute.xlu0 %3797
        %3799 = vrot.lane.b32.xlu0 %v3519, 32
        %v3800 = vpop.permute.xlu0 %3799
        %3801 = vrot.lane.b32.xlu0 %v3520, 32
        %v3802 = vpop.permute.xlu0 %3801
        %3803 = vrot.lane.b32.xlu0 %v3521, 32
        %v3804 = vpop.permute.xlu0 %3803
        %3805 = vrot.lane.b32.xlu0 %v3522, 32
        %v3806 = vpop.permute.xlu0 %3805
        %3807 = vrot.lane.b32.xlu0 %v3523, 32
        %v3808 = vpop.permute.xlu0 %3807
        %3809 = vrot.lane.b32.xlu0 %v3524, 32
        %v3810 = vpop.permute.xlu0 %3809
        %3811 = vrot.lane.b32.xlu0 %v3525, 32
        %v3812 = vpop.permute.xlu0 %3811
        %3813 = vrot.lane.b32.xlu0 %v3526, 32
        %v3814 = vpop.permute.xlu0 %3813
        %v3847 = vmul.f32 %v3432, %v3752
        %v3848 = vmul.f32 %v3434, %v3754
        %v3849 = vmul.f32 %v3436, %v3756
        %v3850 = vmul.f32 %v3438, %v3758
        %v3851 = vmul.f32 %v3440, %v3760
        %v3852 = vmul.f32 %v3442, %v3762
        %v3853 = vmul.f32 %v3444, %v3764
        %v3854 = vmul.f32 %v3446, %v3766
        %v3855 = vmul.f32 %v3448, %v3768
        %v3856 = vmul.f32 %v3450, %v3770
        %v3857 = vmul.f32 %v3452, %v3772
        %v3858 = vmul.f32 %v3454, %v3774
        %v3859 = vmul.f32 %v3456, %v3776
        %v3860 = vmul.f32 %v3458, %v3778
        %v3861 = vmul.f32 %v3460, %v3780
        %v3862 = vmul.f32 %v3462, %v3782
        %v3863 = vmul.f32 %v3464, %v3784
        %v3864 = vmul.f32 %v3466, %v3786
        %v3865 = vmul.f32 %v3468, %v3788
        %v3866 = vmul.f32 %v3470, %v3790
        %v3867 = vmul.f32 %v3472, %v3792
        %v3868 = vmul.f32 %v3474, %v3794
        %v3869 = vmul.f32 %v3476, %v3796
        %v3870 = vmul.f32 %v3478, %v3798
        %v3871 = vmul.f32 %v3480, %v3800
        %v3872 = vmul.f32 %v3482, %v3802
        %v3873 = vmul.f32 %v3484, %v3804
        %v3874 = vmul.f32 %v3486, %v3806
        %v3875 = vmul.f32 %v3488, %v3808
        %v3876 = vmul.f32 %v3490, %v3810
        %v3877 = vmul.f32 %v3492, %v3812
        %v3878 = vmul.f32 %v3494, %v3814
        %3911 = vrot.lane.b32.xlu0 %v3847, 32
        %v3912 = vpop.permute.xlu0 %3911
        %3913 = vrot.lane.b32.xlu0 %v3848, 32
        %v3914 = vpop.permute.xlu0 %3913
        %3915 = vrot.lane.b32.xlu0 %v3849, 32
        %v3916 = vpop.permute.xlu0 %3915
        %3917 = vrot.lane.b32.xlu0 %v3850, 32
        %v3918 = vpop.permute.xlu0 %3917
        %3919 = vrot.lane.b32.xlu0 %v3851, 32
        %v3920 = vpop.permute.xlu0 %3919
        %3921 = vrot.lane.b32.xlu0 %v3852, 32
        %v3922 = vpop.permute.xlu0 %3921
        %3923 = vrot.lane.b32.xlu0 %v3853, 32
        %v3924 = vpop.permute.xlu0 %3923
        %3925 = vrot.lane.b32.xlu0 %v3854, 32
        %v3926 = vpop.permute.xlu0 %3925
        %3927 = vrot.lane.b32.xlu0 %v3855, 32
        %v3928 = vpop.permute.xlu0 %3927
        %3929 = vrot.lane.b32.xlu0 %v3856, 32
        %v3930 = vpop.permute.xlu0 %3929
        %3931 = vrot.lane.b32.xlu0 %v3857, 32
        %v3932 = vpop.permute.xlu0 %3931
        %3933 = vrot.lane.b32.xlu0 %v3858, 32
        %v3934 = vpop.permute.xlu0 %3933
        %3935 = vrot.lane.b32.xlu0 %v3859, 32
        %v3936 = vpop.permute.xlu0 %3935
        %3937 = vrot.lane.b32.xlu0 %v3860, 32
        %v3938 = vpop.permute.xlu0 %3937
        %3939 = vrot.lane.b32.xlu0 %v3861, 32
        %v3940 = vpop.permute.xlu0 %3939
        %3941 = vrot.lane.b32.xlu0 %v3862, 32
        %v3942 = vpop.permute.xlu0 %3941
        %3943 = vrot.lane.b32.xlu0 %v3863, 32
        %v3944 = vpop.permute.xlu0 %3943
        %3945 = vrot.lane.b32.xlu0 %v3864, 32
        %v3946 = vpop.permute.xlu0 %3945
        %3947 = vrot.lane.b32.xlu0 %v3865, 32
        %v3948 = vpop.permute.xlu0 %3947
        %3949 = vrot.lane.b32.xlu0 %v3866, 32
        %v3950 = vpop.permute.xlu0 %3949
        %3951 = vrot.lane.b32.xlu0 %v3867, 32
        %v3952 = vpop.permute.xlu0 %3951
        %3953 = vrot.lane.b32.xlu0 %v3868, 32
        %v3954 = vpop.permute.xlu0 %3953
        %3955 = vrot.lane.b32.xlu0 %v3869, 32
        %v3956 = vpop.permute.xlu0 %3955
        %3957 = vrot.lane.b32.xlu0 %v3870, 32
        %v3958 = vpop.permute.xlu0 %3957
        %3959 = vrot.lane.b32.xlu0 %v3871, 32
        %v3960 = vpop.permute.xlu0 %3959
        %3961 = vrot.lane.b32.xlu0 %v3872, 32
        %v3962 = vpop.permute.xlu0 %3961
        %3963 = vrot.lane.b32.xlu0 %v3873, 32
        %v3964 = vpop.permute.xlu0 %3963
        %3965 = vrot.lane.b32.xlu0 %v3874, 32
        %v3966 = vpop.permute.xlu0 %3965
        %3967 = vrot.lane.b32.xlu0 %v3875, 32
        %v3968 = vpop.permute.xlu0 %3967
        %3969 = vrot.lane.b32.xlu0 %v3876, 32
        %v3970 = vpop.permute.xlu0 %3969
        %3971 = vrot.lane.b32.xlu0 %v3877, 32
        %v3972 = vpop.permute.xlu0 %3971
        %3973 = vrot.lane.b32.xlu0 %v3878, 32
        %v3974 = vpop.permute.xlu0 %3973
        %v4007 = vadd.f32 %v3687, %v3912
        %v4008 = vadd.f32 %v3688, %v3914
        %v4009 = vadd.f32 %v3689, %v3916
        %v4010 = vadd.f32 %v3690, %v3918
        %v4011 = vadd.f32 %v3691, %v3920
        %v4012 = vadd.f32 %v3692, %v3922
        %v4013 = vadd.f32 %v3693, %v3924
        %v4014 = vadd.f32 %v3694, %v3926
        %v4015 = vadd.f32 %v3695, %v3928
        %v4016 = vadd.f32 %v3696, %v3930
        %v4017 = vadd.f32 %v3697, %v3932
        %v4018 = vadd.f32 %v3698, %v3934
        %v4019 = vadd.f32 %v3699, %v3936
        %v4020 = vadd.f32 %v3700, %v3938
        %v4021 = vadd.f32 %v3701, %v3940
        %v4022 = vadd.f32 %v3702, %v3942
        %v4023 = vadd.f32 %v3703, %v3944
        %v4024 = vadd.f32 %v3704, %v3946
        %v4025 = vadd.f32 %v3705, %v3948
        %v4026 = vadd.f32 %v3706, %v3950
        %v4027 = vadd.f32 %v3707, %v3952
        %v4028 = vadd.f32 %v3708, %v3954
        %v4029 = vadd.f32 %v3709, %v3956
        %v4030 = vadd.f32 %v3710, %v3958
        %v4031 = vadd.f32 %v3711, %v3960
        %v4032 = vadd.f32 %v3712, %v3962
        %v4033 = vadd.f32 %v3713, %v3964
        %v4034 = vadd.f32 %v3714, %v3966
        %v4035 = vadd.f32 %v3715, %v3968
        %v4036 = vadd.f32 %v3716, %v3970
        %v4037 = vadd.f32 %v3717, %v3972
        %v4038 = vadd.f32 %v3718, %v3974
        %4071 = vrot.lane.b32.xlu0 %v4007, 96
        %v4072 = vpop.permute.xlu0 %4071
        %4073 = vrot.lane.b32.xlu0 %v4008, 96
        %v4074 = vpop.permute.xlu0 %4073
        %4075 = vrot.lane.b32.xlu0 %v4009, 96
        %v4076 = vpop.permute.xlu0 %4075
        %4077 = vrot.lane.b32.xlu0 %v4010, 96
        %v4078 = vpop.permute.xlu0 %4077
        %4079 = vrot.lane.b32.xlu0 %v4011, 96
        %v4080 = vpop.permute.xlu0 %4079
        %4081 = vrot.lane.b32.xlu0 %v4012, 96
        %v4082 = vpop.permute.xlu0 %4081
        %4083 = vrot.lane.b32.xlu0 %v4013, 96
        %v4084 = vpop.permute.xlu0 %4083
        %4085 = vrot.lane.b32.xlu0 %v4014, 96
        %v4086 = vpop.permute.xlu0 %4085
        %4087 = vrot.lane.b32.xlu0 %v4015, 96
        %v4088 = vpop.permute.xlu0 %4087
        %4089 = vrot.lane.b32.xlu0 %v4016, 96
        %v4090 = vpop.permute.xlu0 %4089
        %4091 = vrot.lane.b32.xlu0 %v4017, 96
        %v4092 = vpop.permute.xlu0 %4091
        %4093 = vrot.lane.b32.xlu0 %v4018, 96
        %v4094 = vpop.permute.xlu0 %4093
        %4095 = vrot.lane.b32.xlu0 %v4019, 96
        %v4096 = vpop.permute.xlu0 %4095
        %4097 = vrot.lane.b32.xlu0 %v4020, 96
        %v4098 = vpop.permute.xlu0 %4097
        %4099 = vrot.lane.b32.xlu0 %v4021, 96
        %v4100 = vpop.permute.xlu0 %4099
        %4101 = vrot.lane.b32.xlu0 %v4022, 96
        %v4102 = vpop.permute.xlu0 %4101
        %4103 = vrot.lane.b32.xlu0 %v4023, 96
        %v4104 = vpop.permute.xlu0 %4103
        %4105 = vrot.lane.b32.xlu0 %v4024, 96
        %v4106 = vpop.permute.xlu0 %4105
        %4107 = vrot.lane.b32.xlu0 %v4025, 96
        %v4108 = vpop.permute.xlu0 %4107
        %4109 = vrot.lane.b32.xlu0 %v4026, 96
        %v4110 = vpop.permute.xlu0 %4109
        %4111 = vrot.lane.b32.xlu0 %v4027, 96
        %v4112 = vpop.permute.xlu0 %4111
        %4113 = vrot.lane.b32.xlu0 %v4028, 96
        %v4114 = vpop.permute.xlu0 %4113
        %4115 = vrot.lane.b32.xlu0 %v4029, 96
        %v4116 = vpop.permute.xlu0 %4115
        %4117 = vrot.lane.b32.xlu0 %v4030, 96
        %v4118 = vpop.permute.xlu0 %4117
        %4119 = vrot.lane.b32.xlu0 %v4031, 96
        %v4120 = vpop.permute.xlu0 %4119
        %4121 = vrot.lane.b32.xlu0 %v4032, 96
        %v4122 = vpop.permute.xlu0 %4121
        %4123 = vrot.lane.b32.xlu0 %v4033, 96
        %v4124 = vpop.permute.xlu0 %4123
        %4125 = vrot.lane.b32.xlu0 %v4034, 96
        %v4126 = vpop.permute.xlu0 %4125
        %4127 = vrot.lane.b32.xlu0 %v4035, 96
        %v4128 = vpop.permute.xlu0 %4127
        %4129 = vrot.lane.b32.xlu0 %v4036, 96
        %v4130 = vpop.permute.xlu0 %4129
        %4131 = vrot.lane.b32.xlu0 %v4037, 96
        %v4132 = vpop.permute.xlu0 %4131
        %4133 = vrot.lane.b32.xlu0 %v4038, 96
        %v4134 = vpop.permute.xlu0 %4133
        %4167 = vst.msk [vmem:[#allocation4] sm:$0xff] %vm433, %v4072
        %4168 = vst.msk [vmem:[#allocation4 + $0x8] sm:$0xff] %vm433, %v4074
        %4169 = vst.msk [vmem:[#allocation4 + $0x10] sm:$0xff] %vm433, %v4076
        %4170 = vst.msk [vmem:[#allocation4 + $0x18] sm:$0xff] %vm433, %v4078
        %4171 = vst.msk [vmem:[#allocation4 + $0x20] sm:$0xff] %vm433, %v4080
        %4172 = vst.msk [vmem:[#allocation4 + $0x28] sm:$0xff] %vm433, %v4082
        %4173 = vst.msk [vmem:[#allocation4 + $0x30] sm:$0xff] %vm433, %v4084
        %4174 = vst.msk [vmem:[#allocation4 + $0x38] sm:$0xff] %vm433, %v4086
        %4175 = vst.msk [vmem:[#allocation4 + $0x40] sm:$0xff] %vm433, %v4088
        %4176 = vst.msk [vmem:[#allocation4 + $0x48] sm:$0xff] %vm433, %v4090
        %4177 = vst.msk [vmem:[#allocation4 + $0x50] sm:$0xff] %vm433, %v4092
        %4178 = vst.msk [vmem:[#allocation4 + $0x58] sm:$0xff] %vm433, %v4094
        %4179 = vst.msk [vmem:[#allocation4 + $0x60] sm:$0xff] %vm433, %v4096
        %4180 = vst.msk [vmem:[#allocation4 + $0x68] sm:$0xff] %vm433, %v4098
        %4181 = vst.msk [vmem:[#allocation4 + $0x70] sm:$0xff] %vm433, %v4100
        %4182 = vst.msk [vmem:[#allocation4 + $0x78] sm:$0xff] %vm433, %v4102
        %4183 = vst.msk [vmem:[#allocation4 + $0x80] sm:$0xff] %vm433, %v4104
        %4184 = vst.msk [vmem:[#allocation4 + $0x88] sm:$0xff] %vm433, %v4106
        %4185 = vst.msk [vmem:[#allocation4 + $0x90] sm:$0xff] %vm433, %v4108
        %4186 = vst.msk [vmem:[#allocation4 + $0x98] sm:$0xff] %vm433, %v4110
        %4187 = vst.msk [vmem:[#allocation4 + $0xa0] sm:$0xff] %vm433, %v4112
        %4188 = vst.msk [vmem:[#allocation4 + $0xa8] sm:$0xff] %vm433, %v4114
        %4189 = vst.msk [vmem:[#allocation4 + $0xb0] sm:$0xff] %vm433, %v4116
        %4190 = vst.msk [vmem:[#allocation4 + $0xb8] sm:$0xff] %vm433, %v4118
        %4191 = vst.msk [vmem:[#allocation4 + $0xc0] sm:$0xff] %vm433, %v4120
        %4192 = vst.msk [vmem:[#allocation4 + $0xc8] sm:$0xff] %vm433, %v4122
        %4193 = vst.msk [vmem:[#allocation4 + $0xd0] sm:$0xff] %vm433, %v4124
        %4194 = vst.msk [vmem:[#allocation4 + $0xd8] sm:$0xff] %vm433, %v4126
        %4195 = vst.msk [vmem:[#allocation4 + $0xe0] sm:$0xff] %vm433, %v4128
        %4196 = vst.msk [vmem:[#allocation4 + $0xe8] sm:$0xff] %vm433, %v4130
        %4197 = vst.msk [vmem:[#allocation4 + $0xf0] sm:$0xff] %vm433, %v4132
        %4198 = vst.msk [vmem:[#allocation4 + $0xf8] sm:$0xff] %vm433, %v4134
        %v4199 = vtanh.pop %v4007
        %v4200 = vtanh.pop %v4008
        %v4201 = vtanh.pop %v4009
        %v4202 = vtanh.pop %v4010
        %v4203 = vtanh.pop %v4011
        %v4204 = vtanh.pop %v4012
        %v4205 = vtanh.pop %v4013
        %v4206 = vtanh.pop %v4014
        %v4207 = vtanh.pop %v4015
        %v4208 = vtanh.pop %v4016
        %v4209 = vtanh.pop %v4017
        %v4210 = vtanh.pop %v4018
        %v4211 = vtanh.pop %v4019
        %v4212 = vtanh.pop %v4020
        %v4213 = vtanh.pop %v4021
        %v4214 = vtanh.pop %v4022
        %v4215 = vtanh.pop %v4023
        %v4216 = vtanh.pop %v4024
        %v4217 = vtanh.pop %v4025
        %v4218 = vtanh.pop %v4026
        %v4219 = vtanh.pop %v4027
        %v4220 = vtanh.pop %v4028
        %v4221 = vtanh.pop %v4029
        %v4222 = vtanh.pop %v4030
        %v4223 = vtanh.pop %v4031
        %v4224 = vtanh.pop %v4032
        %v4225 = vtanh.pop %v4033
        %v4226 = vtanh.pop %v4034
        %v4227 = vtanh.pop %v4035
        %v4228 = vtanh.pop %v4036
        %v4229 = vtanh.pop %v4037
        %v4230 = vtanh.pop %v4038
        %4263 = vrot.lane.b32.xlu0 %v4199, 32
        %v4264 = vpop.permute.xlu0 %4263
        %4265 = vrot.lane.b32.xlu0 %v4200, 32
        %v4266 = vpop.permute.xlu0 %4265
        %4267 = vrot.lane.b32.xlu0 %v4201, 32
        %v4268 = vpop.permute.xlu0 %4267
        %4269 = vrot.lane.b32.xlu0 %v4202, 32
        %v4270 = vpop.permute.xlu0 %4269
        %4271 = vrot.lane.b32.xlu0 %v4203, 32
        %v4272 = vpop.permute.xlu0 %4271
        %4273 = vrot.lane.b32.xlu0 %v4204, 32
        %v4274 = vpop.permute.xlu0 %4273
        %4275 = vrot.lane.b32.xlu0 %v4205, 32
        %v4276 = vpop.permute.xlu0 %4275
        %4277 = vrot.lane.b32.xlu0 %v4206, 32
        %v4278 = vpop.permute.xlu0 %4277
        %4279 = vrot.lane.b32.xlu0 %v4207, 32
        %v4280 = vpop.permute.xlu0 %4279
        %4281 = vrot.lane.b32.xlu0 %v4208, 32
        %v4282 = vpop.permute.xlu0 %4281
        %4283 = vrot.lane.b32.xlu0 %v4209, 32
        %v4284 = vpop.permute.xlu0 %4283
        %4285 = vrot.lane.b32.xlu0 %v4210, 32
        %v4286 = vpop.permute.xlu0 %4285
        %4287 = vrot.lane.b32.xlu0 %v4211, 32
        %v4288 = vpop.permute.xlu0 %4287
        %4289 = vrot.lane.b32.xlu0 %v4212, 32
        %v4290 = vpop.permute.xlu0 %4289
        %4291 = vrot.lane.b32.xlu0 %v4213, 32
        %v4292 = vpop.permute.xlu0 %4291
        %4293 = vrot.lane.b32.xlu0 %v4214, 32
        %v4294 = vpop.permute.xlu0 %4293
        %4295 = vrot.lane.b32.xlu0 %v4215, 32
        %v4296 = vpop.permute.xlu0 %4295
        %4297 = vrot.lane.b32.xlu0 %v4216, 32
        %v4298 = vpop.permute.xlu0 %4297
        %4299 = vrot.lane.b32.xlu0 %v4217, 32
        %v4300 = vpop.permute.xlu0 %4299
        %4301 = vrot.lane.b32.xlu0 %v4218, 32
        %v4302 = vpop.permute.xlu0 %4301
        %4303 = vrot.lane.b32.xlu0 %v4219, 32
        %v4304 = vpop.permute.xlu0 %4303
        %4305 = vrot.lane.b32.xlu0 %v4220, 32
        %v4306 = vpop.permute.xlu0 %4305
        %4307 = vrot.lane.b32.xlu0 %v4221, 32
        %v4308 = vpop.permute.xlu0 %4307
        %4309 = vrot.lane.b32.xlu0 %v4222, 32
        %v4310 = vpop.permute.xlu0 %4309
        %4311 = vrot.lane.b32.xlu0 %v4223, 32
        %v4312 = vpop.permute.xlu0 %4311
        %4313 = vrot.lane.b32.xlu0 %v4224, 32
        %v4314 = vpop.permute.xlu0 %4313
        %4315 = vrot.lane.b32.xlu0 %v4225, 32
        %v4316 = vpop.permute.xlu0 %4315
        %4317 = vrot.lane.b32.xlu0 %v4226, 32
        %v4318 = vpop.permute.xlu0 %4317
        %4319 = vrot.lane.b32.xlu0 %v4227, 32
        %v4320 = vpop.permute.xlu0 %4319
        %4321 = vrot.lane.b32.xlu0 %v4228, 32
        %v4322 = vpop.permute.xlu0 %4321
        %4323 = vrot.lane.b32.xlu0 %v4229, 32
        %v4324 = vpop.permute.xlu0 %4323
        %4325 = vrot.lane.b32.xlu0 %v4230, 32
        %v4326 = vpop.permute.xlu0 %4325
        %v4359 = vmul.f32 %v3432, %v4264
        %v4360 = vmul.f32 %v3434, %v4266
        %v4361 = vmul.f32 %v3436, %v4268
        %v4362 = vmul.f32 %v3438, %v4270
        %v4363 = vmul.f32 %v3440, %v4272
        %v4364 = vmul.f32 %v3442, %v4274
        %v4365 = vmul.f32 %v3444, %v4276
        %v4366 = vmul.f32 %v3446, %v4278
        %v4367 = vmul.f32 %v3448, %v4280
        %v4368 = vmul.f32 %v3450, %v4282
        %v4369 = vmul.f32 %v3452, %v4284
        %v4370 = vmul.f32 %v3454, %v4286
        %v4371 = vmul.f32 %v3456, %v4288
        %v4372 = vmul.f32 %v3458, %v4290
        %v4373 = vmul.f32 %v3460, %v4292
        %v4374 = vmul.f32 %v3462, %v4294
        %v4375 = vmul.f32 %v3464, %v4296
        %v4376 = vmul.f32 %v3466, %v4298
        %v4377 = vmul.f32 %v3468, %v4300
        %v4378 = vmul.f32 %v3470, %v4302
        %v4379 = vmul.f32 %v3472, %v4304
        %v4380 = vmul.f32 %v3474, %v4306
        %v4381 = vmul.f32 %v3476, %v4308
        %v4382 = vmul.f32 %v3478, %v4310
        %v4383 = vmul.f32 %v3480, %v4312
        %v4384 = vmul.f32 %v3482, %v4314
        %v4385 = vmul.f32 %v3484, %v4316
        %v4386 = vmul.f32 %v3486, %v4318
        %v4387 = vmul.f32 %v3488, %v4320
        %v4388 = vmul.f32 %v3490, %v4322
        %v4389 = vmul.f32 %v3492, %v4324
        %v4390 = vmul.f32 %v3494, %v4326
        %4423 = vrot.lane.b32.xlu0 %v4359, 64
        %v4424 = vpop.permute.xlu0 %4423
        %4425 = vrot.lane.b32.xlu0 %v4360, 64
        %v4426 = vpop.permute.xlu0 %4425
        %4427 = vrot.lane.b32.xlu0 %v4361, 64
        %v4428 = vpop.permute.xlu0 %4427
        %4429 = vrot.lane.b32.xlu0 %v4362, 64
        %v4430 = vpop.permute.xlu0 %4429
        %4431 = vrot.lane.b32.xlu0 %v4363, 64
        %v4432 = vpop.permute.xlu0 %4431
        %4433 = vrot.lane.b32.xlu0 %v4364, 64
        %v4434 = vpop.permute.xlu0 %4433
        %4435 = vrot.lane.b32.xlu0 %v4365, 64
        %v4436 = vpop.permute.xlu0 %4435
        %4437 = vrot.lane.b32.xlu0 %v4366, 64
        %v4438 = vpop.permute.xlu0 %4437
        %4439 = vrot.lane.b32.xlu0 %v4367, 64
        %v4440 = vpop.permute.xlu0 %4439
        %4441 = vrot.lane.b32.xlu0 %v4368, 64
        %v4442 = vpop.permute.xlu0 %4441
        %4443 = vrot.lane.b32.xlu0 %v4369, 64
        %v4444 = vpop.permute.xlu0 %4443
        %4445 = vrot.lane.b32.xlu0 %v4370, 64
        %v4446 = vpop.permute.xlu0 %4445
        %4447 = vrot.lane.b32.xlu0 %v4371, 64
        %v4448 = vpop.permute.xlu0 %4447
        %4449 = vrot.lane.b32.xlu0 %v4372, 64
        %v4450 = vpop.permute.xlu0 %4449
        %4451 = vrot.lane.b32.xlu0 %v4373, 64
        %v4452 = vpop.permute.xlu0 %4451
        %4453 = vrot.lane.b32.xlu0 %v4374, 64
        %v4454 = vpop.permute.xlu0 %4453
        %4455 = vrot.lane.b32.xlu0 %v4375, 64
        %v4456 = vpop.permute.xlu0 %4455
        %4457 = vrot.lane.b32.xlu0 %v4376, 64
        %v4458 = vpop.permute.xlu0 %4457
        %4459 = vrot.lane.b32.xlu0 %v4377, 64
        %v4460 = vpop.permute.xlu0 %4459
        %4461 = vrot.lane.b32.xlu0 %v4378, 64
        %v4462 = vpop.permute.xlu0 %4461
        %4463 = vrot.lane.b32.xlu0 %v4379, 64
        %v4464 = vpop.permute.xlu0 %4463
        %4465 = vrot.lane.b32.xlu0 %v4380, 64
        %v4466 = vpop.permute.xlu0 %4465
        %4467 = vrot.lane.b32.xlu0 %v4381, 64
        %v4468 = vpop.permute.xlu0 %4467
        %4469 = vrot.lane.b32.xlu0 %v4382, 64
        %v4470 = vpop.permute.xlu0 %4469
        %4471 = vrot.lane.b32.xlu0 %v4383, 64
        %v4472 = vpop.permute.xlu0 %4471
        %4473 = vrot.lane.b32.xlu0 %v4384, 64
        %v4474 = vpop.permute.xlu0 %4473
        %4475 = vrot.lane.b32.xlu0 %v4385, 64
        %v4476 = vpop.permute.xlu0 %4475
        %4477 = vrot.lane.b32.xlu0 %v4386, 64
        %v4478 = vpop.permute.xlu0 %4477
        %4479 = vrot.lane.b32.xlu0 %v4387, 64
        %v4480 = vpop.permute.xlu0 %4479
        %4481 = vrot.lane.b32.xlu0 %v4388, 64
        %v4482 = vpop.permute.xlu0 %4481
        %4483 = vrot.lane.b32.xlu0 %v4389, 64
        %v4484 = vpop.permute.xlu0 %4483
        %4485 = vrot.lane.b32.xlu0 %v4390, 64
        %v4486 = vpop.permute.xlu0 %4485
        %4519 = vst.msk [vmem:[#allocation2 + $0x10] sm:$0xff] %vm433, %v4424
        %4520 = vst.msk [vmem:[#allocation2 + $0x18] sm:$0xff] %vm433, %v4426
        %4521 = vst.msk [vmem:[#allocation2 + $0x20] sm:$0xff] %vm433, %v4428
        %4522 = vst.msk [vmem:[#allocation2 + $0x28] sm:$0xff] %vm433, %v4430
        %4523 = vst.msk [vmem:[#allocation2 + $0x30] sm:$0xff] %vm433, %v4432
        %4524 = vst.msk [vmem:[#allocation2 + $0x38] sm:$0xff] %vm433, %v4434
        %4525 = vst.msk [vmem:[#allocation2 + $0x40] sm:$0xff] %vm433, %v4436
        %4526 = vst.msk [vmem:[#allocation2 + $0x48] sm:$0xff] %vm433, %v4438
        %4527 = vst.msk [vmem:[#allocation2 + $0x50] sm:$0xff] %vm433, %v4440
        %4528 = vst.msk [vmem:[#allocation2 + $0x58] sm:$0xff] %vm433, %v4442
        %4529 = vst.msk [vmem:[#allocation2 + $0x60] sm:$0xff] %vm433, %v4444
        %4530 = vst.msk [vmem:[#allocation2 + $0x68] sm:$0xff] %vm433, %v4446
        %4531 = vst.msk [vmem:[#allocation2 + $0x70] sm:$0xff] %vm433, %v4448
        %4532 = vst.msk [vmem:[#allocation2 + $0x78] sm:$0xff] %vm433, %v4450
        %4533 = vst.msk [vmem:[#allocation2 + $0x80] sm:$0xff] %vm433, %v4452
        %4534 = vst.msk [vmem:[#allocation2 + $0x88] sm:$0xff] %vm433, %v4454
        %4535 = vst.msk [vmem:[#allocation2 + $0x90] sm:$0xff] %vm433, %v4456
        %4536 = vst.msk [vmem:[#allocation2 + $0x98] sm:$0xff] %vm433, %v4458
        %4537 = vst.msk [vmem:[#allocation2 + $0xa0] sm:$0xff] %vm433, %v4460
        %4538 = vst.msk [vmem:[#allocation2 + $0xa8] sm:$0xff] %vm433, %v4462
        %4539 = vst.msk [vmem:[#allocation2 + $0xb0] sm:$0xff] %vm433, %v4464
        %4540 = vst.msk [vmem:[#allocation2 + $0xb8] sm:$0xff] %vm433, %v4466
        %4541 = vst.msk [vmem:[#allocation2 + $0xc0] sm:$0xff] %vm433, %v4468
        %4542 = vst.msk [vmem:[#allocation2 + $0xc8] sm:$0xff] %vm433, %v4470
        %4543 = vst.msk [vmem:[#allocation2 + $0xd0] sm:$0xff] %vm433, %v4472
        %4544 = vst.msk [vmem:[#allocation2 + $0xd8] sm:$0xff] %vm433, %v4474
        %4545 = vst.msk [vmem:[#allocation2 + $0xe0] sm:$0xff] %vm433, %v4476
        %4546 = vst.msk [vmem:[#allocation2 + $0xe8] sm:$0xff] %vm433, %v4478
        %4547 = vst.msk [vmem:[#allocation2 + $0xf0] sm:$0xff] %vm433, %v4480
        %4548 = vst.msk [vmem:[#allocation2 + $0xf8] sm:$0xff] %vm433, %v4482
        %4549 = vst.msk [vmem:[#allocation2 + $0x100] sm:$0xff] %vm433, %v4484
        %4550 = vst.msk [vmem:[#allocation2 + $0x108] sm:$0xff] %vm433, %v4486
        %vm4551 = vcmask 785920
        %4552 = vst.msk [vmem:[#allocation3 + $0x10] sm:$0xff] %vm4551, %v4359
        %4553 = vst.msk [vmem:[#allocation3 + $0x18] sm:$0xff] %vm4551, %v4360
        %4554 = vst.msk [vmem:[#allocation3 + $0x20] sm:$0xff] %vm4551, %v4361
        %4555 = vst.msk [vmem:[#allocation3 + $0x28] sm:$0xff] %vm4551, %v4362
        %4556 = vst.msk [vmem:[#allocation3 + $0x30] sm:$0xff] %vm4551, %v4363
        %4557 = vst.msk [vmem:[#allocation3 + $0x38] sm:$0xff] %vm4551, %v4364
        %4558 = vst.msk [vmem:[#allocation3 + $0x40] sm:$0xff] %vm4551, %v4365
        %4559 = vst.msk [vmem:[#allocation3 + $0x48] sm:$0xff] %vm4551, %v4366
        %4560 = vst.msk [vmem:[#allocation3 + $0x50] sm:$0xff] %vm4551, %v4367
        %4561 = vst.msk [vmem:[#allocation3 + $0x58] sm:$0xff] %vm4551, %v4368
        %4562 = vst.msk [vmem:[#allocation3 + $0x60] sm:$0xff] %vm4551, %v4369
        %4563 = vst.msk [vmem:[#allocation3 + $0x68] sm:$0xff] %vm4551, %v4370
        %4564 = vst.msk [vmem:[#allocation3 + $0x70] sm:$0xff] %vm4551, %v4371
        %4565 = vst.msk [vmem:[#allocation3 + $0x78] sm:$0xff] %vm4551, %v4372
        %4566 = vst.msk [vmem:[#allocation3 + $0x80] sm:$0xff] %vm4551, %v4373
        %4567 = vst.msk [vmem:[#allocation3 + $0x88] sm:$0xff] %vm4551, %v4374
        %4568 = vst.msk [vmem:[#allocation3 + $0x90] sm:$0xff] %vm4551, %v4375
        %4569 = vst.msk [vmem:[#allocation3 + $0x98] sm:$0xff] %vm4551, %v4376
        %4570 = vst.msk [vmem:[#allocation3 + $0xa0] sm:$0xff] %vm4551, %v4377
        %4571 = vst.msk [vmem:[#allocation3 + $0xa8] sm:$0xff] %vm4551, %v4378
        %4572 = vst.msk [vmem:[#allocation3 + $0xb0] sm:$0xff] %vm4551, %v4379
        %4573 = vst.msk [vmem:[#allocation3 + $0xb8] sm:$0xff] %vm4551, %v4380
        %4574 = vst.msk [vmem:[#allocation3 + $0xc0] sm:$0xff] %vm4551, %v4381
        %4575 = vst.msk [vmem:[#allocation3 + $0xc8] sm:$0xff] %vm4551, %v4382
        %4576 = vst.msk [vmem:[#allocation3 + $0xd0] sm:$0xff] %vm4551, %v4383
        %4577 = vst.msk [vmem:[#allocation3 + $0xd8] sm:$0xff] %vm4551, %v4384
        %4578 = vst.msk [vmem:[#allocation3 + $0xe0] sm:$0xff] %vm4551, %v4385
        %4579 = vst.msk [vmem:[#allocation3 + $0xe8] sm:$0xff] %vm4551, %v4386
        %4580 = vst.msk [vmem:[#allocation3 + $0xf0] sm:$0xff] %vm4551, %v4387
        %4581 = vst.msk [vmem:[#allocation3 + $0xf8] sm:$0xff] %vm4551, %v4388
        %4582 = vst.msk [vmem:[#allocation3 + $0x100] sm:$0xff] %vm4551, %v4389
        %4583 = vst.msk [vmem:[#allocation3 + $0x108] sm:$0xff] %vm4551, %v4390
        %v4584 = vld [vmem:[#allocation3] sm:$0xff]
        %v4585 = vld [vmem:[#allocation3 + $0x8] sm:$0xff]
        %v4586 = vld [vmem:[#allocation3 + $0x10] sm:$0xff]
        %v4587 = vld [vmem:[#allocation3 + $0x18] sm:$0xff]
        %v4588 = vld [vmem:[#allocation3 + $0x20] sm:$0xff]
        %v4589 = vld [vmem:[#allocation3 + $0x28] sm:$0xff]
        %v4590 = vld [vmem:[#allocation3 + $0x30] sm:$0xff]
        %v4591 = vld [vmem:[#allocation3 + $0x38] sm:$0xff]
        %v4592 = vld [vmem:[#allocation3 + $0x40] sm:$0xff]
        %v4593 = vld [vmem:[#allocation3 + $0x48] sm:$0xff]
        %v4594 = vld [vmem:[#allocation3 + $0x50] sm:$0xff]
        %v4595 = vld [vmem:[#allocation3 + $0x58] sm:$0xff]
        %v4596 = vld [vmem:[#allocation3 + $0x60] sm:$0xff]
        %v4597 = vld [vmem:[#allocation3 + $0x68] sm:$0xff]
        %v4598 = vld [vmem:[#allocation3 + $0x70] sm:$0xff]
        %v4599 = vld [vmem:[#allocation3 + $0x78] sm:$0xff]
        %v4600 = vld [vmem:[#allocation3 + $0x80] sm:$0xff]
        %v4601 = vld [vmem:[#allocation3 + $0x88] sm:$0xff]
        %v4602 = vld [vmem:[#allocation3 + $0x90] sm:$0xff]
        %v4603 = vld [vmem:[#allocation3 + $0x98] sm:$0xff]
        %v4604 = vld [vmem:[#allocation3 + $0xa0] sm:$0xff]
        %v4605 = vld [vmem:[#allocation3 + $0xa8] sm:$0xff]
        %v4606 = vld [vmem:[#allocation3 + $0xb0] sm:$0xff]
        %v4607 = vld [vmem:[#allocation3 + $0xb8] sm:$0xff]
        %v4608 = vld [vmem:[#allocation3 + $0xc0] sm:$0xff]
        %v4609 = vld [vmem:[#allocation3 + $0xc8] sm:$0xff]
        %v4610 = vld [vmem:[#allocation3 + $0xd0] sm:$0xff]
        %v4611 = vld [vmem:[#allocation3 + $0xd8] sm:$0xff]
        %v4612 = vld [vmem:[#allocation3 + $0xe0] sm:$0xff]
        %v4613 = vld [vmem:[#allocation3 + $0xe8] sm:$0xff]
        %v4614 = vld [vmem:[#allocation3 + $0xf0] sm:$0xff]
        %v4615 = vld [vmem:[#allocation3 + $0xf8] sm:$0xff]
        %v4616 = vld [vmem:[#allocation3 + $0x100] sm:$0xff]
        %v4617 = vld [vmem:[#allocation3 + $0x108] sm:$0xff]
        %v4618 = vld [vmem:[#allocation3 + $0x110] sm:$0xff]
        %v4619 = vld [vmem:[#allocation3 + $0x118] sm:$0xff]
        %v4621 = vrot.slane %v4619, 7
        %v4658 = vrot.slane %v4584, 7
        %v4659 = vrot.slane %v4585, 7
        %v4660 = vsel %vm1172, %v4658, %v4659
        %v4661 = vrot.slane %v4586, 7
        %v4662 = vsel %vm1172, %v4659, %v4661
        %v4663 = vrot.slane %v4587, 7
        %v4664 = vsel %vm1172, %v4661, %v4663
        %v4665 = vrot.slane %v4588, 7
        %v4666 = vsel %vm1172, %v4663, %v4665
        %v4667 = vrot.slane %v4589, 7
        %v4668 = vsel %vm1172, %v4665, %v4667
        %v4669 = vrot.slane %v4590, 7
        %v4670 = vsel %vm1172, %v4667, %v4669
        %v4671 = vrot.slane %v4591, 7
        %v4672 = vsel %vm1172, %v4669, %v4671
        %v4673 = vrot.slane %v4592, 7
        %v4674 = vsel %vm1172, %v4671, %v4673
        %v4675 = vrot.slane %v4593, 7
        %v4676 = vsel %vm1172, %v4673, %v4675
        %v4677 = vrot.slane %v4594, 7
        %v4678 = vsel %vm1172, %v4675, %v4677
        %v4679 = vrot.slane %v4595, 7
        %v4680 = vsel %vm1172, %v4677, %v4679
        %v4681 = vrot.slane %v4596, 7
        %v4682 = vsel %vm1172, %v4679, %v4681
        %v4683 = vrot.slane %v4597, 7
        %v4684 = vsel %vm1172, %v4681, %v4683
        %v4685 = vrot.slane %v4598, 7
        %v4686 = vsel %vm1172, %v4683, %v4685
        %v4687 = vrot.slane %v4599, 7
        %v4688 = vsel %vm1172, %v4685, %v4687
        %v4689 = vrot.slane %v4600, 7
        %v4690 = vsel %vm1172, %v4687, %v4689
        %v4691 = vrot.slane %v4601, 7
        %v4692 = vsel %vm1172, %v4689, %v4691
        %v4693 = vrot.slane %v4602, 7
        %v4694 = vsel %vm1172, %v4691, %v4693
        %v4695 = vrot.slane %v4603, 7
        %v4696 = vsel %vm1172, %v4693, %v4695
        %v4697 = vrot.slane %v4604, 7
        %v4698 = vsel %vm1172, %v4695, %v4697
        %v4699 = vrot.slane %v4605, 7
        %v4700 = vsel %vm1172, %v4697, %v4699
        %v4701 = vrot.slane %v4606, 7
        %v4702 = vsel %vm1172, %v4699, %v4701
        %v4703 = vrot.slane %v4607, 7
        %v4704 = vsel %vm1172, %v4701, %v4703
        %v4705 = vrot.slane %v4608, 7
        %v4706 = vsel %vm1172, %v4703, %v4705
        %v4707 = vrot.slane %v4609, 7
        %v4708 = vsel %vm1172, %v4705, %v4707
        %v4709 = vrot.slane %v4610, 7
        %v4710 = vsel %vm1172, %v4707, %v4709
        %v4711 = vrot.slane %v4611, 7
        %v4712 = vsel %vm1172, %v4709, %v4711
        %v4713 = vrot.slane %v4612, 7
        %v4714 = vsel %vm1172, %v4711, %v4713
        %v4715 = vrot.slane %v4613, 7
        %v4716 = vsel %vm1172, %v4713, %v4715
        %v4717 = vrot.slane %v4614, 7
        %v4718 = vsel %vm1172, %v4715, %v4717
        %v4719 = vrot.slane %v4615, 7
        %v4720 = vsel %vm1172, %v4717, %v4719
        %v4721 = vrot.slane %v4616, 7
        %v4722 = vsel %vm1172, %v4719, %v4721
        %v4723 = vrot.slane %v4617, 7
        %v4724 = vsel %vm1172, %v4721, %v4723
        %v4725 = vrot.slane %v4618, 7
        %v4726 = vsel %vm1172, %v4723, %v4725
        %v4727 = vsel %vm1172, %v4725, %v4621
        %v4764 = vsel %vm1172, %v4621, %v4658
        %v4765 = vsel %vm1316, %v4764, 0.0
        %v4766 = vsel %vm1317, %v4660, 0.0
        %v4767 = vsel %vm1318, %v4662, 0.0
        %v4768 = vsel %vm1319, %v4664, 0.0
        %v4769 = vsel %vm1320, %v4666, 0.0
        %v4770 = vsel %vm1321, %v4668, 0.0
        %v4771 = vsel %vm1322, %v4670, 0.0
        %v4772 = vsel %vm1323, %v4672, 0.0
        %v4773 = vsel %vm1324, %v4674, 0.0
        %v4774 = vsel %vm1325, %v4676, 0.0
        %v4775 = vsel %vm1326, %v4678, 0.0
        %v4776 = vsel %vm1327, %v4680, 0.0
        %v4777 = vsel %vm1328, %v4682, 0.0
        %v4778 = vsel %vm1329, %v4684, 0.0
        %v4779 = vsel %vm1330, %v4686, 0.0
        %v4780 = vsel %vm1331, %v4688, 0.0
        %v4781 = vsel %vm1332, %v4690, 0.0
        %v4782 = vsel %vm1333, %v4692, 0.0
        %v4783 = vsel %vm1334, %v4694, 0.0
        %v4784 = vsel %vm1335, %v4696, 0.0
        %v4785 = vsel %vm1336, %v4698, 0.0
        %v4786 = vsel %vm1337, %v4700, 0.0
        %v4787 = vsel %vm1338, %v4702, 0.0
        %v4788 = vsel %vm1339, %v4704, 0.0
        %v4789 = vsel %vm1340, %v4706, 0.0
        %v4790 = vsel %vm1341, %v4708, 0.0
        %v4791 = vsel %vm1342, %v4710, 0.0
        %v4792 = vsel %vm1343, %v4712, 0.0
        %v4793 = vsel %vm1344, %v4714, 0.0
        %v4794 = vsel %vm1345, %v4716, 0.0
        %v4795 = vsel %vm1346, %v4718, 0.0
        %v4796 = vsel %vm1347, %v4720, 0.0
        %v4797 = vsel %vm1348, %v4722, 0.0
        %v4798 = vsel %vm1349, %v4724, 0.0
        %v4799 = vsel %vm1350, %v4726, 0.0
        %v4800 = vsel %vm1351, %v4727, 0.0
        %v4801 = vrot.slane %v4584, 1
        %v4802 = vrot.slane %v4585, 1
        %v4803 = vsel %vm1388, %v4801, %v4802
        %v4804 = vrot.slane %v4586, 1
        %v4805 = vsel %vm1388, %v4802, %v4804
        %v4806 = vrot.slane %v4587, 1
        %v4807 = vsel %vm1388, %v4804, %v4806
        %v4808 = vrot.slane %v4588, 1
        %v4809 = vsel %vm1388, %v4806, %v4808
        %v4810 = vrot.slane %v4589, 1
        %v4811 = vsel %vm1388, %v4808, %v4810
        %v4812 = vrot.slane %v4590, 1
        %v4813 = vsel %vm1388, %v4810, %v4812
        %v4814 = vrot.slane %v4591, 1
        %v4815 = vsel %vm1388, %v4812, %v4814
        %v4816 = vrot.slane %v4592, 1
        %v4817 = vsel %vm1388, %v4814, %v4816
        %v4818 = vrot.slane %v4593, 1
        %v4819 = vsel %vm1388, %v4816, %v4818
        %v4820 = vrot.slane %v4594, 1
        %v4821 = vsel %vm1388, %v4818, %v4820
        %v4822 = vrot.slane %v4595, 1
        %v4823 = vsel %vm1388, %v4820, %v4822
        %v4824 = vrot.slane %v4596, 1
        %v4825 = vsel %vm1388, %v4822, %v4824
        %v4826 = vrot.slane %v4597, 1
        %v4827 = vsel %vm1388, %v4824, %v4826
        %v4828 = vrot.slane %v4598, 1
        %v4829 = vsel %vm1388, %v4826, %v4828
        %v4830 = vrot.slane %v4599, 1
        %v4831 = vsel %vm1388, %v4828, %v4830
        %v4832 = vrot.slane %v4600, 1
        %v4833 = vsel %vm1388, %v4830, %v4832
        %v4834 = vrot.slane %v4601, 1
        %v4835 = vsel %vm1388, %v4832, %v4834
        %v4836 = vrot.slane %v4602, 1
        %v4837 = vsel %vm1388, %v4834, %v4836
        %v4838 = vrot.slane %v4603, 1
        %v4839 = vsel %vm1388, %v4836, %v4838
        %v4840 = vrot.slane %v4604, 1
        %v4841 = vsel %vm1388, %v4838, %v4840
        %v4842 = vrot.slane %v4605, 1
        %v4843 = vsel %vm1388, %v4840, %v4842
        %v4844 = vrot.slane %v4606, 1
        %v4845 = vsel %vm1388, %v4842, %v4844
        %v4846 = vrot.slane %v4607, 1
        %v4847 = vsel %vm1388, %v4844, %v4846
        %v4848 = vrot.slane %v4608, 1
        %v4849 = vsel %vm1388, %v4846, %v4848
        %v4850 = vrot.slane %v4609, 1
        %v4851 = vsel %vm1388, %v4848, %v4850
        %v4852 = vrot.slane %v4610, 1
        %v4853 = vsel %vm1388, %v4850, %v4852
        %v4854 = vrot.slane %v4611, 1
        %v4855 = vsel %vm1388, %v4852, %v4854
        %v4856 = vrot.slane %v4612, 1
        %v4857 = vsel %vm1388, %v4854, %v4856
        %v4858 = vrot.slane %v4613, 1
        %v4859 = vsel %vm1388, %v4856, %v4858
        %v4860 = vrot.slane %v4614, 1
        %v4861 = vsel %vm1388, %v4858, %v4860
        %v4862 = vrot.slane %v4615, 1
        %v4863 = vsel %vm1388, %v4860, %v4862
        %v4864 = vrot.slane %v4616, 1
        %v4865 = vsel %vm1388, %v4862, %v4864
        %v4866 = vrot.slane %v4617, 1
        %v4867 = vsel %vm1388, %v4864, %v4866
        %v4868 = vrot.slane %v4618, 1
        %v4869 = vsel %vm1388, %v4866, %v4868
        %v4870 = vrot.slane %v4619, 1
        %v4871 = vsel %vm1388, %v4868, %v4870
        %v4909 = vsel %vm1388, %v4870, %v4801
        %v4910 = vsel %vm1534, %v4803, 0.0
        %v4911 = vsel %vm1535, %v4805, 0.0
        %v4912 = vsel %vm1536, %v4807, 0.0
        %v4913 = vsel %vm1537, %v4809, 0.0
        %v4914 = vsel %vm1538, %v4811, 0.0
        %v4915 = vsel %vm1539, %v4813, 0.0
        %v4916 = vsel %vm1540, %v4815, 0.0
        %v4917 = vsel %vm1541, %v4817, 0.0
        %v4918 = vsel %vm1542, %v4819, 0.0
        %v4919 = vsel %vm1543, %v4821, 0.0
        %v4920 = vsel %vm1544, %v4823, 0.0
        %v4921 = vsel %vm1545, %v4825, 0.0
        %v4922 = vsel %vm1546, %v4827, 0.0
        %v4923 = vsel %vm1547, %v4829, 0.0
        %v4924 = vsel %vm1548, %v4831, 0.0
        %v4925 = vsel %vm1549, %v4833, 0.0
        %v4926 = vsel %vm1550, %v4835, 0.0
        %v4927 = vsel %vm1551, %v4837, 0.0
        %v4928 = vsel %vm1552, %v4839, 0.0
        %v4929 = vsel %vm1553, %v4841, 0.0
        %v4930 = vsel %vm1554, %v4843, 0.0
        %v4931 = vsel %vm1555, %v4845, 0.0
        %v4932 = vsel %vm1556, %v4847, 0.0
        %v4933 = vsel %vm1557, %v4849, 0.0
        %v4934 = vsel %vm1558, %v4851, 0.0
        %v4935 = vsel %vm1559, %v4853, 0.0
        %v4936 = vsel %vm1560, %v4855, 0.0
        %v4937 = vsel %vm1561, %v4857, 0.0
        %v4938 = vsel %vm1562, %v4859, 0.0
        %v4939 = vsel %vm1563, %v4861, 0.0
        %v4940 = vsel %vm1564, %v4863, 0.0
        %v4941 = vsel %vm1565, %v4865, 0.0
        %v4942 = vsel %vm1566, %v4867, 0.0
        %v4943 = vsel %vm1567, %v4869, 0.0
        %v4944 = vsel %vm1568, %v4871, 0.0
        %v4945 = vsel %vm1569, %v4909, 0.0
        %v4946 = vpack.c.bf16 %v4766, %v4765
        %v4947 = vpack.c.bf16 %v4768, %v4767
        %v4948 = vpack.c.bf16 %v4770, %v4769
        %v4949 = vpack.c.bf16 %v4772, %v4771
        %v4950 = vpack.c.bf16 %v4774, %v4773
        %v4951 = vpack.c.bf16 %v4776, %v4775
        %v4952 = vpack.c.bf16 %v4778, %v4777
        %v4953 = vpack.c.bf16 %v4780, %v4779
        %v4954 = vpack.c.bf16 %v4782, %v4781
        %v4955 = vpack.c.bf16 %v4784, %v4783
        %v4956 = vpack.c.bf16 %v4786, %v4785
        %v4957 = vpack.c.bf16 %v4788, %v4787
        %v4958 = vpack.c.bf16 %v4790, %v4789
        %v4959 = vpack.c.bf16 %v4792, %v4791
        %v4960 = vpack.c.bf16 %v4794, %v4793
        %v4961 = vpack.c.bf16 %v4796, %v4795
        %v4962 = vpack.c.bf16 %v4798, %v4797
        %v4963 = vpack.c.bf16 %v4800, %v4799
        %v4964 = vpack.c.bf16 %v4585, %v4584
        %v4965 = vpack.c.bf16 %v4587, %v4586
        %v4966 = vpack.c.bf16 %v4589, %v4588
        %v4967 = vpack.c.bf16 %v4591, %v4590
        %v4968 = vpack.c.bf16 %v4593, %v4592
        %v4969 = vpack.c.bf16 %v4595, %v4594
        %v4970 = vpack.c.bf16 %v4597, %v4596
        %v4971 = vpack.c.bf16 %v4599, %v4598
        %v4972 = vpack.c.bf16 %v4601, %v4600
        %v4973 = vpack.c.bf16 %v4603, %v4602
        %v4974 = vpack.c.bf16 %v4605, %v4604
        %v4975 = vpack.c.bf16 %v4607, %v4606
        %v4976 = vpack.c.bf16 %v4609, %v4608
        %v4977 = vpack.c.bf16 %v4611, %v4610
        %v4978 = vpack.c.bf16 %v4613, %v4612
        %v4979 = vpack.c.bf16 %v4615, %v4614
        %v4980 = vpack.c.bf16 %v4617, %v4616
        %v4981 = vpack.c.bf16 %v4619, %v4618
        %v4982 = vpack.c.bf16 %v4911, %v4910
        %v4983 = vpack.c.bf16 %v4913, %v4912
        %v4984 = vpack.c.bf16 %v4915, %v4914
        %v4985 = vpack.c.bf16 %v4917, %v4916
        %v4986 = vpack.c.bf16 %v4919, %v4918
        %v4987 = vpack.c.bf16 %v4921, %v4920
        %v4988 = vpack.c.bf16 %v4923, %v4922
        %v4989 = vpack.c.bf16 %v4925, %v4924
        %v4990 = vpack.c.bf16 %v4927, %v4926
        %v4991 = vpack.c.bf16 %v4929, %v4928
        %v4992 = vpack.c.bf16 %v4931, %v4930
        %v4993 = vpack.c.bf16 %v4933, %v4932
        %v4994 = vpack.c.bf16 %v4935, %v4934
        %v4995 = vpack.c.bf16 %v4937, %v4936
        %v4996 = vpack.c.bf16 %v4939, %v4938
        %v4997 = vpack.c.bf16 %v4941, %v4940
        %v4998 = vpack.c.bf16 %v4943, %v4942
        %v4999 = vpack.c.bf16 %v4945, %v4944
        %v5000 = vld [vmem:[%s4] sm:$0xff]
        %v5001 = vld [vmem:[%s4 + $0x8] sm:$0xff]
        %v5002 = vld [vmem:[%s4 + $0x10] sm:$0xff]
        %v5003 = vld [vmem:[%s4 + $0x18] sm:$0xff]
        %v5004 = vld [vmem:[%s4 + $0x20] sm:$0xff]
        %v5005 = vld [vmem:[%s4 + $0x28] sm:$0xff]
        %v5006 = vld [vmem:[%s4 + $0x30] sm:$0xff]
        %v5007 = vld [vmem:[%s4 + $0x38] sm:$0xff]
        %v5008 = vld [vmem:[%s4 + $0x40] sm:$0xff]
        %v5009 = vld [vmem:[%s4 + $0x48] sm:$0xff]
        %v5010 = vld [vmem:[%s4 + $0x50] sm:$0xff]
        %v5011 = vld [vmem:[%s4 + $0x58] sm:$0xff]
        %v5012 = vld [vmem:[%s4 + $0x60] sm:$0xff]
        %v5013 = vld [vmem:[%s4 + $0x68] sm:$0xff]
        %v5014 = vld [vmem:[%s4 + $0x70] sm:$0xff]
        %v5015 = vld [vmem:[%s4 + $0x78] sm:$0xff]
        %v5016 = vld [vmem:[%s4 + $0x80] sm:$0xff]
        %v5017 = vld [vmem:[%s4 + $0x88] sm:$0xff]
        %v5018 = vld [vmem:[%s4 + $0x90] sm:$0xff]
        %v5019 = vld [vmem:[%s4 + $0x98] sm:$0xff]
        %v5020 = vld [vmem:[%s4 + $0xa0] sm:$0xff]
        %v5021 = vld [vmem:[%s4 + $0xa8] sm:$0xff]
        %v5022 = vld [vmem:[%s4 + $0xb0] sm:$0xff]
        %v5023 = vld [vmem:[%s4 + $0xb8] sm:$0xff]
        %v5024 = vld [vmem:[%s4 + $0xc0] sm:$0xff]
        %v5025 = vld [vmem:[%s4 + $0xc8] sm:$0xff]
        %v5026 = vld [vmem:[%s4 + $0xd0] sm:$0xff]
        %v5027 = vld [vmem:[%s4 + $0xd8] sm:$0xff]
        %v5028 = vld [vmem:[%s4 + $0xe0] sm:$0xff]
        %v5029 = vld [vmem:[%s4 + $0xe8] sm:$0xff]
        %v5030 = vld [vmem:[%s4 + $0xf0] sm:$0xff]
        %v5031 = vld [vmem:[%s4 + $0xf8] sm:$0xff]
        %v5032 = vld [vmem:[%s4 + $0x100] sm:$0xff]
        %v5033 = vld [vmem:[%s4 + $0x108] sm:$0xff]
        %v5034 = vld [vmem:[%s4 + $0x110] sm:$0xff]
        %v5035 = vld [vmem:[%s4 + $0x118] sm:$0xff]
        %v5036 = vld [vmem:[%s4 + $0x120] sm:$0xff]
        %v5037 = vld [vmem:[%s4 + $0x128] sm:$0xff]
        %v5038 = vld [vmem:[%s4 + $0x130] sm:$0xff]
        %v5039 = vld [vmem:[%s4 + $0x138] sm:$0xff]
        %v5040 = vld [vmem:[%s4 + $0x140] sm:$0xff]
        %v5041 = vld [vmem:[%s4 + $0x148] sm:$0xff]
        %v5042 = vld [vmem:[%s4 + $0x150] sm:$0xff]
        %v5043 = vld [vmem:[%s4 + $0x158] sm:$0xff]
        %v5044 = vld [vmem:[%s4 + $0x160] sm:$0xff]
        %v5045 = vld [vmem:[%s4 + $0x168] sm:$0xff]
        %v5046 = vld [vmem:[%s4 + $0x170] sm:$0xff]
        %v5047 = vld [vmem:[%s4 + $0x178] sm:$0xff]
        %v5048 = vld [vmem:[%s4 + $0x180] sm:$0xff]
        %v5049 = vld [vmem:[%s4 + $0x188] sm:$0xff]
        %v5050 = vld [vmem:[%s4 + $0x190] sm:$0xff]
        %v5051 = vld [vmem:[%s4 + $0x198] sm:$0xff]
        %v5052 = vld [vmem:[%s4 + $0x1a0] sm:$0xff]
        %v5053 = vld [vmem:[%s4 + $0x1a8] sm:$0xff]
        %v5054 = vld [vmem:[%s4 + $0x1b0] sm:$0xff]
        %v5055 = vld [vmem:[%s4 + $0x1b8] sm:$0xff]
        %v5056 = vld [vmem:[%s4 + $0x1c0] sm:$0xff]
        %v5057 = vld [vmem:[%s4 + $0x1c8] sm:$0xff]
        %v5058 = vld [vmem:[%s4 + $0x1d0] sm:$0xff]
        %v5059 = vld [vmem:[%s4 + $0x1d8] sm:$0xff]
        %v5060 = vld [vmem:[%s4 + $0x1e0] sm:$0xff]
        %v5061 = vld [vmem:[%s4 + $0x1e8] sm:$0xff]
        %v5062 = vld [vmem:[%s4 + $0x1f0] sm:$0xff]
        %v5063 = vld [vmem:[%s4 + $0x1f8] sm:$0xff]
        %v5064 = vld [vmem:[%s4 + $0x200] sm:$0xff]
        %v5065 = vld [vmem:[%s4 + $0x208] sm:$0xff]
        %v5066 = vld [vmem:[%s4 + $0x210] sm:$0xff]
        %v5067 = vld [vmem:[%s4 + $0x218] sm:$0xff]
        %v5068 = vld [vmem:[%s4 + $0x220] sm:$0xff]
        %v5069 = vld [vmem:[%s4 + $0x228] sm:$0xff]
        %v5070 = vld [vmem:[%s4 + $0x230] sm:$0xff]
        %v5071 = vld [vmem:[%s4 + $0x238] sm:$0xff]
        %v5072 = vld [vmem:[%s4 + $0x240] sm:$0xff]
        %v5073 = vld [vmem:[%s4 + $0x248] sm:$0xff]
        %v5074 = vld [vmem:[%s4 + $0x250] sm:$0xff]
        %v5075 = vld [vmem:[%s4 + $0x258] sm:$0xff]
        %v5076 = vld [vmem:[%s4 + $0x260] sm:$0xff]
        %v5077 = vld [vmem:[%s4 + $0x268] sm:$0xff]
        %v5078 = vld [vmem:[%s4 + $0x270] sm:$0xff]
        %v5079 = vld [vmem:[%s4 + $0x278] sm:$0xff]
        %v5080 = vld [vmem:[%s4 + $0x280] sm:$0xff]
        %v5081 = vld [vmem:[%s4 + $0x288] sm:$0xff]
        %v5082 = vld [vmem:[%s4 + $0x290] sm:$0xff]
        %v5083 = vld [vmem:[%s4 + $0x298] sm:$0xff]
        %v5084 = vld [vmem:[%s4 + $0x2a0] sm:$0xff]
        %v5085 = vld [vmem:[%s4 + $0x2a8] sm:$0xff]
        %v5086 = vld [vmem:[%s4 + $0x2b0] sm:$0xff]
        %v5087 = vld [vmem:[%s4 + $0x2b8] sm:$0xff]
        %v5088 = vld [vmem:[%s4 + $0x2c0] sm:$0xff]
        %v5089 = vld [vmem:[%s4 + $0x2c8] sm:$0xff]
        %v5090 = vld [vmem:[%s4 + $0x2d0] sm:$0xff]
        %v5091 = vld [vmem:[%s4 + $0x2d8] sm:$0xff]
        %v5092 = vld [vmem:[%s4 + $0x2e0] sm:$0xff]
        %v5093 = vld [vmem:[%s4 + $0x2e8] sm:$0xff]
        %v5094 = vld [vmem:[%s4 + $0x2f0] sm:$0xff]
        %v5095 = vld [vmem:[%s4 + $0x2f8] sm:$0xff]
        %v5096 = vld [vmem:[%s4 + $0x300] sm:$0xff]
        %v5097 = vld [vmem:[%s4 + $0x308] sm:$0xff]
        %v5098 = vld [vmem:[%s4 + $0x310] sm:$0xff]
        %v5099 = vld [vmem:[%s4 + $0x318] sm:$0xff]
        %v5100 = vld [vmem:[%s4 + $0x320] sm:$0xff]
        %v5101 = vld [vmem:[%s4 + $0x328] sm:$0xff]
        %v5102 = vld [vmem:[%s4 + $0x330] sm:$0xff]
        %v5103 = vld [vmem:[%s4 + $0x338] sm:$0xff]
        %v5104 = vld [vmem:[%s4 + $0x340] sm:$0xff]
        %v5105 = vld [vmem:[%s4 + $0x348] sm:$0xff]
        %v5106 = vld [vmem:[%s4 + $0x350] sm:$0xff]
        %v5107 = vld [vmem:[%s4 + $0x358] sm:$0xff]
        %v5108 = vld [vmem:[%s4 + $0x360] sm:$0xff]
        %v5109 = vld [vmem:[%s4 + $0x368] sm:$0xff]
        %v5110 = vld [vmem:[%s4 + $0x370] sm:$0xff]
        %v5111 = vld [vmem:[%s4 + $0x378] sm:$0xff]
        %v5112 = vld [vmem:[%s4 + $0x380] sm:$0xff]
        %v5113 = vld [vmem:[%s4 + $0x388] sm:$0xff]
        %v5114 = vld [vmem:[%s4 + $0x390] sm:$0xff]
        %v5115 = vld [vmem:[%s4 + $0x398] sm:$0xff]
        %v5116 = vld [vmem:[%s4 + $0x3a0] sm:$0xff]
        %v5117 = vld [vmem:[%s4 + $0x3a8] sm:$0xff]
        %v5118 = vld [vmem:[%s4 + $0x3b0] sm:$0xff]
        %v5119 = vld [vmem:[%s4 + $0x3b8] sm:$0xff]
        %v5120 = vld [vmem:[%s4 + $0x3c0] sm:$0xff]
        %v5121 = vld [vmem:[%s4 + $0x3c8] sm:$0xff]
        %v5122 = vld [vmem:[%s4 + $0x3d0] sm:$0xff]
        %v5123 = vld [vmem:[%s4 + $0x3d8] sm:$0xff]
        %v5124 = vld [vmem:[%s4 + $0x3e0] sm:$0xff]
        %v5125 = vld [vmem:[%s4 + $0x3e8] sm:$0xff]
        %v5126 = vld [vmem:[%s4 + $0x3f0] sm:$0xff]
        %v5127 = vld [vmem:[%s4 + $0x3f8] sm:$0xff]
        %v5128 = vld [vmem:[%s4 + $0x400] sm:$0xff]
        %v5129 = vld [vmem:[%s4 + $0x408] sm:$0xff]
        %v5130 = vld [vmem:[%s4 + $0x410] sm:$0xff]
        %v5131 = vld [vmem:[%s4 + $0x418] sm:$0xff]
        %v5132 = vld [vmem:[%s4 + $0x420] sm:$0xff]
        %v5133 = vld [vmem:[%s4 + $0x428] sm:$0xff]
        %v5134 = vld [vmem:[%s4 + $0x430] sm:$0xff]
        %v5135 = vld [vmem:[%s4 + $0x438] sm:$0xff]
        %v5136 = vld [vmem:[%s4 + $0x440] sm:$0xff]
        %v5137 = vld [vmem:[%s4 + $0x448] sm:$0xff]
        %v5138 = vld [vmem:[%s4 + $0x450] sm:$0xff]
        %v5139 = vld [vmem:[%s4 + $0x458] sm:$0xff]
        %v5140 = vld [vmem:[%s4 + $0x460] sm:$0xff]
        %v5141 = vld [vmem:[%s4 + $0x468] sm:$0xff]
        %v5142 = vld [vmem:[%s4 + $0x470] sm:$0xff]
        %v5143 = vld [vmem:[%s4 + $0x478] sm:$0xff]
        %v5145 = vlaneseq
        %v5146 = vshrl.u32 %v5145, 7
        %v5147 = vsub.s32 0, %v5146
        %v5148 = vrot.slane %v1041, %v5147
        %v5149 = vlaneseq
        %v5150 = vshrl.u32 %v5149, 7
        %v5151 = vsub.s32 1, %v5150
        %v5152 = vrot.slane %v1041, %v5151
        %v5299 = vunpack.c.l.b16 %v5000
        %v5300 = vunpack.c.h.b16 %v5000
        %v5301 = vunpack.c.l.b16 %v5001
        %v5302 = vunpack.c.h.b16 %v5001
        %v5303 = vunpack.c.l.b16 %v5002
        %v5304 = vunpack.c.h.b16 %v5002
        %v5305 = vunpack.c.l.b16 %v5003
        %v5306 = vunpack.c.h.b16 %v5003
        %v5307 = vunpack.c.l.b16 %v5004
        %v5308 = vunpack.c.h.b16 %v5004
        %v5309 = vunpack.c.l.b16 %v5005
        %v5310 = vunpack.c.h.b16 %v5005
        %v5311 = vunpack.c.l.b16 %v5006
        %v5312 = vunpack.c.h.b16 %v5006
        %v5313 = vunpack.c.l.b16 %v5007
        %v5314 = vunpack.c.h.b16 %v5007
        %v5315 = vunpack.c.l.b16 %v5008
        %v5316 = vunpack.c.h.b16 %v5008
        %v5317 = vunpack.c.l.b16 %v5009
        %v5318 = vunpack.c.h.b16 %v5009
        %v5319 = vunpack.c.l.b16 %v5010
        %v5320 = vunpack.c.h.b16 %v5010
        %v5321 = vunpack.c.l.b16 %v5011
        %v5322 = vunpack.c.h.b16 %v5011
        %v5323 = vunpack.c.l.b16 %v5012
        %v5324 = vunpack.c.h.b16 %v5012
        %v5325 = vunpack.c.l.b16 %v5013
        %v5326 = vunpack.c.h.b16 %v5013
        %v5327 = vunpack.c.l.b16 %v5014
        %v5328 = vunpack.c.h.b16 %v5014
        %v5329 = vunpack.c.l.b16 %v5015
        %v5330 = vunpack.c.h.b16 %v5015
        %v5331 = vunpack.c.l.b16 %v5016
        %v5332 = vunpack.c.h.b16 %v5016
        %v5333 = vunpack.c.l.b16 %v5017
        %v5334 = vunpack.c.h.b16 %v5017
        %v5335 = vunpack.c.l.b16 %v5018
        %v5336 = vunpack.c.h.b16 %v5018
        %v5337 = vunpack.c.l.b16 %v5019
        %v5338 = vunpack.c.h.b16 %v5019
        %v5339 = vunpack.c.l.b16 %v5020
        %v5340 = vunpack.c.h.b16 %v5020
        %v5341 = vunpack.c.l.b16 %v5021
        %v5342 = vunpack.c.h.b16 %v5021
        %v5343 = vunpack.c.l.b16 %v5022
        %v5344 = vunpack.c.h.b16 %v5022
        %v5345 = vunpack.c.l.b16 %v5023
        %v5346 = vunpack.c.h.b16 %v5023
        %v5347 = vunpack.c.l.b16 %v5024
        %v5348 = vunpack.c.h.b16 %v5024
        %v5349 = vunpack.c.l.b16 %v5025
        %v5350 = vunpack.c.h.b16 %v5025
        %v5351 = vunpack.c.l.b16 %v5026
        %v5352 = vunpack.c.h.b16 %v5026
        %v5353 = vunpack.c.l.b16 %v5027
        %v5354 = vunpack.c.h.b16 %v5027
        %v5355 = vunpack.c.l.b16 %v5028
        %v5356 = vunpack.c.h.b16 %v5028
        %v5357 = vunpack.c.l.b16 %v5029
        %v5358 = vunpack.c.h.b16 %v5029
        %v5359 = vunpack.c.l.b16 %v5030
        %v5360 = vunpack.c.h.b16 %v5030
        %v5361 = vunpack.c.l.b16 %v5031
        %v5362 = vunpack.c.h.b16 %v5031
        %v5363 = vunpack.c.l.b16 %v5032
        %v5364 = vunpack.c.h.b16 %v5032
        %v5365 = vunpack.c.l.b16 %v5033
        %v5366 = vunpack.c.h.b16 %v5033
        %v5367 = vunpack.c.l.b16 %v5034
        %v5368 = vunpack.c.h.b16 %v5034
        %v5369 = vunpack.c.l.b16 %v5035
        %v5370 = vunpack.c.h.b16 %v5035
        %v5371 = vunpack.c.l.b16 %v5036
        %v5372 = vunpack.c.h.b16 %v5036
        %v5373 = vunpack.c.l.b16 %v5037
        %v5374 = vunpack.c.h.b16 %v5037
        %v5375 = vunpack.c.l.b16 %v5038
        %v5376 = vunpack.c.h.b16 %v5038
        %v5377 = vunpack.c.l.b16 %v5039
        %v5378 = vunpack.c.h.b16 %v5039
        %v5379 = vunpack.c.l.b16 %v5040
        %v5380 = vunpack.c.h.b16 %v5040
        %v5381 = vunpack.c.l.b16 %v5041
        %v5382 = vunpack.c.h.b16 %v5041
        %v5383 = vunpack.c.l.b16 %v5042
        %v5384 = vunpack.c.h.b16 %v5042
        %v5385 = vunpack.c.l.b16 %v5043
        %v5386 = vunpack.c.h.b16 %v5043
        %v5387 = vunpack.c.l.b16 %v5044
        %v5388 = vunpack.c.h.b16 %v5044
        %v5389 = vunpack.c.l.b16 %v5045
        %v5390 = vunpack.c.h.b16 %v5045
        %v5391 = vunpack.c.l.b16 %v5046
        %v5392 = vunpack.c.h.b16 %v5046
        %v5393 = vunpack.c.l.b16 %v5047
        %v5394 = vunpack.c.h.b16 %v5047
        %v5395 = vunpack.c.l.b16 %v5048
        %v5396 = vunpack.c.h.b16 %v5048
        %v5397 = vunpack.c.l.b16 %v5049
        %v5398 = vunpack.c.h.b16 %v5049
        %v5399 = vunpack.c.l.b16 %v5050
        %v5400 = vunpack.c.h.b16 %v5050
        %v5401 = vunpack.c.l.b16 %v5051
        %v5402 = vunpack.c.h.b16 %v5051
        %v5403 = vunpack.c.l.b16 %v5052
        %v5404 = vunpack.c.h.b16 %v5052
        %v5405 = vunpack.c.l.b16 %v5053
        %v5406 = vunpack.c.h.b16 %v5053
        %v5407 = vunpack.c.l.b16 %v5054
        %v5408 = vunpack.c.h.b16 %v5054
        %v5409 = vunpack.c.l.b16 %v5055
        %v5410 = vunpack.c.h.b16 %v5055
        %v5411 = vunpack.c.l.b16 %v5056
        %v5412 = vunpack.c.h.b16 %v5056
        %v5413 = vunpack.c.l.b16 %v5057
        %v5414 = vunpack.c.h.b16 %v5057
        %v5415 = vunpack.c.l.b16 %v5058
        %v5416 = vunpack.c.h.b16 %v5058
        %v5417 = vunpack.c.l.b16 %v5059
        %v5418 = vunpack.c.h.b16 %v5059
        %v5419 = vunpack.c.l.b16 %v5060
        %v5420 = vunpack.c.h.b16 %v5060
        %v5421 = vunpack.c.l.b16 %v5061
        %v5422 = vunpack.c.h.b16 %v5061
        %v5423 = vunpack.c.l.b16 %v5062
        %v5424 = vunpack.c.h.b16 %v5062
        %v5425 = vunpack.c.l.b16 %v5063
        %v5426 = vunpack.c.h.b16 %v5063
        %v5427 = vunpack.c.l.b16 %v5064
        %v5428 = vunpack.c.h.b16 %v5064
        %v5429 = vunpack.c.l.b16 %v5065
        %v5430 = vunpack.c.h.b16 %v5065
        %v5431 = vunpack.c.l.b16 %v5066
        %v5432 = vunpack.c.h.b16 %v5066
        %v5433 = vunpack.c.l.b16 %v5067
        %v5434 = vunpack.c.h.b16 %v5067
        %v5435 = vunpack.c.l.b16 %v5068
        %v5436 = vunpack.c.h.b16 %v5068
        %v5437 = vunpack.c.l.b16 %v5069
        %v5438 = vunpack.c.h.b16 %v5069
        %v5439 = vunpack.c.l.b16 %v5070
        %v5440 = vunpack.c.h.b16 %v5070
        %v5441 = vunpack.c.l.b16 %v5071
        %v5442 = vunpack.c.h.b16 %v5071
        %v5443 = vunpack.c.l.b16 %v5072
        %v5444 = vunpack.c.h.b16 %v5072
        %v5445 = vunpack.c.l.b16 %v5073
        %v5446 = vunpack.c.h.b16 %v5073
        %v5447 = vunpack.c.l.b16 %v5074
        %v5448 = vunpack.c.h.b16 %v5074
        %v5449 = vunpack.c.l.b16 %v5075
        %v5450 = vunpack.c.h.b16 %v5075
        %v5451 = vunpack.c.l.b16 %v5076
        %v5452 = vunpack.c.h.b16 %v5076
        %v5453 = vunpack.c.l.b16 %v5077
        %v5454 = vunpack.c.h.b16 %v5077
        %v5455 = vunpack.c.l.b16 %v5078
        %v5456 = vunpack.c.h.b16 %v5078
        %v5457 = vunpack.c.l.b16 %v5079
        %v5458 = vunpack.c.h.b16 %v5079
        %v5459 = vunpack.c.l.b16 %v5080
        %v5460 = vunpack.c.h.b16 %v5080
        %v5461 = vunpack.c.l.b16 %v5081
        %v5462 = vunpack.c.h.b16 %v5081
        %v5463 = vunpack.c.l.b16 %v5082
        %v5464 = vunpack.c.h.b16 %v5082
        %v5465 = vunpack.c.l.b16 %v5083
        %v5466 = vunpack.c.h.b16 %v5083
        %v5467 = vunpack.c.l.b16 %v5084
        %v5468 = vunpack.c.h.b16 %v5084
        %v5469 = vunpack.c.l.b16 %v5085
        %v5470 = vunpack.c.h.b16 %v5085
        %v5471 = vunpack.c.l.b16 %v5086
        %v5472 = vunpack.c.h.b16 %v5086
        %v5473 = vunpack.c.l.b16 %v5087
        %v5474 = vunpack.c.h.b16 %v5087
        %v5475 = vunpack.c.l.b16 %v5088
        %v5476 = vunpack.c.h.b16 %v5088
        %v5477 = vunpack.c.l.b16 %v5089
        %v5478 = vunpack.c.h.b16 %v5089
        %v5479 = vunpack.c.l.b16 %v5090
        %v5480 = vunpack.c.h.b16 %v5090
        %v5481 = vunpack.c.l.b16 %v5091
        %v5482 = vunpack.c.h.b16 %v5091
        %v5483 = vunpack.c.l.b16 %v5092
        %v5484 = vunpack.c.h.b16 %v5092
        %v5485 = vunpack.c.l.b16 %v5093
        %v5486 = vunpack.c.h.b16 %v5093
        %v5487 = vunpack.c.l.b16 %v5094
        %v5488 = vunpack.c.h.b16 %v5094
        %v5489 = vunpack.c.l.b16 %v5095
        %v5490 = vunpack.c.h.b16 %v5095
        %v5491 = vunpack.c.l.b16 %v5096
        %v5492 = vunpack.c.h.b16 %v5096
        %v5493 = vunpack.c.l.b16 %v5097
        %v5494 = vunpack.c.h.b16 %v5097
        %v5495 = vunpack.c.l.b16 %v5098
        %v5496 = vunpack.c.h.b16 %v5098
        %v5497 = vunpack.c.l.b16 %v5099
        %v5498 = vunpack.c.h.b16 %v5099
        %v5499 = vunpack.c.l.b16 %v5100
        %v5500 = vunpack.c.h.b16 %v5100
        %v5501 = vunpack.c.l.b16 %v5101
        %v5502 = vunpack.c.h.b16 %v5101
        %v5503 = vunpack.c.l.b16 %v5102
        %v5504 = vunpack.c.h.b16 %v5102
        %v5505 = vunpack.c.l.b16 %v5103
        %v5506 = vunpack.c.h.b16 %v5103
        %v5507 = vunpack.c.l.b16 %v5104
        %v5508 = vunpack.c.h.b16 %v5104
        %v5509 = vunpack.c.l.b16 %v5105
        %v5510 = vunpack.c.h.b16 %v5105
        %v5511 = vunpack.c.l.b16 %v5106
        %v5512 = vunpack.c.h.b16 %v5106
        %v5513 = vunpack.c.l.b16 %v5107
        %v5514 = vunpack.c.h.b16 %v5107
        %v5515 = vunpack.c.l.b16 %v5108
        %v5516 = vunpack.c.h.b16 %v5108
        %v5517 = vunpack.c.l.b16 %v5109
        %v5518 = vunpack.c.h.b16 %v5109
        %v5519 = vunpack.c.l.b16 %v5110
        %v5520 = vunpack.c.h.b16 %v5110
        %v5521 = vunpack.c.l.b16 %v5111
        %v5522 = vunpack.c.h.b16 %v5111
        %v5523 = vunpack.c.l.b16 %v5112
        %v5524 = vunpack.c.h.b16 %v5112
        %v5525 = vunpack.c.l.b16 %v5113
        %v5526 = vunpack.c.h.b16 %v5113
        %v5527 = vunpack.c.l.b16 %v5114
        %v5528 = vunpack.c.h.b16 %v5114
        %v5529 = vunpack.c.l.b16 %v5115
        %v5530 = vunpack.c.h.b16 %v5115
        %v5531 = vunpack.c.l.b16 %v5116
        %v5532 = vunpack.c.h.b16 %v5116
        %v5533 = vunpack.c.l.b16 %v5117
        %v5534 = vunpack.c.h.b16 %v5117
        %v5535 = vunpack.c.l.b16 %v5118
        %v5536 = vunpack.c.h.b16 %v5118
        %v5537 = vunpack.c.l.b16 %v5119
        %v5538 = vunpack.c.h.b16 %v5119
        %v5539 = vunpack.c.l.b16 %v5120
        %v5540 = vunpack.c.h.b16 %v5120
        %v5541 = vunpack.c.l.b16 %v5121
        %v5542 = vunpack.c.h.b16 %v5121
        %v5543 = vunpack.c.l.b16 %v5122
        %v5544 = vunpack.c.h.b16 %v5122
        %v5545 = vunpack.c.l.b16 %v5123
        %v5546 = vunpack.c.h.b16 %v5123
        %v5547 = vunpack.c.l.b16 %v5124
        %v5548 = vunpack.c.h.b16 %v5124
        %v5549 = vunpack.c.l.b16 %v5125
        %v5550 = vunpack.c.h.b16 %v5125
        %v5551 = vunpack.c.l.b16 %v5126
        %v5552 = vunpack.c.h.b16 %v5126
        %v5553 = vunpack.c.l.b16 %v5127
        %v5554 = vunpack.c.h.b16 %v5127
        %v5555 = vunpack.c.l.b16 %v5128
        %v5556 = vunpack.c.h.b16 %v5128
        %v5557 = vunpack.c.l.b16 %v5129
        %v5558 = vunpack.c.h.b16 %v5129
        %v5559 = vunpack.c.l.b16 %v5130
        %v5560 = vunpack.c.h.b16 %v5130
        %v5561 = vunpack.c.l.b16 %v5131
        %v5562 = vunpack.c.h.b16 %v5131
        %v5563 = vunpack.c.l.b16 %v5132
        %v5564 = vunpack.c.h.b16 %v5132
        %v5565 = vunpack.c.l.b16 %v5133
        %v5566 = vunpack.c.h.b16 %v5133
        %v5567 = vunpack.c.l.b16 %v5134
        %v5568 = vunpack.c.h.b16 %v5134
        %v5569 = vunpack.c.l.b16 %v5135
        %v5570 = vunpack.c.h.b16 %v5135
        %v5571 = vunpack.c.l.b16 %v5136
        %v5572 = vunpack.c.h.b16 %v5136
        %v5573 = vunpack.c.l.b16 %v5137
        %v5574 = vunpack.c.h.b16 %v5137
        %v5575 = vunpack.c.l.b16 %v5138
        %v5576 = vunpack.c.h.b16 %v5138
        %v5577 = vunpack.c.l.b16 %v5139
        %v5578 = vunpack.c.h.b16 %v5139
        %v5579 = vunpack.c.l.b16 %v5140
        %v5580 = vunpack.c.h.b16 %v5140
        %v5581 = vunpack.c.l.b16 %v5141
        %v5582 = vunpack.c.h.b16 %v5141
        %v5583 = vunpack.c.l.b16 %v5142
        %v5584 = vunpack.c.h.b16 %v5142
        %v5585 = vunpack.c.l.b16 %v5143
        %v5586 = vunpack.c.h.b16 %v5143
        %v5587 = vpack.c.b16 %v5301, %v5299
        %v5588 = vpack.c.b16 %v5302, %v5300
        %v5589 = vpack.c.b16 %v5305, %v5303
        %v5590 = vpack.c.b16 %v5306, %v5304
        %v5591 = vpack.c.b16 %v5309, %v5307
        %v5592 = vpack.c.b16 %v5310, %v5308
        %v5593 = vpack.c.b16 %v5313, %v5311
        %v5594 = vpack.c.b16 %v5314, %v5312
        %v5595 = vpack.c.b16 %v5317, %v5315
        %v5596 = vpack.c.b16 %v5318, %v5316
        %v5597 = vpack.c.b16 %v5321, %v5319
        %v5598 = vpack.c.b16 %v5322, %v5320
        %v5599 = vpack.c.b16 %v5325, %v5323
        %v5600 = vpack.c.b16 %v5326, %v5324
        %v5601 = vpack.c.b16 %v5329, %v5327
        %v5602 = vpack.c.b16 %v5330, %v5328
        %v5603 = vpack.c.b16 %v5333, %v5331
        %v5604 = vpack.c.b16 %v5334, %v5332
        %v5605 = vpack.c.b16 %v5337, %v5335
        %v5606 = vpack.c.b16 %v5338, %v5336
        %v5607 = vpack.c.b16 %v5341, %v5339
        %v5608 = vpack.c.b16 %v5342, %v5340
        %v5609 = vpack.c.b16 %v5345, %v5343
        %v5610 = vpack.c.b16 %v5346, %v5344
        %v5611 = vpack.c.b16 %v5349, %v5347
        %v5612 = vpack.c.b16 %v5350, %v5348
        %v5613 = vpack.c.b16 %v5353, %v5351
        %v5614 = vpack.c.b16 %v5354, %v5352
        %v5615 = vpack.c.b16 %v5357, %v5355
        %v5616 = vpack.c.b16 %v5358, %v5356
        %v5617 = vpack.c.b16 %v5361, %v5359
        %v5618 = vpack.c.b16 %v5362, %v5360
        %v5619 = vpack.c.b16 %v5365, %v5363
        %v5620 = vpack.c.b16 %v5366, %v5364
        %v5621 = vpack.c.b16 %v5369, %v5367
        %v5622 = vpack.c.b16 %v5370, %v5368
        %v5623 = vpack.c.b16 %v5373, %v5371
        %v5624 = vpack.c.b16 %v5374, %v5372
        %v5625 = vpack.c.b16 %v5377, %v5375
        %v5626 = vpack.c.b16 %v5378, %v5376
        %v5627 = vpack.c.b16 %v5381, %v5379
        %v5628 = vpack.c.b16 %v5382, %v5380
        %v5629 = vpack.c.b16 %v5385, %v5383
        %v5630 = vpack.c.b16 %v5386, %v5384
        %v5631 = vpack.c.b16 %v5389, %v5387
        %v5632 = vpack.c.b16 %v5390, %v5388
        %v5633 = vpack.c.b16 %v5393, %v5391
        %v5634 = vpack.c.b16 %v5394, %v5392
        %v5635 = vpack.c.b16 %v5397, %v5395
        %v5636 = vpack.c.b16 %v5398, %v5396
        %v5637 = vpack.c.b16 %v5401, %v5399
        %v5638 = vpack.c.b16 %v5402, %v5400
        %v5639 = vpack.c.b16 %v5405, %v5403
        %v5640 = vpack.c.b16 %v5406, %v5404
        %v5641 = vpack.c.b16 %v5409, %v5407
        %v5642 = vpack.c.b16 %v5410, %v5408
        %v5643 = vpack.c.b16 %v5413, %v5411
        %v5644 = vpack.c.b16 %v5414, %v5412
        %v5645 = vpack.c.b16 %v5417, %v5415
        %v5646 = vpack.c.b16 %v5418, %v5416
        %v5647 = vpack.c.b16 %v5421, %v5419
        %v5648 = vpack.c.b16 %v5422, %v5420
        %v5649 = vpack.c.b16 %v5425, %v5423
        %v5650 = vpack.c.b16 %v5426, %v5424
        %v5651 = vpack.c.b16 %v5429, %v5427
        %v5652 = vpack.c.b16 %v5430, %v5428
        %v5653 = vpack.c.b16 %v5433, %v5431
        %v5654 = vpack.c.b16 %v5434, %v5432
        %v5655 = vpack.c.b16 %v5437, %v5435
        %v5656 = vpack.c.b16 %v5438, %v5436
        %v5657 = vpack.c.b16 %v5441, %v5439
        %v5658 = vpack.c.b16 %v5442, %v5440
        %v5659 = vpack.c.b16 %v5445, %v5443
        %v5660 = vpack.c.b16 %v5446, %v5444
        %v5661 = vpack.c.b16 %v5449, %v5447
        %v5662 = vpack.c.b16 %v5450, %v5448
        %v5663 = vpack.c.b16 %v5453, %v5451
        %v5664 = vpack.c.b16 %v5454, %v5452
        %v5665 = vpack.c.b16 %v5457, %v5455
        %v5666 = vpack.c.b16 %v5458, %v5456
        %v5667 = vpack.c.b16 %v5461, %v5459
        %v5668 = vpack.c.b16 %v5462, %v5460
        %v5669 = vpack.c.b16 %v5465, %v5463
        %v5670 = vpack.c.b16 %v5466, %v5464
        %v5671 = vpack.c.b16 %v5469, %v5467
        %v5672 = vpack.c.b16 %v5470, %v5468
        %v5673 = vpack.c.b16 %v5473, %v5471
        %v5674 = vpack.c.b16 %v5474, %v5472
        %v5675 = vpack.c.b16 %v5477, %v5475
        %v5676 = vpack.c.b16 %v5478, %v5476
        %v5677 = vpack.c.b16 %v5481, %v5479
        %v5678 = vpack.c.b16 %v5482, %v5480
        %v5679 = vpack.c.b16 %v5485, %v5483
        %v5680 = vpack.c.b16 %v5486, %v5484
        %v5681 = vpack.c.b16 %v5489, %v5487
        %v5682 = vpack.c.b16 %v5490, %v5488
        %v5683 = vpack.c.b16 %v5493, %v5491
        %v5684 = vpack.c.b16 %v5494, %v5492
        %v5685 = vpack.c.b16 %v5497, %v5495
        %v5686 = vpack.c.b16 %v5498, %v5496
        %v5687 = vpack.c.b16 %v5501, %v5499
        %v5688 = vpack.c.b16 %v5502, %v5500
        %v5689 = vpack.c.b16 %v5505, %v5503
        %v5690 = vpack.c.b16 %v5506, %v5504
        %v5691 = vpack.c.b16 %v5509, %v5507
        %v5692 = vpack.c.b16 %v5510, %v5508
        %v5693 = vpack.c.b16 %v5513, %v5511
        %v5694 = vpack.c.b16 %v5514, %v5512
        %v5695 = vpack.c.b16 %v5517, %v5515
        %v5696 = vpack.c.b16 %v5518, %v5516
        %v5697 = vpack.c.b16 %v5521, %v5519
        %v5698 = vpack.c.b16 %v5522, %v5520
        %v5699 = vpack.c.b16 %v5525, %v5523
        %v5700 = vpack.c.b16 %v5526, %v5524
        %v5701 = vpack.c.b16 %v5529, %v5527
        %v5702 = vpack.c.b16 %v5530, %v5528
        %v5703 = vpack.c.b16 %v5533, %v5531
        %v5704 = vpack.c.b16 %v5534, %v5532
        %v5705 = vpack.c.b16 %v5537, %v5535
        %v5706 = vpack.c.b16 %v5538, %v5536
        %v5707 = vpack.c.b16 %v5541, %v5539
        %v5708 = vpack.c.b16 %v5542, %v5540
        %v5709 = vpack.c.b16 %v5545, %v5543
        %v5710 = vpack.c.b16 %v5546, %v5544
        %v5711 = vpack.c.b16 %v5549, %v5547
        %v5712 = vpack.c.b16 %v5550, %v5548
        %v5713 = vpack.c.b16 %v5553, %v5551
        %v5714 = vpack.c.b16 %v5554, %v5552
        %v5715 = vpack.c.b16 %v5557, %v5555
        %v5716 = vpack.c.b16 %v5558, %v5556
        %v5717 = vpack.c.b16 %v5561, %v5559
        %v5718 = vpack.c.b16 %v5562, %v5560
        %v5719 = vpack.c.b16 %v5565, %v5563
        %v5720 = vpack.c.b16 %v5566, %v5564
        %v5721 = vpack.c.b16 %v5569, %v5567
        %v5722 = vpack.c.b16 %v5570, %v5568
        %v5723 = vpack.c.b16 %v5573, %v5571
        %v5724 = vpack.c.b16 %v5574, %v5572
        %v5725 = vpack.c.b16 %v5577, %v5575
        %v5726 = vpack.c.b16 %v5578, %v5576
        %v5727 = vpack.c.b16 %v5581, %v5579
        %v5728 = vpack.c.b16 %v5582, %v5580
        %v5729 = vpack.c.b16 %v5585, %v5583
        %v5730 = vpack.c.b16 %v5586, %v5584
        %5875 = vmatprep.subr.bf16.mxu0 %v5588
        %5876 = vmatpush1.bf16.msra.mxu0 %v5587
        %5877 = vmatprep.subr.bf16.mxu0 %v5590
        %5878 = vmatpush1.bf16.msra.mxu0 %v5589
        %5879 = vmatprep.subr.bf16.mxu0 %v5592
        %5880 = vmatpush1.bf16.msra.mxu0 %v5591
        %5881 = vmatprep.subr.bf16.mxu0 %v5594
        %5882 = vmatpush1.bf16.msra.mxu0 %v5593
        %5883 = vmatprep.subr.bf16.mxu0 %v5596
        %5884 = vmatpush1.bf16.msra.mxu0 %v5595
        %5885 = vmatprep.subr.bf16.mxu0 %v5598
        %5886 = vmatpush1.bf16.msra.mxu0 %v5597
        %5887 = vmatprep.subr.bf16.mxu0 %v5600
        %5888 = vmatpush1.bf16.msra.mxu0 %v5599
        %5889 = vmatprep.subr.bf16.mxu0 %v5602
        %5890 = vmatpush1.bf16.msra.mxu0 %v5601
        %5891 = vmatprep.subr.bf16.mxu0 %v5604
        %5892 = vmatpush1.bf16.msra.mxu0 %v5603
        %5893 = vmatprep.subr.bf16.mxu0 %v5606
        %5894 = vmatpush1.bf16.msra.mxu0 %v5605
        %5895 = vmatprep.subr.bf16.mxu0 %v5608
        %5896 = vmatpush1.bf16.msra.mxu0 %v5607
        %5897 = vmatprep.subr.bf16.mxu0 %v5610
        %5898 = vmatpush1.bf16.msra.mxu0 %v5609
        %5899 = vmatprep.subr.bf16.mxu0 %v5612
        %5900 = vmatpush1.bf16.msra.mxu0 %v5611
        %5901 = vmatprep.subr.bf16.mxu0 %v5614
        %5902 = vmatpush1.bf16.msra.mxu0 %v5613
        %5903 = vmatprep.subr.bf16.mxu0 %v5616
        %5904 = vmatpush1.bf16.msra.mxu0 %v5615
        %5905 = vmatprep.subr.bf16.mxu0 %v5618
        %5906 = vmatpush1.bf16.msra.mxu0 %v5617
        %5907 = vmatprep.mubr.bf16.mxu0 %v4964
        %5908 = vmatmul.mubr.bf16.gmra.mrb[0].mxu0 %v4946
        %v5909 = vpop.f32.mrb[0].mxu0
        %v5910 = vadd.f32 %v5148, %v5909
        %v5911 = vpop.f32.mrb[0].mxu0
        %v5912 = vadd.f32 %v5152, %v5911
        %v5913 = vpop.f32.mrb[0].mxu0
        %v5914 = vadd.f32 %v5148, %v5913
        %v5915 = vpop.f32.mrb[0].mxu0
        %v5916 = vadd.f32 %v5152, %v5915
        %5917 = vmatprep.mubr.bf16.mxu0 %v4965
        %5918 = vmatmul.mubr.bf16.gmra.mrb[0].mxu0 %v4947
        %v5919 = vpop.f32.mrb[0].mxu0
        %v5920 = vadd.f32 %v5148, %v5919
        %v5921 = vpop.f32.mrb[0].mxu0
        %v5922 = vadd.f32 %v5152, %v5921
        %v5923 = vpop.f32.mrb[0].mxu0
        %v5924 = vadd.f32 %v5148, %v5923
        %v5925 = vpop.f32.mrb[0].mxu0
        %v5926 = vadd.f32 %v5152, %v5925
        %5927 = vmatprep.mubr.bf16.mxu0 %v4966
        %5928 = vmatmul.mubr.bf16.gmra.mrb[0].mxu0 %v4948
        %v5929 = vpop.f32.mrb[0].mxu0
        %v5930 = vadd.f32 %v5148, %v5929
        %v5931 = vpop.f32.mrb[0].mxu0
        %v5932 = vadd.f32 %v5152, %v5931
        %v5933 = vpop.f32.mrb[0].mxu0
        %v5934 = vadd.f32 %v5148, %v5933
        %v5935 = vpop.f32.mrb[0].mxu0
        %v5936 = vadd.f32 %v5152, %v5935
        %5937 = vmatprep.mubr.bf16.mxu0 %v4967
        %5938 = vmatmul.mubr.bf16.gmra.mrb[0].mxu0 %v4949
        %v5939 = vpop.f32.mrb[0].mxu0
        %v5940 = vadd.f32 %v5148, %v5939
        %v5941 = vpop.f32.mrb[0].mxu0
        %v5942 = vadd.f32 %v5152, %v5941
        %v5943 = vpop.f32.mrb[0].mxu0
        %v5944 = vadd.f32 %v5148, %v5943
        %v5945 = vpop.f32.mrb[0].mxu0
        %v5946 = vadd.f32 %v5152, %v5945
        %5947 = vmatprep.mubr.bf16.mxu0 %v4968
        %5948 = vmatmul.mubr.bf16.gmra.mrb[0].mxu0 %v4950
        %v5949 = vpop.f32.mrb[0].mxu0
        %v5950 = vadd.f32 %v5148, %v5949
        %v5951 = vpop.f32.mrb[0].mxu0
        %v5952 = vadd.f32 %v5152, %v5951
        %v5953 = vpop.f32.mrb[0].mxu0
        %v5954 = vadd.f32 %v5148, %v5953
        %v5955 = vpop.f32.mrb[0].mxu0
        %v5956 = vadd.f32 %v5152, %v5955
        %5957 = vmatprep.mubr.bf16.mxu0 %v4969
        %5958 = vmatmul.mubr.bf16.gmra.mrb[0].mxu0 %v4951
        %v5959 = vpop.f32.mrb[0].mxu0
        %v5960 = vadd.f32 %v5148, %v5959
        %v5961 = vpop.f32.mrb[0].mxu0
        %v5962 = vadd.f32 %v5152, %v5961
        %v5963 = vpop.f32.mrb[0].mxu0
        %v5964 = vadd.f32 %v5148, %v5963
        %v5965 = vpop.f32.mrb[0].mxu0
        %v5966 = vadd.f32 %v5152, %v5965
        %5967 = vmatprep.mubr.bf16.mxu0 %v4970
        %5968 = vmatmul.mubr.bf16.gmra.mrb[0].mxu0 %v4952
        %v5969 = vpop.f32.mrb[0].mxu0
        %v5970 = vadd.f32 %v5148, %v5969
        %v5971 = vpop.f32.mrb[0].mxu0
        %v5972 = vadd.f32 %v5152, %v5971
        %v5973 = vpop.f32.mrb[0].mxu0
        %v5974 = vadd.f32 %v5148, %v5973
        %v5975 = vpop.f32.mrb[0].mxu0
        %v5976 = vadd.f32 %v5152, %v5975
        %5977 = vmatprep.mubr.bf16.mxu0 %v4971
        %5978 = vmatmul.mubr.bf16.gmra.mrb[0].mxu0 %v4953
        %v5979 = vpop.f32.mrb[0].mxu0
        %v5980 = vadd.f32 %v5148, %v5979
        %v5981 = vpop.f32.mrb[0].mxu0
        %v5982 = vadd.f32 %v5152, %v5981
        %v5983 = vpop.f32.mrb[0].mxu0
        %v5984 = vadd.f32 %v5148, %v5983
        %v5985 = vpop.f32.mrb[0].mxu0
        %v5986 = vadd.f32 %v5152, %v5985
        %5987 = vmatprep.mubr.bf16.mxu0 %v4972
        %5988 = vmatmul.mubr.bf16.gmra.mrb[0].mxu0 %v4954
        %v5989 = vpop.f32.mrb[0].mxu0
        %v5990 = vadd.f32 %v5148, %v5989
        %v5991 = vpop.f32.mrb[0].mxu0
        %v5992 = vadd.f32 %v5152, %v5991
        %v5993 = vpop.f32.mrb[0].mxu0
        %v5994 = vadd.f32 %v5148, %v5993
        %v5995 = vpop.f32.mrb[0].mxu0
        %v5996 = vadd.f32 %v5152, %v5995
        %5997 = vmatprep.mubr.bf16.mxu0 %v4973
        %5998 = vmatmul.mubr.bf16.gmra.mrb[0].mxu0 %v4955
        %v5999 = vpop.f32.mrb[0].mxu0
        %v6000 = vadd.f32 %v5148, %v5999
        %v6001 = vpop.f32.mrb[0].mxu0
        %v6002 = vadd.f32 %v5152, %v6001
        %v6003 = vpop.f32.mrb[0].mxu0
        %v6004 = vadd.f32 %v5148, %v6003
        %v6005 = vpop.f32.mrb[0].mxu0
        %v6006 = vadd.f32 %v5152, %v6005
        %6007 = vmatprep.mubr.bf16.mxu0 %v4974
        %6008 = vmatmul.mubr.bf16.gmra.mrb[0].mxu0 %v4956
        %v6009 = vpop.f32.mrb[0].mxu0
        %v6010 = vadd.f32 %v5148, %v6009
        %v6011 = vpop.f32.mrb[0].mxu0
        %v6012 = vadd.f32 %v5152, %v6011
        %v6013 = vpop.f32.mrb[0].mxu0
        %v6014 = vadd.f32 %v5148, %v6013
        %v6015 = vpop.f32.mrb[0].mxu0
        %v6016 = vadd.f32 %v5152, %v6015
        %6017 = vmatprep.mubr.bf16.mxu0 %v4975
        %6018 = vmatmul.mubr.bf16.gmra.mrb[0].mxu0 %v4957
        %v6019 = vpop.f32.mrb[0].mxu0
        %v6020 = vadd.f32 %v5148, %v6019
        %v6021 = vpop.f32.mrb[0].mxu0
        %v6022 = vadd.f32 %v5152, %v6021
        %v6023 = vpop.f32.mrb[0].mxu0
        %v6024 = vadd.f32 %v5148, %v6023
        %v6025 = vpop.f32.mrb[0].mxu0
        %v6026 = vadd.f32 %v5152, %v6025
        %6027 = vmatprep.mubr.bf16.mxu0 %v4976
        %6028 = vmatmul.mubr.bf16.gmra.mrb[0].mxu0 %v4958
        %v6029 = vpop.f32.mrb[0].mxu0
        %v6030 = vadd.f32 %v5148, %v6029
        %v6031 = vpop.f32.mrb[0].mxu0
        %v6032 = vadd.f32 %v5152, %v6031
        %v6033 = vpop.f32.mrb[0].mxu0
        %v6034 = vadd.f32 %v5148, %v6033
        %v6035 = vpop.f32.mrb[0].mxu0
        %v6036 = vadd.f32 %v5152, %v6035
        %6037 = vmatprep.mubr.bf16.mxu0 %v4977
        %6038 = vmatmul.mubr.bf16.gmra.mrb[0].mxu0 %v4959
        %v6039 = vpop.f32.mrb[0].mxu0
        %v6040 = vadd.f32 %v5148, %v6039
        %v6041 = vpop.f32.mrb[0].mxu0
        %v6042 = vadd.f32 %v5152, %v6041
        %v6043 = vpop.f32.mrb[0].mxu0
        %v6044 = vadd.f32 %v5148, %v6043
        %v6045 = vpop.f32.mrb[0].mxu0
        %v6046 = vadd.f32 %v5152, %v6045
        %6047 = vmatprep.mubr.bf16.mxu0 %v4978
        %6048 = vmatmul.mubr.bf16.gmra.mrb[0].mxu0 %v4960
        %v6049 = vpop.f32.mrb[0].mxu0
        %v6050 = vadd.f32 %v5148, %v6049
        %v6051 = vpop.f32.mrb[0].mxu0
        %v6052 = vadd.f32 %v5152, %v6051
        %v6053 = vpop.f32.mrb[0].mxu0
        %v6054 = vadd.f32 %v5148, %v6053
        %v6055 = vpop.f32.mrb[0].mxu0
        %v6056 = vadd.f32 %v5152, %v6055
        %6057 = vmatprep.mubr.bf16.mxu0 %v4979
        %6058 = vmatmul.mubr.bf16.gmra.mrb[0].mxu0 %v4961
        %v6059 = vpop.f32.mrb[0].mxu0
        %v6060 = vadd.f32 %v5148, %v6059
        %v6061 = vpop.f32.mrb[0].mxu0
        %v6062 = vadd.f32 %v5152, %v6061
        %v6063 = vpop.f32.mrb[0].mxu0
        %v6064 = vadd.f32 %v5148, %v6063
        %v6065 = vpop.f32.mrb[0].mxu0
        %v6066 = vadd.f32 %v5152, %v6065
        %6067 = vdwg.mxu0
        %6068 = vmatprep.subr.bf16.mxu0 %v5620
        %6069 = vmatpush1.bf16.msra.mxu0 %v5619
        %6070 = vmatprep.subr.bf16.mxu0 %v5622
        %6071 = vmatpush1.bf16.msra.mxu0 %v5621
        %6072 = vmatprep.subr.bf16.mxu0 %v5624
        %6073 = vmatpush1.bf16.msra.mxu0 %v5623
        %6074 = vmatprep.subr.bf16.mxu0 %v5626
        %6075 = vmatpush1.bf16.msra.mxu0 %v5625
        %6076 = vmatprep.subr.bf16.mxu0 %v5628
        %6077 = vmatpush1.bf16.msra.mxu0 %v5627
        %6078 = vmatprep.subr.bf16.mxu0 %v5630
        %6079 = vmatpush1.bf16.msra.mxu0 %v5629
        %6080 = vmatprep.subr.bf16.mxu0 %v5632
        %6081 = vmatpush1.bf16.msra.mxu0 %v5631
        %6082 = vmatprep.subr.bf16.mxu0 %v5634
        %6083 = vmatpush1.bf16.msra.mxu0 %v5633
        %6084 = vmatprep.subr.bf16.mxu0 %v5636
        %6085 = vmatpush1.bf16.msra.mxu0 %v5635
        %6086 = vmatprep.subr.bf16.mxu0 %v5638
        %6087 = vmatpush1.bf16.msra.mxu0 %v5637
        %6088 = vmatprep.subr.bf16.mxu0 %v5640
        %6089 = vmatpush1.bf16.msra.mxu0 %v5639
        %6090 = vmatprep.subr.bf16.mxu0 %v5642
        %6091 = vmatpush1.bf16.msra.mxu0 %v5641
        %6092 = vmatprep.subr.bf16.mxu0 %v5644
        %6093 = vmatpush1.bf16.msra.mxu0 %v5643
        %6094 = vmatprep.subr.bf16.mxu0 %v5646
        %6095 = vmatpush1.bf16.msra.mxu0 %v5645
        %6096 = vmatprep.subr.bf16.mxu0 %v5648
        %6097 = vmatpush1.bf16.msra.mxu0 %v5647
        %6098 = vmatprep.subr.bf16.mxu0 %v5650
        %6099 = vmatpush1.bf16.msra.mxu0 %v5649
        %6100 = vmatprep.mubr.bf16.mxu0 %v4947
        %6101 = vmatmul.mubr.bf16.gmra.mrb[0].mxu0 %v4982
        %v6102 = vpop.f32.mrb[0].mxu0
        %v6103 = vadd.f32 %v5910, %v6102
        %v6104 = vpop.f32.mrb[0].mxu0
        %v6105 = vadd.f32 %v5912, %v6104
        %v6106 = vpop.f32.mrb[0].mxu0
        %v6107 = vadd.f32 %v5914, %v6106
        %v6108 = vpop.f32.mrb[0].mxu0
        %v6109 = vadd.f32 %v5916, %v6108
        %6110 = vmatprep.mubr.bf16.mxu0 %v4948
        %6111 = vmatmul.mubr.bf16.gmra.mrb[0].mxu0 %v4983
        %v6112 = vpop.f32.mrb[0].mxu0
        %v6113 = vadd.f32 %v5920, %v6112
        %v6114 = vpop.f32.mrb[0].mxu0
        %v6115 = vadd.f32 %v5922, %v6114
        %v6116 = vpop.f32.mrb[0].mxu0
        %v6117 = vadd.f32 %v5924, %v6116
        %v6118 = vpop.f32.mrb[0].mxu0
        %v6119 = vadd.f32 %v5926, %v6118
        %6120 = vmatprep.mubr.bf16.mxu0 %v4949
        %6121 = vmatmul.mubr.bf16.gmra.mrb[0].mxu0 %v4984
        %v6122 = vpop.f32.mrb[0].mxu0
        %v6123 = vadd.f32 %v5930, %v6122
        %v6124 = vpop.f32.mrb[0].mxu0
        %v6125 = vadd.f32 %v5932, %v6124
        %v6126 = vpop.f32.mrb[0].mxu0
        %v6127 = vadd.f32 %v5934, %v6126
        %v6128 = vpop.f32.mrb[0].mxu0
        %v6129 = vadd.f32 %v5936, %v6128
        %6130 = vmatprep.mubr.bf16.mxu0 %v4950
        %6131 = vmatmul.mubr.bf16.gmra.mrb[0].mxu0 %v4985
        %v6132 = vpop.f32.mrb[0].mxu0
        %v6133 = vadd.f32 %v5940, %v6132
        %v6134 = vpop.f32.mrb[0].mxu0
        %v6135 = vadd.f32 %v5942, %v6134
        %v6136 = vpop.f32.mrb[0].mxu0
        %v6137 = vadd.f32 %v5944, %v6136
        %v6138 = vpop.f32.mrb[0].mxu0
        %v6139 = vadd.f32 %v5946, %v6138
        %6140 = vmatprep.mubr.bf16.mxu0 %v4951
        %6141 = vmatmul.mubr.bf16.gmra.mrb[0].mxu0 %v4986
        %v6142 = vpop.f32.mrb[0].mxu0
        %v6143 = vadd.f32 %v5950, %v6142
        %v6144 = vpop.f32.mrb[0].mxu0
        %v6145 = vadd.f32 %v5952, %v6144
        %v6146 = vpop.f32.mrb[0].mxu0
        %v6147 = vadd.f32 %v5954, %v6146
        %v6148 = vpop.f32.mrb[0].mxu0
        %v6149 = vadd.f32 %v5956, %v6148
        %6150 = vmatprep.mubr.bf16.mxu0 %v4952
        %6151 = vmatmul.mubr.bf16.gmra.mrb[0].mxu0 %v4987
        %v6152 = vpop.f32.mrb[0].mxu0
        %v6153 = vadd.f32 %v5960, %v6152
        %v6154 = vpop.f32.mrb[0].mxu0
        %v6155 = vadd.f32 %v5962, %v6154
        %v6156 = vpop.f32.mrb[0].mxu0
        %v6157 = vadd.f32 %v5964, %v6156
        %v6158 = vpop.f32.mrb[0].mxu0
        %v6159 = vadd.f32 %v5966, %v6158
        %6160 = vmatprep.mubr.bf16.mxu0 %v4953
        %6161 = vmatmul.mubr.bf16.gmra.mrb[0].mxu0 %v4988
        %v6162 = vpop.f32.mrb[0].mxu0
        %v6163 = vadd.f32 %v5970, %v6162
        %v6164 = vpop.f32.mrb[0].mxu0
        %v6165 = vadd.f32 %v5972, %v6164
        %v6166 = vpop.f32.mrb[0].mxu0
        %v6167 = vadd.f32 %v5974, %v6166
        %v6168 = vpop.f32.mrb[0].mxu0
        %v6169 = vadd.f32 %v5976, %v6168
        %6170 = vmatprep.mubr.bf16.mxu0 %v4954
        %6171 = vmatmul.mubr.bf16.gmra.mrb[0].mxu0 %v4989
        %v6172 = vpop.f32.mrb[0].mxu0
        %v6173 = vadd.f32 %v5980, %v6172
        %v6174 = vpop.f32.mrb[0].mxu0
        %v6175 = vadd.f32 %v5982, %v6174
        %v6176 = vpop.f32.mrb[0].mxu0
        %v6177 = vadd.f32 %v5984, %v6176
        %v6178 = vpop.f32.mrb[0].mxu0
        %v6179 = vadd.f32 %v5986, %v6178
        %6180 = vmatprep.mubr.bf16.mxu0 %v4955
        %6181 = vmatmul.mubr.bf16.gmra.mrb[0].mxu0 %v4990
        %v6182 = vpop.f32.mrb[0].mxu0
        %v6183 = vadd.f32 %v5990, %v6182
        %v6184 = vpop.f32.mrb[0].mxu0
        %v6185 = vadd.f32 %v5992, %v6184
        %v6186 = vpop.f32.mrb[0].mxu0
        %v6187 = vadd.f32 %v5994, %v6186
        %v6188 = vpop.f32.mrb[0].mxu0
        %v6189 = vadd.f32 %v5996, %v6188
        %6190 = vmatprep.mubr.bf16.mxu0 %v4956
        %6191 = vmatmul.mubr.bf16.gmra.mrb[0].mxu0 %v4991
        %v6192 = vpop.f32.mrb[0].mxu0
        %v6193 = vadd.f32 %v6000, %v6192
        %v6194 = vpop.f32.mrb[0].mxu0
        %v6195 = vadd.f32 %v6002, %v6194
        %v6196 = vpop.f32.mrb[0].mxu0
        %v6197 = vadd.f32 %v6004, %v6196
        %v6198 = vpop.f32.mrb[0].mxu0
        %v6199 = vadd.f32 %v6006, %v6198
        %6200 = vmatprep.mubr.bf16.mxu0 %v4957
        %6201 = vmatmul.mubr.bf16.gmra.mrb[0].mxu0 %v4992
        %v6202 = vpop.f32.mrb[0].mxu0
        %v6203 = vadd.f32 %v6010, %v6202
        %v6204 = vpop.f32.mrb[0].mxu0
        %v6205 = vadd.f32 %v6012, %v6204
        %v6206 = vpop.f32.mrb[0].mxu0
        %v6207 = vadd.f32 %v6014, %v6206
        %v6208 = vpop.f32.mrb[0].mxu0
        %v6209 = vadd.f32 %v6016, %v6208
        %6210 = vmatprep.mubr.bf16.mxu0 %v4958
        %6211 = vmatmul.mubr.bf16.gmra.mrb[0].mxu0 %v4993
        %v6212 = vpop.f32.mrb[0].mxu0
        %v6213 = vadd.f32 %v6020, %v6212
        %v6214 = vpop.f32.mrb[0].mxu0
        %v6215 = vadd.f32 %v6022, %v6214
        %v6216 = vpop.f32.mrb[0].mxu0
        %v6217 = vadd.f32 %v6024, %v6216
        %v6218 = vpop.f32.mrb[0].mxu0
        %v6219 = vadd.f32 %v6026, %v6218
        %6220 = vmatprep.mubr.bf16.mxu0 %v4959
        %6221 = vmatmul.mubr.bf16.gmra.mrb[0].mxu0 %v4994
        %v6222 = vpop.f32.mrb[0].mxu0
        %v6223 = vadd.f32 %v6030, %v6222
        %v6224 = vpop.f32.mrb[0].mxu0
        %v6225 = vadd.f32 %v6032, %v6224
        %v6226 = vpop.f32.mrb[0].mxu0
        %v6227 = vadd.f32 %v6034, %v6226
        %v6228 = vpop.f32.mrb[0].mxu0
        %v6229 = vadd.f32 %v6036, %v6228
        %6230 = vmatprep.mubr.bf16.mxu0 %v4960
        %6231 = vmatmul.mubr.bf16.gmra.mrb[0].mxu0 %v4995
        %v6232 = vpop.f32.mrb[0].mxu0
        %v6233 = vadd.f32 %v6040, %v6232
        %v6234 = vpop.f32.mrb[0].mxu0
        %v6235 = vadd.f32 %v6042, %v6234
        %v6236 = vpop.f32.mrb[0].mxu0
        %v6237 = vadd.f32 %v6044, %v6236
        %v6238 = vpop.f32.mrb[0].mxu0
        %v6239 = vadd.f32 %v6046, %v6238
        %6240 = vmatprep.mubr.bf16.mxu0 %v4961
        %6241 = vmatmul.mubr.bf16.gmra.mrb[0].mxu0 %v4996
        %v6242 = vpop.f32.mrb[0].mxu0
        %v6243 = vadd.f32 %v6050, %v6242
        %v6244 = vpop.f32.mrb[0].mxu0
        %v6245 = vadd.f32 %v6052, %v6244
        %v6246 = vpop.f32.mrb[0].mxu0
        %v6247 = vadd.f32 %v6054, %v6246
        %v6248 = vpop.f32.mrb[0].mxu0
        %v6249 = vadd.f32 %v6056, %v6248
        %6250 = vmatprep.mubr.bf16.mxu0 %v4962
        %6251 = vmatmul.mubr.bf16.gmra.mrb[0].mxu0 %v4997
        %v6252 = vpop.f32.mrb[0].mxu0
        %v6253 = vadd.f32 %v6060, %v6252
        %v6254 = vpop.f32.mrb[0].mxu0
        %v6255 = vadd.f32 %v6062, %v6254
        %v6256 = vpop.f32.mrb[0].mxu0
        %v6257 = vadd.f32 %v6064, %v6256
        %v6258 = vpop.f32.mrb[0].mxu0
        %v6259 = vadd.f32 %v6066, %v6258
        %6260 = vdwg.mxu0
        %6261 = vmatprep.subr.bf16.mxu0 %v5652
        %6262 = vmatpush1.bf16.msra.mxu0 %v5651
        %6263 = vmatprep.subr.bf16.mxu0 %v5654
        %6264 = vmatpush1.bf16.msra.mxu0 %v5653
        %6265 = vmatprep.subr.bf16.mxu0 %v5656
        %6266 = vmatpush1.bf16.msra.mxu0 %v5655
        %6267 = vmatprep.subr.bf16.mxu0 %v5658
        %6268 = vmatpush1.bf16.msra.mxu0 %v5657
        %6269 = vmatprep.subr.bf16.mxu0 %v5660
        %6270 = vmatpush1.bf16.msra.mxu0 %v5659
        %6271 = vmatprep.subr.bf16.mxu0 %v5662
        %6272 = vmatpush1.bf16.msra.mxu0 %v5661
        %6273 = vmatprep.subr.bf16.mxu0 %v5664
        %6274 = vmatpush1.bf16.msra.mxu0 %v5663
        %6275 = vmatprep.subr.bf16.mxu0 %v5666
        %6276 = vmatpush1.bf16.msra.mxu0 %v5665
        %6277 = vmatprep.subr.bf16.mxu0 %v5668
        %6278 = vmatpush1.bf16.msra.mxu0 %v5667
        %6279 = vmatprep.subr.bf16.mxu0 %v5670
        %6280 = vmatpush1.bf16.msra.mxu0 %v5669
        %6281 = vmatprep.subr.bf16.mxu0 %v5672
        %6282 = vmatpush1.bf16.msra.mxu0 %v5671
        %6283 = vmatprep.subr.bf16.mxu0 %v5674
        %6284 = vmatpush1.bf16.msra.mxu0 %v5673
        %6285 = vmatprep.subr.bf16.mxu0 %v5676
        %6286 = vmatpush1.bf16.msra.mxu0 %v5675
        %6287 = vmatprep.subr.bf16.mxu0 %v5678
        %6288 = vmatpush1.bf16.msra.mxu0 %v5677
        %6289 = vmatprep.subr.bf16.mxu0 %v5680
        %6290 = vmatpush1.bf16.msra.mxu0 %v5679
        %6291 = vmatprep.subr.bf16.mxu0 %v5682
        %6292 = vmatpush1.bf16.msra.mxu0 %v5681
        %6293 = vmatprep.mubr.bf16.mxu0 %v4983
        %6294 = vmatmul.mubr.bf16.gmra.mrb[0].mxu0 %v4965
        %v6295 = vpop.f32.mrb[0].mxu0
        %v6296 = vadd.f32 %v6103, %v6295
        %v6297 = vpop.f32.mrb[0].mxu0
        %v6298 = vadd.f32 %v6105, %v6297
        %v6299 = vpop.f32.mrb[0].mxu0
        %v6300 = vadd.f32 %v6107, %v6299
        %v6301 = vpop.f32.mrb[0].mxu0
        %v6302 = vadd.f32 %v6109, %v6301
        %6303 = vmatprep.mubr.bf16.mxu0 %v4984
        %6304 = vmatmul.mubr.bf16.gmra.mrb[0].mxu0 %v4966
        %v6305 = vpop.f32.mrb[0].mxu0
        %v6306 = vadd.f32 %v6113, %v6305
        %v6307 = vpop.f32.mrb[0].mxu0
        %v6308 = vadd.f32 %v6115, %v6307
        %v6309 = vpop.f32.mrb[0].mxu0
        %v6310 = vadd.f32 %v6117, %v6309
        %v6311 = vpop.f32.mrb[0].mxu0
        %v6312 = vadd.f32 %v6119, %v6311
        %6313 = vmatprep.mubr.bf16.mxu0 %v4985
        %6314 = vmatmul.mubr.bf16.gmra.mrb[0].mxu0 %v4967
        %v6315 = vpop.f32.mrb[0].mxu0
        %v6316 = vadd.f32 %v6123, %v6315
        %v6317 = vpop.f32.mrb[0].mxu0
        %v6318 = vadd.f32 %v6125, %v6317
        %v6319 = vpop.f32.mrb[0].mxu0
        %v6320 = vadd.f32 %v6127, %v6319
        %v6321 = vpop.f32.mrb[0].mxu0
        %v6322 = vadd.f32 %v6129, %v6321
        %6323 = vmatprep.mubr.bf16.mxu0 %v4986
        %6324 = vmatmul.mubr.bf16.gmra.mrb[0].mxu0 %v4968
        %v6325 = vpop.f32.mrb[0].mxu0
        %v6326 = vadd.f32 %v6133, %v6325
        %v6327 = vpop.f32.mrb[0].mxu0
        %v6328 = vadd.f32 %v6135, %v6327
        %v6329 = vpop.f32.mrb[0].mxu0
        %v6330 = vadd.f32 %v6137, %v6329
        %v6331 = vpop.f32.mrb[0].mxu0
        %v6332 = vadd.f32 %v6139, %v6331
        %6333 = vmatprep.mubr.bf16.mxu0 %v4987
        %6334 = vmatmul.mubr.bf16.gmra.mrb[0].mxu0 %v4969
        %v6335 = vpop.f32.mrb[0].mxu0
        %v6336 = vadd.f32 %v6143, %v6335
        %v6337 = vpop.f32.mrb[0].mxu0
        %v6338 = vadd.f32 %v6145, %v6337
        %v6339 = vpop.f32.mrb[0].mxu0
        %v6340 = vadd.f32 %v6147, %v6339
        %v6341 = vpop.f32.mrb[0].mxu0
        %v6342 = vadd.f32 %v6149, %v6341
        %6343 = vmatprep.mubr.bf16.mxu0 %v4988
        %6344 = vmatmul.mubr.bf16.gmra.mrb[0].mxu0 %v4970
        %v6345 = vpop.f32.mrb[0].mxu0
        %v6346 = vadd.f32 %v6153, %v6345
        %v6347 = vpop.f32.mrb[0].mxu0
        %v6348 = vadd.f32 %v6155, %v6347
        %v6349 = vpop.f32.mrb[0].mxu0
        %v6350 = vadd.f32 %v6157, %v6349
        %v6351 = vpop.f32.mrb[0].mxu0
        %v6352 = vadd.f32 %v6159, %v6351
        %6353 = vmatprep.mubr.bf16.mxu0 %v4989
        %6354 = vmatmul.mubr.bf16.gmra.mrb[0].mxu0 %v4971
        %v6355 = vpop.f32.mrb[0].mxu0
        %v6356 = vadd.f32 %v6163, %v6355
        %v6357 = vpop.f32.mrb[0].mxu0
        %v6358 = vadd.f32 %v6165, %v6357
        %v6359 = vpop.f32.mrb[0].mxu0
        %v6360 = vadd.f32 %v6167, %v6359
        %v6361 = vpop.f32.mrb[0].mxu0
        %v6362 = vadd.f32 %v6169, %v6361
        %6363 = vmatprep.mubr.bf16.mxu0 %v4990
        %6364 = vmatmul.mubr.bf16.gmra.mrb[0].mxu0 %v4972
        %v6365 = vpop.f32.mrb[0].mxu0
        %v6366 = vadd.f32 %v6173, %v6365
        %v6367 = vpop.f32.mrb[0].mxu0
        %v6368 = vadd.f32 %v6175, %v6367
        %v6369 = vpop.f32.mrb[0].mxu0
        %v6370 = vadd.f32 %v6177, %v6369
        %v6371 = vpop.f32.mrb[0].mxu0
        %v6372 = vadd.f32 %v6179, %v6371
        %6373 = vmatprep.mubr.bf16.mxu0 %v4991
        %6374 = vmatmul.mubr.bf16.gmra.mrb[0].mxu0 %v4973
        %v6375 = vpop.f32.mrb[0].mxu0
        %v6376 = vadd.f32 %v6183, %v6375
        %v6377 = vpop.f32.mrb[0].mxu0
        %v6378 = vadd.f32 %v6185, %v6377
        %v6379 = vpop.f32.mrb[0].mxu0
        %v6380 = vadd.f32 %v6187, %v6379
        %v6381 = vpop.f32.mrb[0].mxu0
        %v6382 = vadd.f32 %v6189, %v6381
        %6383 = vmatprep.mubr.bf16.mxu0 %v4992
        %6384 = vmatmul.mubr.bf16.gmra.mrb[0].mxu0 %v4974
        %v6385 = vpop.f32.mrb[0].mxu0
        %v6386 = vadd.f32 %v6193, %v6385
        %v6387 = vpop.f32.mrb[0].mxu0
        %v6388 = vadd.f32 %v6195, %v6387
        %v6389 = vpop.f32.mrb[0].mxu0
        %v6390 = vadd.f32 %v6197, %v6389
        %v6391 = vpop.f32.mrb[0].mxu0
        %v6392 = vadd.f32 %v6199, %v6391
        %6393 = vmatprep.mubr.bf16.mxu0 %v4993
        %6394 = vmatmul.mubr.bf16.gmra.mrb[0].mxu0 %v4975
        %v6395 = vpop.f32.mrb[0].mxu0
        %v6396 = vadd.f32 %v6203, %v6395
        %v6397 = vpop.f32.mrb[0].mxu0
        %v6398 = vadd.f32 %v6205, %v6397
        %v6399 = vpop.f32.mrb[0].mxu0
        %v6400 = vadd.f32 %v6207, %v6399
        %v6401 = vpop.f32.mrb[0].mxu0
        %v6402 = vadd.f32 %v6209, %v6401
        %6403 = vmatprep.mubr.bf16.mxu0 %v4994
        %6404 = vmatmul.mubr.bf16.gmra.mrb[0].mxu0 %v4976
        %v6405 = vpop.f32.mrb[0].mxu0
        %v6406 = vadd.f32 %v6213, %v6405
        %v6407 = vpop.f32.mrb[0].mxu0
        %v6408 = vadd.f32 %v6215, %v6407
        %v6409 = vpop.f32.mrb[0].mxu0
        %v6410 = vadd.f32 %v6217, %v6409
        %v6411 = vpop.f32.mrb[0].mxu0
        %v6412 = vadd.f32 %v6219, %v6411
        %6413 = vmatprep.mubr.bf16.mxu0 %v4995
        %6414 = vmatmul.mubr.bf16.gmra.mrb[0].mxu0 %v4977
        %v6415 = vpop.f32.mrb[0].mxu0
        %v6416 = vadd.f32 %v6223, %v6415
        %v6417 = vpop.f32.mrb[0].mxu0
        %v6418 = vadd.f32 %v6225, %v6417
        %v6419 = vpop.f32.mrb[0].mxu0
        %v6420 = vadd.f32 %v6227, %v6419
        %v6421 = vpop.f32.mrb[0].mxu0
        %v6422 = vadd.f32 %v6229, %v6421
        %6423 = vmatprep.mubr.bf16.mxu0 %v4996
        %6424 = vmatmul.mubr.bf16.gmra.mrb[0].mxu0 %v4978
        %v6425 = vpop.f32.mrb[0].mxu0
        %v6426 = vadd.f32 %v6233, %v6425
        %v6427 = vpop.f32.mrb[0].mxu0
        %v6428 = vadd.f32 %v6235, %v6427
        %v6429 = vpop.f32.mrb[0].mxu0
        %v6430 = vadd.f32 %v6237, %v6429
        %v6431 = vpop.f32.mrb[0].mxu0
        %v6432 = vadd.f32 %v6239, %v6431
        %6433 = vmatprep.mubr.bf16.mxu0 %v4997
        %6434 = vmatmul.mubr.bf16.gmra.mrb[0].mxu0 %v4979
        %v6435 = vpop.f32.mrb[0].mxu0
        %v6436 = vadd.f32 %v6243, %v6435
        %v6437 = vpop.f32.mrb[0].mxu0
        %v6438 = vadd.f32 %v6245, %v6437
        %v6439 = vpop.f32.mrb[0].mxu0
        %v6440 = vadd.f32 %v6247, %v6439
        %v6441 = vpop.f32.mrb[0].mxu0
        %v6442 = vadd.f32 %v6249, %v6441
        %6443 = vmatprep.mubr.bf16.mxu0 %v4998
        %6444 = vmatmul.mubr.bf16.gmra.mrb[0].mxu0 %v4980
        %v6445 = vpop.f32.mrb[0].mxu0
        %v6446 = vadd.f32 %v6253, %v6445
        %v6447 = vpop.f32.mrb[0].mxu0
        %v6448 = vadd.f32 %v6255, %v6447
        %v6449 = vpop.f32.mrb[0].mxu0
        %v6450 = vadd.f32 %v6257, %v6449
        %v6451 = vpop.f32.mrb[0].mxu0
        %v6452 = vadd.f32 %v6259, %v6451
        %6453 = vdwg.mxu0
        %6454 = vmatprep.subr.bf16.mxu0 %v5684
        %6455 = vmatpush1.bf16.msra.mxu0 %v5683
        %6456 = vmatprep.subr.bf16.mxu0 %v5686
        %6457 = vmatpush1.bf16.msra.mxu0 %v5685
        %6458 = vmatprep.subr.bf16.mxu0 %v5688
        %6459 = vmatpush1.bf16.msra.mxu0 %v5687
        %6460 = vmatprep.subr.bf16.mxu0 %v5690
        %6461 = vmatpush1.bf16.msra.mxu0 %v5689
        %6462 = vmatprep.subr.bf16.mxu0 %v5692
        %6463 = vmatpush1.bf16.msra.mxu0 %v5691
        %6464 = vmatprep.subr.bf16.mxu0 %v5694
        %6465 = vmatpush1.bf16.msra.mxu0 %v5693
        %6466 = vmatprep.subr.bf16.mxu0 %v5696
        %6467 = vmatpush1.bf16.msra.mxu0 %v5695
        %6468 = vmatprep.subr.bf16.mxu0 %v5698
        %6469 = vmatpush1.bf16.msra.mxu0 %v5697
        %6470 = vmatprep.subr.bf16.mxu0 %v5700
        %6471 = vmatpush1.bf16.msra.mxu0 %v5699
        %6472 = vmatprep.subr.bf16.mxu0 %v5702
        %6473 = vmatpush1.bf16.msra.mxu0 %v5701
        %6474 = vmatprep.subr.bf16.mxu0 %v5704
        %6475 = vmatpush1.bf16.msra.mxu0 %v5703
        %6476 = vmatprep.subr.bf16.mxu0 %v5706
        %6477 = vmatpush1.bf16.msra.mxu0 %v5705
        %6478 = vmatprep.subr.bf16.mxu0 %v5708
        %6479 = vmatpush1.bf16.msra.mxu0 %v5707
        %6480 = vmatprep.subr.bf16.mxu0 %v5710
        %6481 = vmatpush1.bf16.msra.mxu0 %v5709
        %6482 = vmatprep.subr.bf16.mxu0 %v5712
        %6483 = vmatpush1.bf16.msra.mxu0 %v5711
        %6484 = vmatprep.subr.bf16.mxu0 %v5714
        %6485 = vmatpush1.bf16.msra.mxu0 %v5713
        %6486 = vmatprep.mubr.bf16.mxu0 %v4966
        %6487 = vmatmul.mubr.bf16.gmra.mrb[0].mxu0 %v4948
        %v6488 = vpop.f32.mrb[0].mxu0
        %v6489 = vadd.f32 %v6296, %v6488
        %v6490 = vpop.f32.mrb[0].mxu0
        %v6491 = vadd.f32 %v6298, %v6490
        %v6492 = vpop.f32.mrb[0].mxu0
        %v6493 = vadd.f32 %v6300, %v6492
        %v6494 = vpop.f32.mrb[0].mxu0
        %v6495 = vadd.f32 %v6302, %v6494
        %6496 = vmatprep.mubr.bf16.mxu0 %v4967
        %6497 = vmatmul.mubr.bf16.gmra.mrb[0].mxu0 %v4949
        %v6498 = vpop.f32.mrb[0].mxu0
        %v6499 = vadd.f32 %v6306, %v6498
        %v6500 = vpop.f32.mrb[0].mxu0
        %v6501 = vadd.f32 %v6308, %v6500
        %v6502 = vpop.f32.mrb[0].mxu0
        %v6503 = vadd.f32 %v6310, %v6502
        %v6504 = vpop.f32.mrb[0].mxu0
        %v6505 = vadd.f32 %v6312, %v6504
        %6506 = vmatprep.mubr.bf16.mxu0 %v4968
        %6507 = vmatmul.mubr.bf16.gmra.mrb[0].mxu0 %v4950
        %v6508 = vpop.f32.mrb[0].mxu0
        %v6509 = vadd.f32 %v6316, %v6508
        %v6510 = vpop.f32.mrb[0].mxu0
        %v6511 = vadd.f32 %v6318, %v6510
        %v6512 = vpop.f32.mrb[0].mxu0
        %v6513 = vadd.f32 %v6320, %v6512
        %v6514 = vpop.f32.mrb[0].mxu0
        %v6515 = vadd.f32 %v6322, %v6514
        %6516 = vmatprep.mubr.bf16.mxu0 %v4969
        %6517 = vmatmul.mubr.bf16.gmra.mrb[0].mxu0 %v4951
        %v6518 = vpop.f32.mrb[0].mxu0
        %v6519 = vadd.f32 %v6326, %v6518
        %v6520 = vpop.f32.mrb[0].mxu0
        %v6521 = vadd.f32 %v6328, %v6520
        %v6522 = vpop.f32.mrb[0].mxu0
        %v6523 = vadd.f32 %v6330, %v6522
        %v6524 = vpop.f32.mrb[0].mxu0
        %v6525 = vadd.f32 %v6332, %v6524
        %6526 = vmatprep.mubr.bf16.mxu0 %v4970
        %6527 = vmatmul.mubr.bf16.gmra.mrb[0].mxu0 %v4952
        %v6528 = vpop.f32.mrb[0].mxu0
        %v6529 = vadd.f32 %v6336, %v6528
        %v6530 = vpop.f32.mrb[0].mxu0
        %v6531 = vadd.f32 %v6338, %v6530
        %v6532 = vpop.f32.mrb[0].mxu0
        %v6533 = vadd.f32 %v6340, %v6532
        %v6534 = vpop.f32.mrb[0].mxu0
        %v6535 = vadd.f32 %v6342, %v6534
        %6536 = vmatprep.mubr.bf16.mxu0 %v4971
        %6537 = vmatmul.mubr.bf16.gmra.mrb[0].mxu0 %v4953
        %v6538 = vpop.f32.mrb[0].mxu0
        %v6539 = vadd.f32 %v6346, %v6538
        %v6540 = vpop.f32.mrb[0].mxu0
        %v6541 = vadd.f32 %v6348, %v6540
        %v6542 = vpop.f32.mrb[0].mxu0
        %v6543 = vadd.f32 %v6350, %v6542
        %v6544 = vpop.f32.mrb[0].mxu0
        %v6545 = vadd.f32 %v6352, %v6544
        %6546 = vmatprep.mubr.bf16.mxu0 %v4972
        %6547 = vmatmul.mubr.bf16.gmra.mrb[0].mxu0 %v4954
        %v6548 = vpop.f32.mrb[0].mxu0
        %v6549 = vadd.f32 %v6356, %v6548
        %v6550 = vpop.f32.mrb[0].mxu0
        %v6551 = vadd.f32 %v6358, %v6550
        %v6552 = vpop.f32.mrb[0].mxu0
        %v6553 = vadd.f32 %v6360, %v6552
        %v6554 = vpop.f32.mrb[0].mxu0
        %v6555 = vadd.f32 %v6362, %v6554
        %6556 = vmatprep.mubr.bf16.mxu0 %v4973
        %6557 = vmatmul.mubr.bf16.gmra.mrb[0].mxu0 %v4955
        %v6558 = vpop.f32.mrb[0].mxu0
        %v6559 = vadd.f32 %v6366, %v6558
        %v6560 = vpop.f32.mrb[0].mxu0
        %v6561 = vadd.f32 %v6368, %v6560
        %v6562 = vpop.f32.mrb[0].mxu0
        %v6563 = vadd.f32 %v6370, %v6562
        %v6564 = vpop.f32.mrb[0].mxu0
        %v6565 = vadd.f32 %v6372, %v6564
        %6566 = vmatprep.mubr.bf16.mxu0 %v4974
        %6567 = vmatmul.mubr.bf16.gmra.mrb[0].mxu0 %v4956
        %v6568 = vpop.f32.mrb[0].mxu0
        %v6569 = vadd.f32 %v6376, %v6568
        %v6570 = vpop.f32.mrb[0].mxu0
        %v6571 = vadd.f32 %v6378, %v6570
        %v6572 = vpop.f32.mrb[0].mxu0
        %v6573 = vadd.f32 %v6380, %v6572
        %v6574 = vpop.f32.mrb[0].mxu0
        %v6575 = vadd.f32 %v6382, %v6574
        %6576 = vmatprep.mubr.bf16.mxu0 %v4975
        %6577 = vmatmul.mubr.bf16.gmra.mrb[0].mxu0 %v4957
        %v6578 = vpop.f32.mrb[0].mxu0
        %v6579 = vadd.f32 %v6386, %v6578
        %v6580 = vpop.f32.mrb[0].mxu0
        %v6581 = vadd.f32 %v6388, %v6580
        %v6582 = vpop.f32.mrb[0].mxu0
        %v6583 = vadd.f32 %v6390, %v6582
        %v6584 = vpop.f32.mrb[0].mxu0
        %v6585 = vadd.f32 %v6392, %v6584
        %6586 = vmatprep.mubr.bf16.mxu0 %v4976
        %6587 = vmatmul.mubr.bf16.gmra.mrb[0].mxu0 %v4958
        %v6588 = vpop.f32.mrb[0].mxu0
        %v6589 = vadd.f32 %v6396, %v6588
        %v6590 = vpop.f32.mrb[0].mxu0
        %v6591 = vadd.f32 %v6398, %v6590
        %v6592 = vpop.f32.mrb[0].mxu0
        %v6593 = vadd.f32 %v6400, %v6592
        %v6594 = vpop.f32.mrb[0].mxu0
        %v6595 = vadd.f32 %v6402, %v6594
        %6596 = vmatprep.mubr.bf16.mxu0 %v4977
        %6597 = vmatmul.mubr.bf16.gmra.mrb[0].mxu0 %v4959
        %v6598 = vpop.f32.mrb[0].mxu0
        %v6599 = vadd.f32 %v6406, %v6598
        %v6600 = vpop.f32.mrb[0].mxu0
        %v6601 = vadd.f32 %v6408, %v6600
        %v6602 = vpop.f32.mrb[0].mxu0
        %v6603 = vadd.f32 %v6410, %v6602
        %v6604 = vpop.f32.mrb[0].mxu0
        %v6605 = vadd.f32 %v6412, %v6604
        %6606 = vmatprep.mubr.bf16.mxu0 %v4978
        %6607 = vmatmul.mubr.bf16.gmra.mrb[0].mxu0 %v4960
        %v6608 = vpop.f32.mrb[0].mxu0
        %v6609 = vadd.f32 %v6416, %v6608
        %v6610 = vpop.f32.mrb[0].mxu0
        %v6611 = vadd.f32 %v6418, %v6610
        %v6612 = vpop.f32.mrb[0].mxu0
        %v6613 = vadd.f32 %v6420, %v6612
        %v6614 = vpop.f32.mrb[0].mxu0
        %v6615 = vadd.f32 %v6422, %v6614
        %6616 = vmatprep.mubr.bf16.mxu0 %v4979
        %6617 = vmatmul.mubr.bf16.gmra.mrb[0].mxu0 %v4961
        %v6618 = vpop.f32.mrb[0].mxu0
        %v6619 = vadd.f32 %v6426, %v6618
        %v6620 = vpop.f32.mrb[0].mxu0
        %v6621 = vadd.f32 %v6428, %v6620
        %v6622 = vpop.f32.mrb[0].mxu0
        %v6623 = vadd.f32 %v6430, %v6622
        %v6624 = vpop.f32.mrb[0].mxu0
        %v6625 = vadd.f32 %v6432, %v6624
        %6626 = vmatprep.mubr.bf16.mxu0 %v4980
        %6627 = vmatmul.mubr.bf16.gmra.mrb[0].mxu0 %v4962
        %v6628 = vpop.f32.mrb[0].mxu0
        %v6629 = vadd.f32 %v6436, %v6628
        %v6630 = vpop.f32.mrb[0].mxu0
        %v6631 = vadd.f32 %v6438, %v6630
        %v6632 = vpop.f32.mrb[0].mxu0
        %v6633 = vadd.f32 %v6440, %v6632
        %v6634 = vpop.f32.mrb[0].mxu0
        %v6635 = vadd.f32 %v6442, %v6634
        %6636 = vmatprep.mubr.bf16.mxu0 %v4981
        %6637 = vmatmul.mubr.bf16.gmra.mrb[0].mxu0 %v4963
        %v6638 = vpop.f32.mrb[0].mxu0
        %v6639 = vadd.f32 %v6446, %v6638
        %v6640 = vpop.f32.mrb[0].mxu0
        %v6641 = vadd.f32 %v6448, %v6640
        %v6642 = vpop.f32.mrb[0].mxu0
        %v6643 = vadd.f32 %v6450, %v6642
        %v6644 = vpop.f32.mrb[0].mxu0
        %v6645 = vadd.f32 %v6452, %v6644
        %6646 = vdwg.mxu0
        %6647 = vmatprep.subr.bf16.mxu0 %v5716
        %6648 = vmatpush1.bf16.msra.mxu0 %v5715
        %6649 = vmatprep.subr.bf16.mxu0 %v5718
        %6650 = vmatpush1.bf16.msra.mxu0 %v5717
        %6651 = vmatprep.subr.bf16.mxu0 %v5720
        %6652 = vmatpush1.bf16.msra.mxu0 %v5719
        %6653 = vmatprep.subr.bf16.mxu0 %v5722
        %6654 = vmatpush1.bf16.msra.mxu0 %v5721
        %6655 = vmatprep.subr.bf16.mxu0 %v5724
        %6656 = vmatpush1.bf16.msra.mxu0 %v5723
        %6657 = vmatprep.subr.bf16.mxu0 %v5726
        %6658 = vmatpush1.bf16.msra.mxu0 %v5725
        %6659 = vmatprep.subr.bf16.mxu0 %v5728
        %6660 = vmatpush1.bf16.msra.mxu0 %v5727
        %6661 = vmatprep.subr.bf16.mxu0 %v5730
        %6662 = vmatpush1.bf16.msra.mxu0 %v5729
        %6663 = vmatprep.subr.bf16.mxu0 0
        %6664 = vmatpush1.bf16.msra.mxu0 0
        %6665 = vmatprep.subr.bf16.mxu0 0
        %6666 = vmatpush1.bf16.msra.mxu0 0
        %6667 = vmatprep.subr.bf16.mxu0 0
        %6668 = vmatpush1.bf16.msra.mxu0 0
        %6669 = vmatprep.subr.bf16.mxu0 0
        %6670 = vmatpush1.bf16.msra.mxu0 0
        %6671 = vmatprep.subr.bf16.mxu0 0
        %6672 = vmatpush1.bf16.msra.mxu0 0
        %6673 = vmatprep.subr.bf16.mxu0 0
        %6674 = vmatpush1.bf16.msra.mxu0 0
        %6675 = vmatprep.subr.bf16.mxu0 0
        %6676 = vmatpush1.bf16.msra.mxu0 0
        %6677 = vmatprep.subr.bf16.mxu0 0
        %6678 = vmatpush1.bf16.msra.mxu0 0
        %6679 = vmatprep.mubr.bf16.mxu0 0
        %6680 = vmatmul.mubr.bf16.gmra.mrb[0].mxu0 %v4984
        %v6681 = vpop.f32.mrb[0].mxu0
        %v6682 = vadd.f32 %v6489, %v6681
        %v6683 = vpop.f32.mrb[0].mxu0
        %v6684 = vadd.f32 %v6491, %v6683
        %v6685 = vpop.f32.mrb[0].mxu0
        %v6686 = vadd.f32 %v6493, %v6685
        %v6687 = vpop.f32.mrb[0].mxu0
        %v6688 = vadd.f32 %v6495, %v6687
        %6689 = vmatprep.mubr.bf16.mxu0 0
        %6690 = vmatmul.mubr.bf16.gmra.mrb[0].mxu0 %v4985
        %v6691 = vpop.f32.mrb[0].mxu0
        %v6692 = vadd.f32 %v6499, %v6691
        %v6693 = vpop.f32.mrb[0].mxu0
        %v6694 = vadd.f32 %v6501, %v6693
        %v6695 = vpop.f32.mrb[0].mxu0
        %v6696 = vadd.f32 %v6503, %v6695
        %v6697 = vpop.f32.mrb[0].mxu0
        %v6698 = vadd.f32 %v6505, %v6697
        %6699 = vmatprep.mubr.bf16.mxu0 0
        %6700 = vmatmul.mubr.bf16.gmra.mrb[0].mxu0 %v4986
        %v6701 = vpop.f32.mrb[0].mxu0
        %v6702 = vadd.f32 %v6509, %v6701
        %v6703 = vpop.f32.mrb[0].mxu0
        %v6704 = vadd.f32 %v6511, %v6703
        %v6705 = vpop.f32.mrb[0].mxu0
        %v6706 = vadd.f32 %v6513, %v6705
        %v6707 = vpop.f32.mrb[0].mxu0
        %v6708 = vadd.f32 %v6515, %v6707
        %6709 = vmatprep.mubr.bf16.mxu0 0
        %6710 = vmatmul.mubr.bf16.gmra.mrb[0].mxu0 %v4987
        %v6711 = vpop.f32.mrb[0].mxu0
        %v6712 = vadd.f32 %v6519, %v6711
        %v6713 = vpop.f32.mrb[0].mxu0
        %v6714 = vadd.f32 %v6521, %v6713
        %v6715 = vpop.f32.mrb[0].mxu0
        %v6716 = vadd.f32 %v6523, %v6715
        %v6717 = vpop.f32.mrb[0].mxu0
        %v6718 = vadd.f32 %v6525, %v6717
        %6719 = vmatprep.mubr.bf16.mxu0 0
        %6720 = vmatmul.mubr.bf16.gmra.mrb[0].mxu0 %v4988
        %v6721 = vpop.f32.mrb[0].mxu0
        %v6722 = vadd.f32 %v6529, %v6721
        %v6723 = vpop.f32.mrb[0].mxu0
        %v6724 = vadd.f32 %v6531, %v6723
        %v6725 = vpop.f32.mrb[0].mxu0
        %v6726 = vadd.f32 %v6533, %v6725
        %v6727 = vpop.f32.mrb[0].mxu0
        %v6728 = vadd.f32 %v6535, %v6727
        %6729 = vmatprep.mubr.bf16.mxu0 0
        %6730 = vmatmul.mubr.bf16.gmra.mrb[0].mxu0 %v4989
        %v6731 = vpop.f32.mrb[0].mxu0
        %v6732 = vadd.f32 %v6539, %v6731
        %v6733 = vpop.f32.mrb[0].mxu0
        %v6734 = vadd.f32 %v6541, %v6733
        %v6735 = vpop.f32.mrb[0].mxu0
        %v6736 = vadd.f32 %v6543, %v6735
        %v6737 = vpop.f32.mrb[0].mxu0
        %v6738 = vadd.f32 %v6545, %v6737
        %6739 = vmatprep.mubr.bf16.mxu0 0
        %6740 = vmatmul.mubr.bf16.gmra.mrb[0].mxu0 %v4990
        %v6741 = vpop.f32.mrb[0].mxu0
        %v6742 = vadd.f32 %v6549, %v6741
        %v6743 = vpop.f32.mrb[0].mxu0
        %v6744 = vadd.f32 %v6551, %v6743
        %v6745 = vpop.f32.mrb[0].mxu0
        %v6746 = vadd.f32 %v6553, %v6745
        %v6747 = vpop.f32.mrb[0].mxu0
        %v6748 = vadd.f32 %v6555, %v6747
        %6749 = vmatprep.mubr.bf16.mxu0 0
        %6750 = vmatmul.mubr.bf16.gmra.mrb[0].mxu0 %v4991
        %v6751 = vpop.f32.mrb[0].mxu0
        %v6752 = vadd.f32 %v6559, %v6751
        %v6753 = vpop.f32.mrb[0].mxu0
        %v6754 = vadd.f32 %v6561, %v6753
        %v6755 = vpop.f32.mrb[0].mxu0
        %v6756 = vadd.f32 %v6563, %v6755
        %v6757 = vpop.f32.mrb[0].mxu0
        %v6758 = vadd.f32 %v6565, %v6757
        %6759 = vmatprep.mubr.bf16.mxu0 0
        %6760 = vmatmul.mubr.bf16.gmra.mrb[0].mxu0 %v4992
        %v6761 = vpop.f32.mrb[0].mxu0
        %v6762 = vadd.f32 %v6569, %v6761
        %v6763 = vpop.f32.mrb[0].mxu0
        %v6764 = vadd.f32 %v6571, %v6763
        %v6765 = vpop.f32.mrb[0].mxu0
        %v6766 = vadd.f32 %v6573, %v6765
        %v6767 = vpop.f32.mrb[0].mxu0
        %v6768 = vadd.f32 %v6575, %v6767
        %6769 = vmatprep.mubr.bf16.mxu0 0
        %6770 = vmatmul.mubr.bf16.gmra.mrb[0].mxu0 %v4993
        %v6771 = vpop.f32.mrb[0].mxu0
        %v6772 = vadd.f32 %v6579, %v6771
        %v6773 = vpop.f32.mrb[0].mxu0
        %v6774 = vadd.f32 %v6581, %v6773
        %v6775 = vpop.f32.mrb[0].mxu0
        %v6776 = vadd.f32 %v6583, %v6775
        %v6777 = vpop.f32.mrb[0].mxu0
        %v6778 = vadd.f32 %v6585, %v6777
        %6779 = vmatprep.mubr.bf16.mxu0 0
        %6780 = vmatmul.mubr.bf16.gmra.mrb[0].mxu0 %v4994
        %v6781 = vpop.f32.mrb[0].mxu0
        %v6782 = vadd.f32 %v6589, %v6781
        %v6783 = vpop.f32.mrb[0].mxu0
        %v6784 = vadd.f32 %v6591, %v6783
        %v6785 = vpop.f32.mrb[0].mxu0
        %v6786 = vadd.f32 %v6593, %v6785
        %v6787 = vpop.f32.mrb[0].mxu0
        %v6788 = vadd.f32 %v6595, %v6787
        %6789 = vmatprep.mubr.bf16.mxu0 0
        %6790 = vmatmul.mubr.bf16.gmra.mrb[0].mxu0 %v4995
        %v6791 = vpop.f32.mrb[0].mxu0
        %v6792 = vadd.f32 %v6599, %v6791
        %v6793 = vpop.f32.mrb[0].mxu0
        %v6794 = vadd.f32 %v6601, %v6793
        %v6795 = vpop.f32.mrb[0].mxu0
        %v6796 = vadd.f32 %v6603, %v6795
        %v6797 = vpop.f32.mrb[0].mxu0
        %v6798 = vadd.f32 %v6605, %v6797
        %6799 = vmatprep.mubr.bf16.mxu0 0
        %6800 = vmatmul.mubr.bf16.gmra.mrb[0].mxu0 %v4996
        %v6801 = vpop.f32.mrb[0].mxu0
        %v6802 = vadd.f32 %v6609, %v6801
        %v6803 = vpop.f32.mrb[0].mxu0
        %v6804 = vadd.f32 %v6611, %v6803
        %v6805 = vpop.f32.mrb[0].mxu0
        %v6806 = vadd.f32 %v6613, %v6805
        %v6807 = vpop.f32.mrb[0].mxu0
        %v6808 = vadd.f32 %v6615, %v6807
        %6809 = vmatprep.mubr.bf16.mxu0 0
        %6810 = vmatmul.mubr.bf16.gmra.mrb[0].mxu0 %v4997
        %v6811 = vpop.f32.mrb[0].mxu0
        %v6812 = vadd.f32 %v6619, %v6811
        %v6813 = vpop.f32.mrb[0].mxu0
        %v6814 = vadd.f32 %v6621, %v6813
        %v6815 = vpop.f32.mrb[0].mxu0
        %v6816 = vadd.f32 %v6623, %v6815
        %v6817 = vpop.f32.mrb[0].mxu0
        %v6818 = vadd.f32 %v6625, %v6817
        %6819 = vmatprep.mubr.bf16.mxu0 0
        %6820 = vmatmul.mubr.bf16.gmra.mrb[0].mxu0 %v4998
        %v6821 = vpop.f32.mrb[0].mxu0
        %v6822 = vadd.f32 %v6629, %v6821
        %v6823 = vpop.f32.mrb[0].mxu0
        %v6824 = vadd.f32 %v6631, %v6823
        %v6825 = vpop.f32.mrb[0].mxu0
        %v6826 = vadd.f32 %v6633, %v6825
        %v6827 = vpop.f32.mrb[0].mxu0
        %v6828 = vadd.f32 %v6635, %v6827
        %6829 = vmatprep.mubr.bf16.mxu0 0
        %6830 = vmatmul.mubr.bf16.gmra.mrb[0].mxu0 %v4999
        %v6831 = vpop.f32.mrb[0].mxu0
        %v6832 = vadd.f32 %v6639, %v6831
        %v6833 = vpop.f32.mrb[0].mxu0
        %v6834 = vadd.f32 %v6641, %v6833
        %v6835 = vpop.f32.mrb[0].mxu0
        %v6836 = vadd.f32 %v6643, %v6835
        %v6837 = vpop.f32.mrb[0].mxu0
        %v6838 = vadd.f32 %v6645, %v6837
        %6839 = vdwg.mxu0
        %v6840 = vxor.u32 %v6682, 2147483648
        %v6841 = vxor.u32 %v6686, 2147483648
        %v6842 = vxor.u32 %v6692, 2147483648
        %v6843 = vxor.u32 %v6696, 2147483648
        %v6844 = vxor.u32 %v6702, 2147483648
        %v6845 = vxor.u32 %v6706, 2147483648
        %v6846 = vxor.u32 %v6712, 2147483648
        %v6847 = vxor.u32 %v6716, 2147483648
        %v6848 = vxor.u32 %v6722, 2147483648
        %v6849 = vxor.u32 %v6726, 2147483648
        %v6850 = vxor.u32 %v6732, 2147483648
        %v6851 = vxor.u32 %v6736, 2147483648
        %v6852 = vxor.u32 %v6742, 2147483648
        %v6853 = vxor.u32 %v6746, 2147483648
        %v6854 = vxor.u32 %v6752, 2147483648
        %v6855 = vxor.u32 %v6756, 2147483648
        %v6856 = vxor.u32 %v6762, 2147483648
        %v6857 = vxor.u32 %v6766, 2147483648
        %v6858 = vxor.u32 %v6772, 2147483648
        %v6859 = vxor.u32 %v6776, 2147483648
        %v6860 = vxor.u32 %v6782, 2147483648
        %v6861 = vxor.u32 %v6786, 2147483648
        %v6862 = vxor.u32 %v6792, 2147483648
        %v6863 = vxor.u32 %v6796, 2147483648
        %v6864 = vxor.u32 %v6802, 2147483648
        %v6865 = vxor.u32 %v6806, 2147483648
        %v6866 = vxor.u32 %v6812, 2147483648
        %v6867 = vxor.u32 %v6816, 2147483648
        %v6868 = vxor.u32 %v6822, 2147483648
        %v6869 = vxor.u32 %v6826, 2147483648
        %v6870 = vxor.u32 %v6832, 2147483648
        %v6871 = vxor.u32 %v6836, 2147483648
        %v6872 = vmul.f32 %v6840, 1.442695
        %v6873 = vpow.pop %v6872
        %v6874 = vmul.f32 %v6841, 1.442695
        %v6875 = vpow.pop %v6874
        %v6876 = vmul.f32 %v6842, 1.442695
        %v6877 = vpow.pop %v6876
        %v6878 = vmul.f32 %v6843, 1.442695
        %v6879 = vpow.pop %v6878
        %v6880 = vmul.f32 %v6844, 1.442695
        %v6881 = vpow.pop %v6880
        %v6882 = vmul.f32 %v6845, 1.442695
        %v6883 = vpow.pop %v6882
        %v6884 = vmul.f32 %v6846, 1.442695
        %v6885 = vpow.pop %v6884
        %v6886 = vmul.f32 %v6847, 1.442695
        %v6887 = vpow.pop %v6886
        %v6888 = vmul.f32 %v6848, 1.442695
        %v6889 = vpow.pop %v6888
        %v6890 = vmul.f32 %v6849, 1.442695
        %v6891 = vpow.pop %v6890
        %v6892 = vmul.f32 %v6850, 1.442695
        %v6893 = vpow.pop %v6892
        %v6894 = vmul.f32 %v6851, 1.442695
        %v6895 = vpow.pop %v6894
        %v6896 = vmul.f32 %v6852, 1.442695
        %v6897 = vpow.pop %v6896
        %v6898 = vmul.f32 %v6853, 1.442695
        %v6899 = vpow.pop %v6898
        %v6900 = vmul.f32 %v6854, 1.442695
        %v6901 = vpow.pop %v6900
        %v6902 = vmul.f32 %v6855, 1.442695
        %v6903 = vpow.pop %v6902
        %v6904 = vmul.f32 %v6856, 1.442695
        %v6905 = vpow.pop %v6904
        %v6906 = vmul.f32 %v6857, 1.442695
        %v6907 = vpow.pop %v6906
        %v6908 = vmul.f32 %v6858, 1.442695
        %v6909 = vpow.pop %v6908
        %v6910 = vmul.f32 %v6859, 1.442695
        %v6911 = vpow.pop %v6910
        %v6912 = vmul.f32 %v6860, 1.442695
        %v6913 = vpow.pop %v6912
        %v6914 = vmul.f32 %v6861, 1.442695
        %v6915 = vpow.pop %v6914
        %v6916 = vmul.f32 %v6862, 1.442695
        %v6917 = vpow.pop %v6916
        %v6918 = vmul.f32 %v6863, 1.442695
        %v6919 = vpow.pop %v6918
        %v6920 = vmul.f32 %v6864, 1.442695
        %v6921 = vpow.pop %v6920
        %v6922 = vmul.f32 %v6865, 1.442695
        %v6923 = vpow.pop %v6922
        %v6924 = vmul.f32 %v6866, 1.442695
        %v6925 = vpow.pop %v6924
        %v6926 = vmul.f32 %v6867, 1.442695
        %v6927 = vpow.pop %v6926
        %v6928 = vmul.f32 %v6868, 1.442695
        %v6929 = vpow.pop %v6928
        %v6930 = vmul.f32 %v6869, 1.442695
        %v6931 = vpow.pop %v6930
        %v6932 = vmul.f32 %v6870, 1.442695
        %v6933 = vpow.pop %v6932
        %v6934 = vmul.f32 %v6871, 1.442695
        %v6935 = vpow.pop %v6934
        %v6936 = vadd.f32 %v6873, 1.0
        %v6937 = vadd.f32 %v6875, 1.0
        %v6938 = vadd.f32 %v6877, 1.0
        %v6939 = vadd.f32 %v6879, 1.0
        %v6940 = vadd.f32 %v6881, 1.0
        %v6941 = vadd.f32 %v6883, 1.0
        %v6942 = vadd.f32 %v6885, 1.0
        %v6943 = vadd.f32 %v6887, 1.0
        %v6944 = vadd.f32 %v6889, 1.0
        %v6945 = vadd.f32 %v6891, 1.0
        %v6946 = vadd.f32 %v6893, 1.0
        %v6947 = vadd.f32 %v6895, 1.0
        %v6948 = vadd.f32 %v6897, 1.0
        %v6949 = vadd.f32 %v6899, 1.0
        %v6950 = vadd.f32 %v6901, 1.0
        %v6951 = vadd.f32 %v6903, 1.0
        %v6952 = vadd.f32 %v6905, 1.0
        %v6953 = vadd.f32 %v6907, 1.0
        %v6954 = vadd.f32 %v6909, 1.0
        %v6955 = vadd.f32 %v6911, 1.0
        %v6956 = vadd.f32 %v6913, 1.0
        %v6957 = vadd.f32 %v6915, 1.0
        %v6958 = vadd.f32 %v6917, 1.0
        %v6959 = vadd.f32 %v6919, 1.0
        %v6960 = vadd.f32 %v6921, 1.0
        %v6961 = vadd.f32 %v6923, 1.0
        %v6962 = vadd.f32 %v6925, 1.0
        %v6963 = vadd.f32 %v6927, 1.0
        %v6964 = vadd.f32 %v6929, 1.0
        %v6965 = vadd.f32 %v6931, 1.0
        %v6966 = vadd.f32 %v6933, 1.0
        %v6967 = vadd.f32 %v6935, 1.0
        %v6968 = vrcp.pop %v6936
        %v6969 = vmul.f32 1.0, %v6968
        %v6970 = vrcp.pop %v6937
        %v6971 = vmul.f32 1.0, %v6970
        %v6972 = vrcp.pop %v6938
        %v6973 = vmul.f32 1.0, %v6972
        %v6974 = vrcp.pop %v6939
        %v6975 = vmul.f32 1.0, %v6974
        %v6976 = vrcp.pop %v6940
        %v6977 = vmul.f32 1.0, %v6976
        %v6978 = vrcp.pop %v6941
        %v6979 = vmul.f32 1.0, %v6978
        %v6980 = vrcp.pop %v6942
        %v6981 = vmul.f32 1.0, %v6980
        %v6982 = vrcp.pop %v6943
        %v6983 = vmul.f32 1.0, %v6982
        %v6984 = vrcp.pop %v6944
        %v6985 = vmul.f32 1.0, %v6984
        %v6986 = vrcp.pop %v6945
        %v6987 = vmul.f32 1.0, %v6986
        %v6988 = vrcp.pop %v6946
        %v6989 = vmul.f32 1.0, %v6988
        %v6990 = vrcp.pop %v6947
        %v6991 = vmul.f32 1.0, %v6990
        %v6992 = vrcp.pop %v6948
        %v6993 = vmul.f32 1.0, %v6992
        %v6994 = vrcp.pop %v6949
        %v6995 = vmul.f32 1.0, %v6994
        %v6996 = vrcp.pop %v6950
        %v6997 = vmul.f32 1.0, %v6996
        %v6998 = vrcp.pop %v6951
        %v6999 = vmul.f32 1.0, %v6998
        %v7000 = vrcp.pop %v6952
        %v7001 = vmul.f32 1.0, %v7000
        %v7002 = vrcp.pop %v6953
        %v7003 = vmul.f32 1.0, %v7002
        %v7004 = vrcp.pop %v6954
        %v7005 = vmul.f32 1.0, %v7004
        %v7006 = vrcp.pop %v6955
        %v7007 = vmul.f32 1.0, %v7006
        %v7008 = vrcp.pop %v6956
        %v7009 = vmul.f32 1.0, %v7008
        %v7010 = vrcp.pop %v6957
        %v7011 = vmul.f32 1.0, %v7010
        %v7012 = vrcp.pop %v6958
        %v7013 = vmul.f32 1.0, %v7012
        %v7014 = vrcp.pop %v6959
        %v7015 = vmul.f32 1.0, %v7014
        %v7016 = vrcp.pop %v6960
        %v7017 = vmul.f32 1.0, %v7016
        %v7018 = vrcp.pop %v6961
        %v7019 = vmul.f32 1.0, %v7018
        %v7020 = vrcp.pop %v6962
        %v7021 = vmul.f32 1.0, %v7020
        %v7022 = vrcp.pop %v6963
        %v7023 = vmul.f32 1.0, %v7022
        %v7024 = vrcp.pop %v6964
        %v7025 = vmul.f32 1.0, %v7024
        %v7026 = vrcp.pop %v6965
        %v7027 = vmul.f32 1.0, %v7026
        %v7028 = vrcp.pop %v6966
        %v7029 = vmul.f32 1.0, %v7028
        %v7030 = vrcp.pop %v6967
        %v7031 = vmul.f32 1.0, %v7030
        %v7032 = vxor.u32 %v6684, 2147483648
        %v7033 = vxor.u32 %v6688, 2147483648
        %v7034 = vxor.u32 %v6694, 2147483648
        %v7035 = vxor.u32 %v6698, 2147483648
        %v7036 = vxor.u32 %v6704, 2147483648
        %v7037 = vxor.u32 %v6708, 2147483648
        %v7038 = vxor.u32 %v6714, 2147483648
        %v7039 = vxor.u32 %v6718, 2147483648
        %v7040 = vxor.u32 %v6724, 2147483648
        %v7041 = vxor.u32 %v6728, 2147483648
        %v7042 = vxor.u32 %v6734, 2147483648
        %v7043 = vxor.u32 %v6738, 2147483648
        %v7044 = vxor.u32 %v6744, 2147483648
        %v7045 = vxor.u32 %v6748, 2147483648
        %v7046 = vxor.u32 %v6754, 2147483648
        %v7047 = vxor.u32 %v6758, 2147483648
        %v7048 = vxor.u32 %v6764, 2147483648
        %v7049 = vxor.u32 %v6768, 2147483648
        %v7050 = vxor.u32 %v6774, 2147483648
        %v7051 = vxor.u32 %v6778, 2147483648
        %v7052 = vxor.u32 %v6784, 2147483648
        %v7053 = vxor.u32 %v6788, 2147483648
        %v7054 = vxor.u32 %v6794, 2147483648
        %v7055 = vxor.u32 %v6798, 2147483648
        %v7056 = vxor.u32 %v6804, 2147483648
        %v7057 = vxor.u32 %v6808, 2147483648
        %v7058 = vxor.u32 %v6814, 2147483648
        %v7059 = vxor.u32 %v6818, 2147483648
        %v7060 = vxor.u32 %v6824, 2147483648
        %v7061 = vxor.u32 %v6828, 2147483648
        %v7062 = vxor.u32 %v6834, 2147483648
        %v7063 = vxor.u32 %v6838, 2147483648
        %v7064 = vmul.f32 %v7032, 1.442695
        %v7065 = vpow.pop %v7064
        %v7066 = vmul.f32 %v7033, 1.442695
        %v7067 = vpow.pop %v7066
        %v7068 = vmul.f32 %v7034, 1.442695
        %v7069 = vpow.pop %v7068
        %v7070 = vmul.f32 %v7035, 1.442695
        %v7071 = vpow.pop %v7070
        %v7072 = vmul.f32 %v7036, 1.442695
        %v7073 = vpow.pop %v7072
        %v7074 = vmul.f32 %v7037, 1.442695
        %v7075 = vpow.pop %v7074
        %v7076 = vmul.f32 %v7038, 1.442695
        %v7077 = vpow.pop %v7076
        %v7078 = vmul.f32 %v7039, 1.442695
        %v7079 = vpow.pop %v7078
        %v7080 = vmul.f32 %v7040, 1.442695
        %v7081 = vpow.pop %v7080
        %v7082 = vmul.f32 %v7041, 1.442695
        %v7083 = vpow.pop %v7082
        %v7084 = vmul.f32 %v7042, 1.442695
        %v7085 = vpow.pop %v7084
        %v7086 = vmul.f32 %v7043, 1.442695
        %v7087 = vpow.pop %v7086
        %v7088 = vmul.f32 %v7044, 1.442695
        %v7089 = vpow.pop %v7088
        %v7090 = vmul.f32 %v7045, 1.442695
        %v7091 = vpow.pop %v7090
        %v7092 = vmul.f32 %v7046, 1.442695
        %v7093 = vpow.pop %v7092
        %v7094 = vmul.f32 %v7047, 1.442695
        %v7095 = vpow.pop %v7094
        %v7096 = vmul.f32 %v7048, 1.442695
        %v7097 = vpow.pop %v7096
        %v7098 = vmul.f32 %v7049, 1.442695
        %v7099 = vpow.pop %v7098
        %v7100 = vmul.f32 %v7050, 1.442695
        %v7101 = vpow.pop %v7100
        %v7102 = vmul.f32 %v7051, 1.442695
        %v7103 = vpow.pop %v7102
        %v7104 = vmul.f32 %v7052, 1.442695
        %v7105 = vpow.pop %v7104
        %v7106 = vmul.f32 %v7053, 1.442695
        %v7107 = vpow.pop %v7106
        %v7108 = vmul.f32 %v7054, 1.442695
        %v7109 = vpow.pop %v7108
        %v7110 = vmul.f32 %v7055, 1.442695
        %v7111 = vpow.pop %v7110
        %v7112 = vmul.f32 %v7056, 1.442695
        %v7113 = vpow.pop %v7112
        %v7114 = vmul.f32 %v7057, 1.442695
        %v7115 = vpow.pop %v7114
        %v7116 = vmul.f32 %v7058, 1.442695
        %v7117 = vpow.pop %v7116
        %v7118 = vmul.f32 %v7059, 1.442695
        %v7119 = vpow.pop %v7118
        %v7120 = vmul.f32 %v7060, 1.442695
        %v7121 = vpow.pop %v7120
        %v7122 = vmul.f32 %v7061, 1.442695
        %v7123 = vpow.pop %v7122
        %v7124 = vmul.f32 %v7062, 1.442695
        %v7125 = vpow.pop %v7124
        %v7126 = vmul.f32 %v7063, 1.442695
        %v7127 = vpow.pop %v7126
        %v7128 = vadd.f32 %v7065, 1.0
        %v7129 = vadd.f32 %v7067, 1.0
        %v7130 = vadd.f32 %v7069, 1.0
        %v7131 = vadd.f32 %v7071, 1.0
        %v7132 = vadd.f32 %v7073, 1.0
        %v7133 = vadd.f32 %v7075, 1.0
        %v7134 = vadd.f32 %v7077, 1.0
        %v7135 = vadd.f32 %v7079, 1.0
        %v7136 = vadd.f32 %v7081, 1.0
        %v7137 = vadd.f32 %v7083, 1.0
        %v7138 = vadd.f32 %v7085, 1.0
        %v7139 = vadd.f32 %v7087, 1.0
        %v7140 = vadd.f32 %v7089, 1.0
        %v7141 = vadd.f32 %v7091, 1.0
        %v7142 = vadd.f32 %v7093, 1.0
        %v7143 = vadd.f32 %v7095, 1.0
        %v7144 = vadd.f32 %v7097, 1.0
        %v7145 = vadd.f32 %v7099, 1.0
        %v7146 = vadd.f32 %v7101, 1.0
        %v7147 = vadd.f32 %v7103, 1.0
        %v7148 = vadd.f32 %v7105, 1.0
        %v7149 = vadd.f32 %v7107, 1.0
        %v7150 = vadd.f32 %v7109, 1.0
        %v7151 = vadd.f32 %v7111, 1.0
        %v7152 = vadd.f32 %v7113, 1.0
        %v7153 = vadd.f32 %v7115, 1.0
        %v7154 = vadd.f32 %v7117, 1.0
        %v7155 = vadd.f32 %v7119, 1.0
        %v7156 = vadd.f32 %v7121, 1.0
        %v7157 = vadd.f32 %v7123, 1.0
        %v7158 = vadd.f32 %v7125, 1.0
        %v7159 = vadd.f32 %v7127, 1.0
        %v7160 = vrcp.pop %v7128
        %v7161 = vmul.f32 1.0, %v7160
        %v7162 = vrcp.pop %v7129
        %v7163 = vmul.f32 1.0, %v7162
        %v7164 = vrcp.pop %v7130
        %v7165 = vmul.f32 1.0, %v7164
        %v7166 = vrcp.pop %v7131
        %v7167 = vmul.f32 1.0, %v7166
        %v7168 = vrcp.pop %v7132
        %v7169 = vmul.f32 1.0, %v7168
        %v7170 = vrcp.pop %v7133
        %v7171 = vmul.f32 1.0, %v7170
        %v7172 = vrcp.pop %v7134
        %v7173 = vmul.f32 1.0, %v7172
        %v7174 = vrcp.pop %v7135
        %v7175 = vmul.f32 1.0, %v7174
        %v7176 = vrcp.pop %v7136
        %v7177 = vmul.f32 1.0, %v7176
        %v7178 = vrcp.pop %v7137
        %v7179 = vmul.f32 1.0, %v7178
        %v7180 = vrcp.pop %v7138
        %v7181 = vmul.f32 1.0, %v7180
        %v7182 = vrcp.pop %v7139
        %v7183 = vmul.f32 1.0, %v7182
        %v7184 = vrcp.pop %v7140
        %v7185 = vmul.f32 1.0, %v7184
        %v7186 = vrcp.pop %v7141
        %v7187 = vmul.f32 1.0, %v7186
        %v7188 = vrcp.pop %v7142
        %v7189 = vmul.f32 1.0, %v7188
        %v7190 = vrcp.pop %v7143
        %v7191 = vmul.f32 1.0, %v7190
        %v7192 = vrcp.pop %v7144
        %v7193 = vmul.f32 1.0, %v7192
        %v7194 = vrcp.pop %v7145
        %v7195 = vmul.f32 1.0, %v7194
        %v7196 = vrcp.pop %v7146
        %v7197 = vmul.f32 1.0, %v7196
        %v7198 = vrcp.pop %v7147
        %v7199 = vmul.f32 1.0, %v7198
        %v7200 = vrcp.pop %v7148
        %v7201 = vmul.f32 1.0, %v7200
        %v7202 = vrcp.pop %v7149
        %v7203 = vmul.f32 1.0, %v7202
        %v7204 = vrcp.pop %v7150
        %v7205 = vmul.f32 1.0, %v7204
        %v7206 = vrcp.pop %v7151
        %v7207 = vmul.f32 1.0, %v7206
        %v7208 = vrcp.pop %v7152
        %v7209 = vmul.f32 1.0, %v7208
        %v7210 = vrcp.pop %v7153
        %v7211 = vmul.f32 1.0, %v7210
        %v7212 = vrcp.pop %v7154
        %v7213 = vmul.f32 1.0, %v7212
        %v7214 = vrcp.pop %v7155
        %v7215 = vmul.f32 1.0, %v7214
        %v7216 = vrcp.pop %v7156
        %v7217 = vmul.f32 1.0, %v7216
        %v7218 = vrcp.pop %v7157
        %v7219 = vmul.f32 1.0, %v7218
        %v7220 = vrcp.pop %v7158
        %v7221 = vmul.f32 1.0, %v7220
        %v7222 = vrcp.pop %v7159
        %v7223 = vmul.f32 1.0, %v7222
        %v7224 = vtanh.pop %v6684
        %v7225 = vtanh.pop %v6688
        %v7226 = vtanh.pop %v6694
        %v7227 = vtanh.pop %v6698
        %v7228 = vtanh.pop %v6704
        %v7229 = vtanh.pop %v6708
        %v7230 = vtanh.pop %v6714
        %v7231 = vtanh.pop %v6718
        %v7232 = vtanh.pop %v6724
        %v7233 = vtanh.pop %v6728
        %v7234 = vtanh.pop %v6734
        %v7235 = vtanh.pop %v6738
        %v7236 = vtanh.pop %v6744
        %v7237 = vtanh.pop %v6748
        %v7238 = vtanh.pop %v6754
        %v7239 = vtanh.pop %v6758
        %v7240 = vtanh.pop %v6764
        %v7241 = vtanh.pop %v6768
        %v7242 = vtanh.pop %v6774
        %v7243 = vtanh.pop %v6778
        %v7244 = vtanh.pop %v6784
        %v7245 = vtanh.pop %v6788
        %v7246 = vtanh.pop %v6794
        %v7247 = vtanh.pop %v6798
        %v7248 = vtanh.pop %v6804
        %v7249 = vtanh.pop %v6808
        %v7250 = vtanh.pop %v6814
        %v7251 = vtanh.pop %v6818
        %v7252 = vtanh.pop %v6824
        %v7253 = vtanh.pop %v6828
        %v7254 = vtanh.pop %v6834
        %v7255 = vtanh.pop %v6838
        %v7256 = vld [vmem:[#allocation5] sm:$0xff]
        %v7257 = vld [vmem:[#allocation5 + $0x8] sm:$0xff]
        %v7258 = vld [vmem:[#allocation5 + $0x10] sm:$0xff]
        %v7259 = vld [vmem:[#allocation5 + $0x18] sm:$0xff]
        %v7260 = vld [vmem:[#allocation5 + $0x20] sm:$0xff]
        %v7261 = vld [vmem:[#allocation5 + $0x28] sm:$0xff]
        %v7262 = vld [vmem:[#allocation5 + $0x30] sm:$0xff]
        %v7263 = vld [vmem:[#allocation5 + $0x38] sm:$0xff]
        %v7264 = vld [vmem:[#allocation5 + $0x40] sm:$0xff]
        %v7265 = vld [vmem:[#allocation5 + $0x48] sm:$0xff]
        %v7266 = vld [vmem:[#allocation5 + $0x50] sm:$0xff]
        %v7267 = vld [vmem:[#allocation5 + $0x58] sm:$0xff]
        %v7268 = vld [vmem:[#allocation5 + $0x60] sm:$0xff]
        %v7269 = vld [vmem:[#allocation5 + $0x68] sm:$0xff]
        %v7270 = vld [vmem:[#allocation5 + $0x70] sm:$0xff]
        %v7271 = vld [vmem:[#allocation5 + $0x78] sm:$0xff]
        %v7272 = vld [vmem:[#allocation5 + $0x80] sm:$0xff]
        %v7273 = vld [vmem:[#allocation5 + $0x88] sm:$0xff]
        %v7274 = vld [vmem:[#allocation5 + $0x90] sm:$0xff]
        %v7275 = vld [vmem:[#allocation5 + $0x98] sm:$0xff]
        %v7276 = vld [vmem:[#allocation5 + $0xa0] sm:$0xff]
        %v7277 = vld [vmem:[#allocation5 + $0xa8] sm:$0xff]
        %v7278 = vld [vmem:[#allocation5 + $0xb0] sm:$0xff]
        %v7279 = vld [vmem:[#allocation5 + $0xb8] sm:$0xff]
        %v7280 = vld [vmem:[#allocation5 + $0xc0] sm:$0xff]
        %v7281 = vld [vmem:[#allocation5 + $0xc8] sm:$0xff]
        %v7282 = vld [vmem:[#allocation5 + $0xd0] sm:$0xff]
        %v7283 = vld [vmem:[#allocation5 + $0xd8] sm:$0xff]
        %v7284 = vld [vmem:[#allocation5 + $0xe0] sm:$0xff]
        %v7285 = vld [vmem:[#allocation5 + $0xe8] sm:$0xff]
        %v7286 = vld [vmem:[#allocation5 + $0xf0] sm:$0xff]
        %v7287 = vld [vmem:[#allocation5 + $0xf8] sm:$0xff]
        %7320 = vrot.lane.b32.xlu0 %v7256, 64
        %v7321 = vpop.permute.xlu0 %7320
        %7322 = vrot.lane.b32.xlu0 %v7257, 64
        %v7323 = vpop.permute.xlu0 %7322
        %7324 = vrot.lane.b32.xlu0 %v7258, 64
        %v7325 = vpop.permute.xlu0 %7324
        %7326 = vrot.lane.b32.xlu0 %v7259, 64
        %v7327 = vpop.permute.xlu0 %7326
        %7328 = vrot.lane.b32.xlu0 %v7260, 64
        %v7329 = vpop.permute.xlu0 %7328
        %7330 = vrot.lane.b32.xlu0 %v7261, 64
        %v7331 = vpop.permute.xlu0 %7330
        %7332 = vrot.lane.b32.xlu0 %v7262, 64
        %v7333 = vpop.permute.xlu0 %7332
        %7334 = vrot.lane.b32.xlu0 %v7263, 64
        %v7335 = vpop.permute.xlu0 %7334
        %7336 = vrot.lane.b32.xlu0 %v7264, 64
        %v7337 = vpop.permute.xlu0 %7336
        %7338 = vrot.lane.b32.xlu0 %v7265, 64
        %v7339 = vpop.permute.xlu0 %7338
        %7340 = vrot.lane.b32.xlu0 %v7266, 64
        %v7341 = vpop.permute.xlu0 %7340
        %7342 = vrot.lane.b32.xlu0 %v7267, 64
        %v7343 = vpop.permute.xlu0 %7342
        %7344 = vrot.lane.b32.xlu0 %v7268, 64
        %v7345 = vpop.permute.xlu0 %7344
        %7346 = vrot.lane.b32.xlu0 %v7269, 64
        %v7347 = vpop.permute.xlu0 %7346
        %7348 = vrot.lane.b32.xlu0 %v7270, 64
        %v7349 = vpop.permute.xlu0 %7348
        %7350 = vrot.lane.b32.xlu0 %v7271, 64
        %v7351 = vpop.permute.xlu0 %7350
        %7352 = vrot.lane.b32.xlu0 %v7272, 64
        %v7353 = vpop.permute.xlu0 %7352
        %7354 = vrot.lane.b32.xlu0 %v7273, 64
        %v7355 = vpop.permute.xlu0 %7354
        %7356 = vrot.lane.b32.xlu0 %v7274, 64
        %v7357 = vpop.permute.xlu0 %7356
        %7358 = vrot.lane.b32.xlu0 %v7275, 64
        %v7359 = vpop.permute.xlu0 %7358
        %7360 = vrot.lane.b32.xlu0 %v7276, 64
        %v7361 = vpop.permute.xlu0 %7360
        %7362 = vrot.lane.b32.xlu0 %v7277, 64
        %v7363 = vpop.permute.xlu0 %7362
        %7364 = vrot.lane.b32.xlu0 %v7278, 64
        %v7365 = vpop.permute.xlu0 %7364
        %7366 = vrot.lane.b32.xlu0 %v7279, 64
        %v7367 = vpop.permute.xlu0 %7366
        %7368 = vrot.lane.b32.xlu0 %v7280, 64
        %v7369 = vpop.permute.xlu0 %7368
        %7370 = vrot.lane.b32.xlu0 %v7281, 64
        %v7371 = vpop.permute.xlu0 %7370
        %7372 = vrot.lane.b32.xlu0 %v7282, 64
        %v7373 = vpop.permute.xlu0 %7372
        %7374 = vrot.lane.b32.xlu0 %v7283, 64
        %v7375 = vpop.permute.xlu0 %7374
        %7376 = vrot.lane.b32.xlu0 %v7284, 64
        %v7377 = vpop.permute.xlu0 %7376
        %7378 = vrot.lane.b32.xlu0 %v7285, 64
        %v7379 = vpop.permute.xlu0 %7378
        %7380 = vrot.lane.b32.xlu0 %v7286, 64
        %v7381 = vpop.permute.xlu0 %7380
        %7382 = vrot.lane.b32.xlu0 %v7287, 64
        %v7383 = vpop.permute.xlu0 %7382
        %v7416 = vmul.f32 %v6969, %v7321
        %v7417 = vmul.f32 %v6971, %v7323
        %v7418 = vmul.f32 %v6973, %v7325
        %v7419 = vmul.f32 %v6975, %v7327
        %v7420 = vmul.f32 %v6977, %v7329
        %v7421 = vmul.f32 %v6979, %v7331
        %v7422 = vmul.f32 %v6981, %v7333
        %v7423 = vmul.f32 %v6983, %v7335
        %v7424 = vmul.f32 %v6985, %v7337
        %v7425 = vmul.f32 %v6987, %v7339
        %v7426 = vmul.f32 %v6989, %v7341
        %v7427 = vmul.f32 %v6991, %v7343
        %v7428 = vmul.f32 %v6993, %v7345
        %v7429 = vmul.f32 %v6995, %v7347
        %v7430 = vmul.f32 %v6997, %v7349
        %v7431 = vmul.f32 %v6999, %v7351
        %v7432 = vmul.f32 %v7001, %v7353
        %v7433 = vmul.f32 %v7003, %v7355
        %v7434 = vmul.f32 %v7005, %v7357
        %v7435 = vmul.f32 %v7007, %v7359
        %v7436 = vmul.f32 %v7009, %v7361
        %v7437 = vmul.f32 %v7011, %v7363
        %v7438 = vmul.f32 %v7013, %v7365
        %v7439 = vmul.f32 %v7015, %v7367
        %v7440 = vmul.f32 %v7017, %v7369
        %v7441 = vmul.f32 %v7019, %v7371
        %v7442 = vmul.f32 %v7021, %v7373
        %v7443 = vmul.f32 %v7023, %v7375
        %v7444 = vmul.f32 %v7025, %v7377
        %v7445 = vmul.f32 %v7027, %v7379
        %v7446 = vmul.f32 %v7029, %v7381
        %v7447 = vmul.f32 %v7031, %v7383
        %7480 = vrot.lane.b32.xlu0 %v7224, 64
        %v7481 = vpop.permute.xlu0 %7480
        %7482 = vrot.lane.b32.xlu0 %v7225, 64
        %v7483 = vpop.permute.xlu0 %7482
        %7484 = vrot.lane.b32.xlu0 %v7226, 64
        %v7485 = vpop.permute.xlu0 %7484
        %7486 = vrot.lane.b32.xlu0 %v7227, 64
        %v7487 = vpop.permute.xlu0 %7486
        %7488 = vrot.lane.b32.xlu0 %v7228, 64
        %v7489 = vpop.permute.xlu0 %7488
        %7490 = vrot.lane.b32.xlu0 %v7229, 64
        %v7491 = vpop.permute.xlu0 %7490
        %7492 = vrot.lane.b32.xlu0 %v7230, 64
        %v7493 = vpop.permute.xlu0 %7492
        %7494 = vrot.lane.b32.xlu0 %v7231, 64
        %v7495 = vpop.permute.xlu0 %7494
        %7496 = vrot.lane.b32.xlu0 %v7232, 64
        %v7497 = vpop.permute.xlu0 %7496
        %7498 = vrot.lane.b32.xlu0 %v7233, 64
        %v7499 = vpop.permute.xlu0 %7498
        %7500 = vrot.lane.b32.xlu0 %v7234, 64
        %v7501 = vpop.permute.xlu0 %7500
        %7502 = vrot.lane.b32.xlu0 %v7235, 64
        %v7503 = vpop.permute.xlu0 %7502
        %7504 = vrot.lane.b32.xlu0 %v7236, 64
        %v7505 = vpop.permute.xlu0 %7504
        %7506 = vrot.lane.b32.xlu0 %v7237, 64
        %v7507 = vpop.permute.xlu0 %7506
        %7508 = vrot.lane.b32.xlu0 %v7238, 64
        %v7509 = vpop.permute.xlu0 %7508
        %7510 = vrot.lane.b32.xlu0 %v7239, 64
        %v7511 = vpop.permute.xlu0 %7510
        %7512 = vrot.lane.b32.xlu0 %v7240, 64
        %v7513 = vpop.permute.xlu0 %7512
        %7514 = vrot.lane.b32.xlu0 %v7241, 64
        %v7515 = vpop.permute.xlu0 %7514
        %7516 = vrot.lane.b32.xlu0 %v7242, 64
        %v7517 = vpop.permute.xlu0 %7516
        %7518 = vrot.lane.b32.xlu0 %v7243, 64
        %v7519 = vpop.permute.xlu0 %7518
        %7520 = vrot.lane.b32.xlu0 %v7244, 64
        %v7521 = vpop.permute.xlu0 %7520
        %7522 = vrot.lane.b32.xlu0 %v7245, 64
        %v7523 = vpop.permute.xlu0 %7522
        %7524 = vrot.lane.b32.xlu0 %v7246, 64
        %v7525 = vpop.permute.xlu0 %7524
        %7526 = vrot.lane.b32.xlu0 %v7247, 64
        %v7527 = vpop.permute.xlu0 %7526
        %7528 = vrot.lane.b32.xlu0 %v7248, 64
        %v7529 = vpop.permute.xlu0 %7528
        %7530 = vrot.lane.b32.xlu0 %v7249, 64
        %v7531 = vpop.permute.xlu0 %7530
        %7532 = vrot.lane.b32.xlu0 %v7250, 64
        %v7533 = vpop.permute.xlu0 %7532
        %7534 = vrot.lane.b32.xlu0 %v7251, 64
        %v7535 = vpop.permute.xlu0 %7534
        %7536 = vrot.lane.b32.xlu0 %v7252, 64
        %v7537 = vpop.permute.xlu0 %7536
        %7538 = vrot.lane.b32.xlu0 %v7253, 64
        %v7539 = vpop.permute.xlu0 %7538
        %7540 = vrot.lane.b32.xlu0 %v7254, 64
        %v7541 = vpop.permute.xlu0 %7540
        %7542 = vrot.lane.b32.xlu0 %v7255, 64
        %v7543 = vpop.permute.xlu0 %7542
        %v7576 = vmul.f32 %v6969, %v7481
        %v7577 = vmul.f32 %v6971, %v7483
        %v7578 = vmul.f32 %v6973, %v7485
        %v7579 = vmul.f32 %v6975, %v7487
        %v7580 = vmul.f32 %v6977, %v7489
        %v7581 = vmul.f32 %v6979, %v7491
        %v7582 = vmul.f32 %v6981, %v7493
        %v7583 = vmul.f32 %v6983, %v7495
        %v7584 = vmul.f32 %v6985, %v7497
        %v7585 = vmul.f32 %v6987, %v7499
        %v7586 = vmul.f32 %v6989, %v7501
        %v7587 = vmul.f32 %v6991, %v7503
        %v7588 = vmul.f32 %v6993, %v7505
        %v7589 = vmul.f32 %v6995, %v7507
        %v7590 = vmul.f32 %v6997, %v7509
        %v7591 = vmul.f32 %v6999, %v7511
        %v7592 = vmul.f32 %v7001, %v7513
        %v7593 = vmul.f32 %v7003, %v7515
        %v7594 = vmul.f32 %v7005, %v7517
        %v7595 = vmul.f32 %v7007, %v7519
        %v7596 = vmul.f32 %v7009, %v7521
        %v7597 = vmul.f32 %v7011, %v7523
        %v7598 = vmul.f32 %v7013, %v7525
        %v7599 = vmul.f32 %v7015, %v7527
        %v7600 = vmul.f32 %v7017, %v7529
        %v7601 = vmul.f32 %v7019, %v7531
        %v7602 = vmul.f32 %v7021, %v7533
        %v7603 = vmul.f32 %v7023, %v7535
        %v7604 = vmul.f32 %v7025, %v7537
        %v7605 = vmul.f32 %v7027, %v7539
        %v7606 = vmul.f32 %v7029, %v7541
        %v7607 = vmul.f32 %v7031, %v7543
        %7640 = vrot.lane.b32.xlu0 %v7576, 64
        %v7641 = vpop.permute.xlu0 %7640
        %7642 = vrot.lane.b32.xlu0 %v7577, 64
        %v7643 = vpop.permute.xlu0 %7642
        %7644 = vrot.lane.b32.xlu0 %v7578, 64
        %v7645 = vpop.permute.xlu0 %7644
        %7646 = vrot.lane.b32.xlu0 %v7579, 64
        %v7647 = vpop.permute.xlu0 %7646
        %7648 = vrot.lane.b32.xlu0 %v7580, 64
        %v7649 = vpop.permute.xlu0 %7648
        %7650 = vrot.lane.b32.xlu0 %v7581, 64
        %v7651 = vpop.permute.xlu0 %7650
        %7652 = vrot.lane.b32.xlu0 %v7582, 64
        %v7653 = vpop.permute.xlu0 %7652
        %7654 = vrot.lane.b32.xlu0 %v7583, 64
        %v7655 = vpop.permute.xlu0 %7654
        %7656 = vrot.lane.b32.xlu0 %v7584, 64
        %v7657 = vpop.permute.xlu0 %7656
        %7658 = vrot.lane.b32.xlu0 %v7585, 64
        %v7659 = vpop.permute.xlu0 %7658
        %7660 = vrot.lane.b32.xlu0 %v7586, 64
        %v7661 = vpop.permute.xlu0 %7660
        %7662 = vrot.lane.b32.xlu0 %v7587, 64
        %v7663 = vpop.permute.xlu0 %7662
        %7664 = vrot.lane.b32.xlu0 %v7588, 64
        %v7665 = vpop.permute.xlu0 %7664
        %7666 = vrot.lane.b32.xlu0 %v7589, 64
        %v7667 = vpop.permute.xlu0 %7666
        %7668 = vrot.lane.b32.xlu0 %v7590, 64
        %v7669 = vpop.permute.xlu0 %7668
        %7670 = vrot.lane.b32.xlu0 %v7591, 64
        %v7671 = vpop.permute.xlu0 %7670
        %7672 = vrot.lane.b32.xlu0 %v7592, 64
        %v7673 = vpop.permute.xlu0 %7672
        %7674 = vrot.lane.b32.xlu0 %v7593, 64
        %v7675 = vpop.permute.xlu0 %7674
        %7676 = vrot.lane.b32.xlu0 %v7594, 64
        %v7677 = vpop.permute.xlu0 %7676
        %7678 = vrot.lane.b32.xlu0 %v7595, 64
        %v7679 = vpop.permute.xlu0 %7678
        %7680 = vrot.lane.b32.xlu0 %v7596, 64
        %v7681 = vpop.permute.xlu0 %7680
        %7682 = vrot.lane.b32.xlu0 %v7597, 64
        %v7683 = vpop.permute.xlu0 %7682
        %7684 = vrot.lane.b32.xlu0 %v7598, 64
        %v7685 = vpop.permute.xlu0 %7684
        %7686 = vrot.lane.b32.xlu0 %v7599, 64
        %v7687 = vpop.permute.xlu0 %7686
        %7688 = vrot.lane.b32.xlu0 %v7600, 64
        %v7689 = vpop.permute.xlu0 %7688
        %7690 = vrot.lane.b32.xlu0 %v7601, 64
        %v7691 = vpop.permute.xlu0 %7690
        %7692 = vrot.lane.b32.xlu0 %v7602, 64
        %v7693 = vpop.permute.xlu0 %7692
        %7694 = vrot.lane.b32.xlu0 %v7603, 64
        %v7695 = vpop.permute.xlu0 %7694
        %7696 = vrot.lane.b32.xlu0 %v7604, 64
        %v7697 = vpop.permute.xlu0 %7696
        %7698 = vrot.lane.b32.xlu0 %v7605, 64
        %v7699 = vpop.permute.xlu0 %7698
        %7700 = vrot.lane.b32.xlu0 %v7606, 64
        %v7701 = vpop.permute.xlu0 %7700
        %7702 = vrot.lane.b32.xlu0 %v7607, 64
        %v7703 = vpop.permute.xlu0 %7702
        %v7736 = vadd.f32 %v7416, %v7641
        %v7737 = vadd.f32 %v7417, %v7643
        %v7738 = vadd.f32 %v7418, %v7645
        %v7739 = vadd.f32 %v7419, %v7647
        %v7740 = vadd.f32 %v7420, %v7649
        %v7741 = vadd.f32 %v7421, %v7651
        %v7742 = vadd.f32 %v7422, %v7653
        %v7743 = vadd.f32 %v7423, %v7655
        %v7744 = vadd.f32 %v7424, %v7657
        %v7745 = vadd.f32 %v7425, %v7659
        %v7746 = vadd.f32 %v7426, %v7661
        %v7747 = vadd.f32 %v7427, %v7663
        %v7748 = vadd.f32 %v7428, %v7665
        %v7749 = vadd.f32 %v7429, %v7667
        %v7750 = vadd.f32 %v7430, %v7669
        %v7751 = vadd.f32 %v7431, %v7671
        %v7752 = vadd.f32 %v7432, %v7673
        %v7753 = vadd.f32 %v7433, %v7675
        %v7754 = vadd.f32 %v7434, %v7677
        %v7755 = vadd.f32 %v7435, %v7679
        %v7756 = vadd.f32 %v7436, %v7681
        %v7757 = vadd.f32 %v7437, %v7683
        %v7758 = vadd.f32 %v7438, %v7685
        %v7759 = vadd.f32 %v7439, %v7687
        %v7760 = vadd.f32 %v7440, %v7689
        %v7761 = vadd.f32 %v7441, %v7691
        %v7762 = vadd.f32 %v7442, %v7693
        %v7763 = vadd.f32 %v7443, %v7695
        %v7764 = vadd.f32 %v7444, %v7697
        %v7765 = vadd.f32 %v7445, %v7699
        %v7766 = vadd.f32 %v7446, %v7701
        %v7767 = vadd.f32 %v7447, %v7703
        %7800 = vrot.lane.b32.xlu0 %v7736, 64
        %v7801 = vpop.permute.xlu0 %7800
        %7802 = vrot.lane.b32.xlu0 %v7737, 64
        %v7803 = vpop.permute.xlu0 %7802
        %7804 = vrot.lane.b32.xlu0 %v7738, 64
        %v7805 = vpop.permute.xlu0 %7804
        %7806 = vrot.lane.b32.xlu0 %v7739, 64
        %v7807 = vpop.permute.xlu0 %7806
        %7808 = vrot.lane.b32.xlu0 %v7740, 64
        %v7809 = vpop.permute.xlu0 %7808
        %7810 = vrot.lane.b32.xlu0 %v7741, 64
        %v7811 = vpop.permute.xlu0 %7810
        %7812 = vrot.lane.b32.xlu0 %v7742, 64
        %v7813 = vpop.permute.xlu0 %7812
        %7814 = vrot.lane.b32.xlu0 %v7743, 64
        %v7815 = vpop.permute.xlu0 %7814
        %7816 = vrot.lane.b32.xlu0 %v7744, 64
        %v7817 = vpop.permute.xlu0 %7816
        %7818 = vrot.lane.b32.xlu0 %v7745, 64
        %v7819 = vpop.permute.xlu0 %7818
        %7820 = vrot.lane.b32.xlu0 %v7746, 64
        %v7821 = vpop.permute.xlu0 %7820
        %7822 = vrot.lane.b32.xlu0 %v7747, 64
        %v7823 = vpop.permute.xlu0 %7822
        %7824 = vrot.lane.b32.xlu0 %v7748, 64
        %v7825 = vpop.permute.xlu0 %7824
        %7826 = vrot.lane.b32.xlu0 %v7749, 64
        %v7827 = vpop.permute.xlu0 %7826
        %7828 = vrot.lane.b32.xlu0 %v7750, 64
        %v7829 = vpop.permute.xlu0 %7828
        %7830 = vrot.lane.b32.xlu0 %v7751, 64
        %v7831 = vpop.permute.xlu0 %7830
        %7832 = vrot.lane.b32.xlu0 %v7752, 64
        %v7833 = vpop.permute.xlu0 %7832
        %7834 = vrot.lane.b32.xlu0 %v7753, 64
        %v7835 = vpop.permute.xlu0 %7834
        %7836 = vrot.lane.b32.xlu0 %v7754, 64
        %v7837 = vpop.permute.xlu0 %7836
        %7838 = vrot.lane.b32.xlu0 %v7755, 64
        %v7839 = vpop.permute.xlu0 %7838
        %7840 = vrot.lane.b32.xlu0 %v7756, 64
        %v7841 = vpop.permute.xlu0 %7840
        %7842 = vrot.lane.b32.xlu0 %v7757, 64
        %v7843 = vpop.permute.xlu0 %7842
        %7844 = vrot.lane.b32.xlu0 %v7758, 64
        %v7845 = vpop.permute.xlu0 %7844
        %7846 = vrot.lane.b32.xlu0 %v7759, 64
        %v7847 = vpop.permute.xlu0 %7846
        %7848 = vrot.lane.b32.xlu0 %v7760, 64
        %v7849 = vpop.permute.xlu0 %7848
        %7850 = vrot.lane.b32.xlu0 %v7761, 64
        %v7851 = vpop.permute.xlu0 %7850
        %7852 = vrot.lane.b32.xlu0 %v7762, 64
        %v7853 = vpop.permute.xlu0 %7852
        %7854 = vrot.lane.b32.xlu0 %v7763, 64
        %v7855 = vpop.permute.xlu0 %7854
        %7856 = vrot.lane.b32.xlu0 %v7764, 64
        %v7857 = vpop.permute.xlu0 %7856
        %7858 = vrot.lane.b32.xlu0 %v7765, 64
        %v7859 = vpop.permute.xlu0 %7858
        %7860 = vrot.lane.b32.xlu0 %v7766, 64
        %v7861 = vpop.permute.xlu0 %7860
        %7862 = vrot.lane.b32.xlu0 %v7767, 64
        %v7863 = vpop.permute.xlu0 %7862
        %7896 = vst.msk [vmem:[#allocation5] sm:$0xff] %vm466, %v7801
        %7897 = vst.msk [vmem:[#allocation5 + $0x8] sm:$0xff] %vm466, %v7803
        %7898 = vst.msk [vmem:[#allocation5 + $0x10] sm:$0xff] %vm466, %v7805
        %7899 = vst.msk [vmem:[#allocation5 + $0x18] sm:$0xff] %vm466, %v7807
        %7900 = vst.msk [vmem:[#allocation5 + $0x20] sm:$0xff] %vm466, %v7809
        %7901 = vst.msk [vmem:[#allocation5 + $0x28] sm:$0xff] %vm466, %v7811
        %7902 = vst.msk [vmem:[#allocation5 + $0x30] sm:$0xff] %vm466, %v7813
        %7903 = vst.msk [vmem:[#allocation5 + $0x38] sm:$0xff] %vm466, %v7815
        %7904 = vst.msk [vmem:[#allocation5 + $0x40] sm:$0xff] %vm466, %v7817
        %7905 = vst.msk [vmem:[#allocation5 + $0x48] sm:$0xff] %vm466, %v7819
        %7906 = vst.msk [vmem:[#allocation5 + $0x50] sm:$0xff] %vm466, %v7821
        %7907 = vst.msk [vmem:[#allocation5 + $0x58] sm:$0xff] %vm466, %v7823
        %7908 = vst.msk [vmem:[#allocation5 + $0x60] sm:$0xff] %vm466, %v7825
        %7909 = vst.msk [vmem:[#allocation5 + $0x68] sm:$0xff] %vm466, %v7827
        %7910 = vst.msk [vmem:[#allocation5 + $0x70] sm:$0xff] %vm466, %v7829
        %7911 = vst.msk [vmem:[#allocation5 + $0x78] sm:$0xff] %vm466, %v7831
        %7912 = vst.msk [vmem:[#allocation5 + $0x80] sm:$0xff] %vm466, %v7833
        %7913 = vst.msk [vmem:[#allocation5 + $0x88] sm:$0xff] %vm466, %v7835
        %7914 = vst.msk [vmem:[#allocation5 + $0x90] sm:$0xff] %vm466, %v7837
        %7915 = vst.msk [vmem:[#allocation5 + $0x98] sm:$0xff] %vm466, %v7839
        %7916 = vst.msk [vmem:[#allocation5 + $0xa0] sm:$0xff] %vm466, %v7841
        %7917 = vst.msk [vmem:[#allocation5 + $0xa8] sm:$0xff] %vm466, %v7843
        %7918 = vst.msk [vmem:[#allocation5 + $0xb0] sm:$0xff] %vm466, %v7845
        %7919 = vst.msk [vmem:[#allocation5 + $0xb8] sm:$0xff] %vm466, %v7847
        %7920 = vst.msk [vmem:[#allocation5 + $0xc0] sm:$0xff] %vm466, %v7849
        %7921 = vst.msk [vmem:[#allocation5 + $0xc8] sm:$0xff] %vm466, %v7851
        %7922 = vst.msk [vmem:[#allocation5 + $0xd0] sm:$0xff] %vm466, %v7853
        %7923 = vst.msk [vmem:[#allocation5 + $0xd8] sm:$0xff] %vm466, %v7855
        %7924 = vst.msk [vmem:[#allocation5 + $0xe0] sm:$0xff] %vm466, %v7857
        %7925 = vst.msk [vmem:[#allocation5 + $0xe8] sm:$0xff] %vm466, %v7859
        %7926 = vst.msk [vmem:[#allocation5 + $0xf0] sm:$0xff] %vm466, %v7861
        %7927 = vst.msk [vmem:[#allocation5 + $0xf8] sm:$0xff] %vm466, %v7863
        %v7928 = vtanh.pop %v7736
        %v7929 = vtanh.pop %v7737
        %v7930 = vtanh.pop %v7738
        %v7931 = vtanh.pop %v7739
        %v7932 = vtanh.pop %v7740
        %v7933 = vtanh.pop %v7741
        %v7934 = vtanh.pop %v7742
        %v7935 = vtanh.pop %v7743
        %v7936 = vtanh.pop %v7744
        %v7937 = vtanh.pop %v7745
        %v7938 = vtanh.pop %v7746
        %v7939 = vtanh.pop %v7747
        %v7940 = vtanh.pop %v7748
        %v7941 = vtanh.pop %v7749
        %v7942 = vtanh.pop %v7750
        %v7943 = vtanh.pop %v7751
        %v7944 = vtanh.pop %v7752
        %v7945 = vtanh.pop %v7753
        %v7946 = vtanh.pop %v7754
        %v7947 = vtanh.pop %v7755
        %v7948 = vtanh.pop %v7756
        %v7949 = vtanh.pop %v7757
        %v7950 = vtanh.pop %v7758
        %v7951 = vtanh.pop %v7759
        %v7952 = vtanh.pop %v7760
        %v7953 = vtanh.pop %v7761
        %v7954 = vtanh.pop %v7762
        %v7955 = vtanh.pop %v7763
        %v7956 = vtanh.pop %v7764
        %v7957 = vtanh.pop %v7765
        %v7958 = vtanh.pop %v7766
        %v7959 = vtanh.pop %v7767
        %7992 = vrot.lane.b32.xlu0 %v7928, 64
        %v7993 = vpop.permute.xlu0 %7992
        %7994 = vrot.lane.b32.xlu0 %v7929, 64
        %v7995 = vpop.permute.xlu0 %7994
        %7996 = vrot.lane.b32.xlu0 %v7930, 64
        %v7997 = vpop.permute.xlu0 %7996
        %7998 = vrot.lane.b32.xlu0 %v7931, 64
        %v7999 = vpop.permute.xlu0 %7998
        %8000 = vrot.lane.b32.xlu0 %v7932, 64
        %v8001 = vpop.permute.xlu0 %8000
        %8002 = vrot.lane.b32.xlu0 %v7933, 64
        %v8003 = vpop.permute.xlu0 %8002
        %8004 = vrot.lane.b32.xlu0 %v7934, 64
        %v8005 = vpop.permute.xlu0 %8004
        %8006 = vrot.lane.b32.xlu0 %v7935, 64
        %v8007 = vpop.permute.xlu0 %8006
        %8008 = vrot.lane.b32.xlu0 %v7936, 64
        %v8009 = vpop.permute.xlu0 %8008
        %8010 = vrot.lane.b32.xlu0 %v7937, 64
        %v8011 = vpop.permute.xlu0 %8010
        %8012 = vrot.lane.b32.xlu0 %v7938, 64
        %v8013 = vpop.permute.xlu0 %8012
        %8014 = vrot.lane.b32.xlu0 %v7939, 64
        %v8015 = vpop.permute.xlu0 %8014
        %8016 = vrot.lane.b32.xlu0 %v7940, 64
        %v8017 = vpop.permute.xlu0 %8016
        %8018 = vrot.lane.b32.xlu0 %v7941, 64
        %v8019 = vpop.permute.xlu0 %8018
        %8020 = vrot.lane.b32.xlu0 %v7942, 64
        %v8021 = vpop.permute.xlu0 %8020
        %8022 = vrot.lane.b32.xlu0 %v7943, 64
        %v8023 = vpop.permute.xlu0 %8022
        %8024 = vrot.lane.b32.xlu0 %v7944, 64
        %v8025 = vpop.permute.xlu0 %8024
        %8026 = vrot.lane.b32.xlu0 %v7945, 64
        %v8027 = vpop.permute.xlu0 %8026
        %8028 = vrot.lane.b32.xlu0 %v7946, 64
        %v8029 = vpop.permute.xlu0 %8028
        %8030 = vrot.lane.b32.xlu0 %v7947, 64
        %v8031 = vpop.permute.xlu0 %8030
        %8032 = vrot.lane.b32.xlu0 %v7948, 64
        %v8033 = vpop.permute.xlu0 %8032
        %8034 = vrot.lane.b32.xlu0 %v7949, 64
        %v8035 = vpop.permute.xlu0 %8034
        %8036 = vrot.lane.b32.xlu0 %v7950, 64
        %v8037 = vpop.permute.xlu0 %8036
        %8038 = vrot.lane.b32.xlu0 %v7951, 64
        %v8039 = vpop.permute.xlu0 %8038
        %8040 = vrot.lane.b32.xlu0 %v7952, 64
        %v8041 = vpop.permute.xlu0 %8040
        %8042 = vrot.lane.b32.xlu0 %v7953, 64
        %v8043 = vpop.permute.xlu0 %8042
        %8044 = vrot.lane.b32.xlu0 %v7954, 64
        %v8045 = vpop.permute.xlu0 %8044
        %8046 = vrot.lane.b32.xlu0 %v7955, 64
        %v8047 = vpop.permute.xlu0 %8046
        %8048 = vrot.lane.b32.xlu0 %v7956, 64
        %v8049 = vpop.permute.xlu0 %8048
        %8050 = vrot.lane.b32.xlu0 %v7957, 64
        %v8051 = vpop.permute.xlu0 %8050
        %8052 = vrot.lane.b32.xlu0 %v7958, 64
        %v8053 = vpop.permute.xlu0 %8052
        %8054 = vrot.lane.b32.xlu0 %v7959, 64
        %v8055 = vpop.permute.xlu0 %8054
        %v8088 = vmul.f32 %v7161, %v7993
        %v8089 = vmul.f32 %v7163, %v7995
        %v8090 = vmul.f32 %v7165, %v7997
        %v8091 = vmul.f32 %v7167, %v7999
        %v8092 = vmul.f32 %v7169, %v8001
        %v8093 = vmul.f32 %v7171, %v8003
        %v8094 = vmul.f32 %v7173, %v8005
        %v8095 = vmul.f32 %v7175, %v8007
        %v8096 = vmul.f32 %v7177, %v8009
        %v8097 = vmul.f32 %v7179, %v8011
        %v8098 = vmul.f32 %v7181, %v8013
        %v8099 = vmul.f32 %v7183, %v8015
        %v8100 = vmul.f32 %v7185, %v8017
        %v8101 = vmul.f32 %v7187, %v8019
        %v8102 = vmul.f32 %v7189, %v8021
        %v8103 = vmul.f32 %v7191, %v8023
        %v8104 = vmul.f32 %v7193, %v8025
        %v8105 = vmul.f32 %v7195, %v8027
        %v8106 = vmul.f32 %v7197, %v8029
        %v8107 = vmul.f32 %v7199, %v8031
        %v8108 = vmul.f32 %v7201, %v8033
        %v8109 = vmul.f32 %v7203, %v8035
        %v8110 = vmul.f32 %v7205, %v8037
        %v8111 = vmul.f32 %v7207, %v8039
        %v8112 = vmul.f32 %v7209, %v8041
        %v8113 = vmul.f32 %v7211, %v8043
        %v8114 = vmul.f32 %v7213, %v8045
        %v8115 = vmul.f32 %v7215, %v8047
        %v8116 = vmul.f32 %v7217, %v8049
        %v8117 = vmul.f32 %v7219, %v8051
        %v8118 = vmul.f32 %v7221, %v8053
        %v8119 = vmul.f32 %v7223, %v8055
        %8120 = vst.msk [vmem:[#allocation3 + $0x10] sm:$0xff] %vm466, %v8088
        %8121 = vst.msk [vmem:[#allocation3 + $0x18] sm:$0xff] %vm466, %v8089
        %8122 = vst.msk [vmem:[#allocation3 + $0x20] sm:$0xff] %vm466, %v8090
        %8123 = vst.msk [vmem:[#allocation3 + $0x28] sm:$0xff] %vm466, %v8091
        %8124 = vst.msk [vmem:[#allocation3 + $0x30] sm:$0xff] %vm466, %v8092
        %8125 = vst.msk [vmem:[#allocation3 + $0x38] sm:$0xff] %vm466, %v8093
        %8126 = vst.msk [vmem:[#allocation3 + $0x40] sm:$0xff] %vm466, %v8094
        %8127 = vst.msk [vmem:[#allocation3 + $0x48] sm:$0xff] %vm466, %v8095
        %8128 = vst.msk [vmem:[#allocation3 + $0x50] sm:$0xff] %vm466, %v8096
        %8129 = vst.msk [vmem:[#allocation3 + $0x58] sm:$0xff] %vm466, %v8097
        %8130 = vst.msk [vmem:[#allocation3 + $0x60] sm:$0xff] %vm466, %v8098
        %8131 = vst.msk [vmem:[#allocation3 + $0x68] sm:$0xff] %vm466, %v8099
        %8132 = vst.msk [vmem:[#allocation3 + $0x70] sm:$0xff] %vm466, %v8100
        %8133 = vst.msk [vmem:[#allocation3 + $0x78] sm:$0xff] %vm466, %v8101
        %8134 = vst.msk [vmem:[#allocation3 + $0x80] sm:$0xff] %vm466, %v8102
        %8135 = vst.msk [vmem:[#allocation3 + $0x88] sm:$0xff] %vm466, %v8103
        %8136 = vst.msk [vmem:[#allocation3 + $0x90] sm:$0xff] %vm466, %v8104
        %8137 = vst.msk [vmem:[#allocation3 + $0x98] sm:$0xff] %vm466, %v8105
        %8138 = vst.msk [vmem:[#allocation3 + $0xa0] sm:$0xff] %vm466, %v8106
        %8139 = vst.msk [vmem:[#allocation3 + $0xa8] sm:$0xff] %vm466, %v8107
        %8140 = vst.msk [vmem:[#allocation3 + $0xb0] sm:$0xff] %vm466, %v8108
        %8141 = vst.msk [vmem:[#allocation3 + $0xb8] sm:$0xff] %vm466, %v8109
        %8142 = vst.msk [vmem:[#allocation3 + $0xc0] sm:$0xff] %vm466, %v8110
        %8143 = vst.msk [vmem:[#allocation3 + $0xc8] sm:$0xff] %vm466, %v8111
        %8144 = vst.msk [vmem:[#allocation3 + $0xd0] sm:$0xff] %vm466, %v8112
        %8145 = vst.msk [vmem:[#allocation3 + $0xd8] sm:$0xff] %vm466, %v8113
        %8146 = vst.msk [vmem:[#allocation3 + $0xe0] sm:$0xff] %vm466, %v8114
        %8147 = vst.msk [vmem:[#allocation3 + $0xe8] sm:$0xff] %vm466, %v8115
        %8148 = vst.msk [vmem:[#allocation3 + $0xf0] sm:$0xff] %vm466, %v8116
        %8149 = vst.msk [vmem:[#allocation3 + $0xf8] sm:$0xff] %vm466, %v8117
        %8150 = vst.msk [vmem:[#allocation3 + $0x100] sm:$0xff] %vm466, %v8118
        %8151 = vst.msk [vmem:[#allocation3 + $0x108] sm:$0xff] %vm466, %v8119
      $region65: #{_convlstm_forward.1} parent=59 // loop_footer
        %s1047 = sadd.s32 1, %s1043
      $region66: #{_convlstm_forward.1} parent=59 // loop_footer_branch
        %1042 = sbr.rel target = $region62
      $region67: #{_convlstm_forward.1} parent=59 // loop_exit
        _
      %v8152 = vld [vmem:[#allocation3] sm:$0xff]
      %v8153 = vld [vmem:[#allocation3 + $0x8] sm:$0xff]
      %v8154 = vld [vmem:[#allocation3 + $0x10] sm:$0xff]
      %v8155 = vld [vmem:[#allocation3 + $0x18] sm:$0xff]
      %v8156 = vld [vmem:[#allocation3 + $0x20] sm:$0xff]
      %v8157 = vld [vmem:[#allocation3 + $0x28] sm:$0xff]
      %v8158 = vld [vmem:[#allocation3 + $0x30] sm:$0xff]
      %v8159 = vld [vmem:[#allocation3 + $0x38] sm:$0xff]
      %v8160 = vld [vmem:[#allocation3 + $0x40] sm:$0xff]
      %v8161 = vld [vmem:[#allocation3 + $0x48] sm:$0xff]
      %v8162 = vld [vmem:[#allocation3 + $0x50] sm:$0xff]
      %v8163 = vld [vmem:[#allocation3 + $0x58] sm:$0xff]
      %v8164 = vld [vmem:[#allocation3 + $0x60] sm:$0xff]
      %v8165 = vld [vmem:[#allocation3 + $0x68] sm:$0xff]
      %v8166 = vld [vmem:[#allocation3 + $0x70] sm:$0xff]
      %v8167 = vld [vmem:[#allocation3 + $0x78] sm:$0xff]
      %v8168 = vld [vmem:[#allocation3 + $0x80] sm:$0xff]
      %v8169 = vld [vmem:[#allocation3 + $0x88] sm:$0xff]
      %v8170 = vld [vmem:[#allocation3 + $0x90] sm:$0xff]
      %v8171 = vld [vmem:[#allocation3 + $0x98] sm:$0xff]
      %v8172 = vld [vmem:[#allocation3 + $0xa0] sm:$0xff]
      %v8173 = vld [vmem:[#allocation3 + $0xa8] sm:$0xff]
      %v8174 = vld [vmem:[#allocation3 + $0xb0] sm:$0xff]
      %v8175 = vld [vmem:[#allocation3 + $0xb8] sm:$0xff]
      %v8176 = vld [vmem:[#allocation3 + $0xc0] sm:$0xff]
      %v8177 = vld [vmem:[#allocation3 + $0xc8] sm:$0xff]
      %v8178 = vld [vmem:[#allocation3 + $0xd0] sm:$0xff]
      %v8179 = vld [vmem:[#allocation3 + $0xd8] sm:$0xff]
      %v8180 = vld [vmem:[#allocation3 + $0xe0] sm:$0xff]
      %v8181 = vld [vmem:[#allocation3 + $0xe8] sm:$0xff]
      %v8182 = vld [vmem:[#allocation3 + $0xf0] sm:$0xff]
      %v8183 = vld [vmem:[#allocation3 + $0xf8] sm:$0xff]
      %v8184 = vld [vmem:[#allocation3 + $0x100] sm:$0xff]
      %v8185 = vld [vmem:[#allocation3 + $0x108] sm:$0xff]
      %v8186 = vld [vmem:[#allocation3 + $0x110] sm:$0xff]
      %v8187 = vld [vmem:[#allocation3 + $0x118] sm:$0xff]
      %v8189 = vrot.slane %v8187, 7
      %vm8226 = vcmask 1040384
      %v8227 = vrot.slane %v8152, 7
      %v8228 = vrot.slane %v8153, 7
      %v8229 = vsel %vm8226, %v8227, %v8228
      %v8230 = vrot.slane %v8154, 7
      %v8231 = vsel %vm8226, %v8228, %v8230
      %v8232 = vrot.slane %v8155, 7
      %v8233 = vsel %vm8226, %v8230, %v8232
      %v8234 = vrot.slane %v8156, 7
      %v8235 = vsel %vm8226, %v8232, %v8234
      %v8236 = vrot.slane %v8157, 7
      %v8237 = vsel %vm8226, %v8234, %v8236
      %v8238 = vrot.slane %v8158, 7
      %v8239 = vsel %vm8226, %v8236, %v8238
      %v8240 = vrot.slane %v8159, 7
      %v8241 = vsel %vm8226, %v8238, %v8240
      %v8242 = vrot.slane %v8160, 7
      %v8243 = vsel %vm8226, %v8240, %v8242
      %v8244 = vrot.slane %v8161, 7
      %v8245 = vsel %vm8226, %v8242, %v8244
      %v8246 = vrot.slane %v8162, 7
      %v8247 = vsel %vm8226, %v8244, %v8246
      %v8248 = vrot.slane %v8163, 7
      %v8249 = vsel %vm8226, %v8246, %v8248
      %v8250 = vrot.slane %v8164, 7
      %v8251 = vsel %vm8226, %v8248, %v8250
      %v8252 = vrot.slane %v8165, 7
      %v8253 = vsel %vm8226, %v8250, %v8252
      %v8254 = vrot.slane %v8166, 7
      %v8255 = vsel %vm8226, %v8252, %v8254
      %v8256 = vrot.slane %v8167, 7
      %v8257 = vsel %vm8226, %v8254, %v8256
      %v8258 = vrot.slane %v8168, 7
      %v8259 = vsel %vm8226, %v8256, %v8258
      %v8260 = vrot.slane %v8169, 7
      %v8261 = vsel %vm8226, %v8258, %v8260
      %v8262 = vrot.slane %v8170, 7
      %v8263 = vsel %vm8226, %v8260, %v8262
      %v8264 = vrot.slane %v8171, 7
      %v8265 = vsel %vm8226, %v8262, %v8264
      %v8266 = vrot.slane %v8172, 7
      %v8267 = vsel %vm8226, %v8264, %v8266
      %v8268 = vrot.slane %v8173, 7
      %v8269 = vsel %vm8226, %v8266, %v8268
      %v8270 = vrot.slane %v8174, 7
      %v8271 = vsel %vm8226, %v8268, %v8270
      %v8272 = vrot.slane %v8175, 7
      %v8273 = vsel %vm8226, %v8270, %v8272
      %v8274 = vrot.slane %v8176, 7
      %v8275 = vsel %vm8226, %v8272, %v8274
      %v8276 = vrot.slane %v8177, 7
      %v8277 = vsel %vm8226, %v8274, %v8276
      %v8278 = vrot.slane %v8178, 7
      %v8279 = vsel %vm8226, %v8276, %v8278
      %v8280 = vrot.slane %v8179, 7
      %v8281 = vsel %vm8226, %v8278, %v8280
      %v8282 = vrot.slane %v8180, 7
      %v8283 = vsel %vm8226, %v8280, %v8282
      %v8284 = vrot.slane %v8181, 7
      %v8285 = vsel %vm8226, %v8282, %v8284
      %v8286 = vrot.slane %v8182, 7
      %v8287 = vsel %vm8226, %v8284, %v8286
      %v8288 = vrot.slane %v8183, 7
      %v8289 = vsel %vm8226, %v8286, %v8288
      %v8290 = vrot.slane %v8184, 7
      %v8291 = vsel %vm8226, %v8288, %v8290
      %v8292 = vrot.slane %v8185, 7
      %v8293 = vsel %vm8226, %v8290, %v8292
      %v8294 = vrot.slane %v8186, 7
      %v8295 = vsel %vm8226, %v8292, %v8294
      %v8296 = vsel %vm8226, %v8294, %v8189
      %v8333 = vsel %vm8226, %v8189, %v8227
      %v8334 = vsel %vm968, 1, 0
      %v8335 = vsel %vm969, 1, 0
      %v8336 = vsel %vm970, 1, 0
      %v8337 = vsel %vm971, 1, 0
      %v8338 = vsel %vm972, 1, 0
      %v8339 = vsel %vm973, 1, 0
      %v8340 = vsel %vm974, 1, 0
      %v8341 = vsel %vm975, 1, 0
      %v8342 = vsel %vm976, 1, 0
      %v8343 = vsel %vm977, 1, 0
      %v8344 = vsel %vm978, 1, 0
      %v8345 = vsel %vm979, 1, 0
      %v8346 = vsel %vm980, 1, 0
      %v8347 = vsel %vm981, 1, 0
      %v8348 = vsel %vm982, 1, 0
      %v8349 = vsel %vm983, 1, 0
      %v8350 = vsel %vm984, 1, 0
      %v8351 = vsel %vm985, 1, 0
      %v8352 = vsel %vm986, 1, 0
      %v8353 = vsel %vm987, 1, 0
      %v8354 = vsel %vm988, 1, 0
      %v8355 = vsel %vm989, 1, 0
      %v8356 = vsel %vm990, 1, 0
      %v8357 = vsel %vm991, 1, 0
      %v8358 = vsel %vm992, 1, 0
      %v8359 = vsel %vm993, 1, 0
      %v8360 = vsel %vm994, 1, 0
      %v8361 = vsel %vm995, 1, 0
      %v8362 = vsel %vm996, 1, 0
      %v8363 = vsel %vm997, 1, 0
      %v8364 = vsel %vm998, 1, 0
      %v8365 = vsel %vm999, 1, 0
      %v8366 = vsel %vm1000, 1, 0
      %v8367 = vsel %vm1001, 1, 0
      %v8368 = vsel %vm1002, 1, 0
      %v8369 = vsel %vm1003, 1, 0
      %vm8370 = vcmp.eq.s32.totalorder %v8334, 1
      %vm8371 = vcmp.eq.s32.totalorder %v8335, 1
      %vm8372 = vcmp.eq.s32.totalorder %v8336, 1
      %vm8373 = vcmp.eq.s32.totalorder %v8337, 1
      %vm8374 = vcmp.eq.s32.totalorder %v8338, 1
      %vm8375 = vcmp.eq.s32.totalorder %v8339, 1
      %vm8376 = vcmp.eq.s32.totalorder %v8340, 1
      %vm8377 = vcmp.eq.s32.totalorder %v8341, 1
      %vm8378 = vcmp.eq.s32.totalorder %v8342, 1
      %vm8379 = vcmp.eq.s32.totalorder %v8343, 1
      %vm8380 = vcmp.eq.s32.totalorder %v8344, 1
      %vm8381 = vcmp.eq.s32.totalorder %v8345, 1
      %vm8382 = vcmp.eq.s32.totalorder %v8346, 1
      %vm8383 = vcmp.eq.s32.totalorder %v8347, 1
      %vm8384 = vcmp.eq.s32.totalorder %v8348, 1
      %vm8385 = vcmp.eq.s32.totalorder %v8349, 1
      %vm8386 = vcmp.eq.s32.totalorder %v8350, 1
      %vm8387 = vcmp.eq.s32.totalorder %v8351, 1
      %vm8388 = vcmp.eq.s32.totalorder %v8352, 1
      %vm8389 = vcmp.eq.s32.totalorder %v8353, 1
      %vm8390 = vcmp.eq.s32.totalorder %v8354, 1
      %vm8391 = vcmp.eq.s32.totalorder %v8355, 1
      %vm8392 = vcmp.eq.s32.totalorder %v8356, 1
      %vm8393 = vcmp.eq.s32.totalorder %v8357, 1
      %vm8394 = vcmp.eq.s32.totalorder %v8358, 1
      %vm8395 = vcmp.eq.s32.totalorder %v8359, 1
      %vm8396 = vcmp.eq.s32.totalorder %v8360, 1
      %vm8397 = vcmp.eq.s32.totalorder %v8361, 1
      %vm8398 = vcmp.eq.s32.totalorder %v8362, 1
      %vm8399 = vcmp.eq.s32.totalorder %v8363, 1
      %vm8400 = vcmp.eq.s32.totalorder %v8364, 1
      %vm8401 = vcmp.eq.s32.totalorder %v8365, 1
      %vm8402 = vcmp.eq.s32.totalorder %v8366, 1
      %vm8403 = vcmp.eq.s32.totalorder %v8367, 1
      %vm8404 = vcmp.eq.s32.totalorder %v8368, 1
      %vm8405 = vcmp.eq.s32.totalorder %v8369, 1
      %v8406 = vsel %vm8370, %v8333, 0.0
      %v8407 = vsel %vm8371, %v8229, 0.0
      %v8408 = vsel %vm8372, %v8231, 0.0
      %v8409 = vsel %vm8373, %v8233, 0.0
      %v8410 = vsel %vm8374, %v8235, 0.0
      %v8411 = vsel %vm8375, %v8237, 0.0
      %v8412 = vsel %vm8376, %v8239, 0.0
      %v8413 = vsel %vm8377, %v8241, 0.0
      %v8414 = vsel %vm8378, %v8243, 0.0
      %v8415 = vsel %vm8379, %v8245, 0.0
      %v8416 = vsel %vm8380, %v8247, 0.0
      %v8417 = vsel %vm8381, %v8249, 0.0
      %v8418 = vsel %vm8382, %v8251, 0.0
      %v8419 = vsel %vm8383, %v8253, 0.0
      %v8420 = vsel %vm8384, %v8255, 0.0
      %v8421 = vsel %vm8385, %v8257, 0.0
      %v8422 = vsel %vm8386, %v8259, 0.0
      %v8423 = vsel %vm8387, %v8261, 0.0
      %v8424 = vsel %vm8388, %v8263, 0.0
      %v8425 = vsel %vm8389, %v8265, 0.0
      %v8426 = vsel %vm8390, %v8267, 0.0
      %v8427 = vsel %vm8391, %v8269, 0.0
      %v8428 = vsel %vm8392, %v8271, 0.0
      %v8429 = vsel %vm8393, %v8273, 0.0
      %v8430 = vsel %vm8394, %v8275, 0.0
      %v8431 = vsel %vm8395, %v8277, 0.0
      %v8432 = vsel %vm8396, %v8279, 0.0
      %v8433 = vsel %vm8397, %v8281, 0.0
      %v8434 = vsel %vm8398, %v8283, 0.0
      %v8435 = vsel %vm8399, %v8285, 0.0
      %v8436 = vsel %vm8400, %v8287, 0.0
      %v8437 = vsel %vm8401, %v8289, 0.0
      %v8438 = vsel %vm8402, %v8291, 0.0
      %v8439 = vsel %vm8403, %v8293, 0.0
      %v8440 = vsel %vm8404, %v8295, 0.0
      %v8441 = vsel %vm8405, %v8296, 0.0
      %vm8442 = vcmask 1046528
      %v8443 = vrot.slane %v8152, 1
      %v8444 = vrot.slane %v8153, 1
      %v8445 = vsel %vm8442, %v8443, %v8444
      %v8446 = vrot.slane %v8154, 1
      %v8447 = vsel %vm8442, %v8444, %v8446
      %v8448 = vrot.slane %v8155, 1
      %v8449 = vsel %vm8442, %v8446, %v8448
      %v8450 = vrot.slane %v8156, 1
      %v8451 = vsel %vm8442, %v8448, %v8450
      %v8452 = vrot.slane %v8157, 1
      %v8453 = vsel %vm8442, %v8450, %v8452
      %v8454 = vrot.slane %v8158, 1
      %v8455 = vsel %vm8442, %v8452, %v8454
      %v8456 = vrot.slane %v8159, 1
      %v8457 = vsel %vm8442, %v8454, %v8456
      %v8458 = vrot.slane %v8160, 1
      %v8459 = vsel %vm8442, %v8456, %v8458
      %v8460 = vrot.slane %v8161, 1
      %v8461 = vsel %vm8442, %v8458, %v8460
      %v8462 = vrot.slane %v8162, 1
      %v8463 = vsel %vm8442, %v8460, %v8462
      %v8464 = vrot.slane %v8163, 1
      %v8465 = vsel %vm8442, %v8462, %v8464
      %v8466 = vrot.slane %v8164, 1
      %v8467 = vsel %vm8442, %v8464, %v8466
      %v8468 = vrot.slane %v8165, 1
      %v8469 = vsel %vm8442, %v8466, %v8468
      %v8470 = vrot.slane %v8166, 1
      %v8471 = vsel %vm8442, %v8468, %v8470
      %v8472 = vrot.slane %v8167, 1
      %v8473 = vsel %vm8442, %v8470, %v8472
      %v8474 = vrot.slane %v8168, 1
      %v8475 = vsel %vm8442, %v8472, %v8474
      %v8476 = vrot.slane %v8169, 1
      %v8477 = vsel %vm8442, %v8474, %v8476
      %v8478 = vrot.slane %v8170, 1
      %v8479 = vsel %vm8442, %v8476, %v8478
      %v8480 = vrot.slane %v8171, 1
      %v8481 = vsel %vm8442, %v8478, %v8480
      %v8482 = vrot.slane %v8172, 1
      %v8483 = vsel %vm8442, %v8480, %v8482
      %v8484 = vrot.slane %v8173, 1
      %v8485 = vsel %vm8442, %v8482, %v8484
      %v8486 = vrot.slane %v8174, 1
      %v8487 = vsel %vm8442, %v8484, %v8486
      %v8488 = vrot.slane %v8175, 1
      %v8489 = vsel %vm8442, %v8486, %v8488
      %v8490 = vrot.slane %v8176, 1
      %v8491 = vsel %vm8442, %v8488, %v8490
      %v8492 = vrot.slane %v8177, 1
      %v8493 = vsel %vm8442, %v8490, %v8492
      %v8494 = vrot.slane %v8178, 1
      %v8495 = vsel %vm8442, %v8492, %v8494
      %v8496 = vrot.slane %v8179, 1
      %v8497 = vsel %vm8442, %v8494, %v8496
      %v8498 = vrot.slane %v8180, 1
      %v8499 = vsel %vm8442, %v8496, %v8498
      %v8500 = vrot.slane %v8181, 1
      %v8501 = vsel %vm8442, %v8498, %v8500
      %v8502 = vrot.slane %v8182, 1
      %v8503 = vsel %vm8442, %v8500, %v8502
      %v8504 = vrot.slane %v8183, 1
      %v8505 = vsel %vm8442, %v8502, %v8504
      %v8506 = vrot.slane %v8184, 1
      %v8507 = vsel %vm8442, %v8504, %v8506
      %v8508 = vrot.slane %v8185, 1
      %v8509 = vsel %vm8442, %v8506, %v8508
      %v8510 = vrot.slane %v8186, 1
      %v8511 = vsel %vm8442, %v8508, %v8510
      %v8512 = vrot.slane %v8187, 1
      %v8513 = vsel %vm8442, %v8510, %v8512
      %v8551 = vsel %vm8442, %v8512, %v8443
      %v8552 = vsel %vm1004, 1, 0
      %v8553 = vsel %vm1005, 1, 0
      %v8554 = vsel %vm1006, 1, 0
      %v8555 = vsel %vm1007, 1, 0
      %v8556 = vsel %vm1008, 1, 0
      %v8557 = vsel %vm1009, 1, 0
      %v8558 = vsel %vm1010, 1, 0
      %v8559 = vsel %vm1011, 1, 0
      %v8560 = vsel %vm1012, 1, 0
      %v8561 = vsel %vm1013, 1, 0
      %v8562 = vsel %vm1014, 1, 0
      %v8563 = vsel %vm1015, 1, 0
      %v8564 = vsel %vm1016, 1, 0
      %v8565 = vsel %vm1017, 1, 0
      %v8566 = vsel %vm1018, 1, 0
      %v8567 = vsel %vm1019, 1, 0
      %v8568 = vsel %vm1020, 1, 0
      %v8569 = vsel %vm1021, 1, 0
      %v8570 = vsel %vm1022, 1, 0
      %v8571 = vsel %vm1023, 1, 0
      %v8572 = vsel %vm1024, 1, 0
      %v8573 = vsel %vm1025, 1, 0
      %v8574 = vsel %vm1026, 1, 0
      %v8575 = vsel %vm1027, 1, 0
      %v8576 = vsel %vm1028, 1, 0
      %v8577 = vsel %vm1029, 1, 0
      %v8578 = vsel %vm1030, 1, 0
      %v8579 = vsel %vm1031, 1, 0
      %v8580 = vsel %vm1032, 1, 0
      %v8581 = vsel %vm1033, 1, 0
      %v8582 = vsel %vm1034, 1, 0
      %v8583 = vsel %vm1035, 1, 0
      %v8584 = vsel %vm1036, 1, 0
      %v8585 = vsel %vm1037, 1, 0
      %v8586 = vsel %vm1038, 1, 0
      %v8587 = vsel %vm1039, 1, 0
      %vm8588 = vcmp.eq.s32.totalorder %v8552, 1
      %vm8589 = vcmp.eq.s32.totalorder %v8553, 1
      %vm8590 = vcmp.eq.s32.totalorder %v8554, 1
      %vm8591 = vcmp.eq.s32.totalorder %v8555, 1
      %vm8592 = vcmp.eq.s32.totalorder %v8556, 1
      %vm8593 = vcmp.eq.s32.totalorder %v8557, 1
      %vm8594 = vcmp.eq.s32.totalorder %v8558, 1
      %vm8595 = vcmp.eq.s32.totalorder %v8559, 1
      %vm8596 = vcmp.eq.s32.totalorder %v8560, 1
      %vm8597 = vcmp.eq.s32.totalorder %v8561, 1
      %vm8598 = vcmp.eq.s32.totalorder %v8562, 1
      %vm8599 = vcmp.eq.s32.totalorder %v8563, 1
      %vm8600 = vcmp.eq.s32.totalorder %v8564, 1
      %vm8601 = vcmp.eq.s32.totalorder %v8565, 1
      %vm8602 = vcmp.eq.s32.totalorder %v8566, 1
      %vm8603 = vcmp.eq.s32.totalorder %v8567, 1
      %vm8604 = vcmp.eq.s32.totalorder %v8568, 1
      %vm8605 = vcmp.eq.s32.totalorder %v8569, 1
      %vm8606 = vcmp.eq.s32.totalorder %v8570, 1
      %vm8607 = vcmp.eq.s32.totalorder %v8571, 1
      %vm8608 = vcmp.eq.s32.totalorder %v8572, 1
      %vm8609 = vcmp.eq.s32.totalorder %v8573, 1
      %vm8610 = vcmp.eq.s32.totalorder %v8574, 1
      %vm8611 = vcmp.eq.s32.totalorder %v8575, 1
      %vm8612 = vcmp.eq.s32.totalorder %v8576, 1
      %vm8613 = vcmp.eq.s32.totalorder %v8577, 1
      %vm8614 = vcmp.eq.s32.totalorder %v8578, 1
      %vm8615 = vcmp.eq.s32.totalorder %v8579, 1
      %vm8616 = vcmp.eq.s32.totalorder %v8580, 1
      %vm8617 = vcmp.eq.s32.totalorder %v8581, 1
      %vm8618 = vcmp.eq.s32.totalorder %v8582, 1
      %vm8619 = vcmp.eq.s32.totalorder %v8583, 1
      %vm8620 = vcmp.eq.s32.totalorder %v8584, 1
      %vm8621 = vcmp.eq.s32.totalorder %v8585, 1
      %vm8622 = vcmp.eq.s32.totalorder %v8586, 1
      %vm8623 = vcmp.eq.s32.totalorder %v8587, 1
      %v8624 = vsel %vm8588, %v8445, 0.0
      %v8625 = vsel %vm8589, %v8447, 0.0
      %v8626 = vsel %vm8590, %v8449, 0.0
      %v8627 = vsel %vm8591, %v8451, 0.0
      %v8628 = vsel %vm8592, %v8453, 0.0
      %v8629 = vsel %vm8593, %v8455, 0.0
      %v8630 = vsel %vm8594, %v8457, 0.0
      %v8631 = vsel %vm8595, %v8459, 0.0
      %v8632 = vsel %vm8596, %v8461, 0.0
      %v8633 = vsel %vm8597, %v8463, 0.0
      %v8634 = vsel %vm8598, %v8465, 0.0
      %v8635 = vsel %vm8599, %v8467, 0.0
      %v8636 = vsel %vm8600, %v8469, 0.0
      %v8637 = vsel %vm8601, %v8471, 0.0
      %v8638 = vsel %vm8602, %v8473, 0.0
      %v8639 = vsel %vm8603, %v8475, 0.0
      %v8640 = vsel %vm8604, %v8477, 0.0
      %v8641 = vsel %vm8605, %v8479, 0.0
      %v8642 = vsel %vm8606, %v8481, 0.0
      %v8643 = vsel %vm8607, %v8483, 0.0
      %v8644 = vsel %vm8608, %v8485, 0.0
      %v8645 = vsel %vm8609, %v8487, 0.0
      %v8646 = vsel %vm8610, %v8489, 0.0
      %v8647 = vsel %vm8611, %v8491, 0.0
      %v8648 = vsel %vm8612, %v8493, 0.0
      %v8649 = vsel %vm8613, %v8495, 0.0
      %v8650 = vsel %vm8614, %v8497, 0.0
      %v8651 = vsel %vm8615, %v8499, 0.0
      %v8652 = vsel %vm8616, %v8501, 0.0
      %v8653 = vsel %vm8617, %v8503, 0.0
      %v8654 = vsel %vm8618, %v8505, 0.0
      %v8655 = vsel %vm8619, %v8507, 0.0
      %v8656 = vsel %vm8620, %v8509, 0.0
      %v8657 = vsel %vm8621, %v8511, 0.0
      %v8658 = vsel %vm8622, %v8513, 0.0
      %v8659 = vsel %vm8623, %v8551, 0.0
      %v8660 = vpack.c.bf16 %v8407, %v8406
      %v8661 = vpack.c.bf16 %v8409, %v8408
      %v8662 = vpack.c.bf16 %v8411, %v8410
      %v8663 = vpack.c.bf16 %v8413, %v8412
      %v8664 = vpack.c.bf16 %v8415, %v8414
      %v8665 = vpack.c.bf16 %v8417, %v8416
      %v8666 = vpack.c.bf16 %v8419, %v8418
      %v8667 = vpack.c.bf16 %v8421, %v8420
      %v8668 = vpack.c.bf16 %v8423, %v8422
      %v8669 = vpack.c.bf16 %v8425, %v8424
      %v8670 = vpack.c.bf16 %v8427, %v8426
      %v8671 = vpack.c.bf16 %v8429, %v8428
      %v8672 = vpack.c.bf16 %v8431, %v8430
      %v8673 = vpack.c.bf16 %v8433, %v8432
      %v8674 = vpack.c.bf16 %v8435, %v8434
      %v8675 = vpack.c.bf16 %v8437, %v8436
      %v8676 = vpack.c.bf16 %v8439, %v8438
      %v8677 = vpack.c.bf16 %v8441, %v8440
      %v8678 = vpack.c.bf16 %v8153, %v8152
      %v8679 = vpack.c.bf16 %v8155, %v8154
      %v8680 = vpack.c.bf16 %v8157, %v8156
      %v8681 = vpack.c.bf16 %v8159, %v8158
      %v8682 = vpack.c.bf16 %v8161, %v8160
      %v8683 = vpack.c.bf16 %v8163, %v8162
      %v8684 = vpack.c.bf16 %v8165, %v8164
      %v8685 = vpack.c.bf16 %v8167, %v8166
      %v8686 = vpack.c.bf16 %v8169, %v8168
      %v8687 = vpack.c.bf16 %v8171, %v8170
      %v8688 = vpack.c.bf16 %v8173, %v8172
      %v8689 = vpack.c.bf16 %v8175, %v8174
      %v8690 = vpack.c.bf16 %v8177, %v8176
      %v8691 = vpack.c.bf16 %v8179, %v8178
      %v8692 = vpack.c.bf16 %v8181, %v8180
      %v8693 = vpack.c.bf16 %v8183, %v8182
      %v8694 = vpack.c.bf16 %v8185, %v8184
      %v8695 = vpack.c.bf16 %v8187, %v8186
      %v8696 = vpack.c.bf16 %v8625, %v8624
      %v8697 = vpack.c.bf16 %v8627, %v8626
      %v8698 = vpack.c.bf16 %v8629, %v8628
      %v8699 = vpack.c.bf16 %v8631, %v8630
      %v8700 = vpack.c.bf16 %v8633, %v8632
      %v8701 = vpack.c.bf16 %v8635, %v8634
      %v8702 = vpack.c.bf16 %v8637, %v8636
      %v8703 = vpack.c.bf16 %v8639, %v8638
      %v8704 = vpack.c.bf16 %v8641, %v8640
      %v8705 = vpack.c.bf16 %v8643, %v8642
      %v8706 = vpack.c.bf16 %v8645, %v8644
      %v8707 = vpack.c.bf16 %v8647, %v8646
      %v8708 = vpack.c.bf16 %v8649, %v8648
      %v8709 = vpack.c.bf16 %v8651, %v8650
      %v8710 = vpack.c.bf16 %v8653, %v8652
      %v8711 = vpack.c.bf16 %v8655, %v8654
      %v8712 = vpack.c.bf16 %v8657, %v8656
      %v8713 = vpack.c.bf16 %v8659, %v8658
      %v8714 = vld [vmem:[%s6] sm:$0xf]
      %v8715 = vld [vmem:[%s6 + $0x4] sm:$0xf]
      %v8716 = vld [vmem:[%s6 + $0x8] sm:$0xf]
      %v8717 = vld [vmem:[%s6 + $0xc] sm:$0xf]
      %v8718 = vld [vmem:[%s6 + $0x10] sm:$0xf]
      %v8719 = vld [vmem:[%s6 + $0x14] sm:$0xf]
      %v8720 = vld [vmem:[%s6 + $0x18] sm:$0xf]
      %v8721 = vld [vmem:[%s6 + $0x1c] sm:$0xf]
      %v8722 = vld [vmem:[%s6 + $0x20] sm:$0xf]
      %v8723 = vld [vmem:[%s6 + $0x24] sm:$0xf]
      %v8724 = vld [vmem:[%s6 + $0x28] sm:$0xf]
      %v8725 = vld [vmem:[%s6 + $0x2c] sm:$0xf]
      %v8726 = vld [vmem:[%s6 + $0x30] sm:$0xf]
      %v8727 = vld [vmem:[%s6 + $0x34] sm:$0xf]
      %v8728 = vld [vmem:[%s6 + $0x38] sm:$0xf]
      %v8729 = vld [vmem:[%s6 + $0x3c] sm:$0xf]
      %v8730 = vld [vmem:[%s6 + $0x40] sm:$0xf]
      %v8731 = vld [vmem:[%s6 + $0x44] sm:$0xf]
      %v8732 = vld [vmem:[%s6 + $0x48] sm:$0xf]
      %v8733 = vld [vmem:[%s6 + $0x4c] sm:$0xf]
      %v8734 = vld [vmem:[%s6 + $0x50] sm:$0xf]
      %v8735 = vld [vmem:[%s6 + $0x54] sm:$0xf]
      %v8736 = vld [vmem:[%s6 + $0x58] sm:$0xf]
      %v8737 = vld [vmem:[%s6 + $0x5c] sm:$0xf]
      %v8738 = vld [vmem:[%s6 + $0x60] sm:$0xf]
      %v8739 = vld [vmem:[%s6 + $0x64] sm:$0xf]
      %v8740 = vld [vmem:[%s6 + $0x68] sm:$0xf]
      %v8741 = vld [vmem:[%s6 + $0x6c] sm:$0xf]
      %v8742 = vld [vmem:[%s6 + $0x70] sm:$0xf]
      %v8743 = vld [vmem:[%s6 + $0x74] sm:$0xf]
      %v8744 = vld [vmem:[%s6 + $0x78] sm:$0xf]
      %v8745 = vld [vmem:[%s6 + $0x7c] sm:$0xf]
      %v8746 = vld [vmem:[%s6 + $0x80] sm:$0xf]
      %v8747 = vld [vmem:[%s6 + $0x84] sm:$0xf]
      %v8748 = vld [vmem:[%s6 + $0x88] sm:$0xf]
      %v8749 = vld [vmem:[%s6 + $0x8c] sm:$0xf]
      %v8750 = vld [vmem:[%s6 + $0x90] sm:$0xf]
      %v8751 = vld [vmem:[%s6 + $0x94] sm:$0xf]
      %v8752 = vld [vmem:[%s6 + $0x98] sm:$0xf]
      %v8753 = vld [vmem:[%s6 + $0x9c] sm:$0xf]
      %v8754 = vld [vmem:[%s6 + $0xa0] sm:$0xf]
      %v8755 = vld [vmem:[%s6 + $0xa4] sm:$0xf]
      %v8756 = vld [vmem:[%s6 + $0xa8] sm:$0xf]
      %v8757 = vld [vmem:[%s6 + $0xac] sm:$0xf]
      %v8758 = vld [vmem:[%s6 + $0xb0] sm:$0xf]
      %v8759 = vld [vmem:[%s6 + $0xb4] sm:$0xf]
      %v8760 = vld [vmem:[%s6 + $0xb8] sm:$0xf]
      %v8761 = vld [vmem:[%s6 + $0xbc] sm:$0xf]
      %v8762 = vld [vmem:[%s6 + $0xc0] sm:$0xf]
      %v8763 = vld [vmem:[%s6 + $0xc4] sm:$0xf]
      %v8764 = vld [vmem:[%s6 + $0xc8] sm:$0xf]
      %v8765 = vld [vmem:[%s6 + $0xcc] sm:$0xf]
      %v8766 = vld [vmem:[%s6 + $0xd0] sm:$0xf]
      %v8767 = vld [vmem:[%s6 + $0xd4] sm:$0xf]
      %v8768 = vld [vmem:[%s6 + $0xd8] sm:$0xf]
      %v8769 = vld [vmem:[%s6 + $0xdc] sm:$0xf]
      %v8770 = vld [vmem:[%s6 + $0xe0] sm:$0xf]
      %v8771 = vld [vmem:[%s6 + $0xe4] sm:$0xf]
      %v8772 = vld [vmem:[%s6 + $0xe8] sm:$0xf]
      %v8773 = vld [vmem:[%s6 + $0xec] sm:$0xf]
      %v8774 = vld [vmem:[%s6 + $0xf0] sm:$0xf]
      %v8775 = vld [vmem:[%s6 + $0xf4] sm:$0xf]
      %v8776 = vld [vmem:[%s6 + $0xf8] sm:$0xf]
      %v8777 = vld [vmem:[%s6 + $0xfc] sm:$0xf]
      %v8778 = vld [vmem:[%s6 + $0x100] sm:$0xf]
      %v8779 = vld [vmem:[%s6 + $0x104] sm:$0xf]
      %v8780 = vld [vmem:[%s6 + $0x108] sm:$0xf]
      %v8781 = vld [vmem:[%s6 + $0x10c] sm:$0xf]
      %v8782 = vld [vmem:[%s6 + $0x110] sm:$0xf]
      %v8783 = vld [vmem:[%s6 + $0x114] sm:$0xf]
      %v8784 = vld [vmem:[%s6 + $0x118] sm:$0xf]
      %v8785 = vld [vmem:[%s6 + $0x11c] sm:$0xf]
      %v8786 = vld [vmem:[%s6 + $0x120] sm:$0xf]
      %v8787 = vld [vmem:[%s6 + $0x124] sm:$0xf]
      %v8788 = vld [vmem:[%s6 + $0x128] sm:$0xf]
      %v8789 = vld [vmem:[%s6 + $0x12c] sm:$0xf]
      %v8790 = vld [vmem:[%s6 + $0x130] sm:$0xf]
      %v8791 = vld [vmem:[%s6 + $0x134] sm:$0xf]
      %v8792 = vld [vmem:[%s6 + $0x138] sm:$0xf]
      %v8793 = vld [vmem:[%s6 + $0x13c] sm:$0xf]
      %v8794 = vld [vmem:[%s6 + $0x140] sm:$0xf]
      %v8795 = vld [vmem:[%s6 + $0x144] sm:$0xf]
      %v8796 = vld [vmem:[%s6 + $0x148] sm:$0xf]
      %v8797 = vld [vmem:[%s6 + $0x14c] sm:$0xf]
      %v8798 = vld [vmem:[%s6 + $0x150] sm:$0xf]
      %v8799 = vld [vmem:[%s6 + $0x154] sm:$0xf]
      %v8800 = vld [vmem:[%s6 + $0x158] sm:$0xf]
      %v8801 = vld [vmem:[%s6 + $0x15c] sm:$0xf]
      %v8802 = vld [vmem:[%s6 + $0x160] sm:$0xf]
      %v8803 = vld [vmem:[%s6 + $0x164] sm:$0xf]
      %v8804 = vld [vmem:[%s6 + $0x168] sm:$0xf]
      %v8805 = vld [vmem:[%s6 + $0x16c] sm:$0xf]
      %v8806 = vld [vmem:[%s6 + $0x170] sm:$0xf]
      %v8807 = vld [vmem:[%s6 + $0x174] sm:$0xf]
      %v8808 = vld [vmem:[%s6 + $0x178] sm:$0xf]
      %v8809 = vld [vmem:[%s6 + $0x17c] sm:$0xf]
      %v8810 = vld [vmem:[%s6 + $0x180] sm:$0xf]
      %v8811 = vld [vmem:[%s6 + $0x184] sm:$0xf]
      %v8812 = vld [vmem:[%s6 + $0x188] sm:$0xf]
      %v8813 = vld [vmem:[%s6 + $0x18c] sm:$0xf]
      %v8814 = vld [vmem:[%s6 + $0x190] sm:$0xf]
      %v8815 = vld [vmem:[%s6 + $0x194] sm:$0xf]
      %v8816 = vld [vmem:[%s6 + $0x198] sm:$0xf]
      %v8817 = vld [vmem:[%s6 + $0x19c] sm:$0xf]
      %v8818 = vld [vmem:[%s6 + $0x1a0] sm:$0xf]
      %v8819 = vld [vmem:[%s6 + $0x1a4] sm:$0xf]
      %v8820 = vld [vmem:[%s6 + $0x1a8] sm:$0xf]
      %v8821 = vld [vmem:[%s6 + $0x1ac] sm:$0xf]
      %v8822 = vld [vmem:[%s6 + $0x1b0] sm:$0xf]
      %v8823 = vld [vmem:[%s6 + $0x1b4] sm:$0xf]
      %v8824 = vld [vmem:[%s6 + $0x1b8] sm:$0xf]
      %v8825 = vld [vmem:[%s6 + $0x1bc] sm:$0xf]
      %v8826 = vld [vmem:[%s6 + $0x1c0] sm:$0xf]
      %v8827 = vld [vmem:[%s6 + $0x1c4] sm:$0xf]
      %v8828 = vld [vmem:[%s6 + $0x1c8] sm:$0xf]
      %v8829 = vld [vmem:[%s6 + $0x1cc] sm:$0xf]
      %v8830 = vld [vmem:[%s6 + $0x1d0] sm:$0xf]
      %v8831 = vld [vmem:[%s6 + $0x1d4] sm:$0xf]
      %v8832 = vld [vmem:[%s6 + $0x1d8] sm:$0xf]
      %v8833 = vld [vmem:[%s6 + $0x1dc] sm:$0xf]
      %v8834 = vld [vmem:[%s6 + $0x1e0] sm:$0xf]
      %v8835 = vld [vmem:[%s6 + $0x1e4] sm:$0xf]
      %v8836 = vld [vmem:[%s6 + $0x1e8] sm:$0xf]
      %v8837 = vld [vmem:[%s6 + $0x1ec] sm:$0xf]
      %v8838 = vld [vmem:[%s6 + $0x1f0] sm:$0xf]
      %v8839 = vld [vmem:[%s6 + $0x1f4] sm:$0xf]
      %v8840 = vld [vmem:[%s6 + $0x1f8] sm:$0xf]
      %v8841 = vld [vmem:[%s6 + $0x1fc] sm:$0xf]
      %v8842 = vld [vmem:[%s6 + $0x200] sm:$0xf]
      %v8843 = vld [vmem:[%s6 + $0x204] sm:$0xf]
      %v8844 = vld [vmem:[%s6 + $0x208] sm:$0xf]
      %v8845 = vld [vmem:[%s6 + $0x20c] sm:$0xf]
      %v8846 = vld [vmem:[%s6 + $0x210] sm:$0xf]
      %v8847 = vld [vmem:[%s6 + $0x214] sm:$0xf]
      %v8848 = vld [vmem:[%s6 + $0x218] sm:$0xf]
      %v8849 = vld [vmem:[%s6 + $0x21c] sm:$0xf]
      %v8850 = vld [vmem:[%s6 + $0x220] sm:$0xf]
      %v8851 = vld [vmem:[%s6 + $0x224] sm:$0xf]
      %v8852 = vld [vmem:[%s6 + $0x228] sm:$0xf]
      %v8853 = vld [vmem:[%s6 + $0x22c] sm:$0xf]
      %v8854 = vld [vmem:[%s6 + $0x230] sm:$0xf]
      %v8855 = vld [vmem:[%s6 + $0x234] sm:$0xf]
      %v8856 = vld [vmem:[%s6 + $0x238] sm:$0xf]
      %v8857 = vld [vmem:[%s6 + $0x23c] sm:$0xf]
      %v8858 = vld [vmem:[%s7] sm:$0x1]
      %v8860 = vlaneseq
      %v8861 = vshrl.u32 %v8860, 7
      %v8862 = vsub.s32 0, %v8861
      %v8863 = vrot.slane %v8858, %v8862
      %v9009 = vunpack.c.l.b16 %v8714
      %v9010 = vunpack.c.l.b16 %v8715
      %v9011 = vunpack.c.l.b16 %v8716
      %v9012 = vunpack.c.l.b16 %v8717
      %v9013 = vunpack.c.l.b16 %v8718
      %v9014 = vunpack.c.l.b16 %v8719
      %v9015 = vunpack.c.l.b16 %v8720
      %v9016 = vunpack.c.l.b16 %v8721
      %v9017 = vunpack.c.l.b16 %v8722
      %v9018 = vunpack.c.l.b16 %v8723
      %v9019 = vunpack.c.l.b16 %v8724
      %v9020 = vunpack.c.l.b16 %v8725
      %v9021 = vunpack.c.l.b16 %v8726
      %v9022 = vunpack.c.l.b16 %v8727
      %v9023 = vunpack.c.l.b16 %v8728
      %v9024 = vunpack.c.l.b16 %v8729
      %v9025 = vunpack.c.l.b16 %v8730
      %v9026 = vunpack.c.l.b16 %v8731
      %v9027 = vunpack.c.l.b16 %v8732
      %v9028 = vunpack.c.l.b16 %v8733
      %v9029 = vunpack.c.l.b16 %v8734
      %v9030 = vunpack.c.l.b16 %v8735
      %v9031 = vunpack.c.l.b16 %v8736
      %v9032 = vunpack.c.l.b16 %v8737
      %v9033 = vunpack.c.l.b16 %v8738
      %v9034 = vunpack.c.l.b16 %v8739
      %v9035 = vunpack.c.l.b16 %v8740
      %v9036 = vunpack.c.l.b16 %v8741
      %v9037 = vunpack.c.l.b16 %v8742
      %v9038 = vunpack.c.l.b16 %v8743
      %v9039 = vunpack.c.l.b16 %v8744
      %v9040 = vunpack.c.l.b16 %v8745
      %v9041 = vunpack.c.l.b16 %v8746
      %v9042 = vunpack.c.l.b16 %v8747
      %v9043 = vunpack.c.l.b16 %v8748
      %v9044 = vunpack.c.l.b16 %v8749
      %v9045 = vunpack.c.l.b16 %v8750
      %v9046 = vunpack.c.l.b16 %v8751
      %v9047 = vunpack.c.l.b16 %v8752
      %v9048 = vunpack.c.l.b16 %v8753
      %v9049 = vunpack.c.l.b16 %v8754
      %v9050 = vunpack.c.l.b16 %v8755
      %v9051 = vunpack.c.l.b16 %v8756
      %v9052 = vunpack.c.l.b16 %v8757
      %v9053 = vunpack.c.l.b16 %v8758
      %v9054 = vunpack.c.l.b16 %v8759
      %v9055 = vunpack.c.l.b16 %v8760
      %v9056 = vunpack.c.l.b16 %v8761
      %v9057 = vunpack.c.l.b16 %v8762
      %v9058 = vunpack.c.l.b16 %v8763
      %v9059 = vunpack.c.l.b16 %v8764
      %v9060 = vunpack.c.l.b16 %v8765
      %v9061 = vunpack.c.l.b16 %v8766
      %v9062 = vunpack.c.l.b16 %v8767
      %v9063 = vunpack.c.l.b16 %v8768
      %v9064 = vunpack.c.l.b16 %v8769
      %v9065 = vunpack.c.l.b16 %v8770
      %v9066 = vunpack.c.l.b16 %v8771
      %v9067 = vunpack.c.l.b16 %v8772
      %v9068 = vunpack.c.l.b16 %v8773
      %v9069 = vunpack.c.l.b16 %v8774
      %v9070 = vunpack.c.l.b16 %v8775
      %v9071 = vunpack.c.l.b16 %v8776
      %v9072 = vunpack.c.l.b16 %v8777
      %v9073 = vunpack.c.l.b16 %v8778
      %v9074 = vunpack.c.l.b16 %v8779
      %v9075 = vunpack.c.l.b16 %v8780
      %v9076 = vunpack.c.l.b16 %v8781
      %v9077 = vunpack.c.l.b16 %v8782
      %v9078 = vunpack.c.l.b16 %v8783
      %v9079 = vunpack.c.l.b16 %v8784
      %v9080 = vunpack.c.l.b16 %v8785
      %v9081 = vunpack.c.l.b16 %v8786
      %v9082 = vunpack.c.l.b16 %v8787
      %v9083 = vunpack.c.l.b16 %v8788
      %v9084 = vunpack.c.l.b16 %v8789
      %v9085 = vunpack.c.l.b16 %v8790
      %v9086 = vunpack.c.l.b16 %v8791
      %v9087 = vunpack.c.l.b16 %v8792
      %v9088 = vunpack.c.l.b16 %v8793
      %v9089 = vunpack.c.l.b16 %v8794
      %v9090 = vunpack.c.l.b16 %v8795
      %v9091 = vunpack.c.l.b16 %v8796
      %v9092 = vunpack.c.l.b16 %v8797
      %v9093 = vunpack.c.l.b16 %v8798
      %v9094 = vunpack.c.l.b16 %v8799
      %v9095 = vunpack.c.l.b16 %v8800
      %v9096 = vunpack.c.l.b16 %v8801
      %v9097 = vunpack.c.l.b16 %v8802
      %v9098 = vunpack.c.l.b16 %v8803
      %v9099 = vunpack.c.l.b16 %v8804
      %v9100 = vunpack.c.l.b16 %v8805
      %v9101 = vunpack.c.l.b16 %v8806
      %v9102 = vunpack.c.l.b16 %v8807
      %v9103 = vunpack.c.l.b16 %v8808
      %v9104 = vunpack.c.l.b16 %v8809
      %v9105 = vunpack.c.l.b16 %v8810
      %v9106 = vunpack.c.l.b16 %v8811
      %v9107 = vunpack.c.l.b16 %v8812
      %v9108 = vunpack.c.l.b16 %v8813
      %v9109 = vunpack.c.l.b16 %v8814
      %v9110 = vunpack.c.l.b16 %v8815
      %v9111 = vunpack.c.l.b16 %v8816
      %v9112 = vunpack.c.l.b16 %v8817
      %v9113 = vunpack.c.l.b16 %v8818
      %v9114 = vunpack.c.l.b16 %v8819
      %v9115 = vunpack.c.l.b16 %v8820
      %v9116 = vunpack.c.l.b16 %v8821
      %v9117 = vunpack.c.l.b16 %v8822
      %v9118 = vunpack.c.l.b16 %v8823
      %v9119 = vunpack.c.l.b16 %v8824
      %v9120 = vunpack.c.l.b16 %v8825
      %v9121 = vunpack.c.l.b16 %v8826
      %v9122 = vunpack.c.l.b16 %v8827
      %v9123 = vunpack.c.l.b16 %v8828
      %v9124 = vunpack.c.l.b16 %v8829
      %v9125 = vunpack.c.l.b16 %v8830
      %v9126 = vunpack.c.l.b16 %v8831
      %v9127 = vunpack.c.l.b16 %v8832
      %v9128 = vunpack.c.l.b16 %v8833
      %v9129 = vunpack.c.l.b16 %v8834
      %v9130 = vunpack.c.l.b16 %v8835
      %v9131 = vunpack.c.l.b16 %v8836
      %v9132 = vunpack.c.l.b16 %v8837
      %v9133 = vunpack.c.l.b16 %v8838
      %v9134 = vunpack.c.l.b16 %v8839
      %v9135 = vunpack.c.l.b16 %v8840
      %v9136 = vunpack.c.l.b16 %v8841
      %v9137 = vunpack.c.l.b16 %v8842
      %v9138 = vunpack.c.l.b16 %v8843
      %v9139 = vunpack.c.l.b16 %v8844
      %v9140 = vunpack.c.l.b16 %v8845
      %v9141 = vunpack.c.l.b16 %v8846
      %v9142 = vunpack.c.l.b16 %v8847
      %v9143 = vunpack.c.l.b16 %v8848
      %v9144 = vunpack.c.l.b16 %v8849
      %v9145 = vunpack.c.l.b16 %v8850
      %v9146 = vunpack.c.l.b16 %v8851
      %v9147 = vunpack.c.l.b16 %v8852
      %v9148 = vunpack.c.l.b16 %v8853
      %v9149 = vunpack.c.l.b16 %v8854
      %v9150 = vunpack.c.l.b16 %v8855
      %v9151 = vunpack.c.l.b16 %v8856
      %v9152 = vunpack.c.l.b16 %v8857
      %v9153 = vpack.c.b16 %v9010, %v9009
      %v9154 = vpack.c.b16 %v9012, %v9011
      %v9155 = vpack.c.b16 %v9014, %v9013
      %v9156 = vpack.c.b16 %v9016, %v9015
      %v9157 = vpack.c.b16 %v9018, %v9017
      %v9158 = vpack.c.b16 %v9020, %v9019
      %v9159 = vpack.c.b16 %v9022, %v9021
      %v9160 = vpack.c.b16 %v9024, %v9023
      %v9161 = vpack.c.b16 %v9026, %v9025
      %v9162 = vpack.c.b16 %v9028, %v9027
      %v9163 = vpack.c.b16 %v9030, %v9029
      %v9164 = vpack.c.b16 %v9032, %v9031
      %v9165 = vpack.c.b16 %v9034, %v9033
      %v9166 = vpack.c.b16 %v9036, %v9035
      %v9167 = vpack.c.b16 %v9038, %v9037
      %v9168 = vpack.c.b16 %v9040, %v9039
      %v9169 = vpack.c.b16 %v9042, %v9041
      %v9170 = vpack.c.b16 %v9044, %v9043
      %v9171 = vpack.c.b16 %v9046, %v9045
      %v9172 = vpack.c.b16 %v9048, %v9047
      %v9173 = vpack.c.b16 %v9050, %v9049
      %v9174 = vpack.c.b16 %v9052, %v9051
      %v9175 = vpack.c.b16 %v9054, %v9053
      %v9176 = vpack.c.b16 %v9056, %v9055
      %v9177 = vpack.c.b16 %v9058, %v9057
      %v9178 = vpack.c.b16 %v9060, %v9059
      %v9179 = vpack.c.b16 %v9062, %v9061
      %v9180 = vpack.c.b16 %v9064, %v9063
      %v9181 = vpack.c.b16 %v9066, %v9065
      %v9182 = vpack.c.b16 %v9068, %v9067
      %v9183 = vpack.c.b16 %v9070, %v9069
      %v9184 = vpack.c.b16 %v9072, %v9071
      %v9185 = vpack.c.b16 %v9074, %v9073
      %v9186 = vpack.c.b16 %v9076, %v9075
      %v9187 = vpack.c.b16 %v9078, %v9077
      %v9188 = vpack.c.b16 %v9080, %v9079
      %v9189 = vpack.c.b16 %v9082, %v9081
      %v9190 = vpack.c.b16 %v9084, %v9083
      %v9191 = vpack.c.b16 %v9086, %v9085
      %v9192 = vpack.c.b16 %v9088, %v9087
      %v9193 = vpack.c.b16 %v9090, %v9089
      %v9194 = vpack.c.b16 %v9092, %v9091
      %v9195 = vpack.c.b16 %v9094, %v9093
      %v9196 = vpack.c.b16 %v9096, %v9095
      %v9197 = vpack.c.b16 %v9098, %v9097
      %v9198 = vpack.c.b16 %v9100, %v9099
      %v9199 = vpack.c.b16 %v9102, %v9101
      %v9200 = vpack.c.b16 %v9104, %v9103
      %v9201 = vpack.c.b16 %v9106, %v9105
      %v9202 = vpack.c.b16 %v9108, %v9107
      %v9203 = vpack.c.b16 %v9110, %v9109
      %v9204 = vpack.c.b16 %v9112, %v9111
      %v9205 = vpack.c.b16 %v9114, %v9113
      %v9206 = vpack.c.b16 %v9116, %v9115
      %v9207 = vpack.c.b16 %v9118, %v9117
      %v9208 = vpack.c.b16 %v9120, %v9119
      %v9209 = vpack.c.b16 %v9122, %v9121
      %v9210 = vpack.c.b16 %v9124, %v9123
      %v9211 = vpack.c.b16 %v9126, %v9125
      %v9212 = vpack.c.b16 %v9128, %v9127
      %v9213 = vpack.c.b16 %v9130, %v9129
      %v9214 = vpack.c.b16 %v9132, %v9131
      %v9215 = vpack.c.b16 %v9134, %v9133
      %v9216 = vpack.c.b16 %v9136, %v9135
      %v9217 = vpack.c.b16 %v9138, %v9137
      %v9218 = vpack.c.b16 %v9140, %v9139
      %v9219 = vpack.c.b16 %v9142, %v9141
      %v9220 = vpack.c.b16 %v9144, %v9143
      %v9221 = vpack.c.b16 %v9146, %v9145
      %v9222 = vpack.c.b16 %v9148, %v9147
      %v9223 = vpack.c.b16 %v9150, %v9149
      %v9224 = vpack.c.b16 %v9152, %v9151
      %9297 = vmatprep.subr.bf16.mxu0 0
      %9298 = vmatpush1.bf16.msra.mxu0 %v9153
      %9299 = vmatprep.subr.bf16.mxu0 0
      %9300 = vmatpush1.bf16.msra.mxu0 %v9154
      %9301 = vmatprep.subr.bf16.mxu0 0
      %9302 = vmatpush1.bf16.msra.mxu0 %v9155
      %9303 = vmatprep.subr.bf16.mxu0 0
      %9304 = vmatpush1.bf16.msra.mxu0 %v9156
      %9305 = vmatprep.subr.bf16.mxu0 0
      %9306 = vmatpush1.bf16.msra.mxu0 %v9157
      %9307 = vmatprep.subr.bf16.mxu0 0
      %9308 = vmatpush1.bf16.msra.mxu0 %v9158
      %9309 = vmatprep.subr.bf16.mxu0 0
      %9310 = vmatpush1.bf16.msra.mxu0 %v9159
      %9311 = vmatprep.subr.bf16.mxu0 0
      %9312 = vmatpush1.bf16.msra.mxu0 %v9160
      %9313 = vmatprep.subr.bf16.mxu0 0
      %9314 = vmatpush1.bf16.msra.mxu0 %v9161
      %9315 = vmatprep.subr.bf16.mxu0 0
      %9316 = vmatpush1.bf16.msra.mxu0 %v9162
      %9317 = vmatprep.subr.bf16.mxu0 0
      %9318 = vmatpush1.bf16.msra.mxu0 %v9163
      %9319 = vmatprep.subr.bf16.mxu0 0
      %9320 = vmatpush1.bf16.msra.mxu0 %v9164
      %9321 = vmatprep.subr.bf16.mxu0 0
      %9322 = vmatpush1.bf16.msra.mxu0 %v9165
      %9323 = vmatprep.subr.bf16.mxu0 0
      %9324 = vmatpush1.bf16.msra.mxu0 %v9166
      %9325 = vmatprep.subr.bf16.mxu0 0
      %9326 = vmatpush1.bf16.msra.mxu0 %v9167
      %9327 = vmatprep.subr.bf16.mxu0 0
      %9328 = vmatpush1.bf16.msra.mxu0 %v9168
      %9329 = vmatprep.mubr.bf16.mxu0 %v8678
      %9330 = vmatmul.mubr.bf16.gmra.mrb[0].mxu0 %v8660
      %v9331 = vpop.f32.mrb[0].mxu0
      %v9332 = vadd.f32 %v8863, %v9331
      %v9333 = vpop.f32.mrb[0].mxu0
      %v9334 = vpop.f32.mrb[0].mxu0
      %v9335 = vadd.f32 %v8863, %v9334
      %v9336 = vpop.f32.mrb[0].mxu0
      %9337 = vmatprep.mubr.bf16.mxu0 %v8679
      %9338 = vmatmul.mubr.bf16.gmra.mrb[0].mxu0 %v8661
      %v9339 = vpop.f32.mrb[0].mxu0
      %v9340 = vadd.f32 %v8863, %v9339
      %v9341 = vpop.f32.mrb[0].mxu0
      %v9342 = vpop.f32.mrb[0].mxu0
      %v9343 = vadd.f32 %v8863, %v9342
      %v9344 = vpop.f32.mrb[0].mxu0
      %9345 = vmatprep.mubr.bf16.mxu0 %v8680
      %9346 = vmatmul.mubr.bf16.gmra.mrb[0].mxu0 %v8662
      %v9347 = vpop.f32.mrb[0].mxu0
      %v9348 = vadd.f32 %v8863, %v9347
      %v9349 = vpop.f32.mrb[0].mxu0
      %v9350 = vpop.f32.mrb[0].mxu0
      %v9351 = vadd.f32 %v8863, %v9350
      %v9352 = vpop.f32.mrb[0].mxu0
      %9353 = vmatprep.mubr.bf16.mxu0 %v8681
      %9354 = vmatmul.mubr.bf16.gmra.mrb[0].mxu0 %v8663
      %v9355 = vpop.f32.mrb[0].mxu0
      %v9356 = vadd.f32 %v8863, %v9355
      %v9357 = vpop.f32.mrb[0].mxu0
      %v9358 = vpop.f32.mrb[0].mxu0
      %v9359 = vadd.f32 %v8863, %v9358
      %v9360 = vpop.f32.mrb[0].mxu0
      %9361 = vmatprep.mubr.bf16.mxu0 %v8682
      %9362 = vmatmul.mubr.bf16.gmra.mrb[0].mxu0 %v8664
      %v9363 = vpop.f32.mrb[0].mxu0
      %v9364 = vadd.f32 %v8863, %v9363
      %v9365 = vpop.f32.mrb[0].mxu0
      %v9366 = vpop.f32.mrb[0].mxu0
      %v9367 = vadd.f32 %v8863, %v9366
      %v9368 = vpop.f32.mrb[0].mxu0
      %9369 = vmatprep.mubr.bf16.mxu0 %v8683
      %9370 = vmatmul.mubr.bf16.gmra.mrb[0].mxu0 %v8665
      %v9371 = vpop.f32.mrb[0].mxu0
      %v9372 = vadd.f32 %v8863, %v9371
      %v9373 = vpop.f32.mrb[0].mxu0
      %v9374 = vpop.f32.mrb[0].mxu0
      %v9375 = vadd.f32 %v8863, %v9374
      %v9376 = vpop.f32.mrb[0].mxu0
      %9377 = vmatprep.mubr.bf16.mxu0 %v8684
      %9378 = vmatmul.mubr.bf16.gmra.mrb[0].mxu0 %v8666
      %v9379 = vpop.f32.mrb[0].mxu0
      %v9380 = vadd.f32 %v8863, %v9379
      %v9381 = vpop.f32.mrb[0].mxu0
      %v9382 = vpop.f32.mrb[0].mxu0
      %v9383 = vadd.f32 %v8863, %v9382
      %v9384 = vpop.f32.mrb[0].mxu0
      %9385 = vmatprep.mubr.bf16.mxu0 %v8685
      %9386 = vmatmul.mubr.bf16.gmra.mrb[0].mxu0 %v8667
      %v9387 = vpop.f32.mrb[0].mxu0
      %v9388 = vadd.f32 %v8863, %v9387
      %v9389 = vpop.f32.mrb[0].mxu0
      %v9390 = vpop.f32.mrb[0].mxu0
      %v9391 = vadd.f32 %v8863, %v9390
      %v9392 = vpop.f32.mrb[0].mxu0
      %9393 = vmatprep.mubr.bf16.mxu0 %v8686
      %9394 = vmatmul.mubr.bf16.gmra.mrb[0].mxu0 %v8668
      %v9395 = vpop.f32.mrb[0].mxu0
      %v9396 = vadd.f32 %v8863, %v9395
      %v9397 = vpop.f32.mrb[0].mxu0
      %v9398 = vpop.f32.mrb[0].mxu0
      %v9399 = vadd.f32 %v8863, %v9398
      %v9400 = vpop.f32.mrb[0].mxu0
      %9401 = vmatprep.mubr.bf16.mxu0 %v8687
      %9402 = vmatmul.mubr.bf16.gmra.mrb[0].mxu0 %v8669
      %v9403 = vpop.f32.mrb[0].mxu0
      %v9404 = vadd.f32 %v8863, %v9403
      %v9405 = vpop.f32.mrb[0].mxu0
      %v9406 = vpop.f32.mrb[0].mxu0
      %v9407 = vadd.f32 %v8863, %v9406
      %v9408 = vpop.f32.mrb[0].mxu0
      %9409 = vmatprep.mubr.bf16.mxu0 %v8688
      %9410 = vmatmul.mubr.bf16.gmra.mrb[0].mxu0 %v8670
      %v9411 = vpop.f32.mrb[0].mxu0
      %v9412 = vadd.f32 %v8863, %v9411
      %v9413 = vpop.f32.mrb[0].mxu0
      %v9414 = vpop.f32.mrb[0].mxu0
      %v9415 = vadd.f32 %v8863, %v9414
      %v9416 = vpop.f32.mrb[0].mxu0
      %9417 = vmatprep.mubr.bf16.mxu0 %v8689
      %9418 = vmatmul.mubr.bf16.gmra.mrb[0].mxu0 %v8671
      %v9419 = vpop.f32.mrb[0].mxu0
      %v9420 = vadd.f32 %v8863, %v9419
      %v9421 = vpop.f32.mrb[0].mxu0
      %v9422 = vpop.f32.mrb[0].mxu0
      %v9423 = vadd.f32 %v8863, %v9422
      %v9424 = vpop.f32.mrb[0].mxu0
      %9425 = vmatprep.mubr.bf16.mxu0 %v8690
      %9426 = vmatmul.mubr.bf16.gmra.mrb[0].mxu0 %v8672
      %v9427 = vpop.f32.mrb[0].mxu0
      %v9428 = vadd.f32 %v8863, %v9427
      %v9429 = vpop.f32.mrb[0].mxu0
      %v9430 = vpop.f32.mrb[0].mxu0
      %v9431 = vadd.f32 %v8863, %v9430
      %v9432 = vpop.f32.mrb[0].mxu0
      %9433 = vmatprep.mubr.bf16.mxu0 %v8691
      %9434 = vmatmul.mubr.bf16.gmra.mrb[0].mxu0 %v8673
      %v9435 = vpop.f32.mrb[0].mxu0
      %v9436 = vadd.f32 %v8863, %v9435
      %v9437 = vpop.f32.mrb[0].mxu0
      %v9438 = vpop.f32.mrb[0].mxu0
      %v9439 = vadd.f32 %v8863, %v9438
      %v9440 = vpop.f32.mrb[0].mxu0
      %9441 = vmatprep.mubr.bf16.mxu0 %v8692
      %9442 = vmatmul.mubr.bf16.gmra.mrb[0].mxu0 %v8674
      %v9443 = vpop.f32.mrb[0].mxu0
      %v9444 = vadd.f32 %v8863, %v9443
      %v9445 = vpop.f32.mrb[0].mxu0
      %v9446 = vpop.f32.mrb[0].mxu0
      %v9447 = vadd.f32 %v8863, %v9446
      %v9448 = vpop.f32.mrb[0].mxu0
      %9449 = vmatprep.mubr.bf16.mxu0 %v8693
      %9450 = vmatmul.mubr.bf16.gmra.mrb[0].mxu0 %v8675
      %v9451 = vpop.f32.mrb[0].mxu0
      %v9452 = vadd.f32 %v8863, %v9451
      %v9453 = vpop.f32.mrb[0].mxu0
      %v9454 = vpop.f32.mrb[0].mxu0
      %v9455 = vadd.f32 %v8863, %v9454
      %v9456 = vpop.f32.mrb[0].mxu0
      %9457 = vdwg.mxu0
      %9458 = vmatprep.subr.bf16.mxu0 0
      %9459 = vmatpush1.bf16.msra.mxu0 %v9169
      %9460 = vmatprep.subr.bf16.mxu0 0
      %9461 = vmatpush1.bf16.msra.mxu0 %v9170
      %9462 = vmatprep.subr.bf16.mxu0 0
      %9463 = vmatpush1.bf16.msra.mxu0 %v9171
      %9464 = vmatprep.subr.bf16.mxu0 0
      %9465 = vmatpush1.bf16.msra.mxu0 %v9172
      %9466 = vmatprep.subr.bf16.mxu0 0
      %9467 = vmatpush1.bf16.msra.mxu0 %v9173
      %9468 = vmatprep.subr.bf16.mxu0 0
      %9469 = vmatpush1.bf16.msra.mxu0 %v9174
      %9470 = vmatprep.subr.bf16.mxu0 0
      %9471 = vmatpush1.bf16.msra.mxu0 %v9175
      %9472 = vmatprep.subr.bf16.mxu0 0
      %9473 = vmatpush1.bf16.msra.mxu0 %v9176
      %9474 = vmatprep.subr.bf16.mxu0 0
      %9475 = vmatpush1.bf16.msra.mxu0 %v9177
      %9476 = vmatprep.subr.bf16.mxu0 0
      %9477 = vmatpush1.bf16.msra.mxu0 %v9178
      %9478 = vmatprep.subr.bf16.mxu0 0
      %9479 = vmatpush1.bf16.msra.mxu0 %v9179
      %9480 = vmatprep.subr.bf16.mxu0 0
      %9481 = vmatpush1.bf16.msra.mxu0 %v9180
      %9482 = vmatprep.subr.bf16.mxu0 0
      %9483 = vmatpush1.bf16.msra.mxu0 %v9181
      %9484 = vmatprep.subr.bf16.mxu0 0
      %9485 = vmatpush1.bf16.msra.mxu0 %v9182
      %9486 = vmatprep.subr.bf16.mxu0 0
      %9487 = vmatpush1.bf16.msra.mxu0 %v9183
      %9488 = vmatprep.subr.bf16.mxu0 0
      %9489 = vmatpush1.bf16.msra.mxu0 %v9184
      %9490 = vmatprep.mubr.bf16.mxu0 %v8661
      %9491 = vmatmul.mubr.bf16.gmra.mrb[0].mxu0 %v8696
      %v9492 = vpop.f32.mrb[0].mxu0
      %v9493 = vadd.f32 %v9332, %v9492
      %v9494 = vpop.f32.mrb[0].mxu0
      %v9495 = vpop.f32.mrb[0].mxu0
      %v9496 = vadd.f32 %v9335, %v9495
      %v9497 = vpop.f32.mrb[0].mxu0
      %9498 = vmatprep.mubr.bf16.mxu0 %v8662
      %9499 = vmatmul.mubr.bf16.gmra.mrb[0].mxu0 %v8697
      %v9500 = vpop.f32.mrb[0].mxu0
      %v9501 = vadd.f32 %v9340, %v9500
      %v9502 = vpop.f32.mrb[0].mxu0
      %v9503 = vpop.f32.mrb[0].mxu0
      %v9504 = vadd.f32 %v9343, %v9503
      %v9505 = vpop.f32.mrb[0].mxu0
      %9506 = vmatprep.mubr.bf16.mxu0 %v8663
      %9507 = vmatmul.mubr.bf16.gmra.mrb[0].mxu0 %v8698
      %v9508 = vpop.f32.mrb[0].mxu0
      %v9509 = vadd.f32 %v9348, %v9508
      %v9510 = vpop.f32.mrb[0].mxu0
      %v9511 = vpop.f32.mrb[0].mxu0
      %v9512 = vadd.f32 %v9351, %v9511
      %v9513 = vpop.f32.mrb[0].mxu0
      %9514 = vmatprep.mubr.bf16.mxu0 %v8664
      %9515 = vmatmul.mubr.bf16.gmra.mrb[0].mxu0 %v8699
      %v9516 = vpop.f32.mrb[0].mxu0
      %v9517 = vadd.f32 %v9356, %v9516
      %v9518 = vpop.f32.mrb[0].mxu0
      %v9519 = vpop.f32.mrb[0].mxu0
      %v9520 = vadd.f32 %v9359, %v9519
      %v9521 = vpop.f32.mrb[0].mxu0
      %9522 = vmatprep.mubr.bf16.mxu0 %v8665
      %9523 = vmatmul.mubr.bf16.gmra.mrb[0].mxu0 %v8700
      %v9524 = vpop.f32.mrb[0].mxu0
      %v9525 = vadd.f32 %v9364, %v9524
      %v9526 = vpop.f32.mrb[0].mxu0
      %v9527 = vpop.f32.mrb[0].mxu0
      %v9528 = vadd.f32 %v9367, %v9527
      %v9529 = vpop.f32.mrb[0].mxu0
      %9530 = vmatprep.mubr.bf16.mxu0 %v8666
      %9531 = vmatmul.mubr.bf16.gmra.mrb[0].mxu0 %v8701
      %v9532 = vpop.f32.mrb[0].mxu0
      %v9533 = vadd.f32 %v9372, %v9532
      %v9534 = vpop.f32.mrb[0].mxu0
      %v9535 = vpop.f32.mrb[0].mxu0
      %v9536 = vadd.f32 %v9375, %v9535
      %v9537 = vpop.f32.mrb[0].mxu0
      %9538 = vmatprep.mubr.bf16.mxu0 %v8667
      %9539 = vmatmul.mubr.bf16.gmra.mrb[0].mxu0 %v8702
      %v9540 = vpop.f32.mrb[0].mxu0
      %v9541 = vadd.f32 %v9380, %v9540
      %v9542 = vpop.f32.mrb[0].mxu0
      %v9543 = vpop.f32.mrb[0].mxu0
      %v9544 = vadd.f32 %v9383, %v9543
      %v9545 = vpop.f32.mrb[0].mxu0
      %9546 = vmatprep.mubr.bf16.mxu0 %v8668
      %9547 = vmatmul.mubr.bf16.gmra.mrb[0].mxu0 %v8703
      %v9548 = vpop.f32.mrb[0].mxu0
      %v9549 = vadd.f32 %v9388, %v9548
      %v9550 = vpop.f32.mrb[0].mxu0
      %v9551 = vpop.f32.mrb[0].mxu0
      %v9552 = vadd.f32 %v9391, %v9551
      %v9553 = vpop.f32.mrb[0].mxu0
      %9554 = vmatprep.mubr.bf16.mxu0 %v8669
      %9555 = vmatmul.mubr.bf16.gmra.mrb[0].mxu0 %v8704
      %v9556 = vpop.f32.mrb[0].mxu0
      %v9557 = vadd.f32 %v9396, %v9556
      %v9558 = vpop.f32.mrb[0].mxu0
      %v9559 = vpop.f32.mrb[0].mxu0
      %v9560 = vadd.f32 %v9399, %v9559
      %v9561 = vpop.f32.mrb[0].mxu0
      %9562 = vmatprep.mubr.bf16.mxu0 %v8670
      %9563 = vmatmul.mubr.bf16.gmra.mrb[0].mxu0 %v8705
      %v9564 = vpop.f32.mrb[0].mxu0
      %v9565 = vadd.f32 %v9404, %v9564
      %v9566 = vpop.f32.mrb[0].mxu0
      %v9567 = vpop.f32.mrb[0].mxu0
      %v9568 = vadd.f32 %v9407, %v9567
      %v9569 = vpop.f32.mrb[0].mxu0
      %9570 = vmatprep.mubr.bf16.mxu0 %v8671
      %9571 = vmatmul.mubr.bf16.gmra.mrb[0].mxu0 %v8706
      %v9572 = vpop.f32.mrb[0].mxu0
      %v9573 = vadd.f32 %v9412, %v9572
      %v9574 = vpop.f32.mrb[0].mxu0
      %v9575 = vpop.f32.mrb[0].mxu0
      %v9576 = vadd.f32 %v9415, %v9575
      %v9577 = vpop.f32.mrb[0].mxu0
      %9578 = vmatprep.mubr.bf16.mxu0 %v8672
      %9579 = vmatmul.mubr.bf16.gmra.mrb[0].mxu0 %v8707
      %v9580 = vpop.f32.mrb[0].mxu0
      %v9581 = vadd.f32 %v9420, %v9580
      %v9582 = vpop.f32.mrb[0].mxu0
      %v9583 = vpop.f32.mrb[0].mxu0
      %v9584 = vadd.f32 %v9423, %v9583
      %v9585 = vpop.f32.mrb[0].mxu0
      %9586 = vmatprep.mubr.bf16.mxu0 %v8673
      %9587 = vmatmul.mubr.bf16.gmra.mrb[0].mxu0 %v8708
      %v9588 = vpop.f32.mrb[0].mxu0
      %v9589 = vadd.f32 %v9428, %v9588
      %v9590 = vpop.f32.mrb[0].mxu0
      %v9591 = vpop.f32.mrb[0].mxu0
      %v9592 = vadd.f32 %v9431, %v9591
      %v9593 = vpop.f32.mrb[0].mxu0
      %9594 = vmatprep.mubr.bf16.mxu0 %v8674
      %9595 = vmatmul.mubr.bf16.gmra.mrb[0].mxu0 %v8709
      %v9596 = vpop.f32.mrb[0].mxu0
      %v9597 = vadd.f32 %v9436, %v9596
      %v9598 = vpop.f32.mrb[0].mxu0
      %v9599 = vpop.f32.mrb[0].mxu0
      %v9600 = vadd.f32 %v9439, %v9599
      %v9601 = vpop.f32.mrb[0].mxu0
      %9602 = vmatprep.mubr.bf16.mxu0 %v8675
      %9603 = vmatmul.mubr.bf16.gmra.mrb[0].mxu0 %v8710
      %v9604 = vpop.f32.mrb[0].mxu0
      %v9605 = vadd.f32 %v9444, %v9604
      %v9606 = vpop.f32.mrb[0].mxu0
      %v9607 = vpop.f32.mrb[0].mxu0
      %v9608 = vadd.f32 %v9447, %v9607
      %v9609 = vpop.f32.mrb[0].mxu0
      %9610 = vmatprep.mubr.bf16.mxu0 %v8676
      %9611 = vmatmul.mubr.bf16.gmra.mrb[0].mxu0 %v8711
      %v9612 = vpop.f32.mrb[0].mxu0
      %v9613 = vadd.f32 %v9452, %v9612
      %v9614 = vpop.f32.mrb[0].mxu0
      %v9615 = vpop.f32.mrb[0].mxu0
      %v9616 = vadd.f32 %v9455, %v9615
      %v9617 = vpop.f32.mrb[0].mxu0
      %9618 = vdwg.mxu0
      %9619 = vmatprep.subr.bf16.mxu0 0
      %9620 = vmatpush1.bf16.msra.mxu0 %v9185
      %9621 = vmatprep.subr.bf16.mxu0 0
      %9622 = vmatpush1.bf16.msra.mxu0 %v9186
      %9623 = vmatprep.subr.bf16.mxu0 0
      %9624 = vmatpush1.bf16.msra.mxu0 %v9187
      %9625 = vmatprep.subr.bf16.mxu0 0
      %9626 = vmatpush1.bf16.msra.mxu0 %v9188
      %9627 = vmatprep.subr.bf16.mxu0 0
      %9628 = vmatpush1.bf16.msra.mxu0 %v9189
      %9629 = vmatprep.subr.bf16.mxu0 0
      %9630 = vmatpush1.bf16.msra.mxu0 %v9190
      %9631 = vmatprep.subr.bf16.mxu0 0
      %9632 = vmatpush1.bf16.msra.mxu0 %v9191
      %9633 = vmatprep.subr.bf16.mxu0 0
      %9634 = vmatpush1.bf16.msra.mxu0 %v9192
      %9635 = vmatprep.subr.bf16.mxu0 0
      %9636 = vmatpush1.bf16.msra.mxu0 %v9193
      %9637 = vmatprep.subr.bf16.mxu0 0
      %9638 = vmatpush1.bf16.msra.mxu0 %v9194
      %9639 = vmatprep.subr.bf16.mxu0 0
      %9640 = vmatpush1.bf16.msra.mxu0 %v9195
      %9641 = vmatprep.subr.bf16.mxu0 0
      %9642 = vmatpush1.bf16.msra.mxu0 %v9196
      %9643 = vmatprep.subr.bf16.mxu0 0
      %9644 = vmatpush1.bf16.msra.mxu0 %v9197
      %9645 = vmatprep.subr.bf16.mxu0 0
      %9646 = vmatpush1.bf16.msra.mxu0 %v9198
      %9647 = vmatprep.subr.bf16.mxu0 0
      %9648 = vmatpush1.bf16.msra.mxu0 %v9199
      %9649 = vmatprep.subr.bf16.mxu0 0
      %9650 = vmatpush1.bf16.msra.mxu0 %v9200
      %9651 = vmatprep.mubr.bf16.mxu0 %v8697
      %9652 = vmatmul.mubr.bf16.gmra.mrb[0].mxu0 %v8679
      %v9653 = vpop.f32.mrb[0].mxu0
      %v9654 = vadd.f32 %v9493, %v9653
      %v9655 = vpop.f32.mrb[0].mxu0
      %v9656 = vpop.f32.mrb[0].mxu0
      %v9657 = vadd.f32 %v9496, %v9656
      %v9658 = vpop.f32.mrb[0].mxu0
      %9659 = vmatprep.mubr.bf16.mxu0 %v8698
      %9660 = vmatmul.mubr.bf16.gmra.mrb[0].mxu0 %v8680
      %v9661 = vpop.f32.mrb[0].mxu0
      %v9662 = vadd.f32 %v9501, %v9661
      %v9663 = vpop.f32.mrb[0].mxu0
      %v9664 = vpop.f32.mrb[0].mxu0
      %v9665 = vadd.f32 %v9504, %v9664
      %v9666 = vpop.f32.mrb[0].mxu0
      %9667 = vmatprep.mubr.bf16.mxu0 %v8699
      %9668 = vmatmul.mubr.bf16.gmra.mrb[0].mxu0 %v8681
      %v9669 = vpop.f32.mrb[0].mxu0
      %v9670 = vadd.f32 %v9509, %v9669
      %v9671 = vpop.f32.mrb[0].mxu0
      %v9672 = vpop.f32.mrb[0].mxu0
      %v9673 = vadd.f32 %v9512, %v9672
      %v9674 = vpop.f32.mrb[0].mxu0
      %9675 = vmatprep.mubr.bf16.mxu0 %v8700
      %9676 = vmatmul.mubr.bf16.gmra.mrb[0].mxu0 %v8682
      %v9677 = vpop.f32.mrb[0].mxu0
      %v9678 = vadd.f32 %v9517, %v9677
      %v9679 = vpop.f32.mrb[0].mxu0
      %v9680 = vpop.f32.mrb[0].mxu0
      %v9681 = vadd.f32 %v9520, %v9680
      %v9682 = vpop.f32.mrb[0].mxu0
      %9683 = vmatprep.mubr.bf16.mxu0 %v8701
      %9684 = vmatmul.mubr.bf16.gmra.mrb[0].mxu0 %v8683
      %v9685 = vpop.f32.mrb[0].mxu0
      %v9686 = vadd.f32 %v9525, %v9685
      %v9687 = vpop.f32.mrb[0].mxu0
      %v9688 = vpop.f32.mrb[0].mxu0
      %v9689 = vadd.f32 %v9528, %v9688
      %v9690 = vpop.f32.mrb[0].mxu0
      %9691 = vmatprep.mubr.bf16.mxu0 %v8702
      %9692 = vmatmul.mubr.bf16.gmra.mrb[0].mxu0 %v8684
      %v9693 = vpop.f32.mrb[0].mxu0
      %v9694 = vadd.f32 %v9533, %v9693
      %v9695 = vpop.f32.mrb[0].mxu0
      %v9696 = vpop.f32.mrb[0].mxu0
      %v9697 = vadd.f32 %v9536, %v9696
      %v9698 = vpop.f32.mrb[0].mxu0
      %9699 = vmatprep.mubr.bf16.mxu0 %v8703
      %9700 = vmatmul.mubr.bf16.gmra.mrb[0].mxu0 %v8685
      %v9701 = vpop.f32.mrb[0].mxu0
      %v9702 = vadd.f32 %v9541, %v9701
      %v9703 = vpop.f32.mrb[0].mxu0
      %v9704 = vpop.f32.mrb[0].mxu0
      %v9705 = vadd.f32 %v9544, %v9704
      %v9706 = vpop.f32.mrb[0].mxu0
      %9707 = vmatprep.mubr.bf16.mxu0 %v8704
      %9708 = vmatmul.mubr.bf16.gmra.mrb[0].mxu0 %v8686
      %v9709 = vpop.f32.mrb[0].mxu0
      %v9710 = vadd.f32 %v9549, %v9709
      %v9711 = vpop.f32.mrb[0].mxu0
      %v9712 = vpop.f32.mrb[0].mxu0
      %v9713 = vadd.f32 %v9552, %v9712
      %v9714 = vpop.f32.mrb[0].mxu0
      %9715 = vmatprep.mubr.bf16.mxu0 %v8705
      %9716 = vmatmul.mubr.bf16.gmra.mrb[0].mxu0 %v8687
      %v9717 = vpop.f32.mrb[0].mxu0
      %v9718 = vadd.f32 %v9557, %v9717
      %v9719 = vpop.f32.mrb[0].mxu0
      %v9720 = vpop.f32.mrb[0].mxu0
      %v9721 = vadd.f32 %v9560, %v9720
      %v9722 = vpop.f32.mrb[0].mxu0
      %9723 = vmatprep.mubr.bf16.mxu0 %v8706
      %9724 = vmatmul.mubr.bf16.gmra.mrb[0].mxu0 %v8688
      %v9725 = vpop.f32.mrb[0].mxu0
      %v9726 = vadd.f32 %v9565, %v9725
      %v9727 = vpop.f32.mrb[0].mxu0
      %v9728 = vpop.f32.mrb[0].mxu0
      %v9729 = vadd.f32 %v9568, %v9728
      %v9730 = vpop.f32.mrb[0].mxu0
      %9731 = vmatprep.mubr.bf16.mxu0 %v8707
      %9732 = vmatmul.mubr.bf16.gmra.mrb[0].mxu0 %v8689
      %v9733 = vpop.f32.mrb[0].mxu0
      %v9734 = vadd.f32 %v9573, %v9733
      %v9735 = vpop.f32.mrb[0].mxu0
      %v9736 = vpop.f32.mrb[0].mxu0
      %v9737 = vadd.f32 %v9576, %v9736
      %v9738 = vpop.f32.mrb[0].mxu0
      %9739 = vmatprep.mubr.bf16.mxu0 %v8708
      %9740 = vmatmul.mubr.bf16.gmra.mrb[0].mxu0 %v8690
      %v9741 = vpop.f32.mrb[0].mxu0
      %v9742 = vadd.f32 %v9581, %v9741
      %v9743 = vpop.f32.mrb[0].mxu0
      %v9744 = vpop.f32.mrb[0].mxu0
      %v9745 = vadd.f32 %v9584, %v9744
      %v9746 = vpop.f32.mrb[0].mxu0
      %9747 = vmatprep.mubr.bf16.mxu0 %v8709
      %9748 = vmatmul.mubr.bf16.gmra.mrb[0].mxu0 %v8691
      %v9749 = vpop.f32.mrb[0].mxu0
      %v9750 = vadd.f32 %v9589, %v9749
      %v9751 = vpop.f32.mrb[0].mxu0
      %v9752 = vpop.f32.mrb[0].mxu0
      %v9753 = vadd.f32 %v9592, %v9752
      %v9754 = vpop.f32.mrb[0].mxu0
      %9755 = vmatprep.mubr.bf16.mxu0 %v8710
      %9756 = vmatmul.mubr.bf16.gmra.mrb[0].mxu0 %v8692
      %v9757 = vpop.f32.mrb[0].mxu0
      %v9758 = vadd.f32 %v9597, %v9757
      %v9759 = vpop.f32.mrb[0].mxu0
      %v9760 = vpop.f32.mrb[0].mxu0
      %v9761 = vadd.f32 %v9600, %v9760
      %v9762 = vpop.f32.mrb[0].mxu0
      %9763 = vmatprep.mubr.bf16.mxu0 %v8711
      %9764 = vmatmul.mubr.bf16.gmra.mrb[0].mxu0 %v8693
      %v9765 = vpop.f32.mrb[0].mxu0
      %v9766 = vadd.f32 %v9605, %v9765
      %v9767 = vpop.f32.mrb[0].mxu0
      %v9768 = vpop.f32.mrb[0].mxu0
      %v9769 = vadd.f32 %v9608, %v9768
      %v9770 = vpop.f32.mrb[0].mxu0
      %9771 = vmatprep.mubr.bf16.mxu0 %v8712
      %9772 = vmatmul.mubr.bf16.gmra.mrb[0].mxu0 %v8694
      %v9773 = vpop.f32.mrb[0].mxu0
      %v9774 = vadd.f32 %v9613, %v9773
      %v9775 = vpop.f32.mrb[0].mxu0
      %v9776 = vpop.f32.mrb[0].mxu0
      %v9777 = vadd.f32 %v9616, %v9776
      %v9778 = vpop.f32.mrb[0].mxu0
      %9779 = vdwg.mxu0
      %9780 = vmatprep.subr.bf16.mxu0 0
      %9781 = vmatpush1.bf16.msra.mxu0 %v9201
      %9782 = vmatprep.subr.bf16.mxu0 0
      %9783 = vmatpush1.bf16.msra.mxu0 %v9202
      %9784 = vmatprep.subr.bf16.mxu0 0
      %9785 = vmatpush1.bf16.msra.mxu0 %v9203
      %9786 = vmatprep.subr.bf16.mxu0 0
      %9787 = vmatpush1.bf16.msra.mxu0 %v9204
      %9788 = vmatprep.subr.bf16.mxu0 0
      %9789 = vmatpush1.bf16.msra.mxu0 %v9205
      %9790 = vmatprep.subr.bf16.mxu0 0
      %9791 = vmatpush1.bf16.msra.mxu0 %v9206
      %9792 = vmatprep.subr.bf16.mxu0 0
      %9793 = vmatpush1.bf16.msra.mxu0 %v9207
      %9794 = vmatprep.subr.bf16.mxu0 0
      %9795 = vmatpush1.bf16.msra.mxu0 %v9208
      %9796 = vmatprep.subr.bf16.mxu0 0
      %9797 = vmatpush1.bf16.msra.mxu0 %v9209
      %9798 = vmatprep.subr.bf16.mxu0 0
      %9799 = vmatpush1.bf16.msra.mxu0 %v9210
      %9800 = vmatprep.subr.bf16.mxu0 0
      %9801 = vmatpush1.bf16.msra.mxu0 %v9211
      %9802 = vmatprep.subr.bf16.mxu0 0
      %9803 = vmatpush1.bf16.msra.mxu0 %v9212
      %9804 = vmatprep.subr.bf16.mxu0 0
      %9805 = vmatpush1.bf16.msra.mxu0 %v9213
      %9806 = vmatprep.subr.bf16.mxu0 0
      %9807 = vmatpush1.bf16.msra.mxu0 %v9214
      %9808 = vmatprep.subr.bf16.mxu0 0
      %9809 = vmatpush1.bf16.msra.mxu0 %v9215
      %9810 = vmatprep.subr.bf16.mxu0 0
      %9811 = vmatpush1.bf16.msra.mxu0 %v9216
      %9812 = vmatprep.mubr.bf16.mxu0 %v8680
      %9813 = vmatmul.mubr.bf16.gmra.mrb[0].mxu0 %v8662
      %v9814 = vpop.f32.mrb[0].mxu0
      %v9815 = vadd.f32 %v9654, %v9814
      %v9816 = vpop.f32.mrb[0].mxu0
      %v9817 = vpop.f32.mrb[0].mxu0
      %v9818 = vadd.f32 %v9657, %v9817
      %v9819 = vpop.f32.mrb[0].mxu0
      %9820 = vmatprep.mubr.bf16.mxu0 %v8681
      %9821 = vmatmul.mubr.bf16.gmra.mrb[0].mxu0 %v8663
      %v9822 = vpop.f32.mrb[0].mxu0
      %v9823 = vadd.f32 %v9662, %v9822
      %v9824 = vpop.f32.mrb[0].mxu0
      %v9825 = vpop.f32.mrb[0].mxu0
      %v9826 = vadd.f32 %v9665, %v9825
      %v9827 = vpop.f32.mrb[0].mxu0
      %9828 = vmatprep.mubr.bf16.mxu0 %v8682
      %9829 = vmatmul.mubr.bf16.gmra.mrb[0].mxu0 %v8664
      %v9830 = vpop.f32.mrb[0].mxu0
      %v9831 = vadd.f32 %v9670, %v9830
      %v9832 = vpop.f32.mrb[0].mxu0
      %v9833 = vpop.f32.mrb[0].mxu0
      %v9834 = vadd.f32 %v9673, %v9833
      %v9835 = vpop.f32.mrb[0].mxu0
      %9836 = vmatprep.mubr.bf16.mxu0 %v8683
      %9837 = vmatmul.mubr.bf16.gmra.mrb[0].mxu0 %v8665
      %v9838 = vpop.f32.mrb[0].mxu0
      %v9839 = vadd.f32 %v9678, %v9838
      %v9840 = vpop.f32.mrb[0].mxu0
      %v9841 = vpop.f32.mrb[0].mxu0
      %v9842 = vadd.f32 %v9681, %v9841
      %v9843 = vpop.f32.mrb[0].mxu0
      %9844 = vmatprep.mubr.bf16.mxu0 %v8684
      %9845 = vmatmul.mubr.bf16.gmra.mrb[0].mxu0 %v8666
      %v9846 = vpop.f32.mrb[0].mxu0
      %v9847 = vadd.f32 %v9686, %v9846
      %v9848 = vpop.f32.mrb[0].mxu0
      %v9849 = vpop.f32.mrb[0].mxu0
      %v9850 = vadd.f32 %v9689, %v9849
      %v9851 = vpop.f32.mrb[0].mxu0
      %9852 = vmatprep.mubr.bf16.mxu0 %v8685
      %9853 = vmatmul.mubr.bf16.gmra.mrb[0].mxu0 %v8667
      %v9854 = vpop.f32.mrb[0].mxu0
      %v9855 = vadd.f32 %v9694, %v9854
      %v9856 = vpop.f32.mrb[0].mxu0
      %v9857 = vpop.f32.mrb[0].mxu0
      %v9858 = vadd.f32 %v9697, %v9857
      %v9859 = vpop.f32.mrb[0].mxu0
      %9860 = vmatprep.mubr.bf16.mxu0 %v8686
      %9861 = vmatmul.mubr.bf16.gmra.mrb[0].mxu0 %v8668
      %v9862 = vpop.f32.mrb[0].mxu0
      %v9863 = vadd.f32 %v9702, %v9862
      %v9864 = vpop.f32.mrb[0].mxu0
      %v9865 = vpop.f32.mrb[0].mxu0
      %v9866 = vadd.f32 %v9705, %v9865
      %v9867 = vpop.f32.mrb[0].mxu0
      %9868 = vmatprep.mubr.bf16.mxu0 %v8687
      %9869 = vmatmul.mubr.bf16.gmra.mrb[0].mxu0 %v8669
      %v9870 = vpop.f32.mrb[0].mxu0
      %v9871 = vadd.f32 %v9710, %v9870
      %v9872 = vpop.f32.mrb[0].mxu0
      %v9873 = vpop.f32.mrb[0].mxu0
      %v9874 = vadd.f32 %v9713, %v9873
      %v9875 = vpop.f32.mrb[0].mxu0
      %9876 = vmatprep.mubr.bf16.mxu0 %v8688
      %9877 = vmatmul.mubr.bf16.gmra.mrb[0].mxu0 %v8670
      %v9878 = vpop.f32.mrb[0].mxu0
      %v9879 = vadd.f32 %v9718, %v9878
      %v9880 = vpop.f32.mrb[0].mxu0
      %v9881 = vpop.f32.mrb[0].mxu0
      %v9882 = vadd.f32 %v9721, %v9881
      %v9883 = vpop.f32.mrb[0].mxu0
      %9884 = vmatprep.mubr.bf16.mxu0 %v8689
      %9885 = vmatmul.mubr.bf16.gmra.mrb[0].mxu0 %v8671
      %v9886 = vpop.f32.mrb[0].mxu0
      %v9887 = vadd.f32 %v9726, %v9886
      %v9888 = vpop.f32.mrb[0].mxu0
      %v9889 = vpop.f32.mrb[0].mxu0
      %v9890 = vadd.f32 %v9729, %v9889
      %v9891 = vpop.f32.mrb[0].mxu0
      %9892 = vmatprep.mubr.bf16.mxu0 %v8690
      %9893 = vmatmul.mubr.bf16.gmra.mrb[0].mxu0 %v8672
      %v9894 = vpop.f32.mrb[0].mxu0
      %v9895 = vadd.f32 %v9734, %v9894
      %v9896 = vpop.f32.mrb[0].mxu0
      %v9897 = vpop.f32.mrb[0].mxu0
      %v9898 = vadd.f32 %v9737, %v9897
      %v9899 = vpop.f32.mrb[0].mxu0
      %9900 = vmatprep.mubr.bf16.mxu0 %v8691
      %9901 = vmatmul.mubr.bf16.gmra.mrb[0].mxu0 %v8673
      %v9902 = vpop.f32.mrb[0].mxu0
      %v9903 = vadd.f32 %v9742, %v9902
      %v9904 = vpop.f32.mrb[0].mxu0
      %v9905 = vpop.f32.mrb[0].mxu0
      %v9906 = vadd.f32 %v9745, %v9905
      %v9907 = vpop.f32.mrb[0].mxu0
      %9908 = vmatprep.mubr.bf16.mxu0 %v8692
      %9909 = vmatmul.mubr.bf16.gmra.mrb[0].mxu0 %v8674
      %v9910 = vpop.f32.mrb[0].mxu0
      %v9911 = vadd.f32 %v9750, %v9910
      %v9912 = vpop.f32.mrb[0].mxu0
      %v9913 = vpop.f32.mrb[0].mxu0
      %v9914 = vadd.f32 %v9753, %v9913
      %v9915 = vpop.f32.mrb[0].mxu0
      %9916 = vmatprep.mubr.bf16.mxu0 %v8693
      %9917 = vmatmul.mubr.bf16.gmra.mrb[0].mxu0 %v8675
      %v9918 = vpop.f32.mrb[0].mxu0
      %v9919 = vadd.f32 %v9758, %v9918
      %v9920 = vpop.f32.mrb[0].mxu0
      %v9921 = vpop.f32.mrb[0].mxu0
      %v9922 = vadd.f32 %v9761, %v9921
      %v9923 = vpop.f32.mrb[0].mxu0
      %9924 = vmatprep.mubr.bf16.mxu0 %v8694
      %9925 = vmatmul.mubr.bf16.gmra.mrb[0].mxu0 %v8676
      %v9926 = vpop.f32.mrb[0].mxu0
      %v9927 = vadd.f32 %v9766, %v9926
      %v9928 = vpop.f32.mrb[0].mxu0
      %v9929 = vpop.f32.mrb[0].mxu0
      %v9930 = vadd.f32 %v9769, %v9929
      %v9931 = vpop.f32.mrb[0].mxu0
      %9932 = vmatprep.mubr.bf16.mxu0 %v8695
      %9933 = vmatmul.mubr.bf16.gmra.mrb[0].mxu0 %v8677
      %v9934 = vpop.f32.mrb[0].mxu0
      %v9935 = vadd.f32 %v9774, %v9934
      %v9936 = vpop.f32.mrb[0].mxu0
      %v9937 = vpop.f32.mrb[0].mxu0
      %v9938 = vadd.f32 %v9777, %v9937
      %v9939 = vpop.f32.mrb[0].mxu0
      %9940 = vdwg.mxu0
      %9941 = vmatprep.subr.bf16.mxu0 0
      %9942 = vmatpush1.bf16.msra.mxu0 %v9217
      %9943 = vmatprep.subr.bf16.mxu0 0
      %9944 = vmatpush1.bf16.msra.mxu0 %v9218
      %9945 = vmatprep.subr.bf16.mxu0 0
      %9946 = vmatpush1.bf16.msra.mxu0 %v9219
      %9947 = vmatprep.subr.bf16.mxu0 0
      %9948 = vmatpush1.bf16.msra.mxu0 %v9220
      %9949 = vmatprep.subr.bf16.mxu0 0
      %9950 = vmatpush1.bf16.msra.mxu0 %v9221
      %9951 = vmatprep.subr.bf16.mxu0 0
      %9952 = vmatpush1.bf16.msra.mxu0 %v9222
      %9953 = vmatprep.subr.bf16.mxu0 0
      %9954 = vmatpush1.bf16.msra.mxu0 %v9223
      %9955 = vmatprep.subr.bf16.mxu0 0
      %9956 = vmatpush1.bf16.msra.mxu0 %v9224
      %9957 = vmatprep.subr.bf16.mxu0 0
      %9958 = vmatpush1.bf16.msra.mxu0 0
      %9959 = vmatprep.subr.bf16.mxu0 0
      %9960 = vmatpush1.bf16.msra.mxu0 0
      %9961 = vmatprep.subr.bf16.mxu0 0
      %9962 = vmatpush1.bf16.msra.mxu0 0
      %9963 = vmatprep.subr.bf16.mxu0 0
      %9964 = vmatpush1.bf16.msra.mxu0 0
      %9965 = vmatprep.subr.bf16.mxu0 0
      %9966 = vmatpush1.bf16.msra.mxu0 0
      %9967 = vmatprep.subr.bf16.mxu0 0
      %9968 = vmatpush1.bf16.msra.mxu0 0
      %9969 = vmatprep.subr.bf16.mxu0 0
      %9970 = vmatpush1.bf16.msra.mxu0 0
      %9971 = vmatprep.subr.bf16.mxu0 0
      %9972 = vmatpush1.bf16.msra.mxu0 0
      %9973 = vmatprep.mubr.bf16.mxu0 0
      %9974 = vmatmul.mubr.bf16.gmra.mrb[0].mxu0 %v8698
      %v9975 = vpop.f32.mrb[0].mxu0
      %v9976 = vadd.f32 %v9815, %v9975
      %v9977 = vpop.f32.mrb[0].mxu0
      %v9978 = vpop.f32.mrb[0].mxu0
      %v9979 = vadd.f32 %v9818, %v9978
      %v9980 = vpop.f32.mrb[0].mxu0
      %9981 = vmatprep.mubr.bf16.mxu0 0
      %9982 = vmatmul.mubr.bf16.gmra.mrb[0].mxu0 %v8699
      %v9983 = vpop.f32.mrb[0].mxu0
      %v9984 = vadd.f32 %v9823, %v9983
      %v9985 = vpop.f32.mrb[0].mxu0
      %v9986 = vpop.f32.mrb[0].mxu0
      %v9987 = vadd.f32 %v9826, %v9986
      %v9988 = vpop.f32.mrb[0].mxu0
      %9989 = vmatprep.mubr.bf16.mxu0 0
      %9990 = vmatmul.mubr.bf16.gmra.mrb[0].mxu0 %v8700
      %v9991 = vpop.f32.mrb[0].mxu0
      %v9992 = vadd.f32 %v9831, %v9991
      %v9993 = vpop.f32.mrb[0].mxu0
      %v9994 = vpop.f32.mrb[0].mxu0
      %v9995 = vadd.f32 %v9834, %v9994
      %v9996 = vpop.f32.mrb[0].mxu0
      %9997 = vmatprep.mubr.bf16.mxu0 0
      %9998 = vmatmul.mubr.bf16.gmra.mrb[0].mxu0 %v8701
      %v9999 = vpop.f32.mrb[0].mxu0
      %v10000 = vadd.f32 %v9839, %v9999
      %v10001 = vpop.f32.mrb[0].mxu0
      %v10002 = vpop.f32.mrb[0].mxu0
      %v10003 = vadd.f32 %v9842, %v10002
      %v10004 = vpop.f32.mrb[0].mxu0
      %10005 = vmatprep.mubr.bf16.mxu0 0
      %10006 = vmatmul.mubr.bf16.gmra.mrb[0].mxu0 %v8702
      %v10007 = vpop.f32.mrb[0].mxu0
      %v10008 = vadd.f32 %v9847, %v10007
      %v10009 = vpop.f32.mrb[0].mxu0
      %v10010 = vpop.f32.mrb[0].mxu0
      %v10011 = vadd.f32 %v9850, %v10010
      %v10012 = vpop.f32.mrb[0].mxu0
      %10013 = vmatprep.mubr.bf16.mxu0 0
      %10014 = vmatmul.mubr.bf16.gmra.mrb[0].mxu0 %v8703
      %v10015 = vpop.f32.mrb[0].mxu0
      %v10016 = vadd.f32 %v9855, %v10015
      %v10017 = vpop.f32.mrb[0].mxu0
      %v10018 = vpop.f32.mrb[0].mxu0
      %v10019 = vadd.f32 %v9858, %v10018
      %v10020 = vpop.f32.mrb[0].mxu0
      %10021 = vmatprep.mubr.bf16.mxu0 0
      %10022 = vmatmul.mubr.bf16.gmra.mrb[0].mxu0 %v8704
      %v10023 = vpop.f32.mrb[0].mxu0
      %v10024 = vadd.f32 %v9863, %v10023
      %v10025 = vpop.f32.mrb[0].mxu0
      %v10026 = vpop.f32.mrb[0].mxu0
      %v10027 = vadd.f32 %v9866, %v10026
      %v10028 = vpop.f32.mrb[0].mxu0
      %10029 = vmatprep.mubr.bf16.mxu0 0
      %10030 = vmatmul.mubr.bf16.gmra.mrb[0].mxu0 %v8705
      %v10031 = vpop.f32.mrb[0].mxu0
      %v10032 = vadd.f32 %v9871, %v10031
      %v10033 = vpop.f32.mrb[0].mxu0
      %v10034 = vpop.f32.mrb[0].mxu0
      %v10035 = vadd.f32 %v9874, %v10034
      %v10036 = vpop.f32.mrb[0].mxu0
      %10037 = vmatprep.mubr.bf16.mxu0 0
      %10038 = vmatmul.mubr.bf16.gmra.mrb[0].mxu0 %v8706
      %v10039 = vpop.f32.mrb[0].mxu0
      %v10040 = vadd.f32 %v9879, %v10039
      %v10041 = vpop.f32.mrb[0].mxu0
      %v10042 = vpop.f32.mrb[0].mxu0
      %v10043 = vadd.f32 %v9882, %v10042
      %v10044 = vpop.f32.mrb[0].mxu0
      %10045 = vmatprep.mubr.bf16.mxu0 0
      %10046 = vmatmul.mubr.bf16.gmra.mrb[0].mxu0 %v8707
      %v10047 = vpop.f32.mrb[0].mxu0
      %v10048 = vadd.f32 %v9887, %v10047
      %v10049 = vpop.f32.mrb[0].mxu0
      %v10050 = vpop.f32.mrb[0].mxu0
      %v10051 = vadd.f32 %v9890, %v10050
      %v10052 = vpop.f32.mrb[0].mxu0
      %10053 = vmatprep.mubr.bf16.mxu0 0
      %10054 = vmatmul.mubr.bf16.gmra.mrb[0].mxu0 %v8708
      %v10055 = vpop.f32.mrb[0].mxu0
      %v10056 = vadd.f32 %v9895, %v10055
      %v10057 = vpop.f32.mrb[0].mxu0
      %v10058 = vpop.f32.mrb[0].mxu0
      %v10059 = vadd.f32 %v9898, %v10058
      %v10060 = vpop.f32.mrb[0].mxu0
      %10061 = vmatprep.mubr.bf16.mxu0 0
      %10062 = vmatmul.mubr.bf16.gmra.mrb[0].mxu0 %v8709
      %v10063 = vpop.f32.mrb[0].mxu0
      %v10064 = vadd.f32 %v9903, %v10063
      %v10065 = vpop.f32.mrb[0].mxu0
      %v10066 = vpop.f32.mrb[0].mxu0
      %v10067 = vadd.f32 %v9906, %v10066
      %v10068 = vpop.f32.mrb[0].mxu0
      %10069 = vmatprep.mubr.bf16.mxu0 0
      %10070 = vmatmul.mubr.bf16.gmra.mrb[0].mxu0 %v8710
      %v10071 = vpop.f32.mrb[0].mxu0
      %v10072 = vadd.f32 %v9911, %v10071
      %v10073 = vpop.f32.mrb[0].mxu0
      %v10074 = vpop.f32.mrb[0].mxu0
      %v10075 = vadd.f32 %v9914, %v10074
      %v10076 = vpop.f32.mrb[0].mxu0
      %10077 = vmatprep.mubr.bf16.mxu0 0
      %10078 = vmatmul.mubr.bf16.gmra.mrb[0].mxu0 %v8711
      %v10079 = vpop.f32.mrb[0].mxu0
      %v10080 = vadd.f32 %v9919, %v10079
      %v10081 = vpop.f32.mrb[0].mxu0
      %v10082 = vpop.f32.mrb[0].mxu0
      %v10083 = vadd.f32 %v9922, %v10082
      %v10084 = vpop.f32.mrb[0].mxu0
      %10085 = vmatprep.mubr.bf16.mxu0 0
      %10086 = vmatmul.mubr.bf16.gmra.mrb[0].mxu0 %v8712
      %v10087 = vpop.f32.mrb[0].mxu0
      %v10088 = vadd.f32 %v9927, %v10087
      %v10089 = vpop.f32.mrb[0].mxu0
      %v10090 = vpop.f32.mrb[0].mxu0
      %v10091 = vadd.f32 %v9930, %v10090
      %v10092 = vpop.f32.mrb[0].mxu0
      %10093 = vmatprep.mubr.bf16.mxu0 0
      %10094 = vmatmul.mubr.bf16.gmra.mrb[0].mxu0 %v8713
      %v10095 = vpop.f32.mrb[0].mxu0
      %v10096 = vadd.f32 %v9935, %v10095
      %v10097 = vpop.f32.mrb[0].mxu0
      %v10098 = vpop.f32.mrb[0].mxu0
      %v10099 = vadd.f32 %v9938, %v10098
      %v10100 = vpop.f32.mrb[0].mxu0
      %10101 = vdwg.mxu0
      %v10102 = vmax.f32 %v9976, 0.0
      %v10103 = vmax.f32 %v9979, 0.0
      %v10104 = vmax.f32 %v9984, 0.0
      %v10105 = vmax.f32 %v9987, 0.0
      %v10106 = vmax.f32 %v9992, 0.0
      %v10107 = vmax.f32 %v9995, 0.0
      %v10108 = vmax.f32 %v10000, 0.0
      %v10109 = vmax.f32 %v10003, 0.0
      %v10110 = vmax.f32 %v10008, 0.0
      %v10111 = vmax.f32 %v10011, 0.0
      %v10112 = vmax.f32 %v10016, 0.0
      %v10113 = vmax.f32 %v10019, 0.0
      %v10114 = vmax.f32 %v10024, 0.0
      %v10115 = vmax.f32 %v10027, 0.0
      %v10116 = vmax.f32 %v10032, 0.0
      %v10117 = vmax.f32 %v10035, 0.0
      %v10118 = vmax.f32 %v10040, 0.0
      %v10119 = vmax.f32 %v10043, 0.0
      %v10120 = vmax.f32 %v10048, 0.0
      %v10121 = vmax.f32 %v10051, 0.0
      %v10122 = vmax.f32 %v10056, 0.0
      %v10123 = vmax.f32 %v10059, 0.0
      %v10124 = vmax.f32 %v10064, 0.0
      %v10125 = vmax.f32 %v10067, 0.0
      %v10126 = vmax.f32 %v10072, 0.0
      %v10127 = vmax.f32 %v10075, 0.0
      %v10128 = vmax.f32 %v10080, 0.0
      %v10129 = vmax.f32 %v10083, 0.0
      %v10130 = vmax.f32 %v10088, 0.0
      %v10131 = vmax.f32 %v10091, 0.0
      %v10132 = vmax.f32 %v10096, 0.0
      %v10133 = vmax.f32 %v10099, 0.0
      %10134 = vst.msk [vmem:[#allocation2 + $0x10] sm:$0xff] %vm466, %v10102
      %10135 = vst.msk [vmem:[#allocation2 + $0x18] sm:$0xff] %vm466, %v10103
      %10136 = vst.msk [vmem:[#allocation2 + $0x20] sm:$0xff] %vm466, %v10104
      %10137 = vst.msk [vmem:[#allocation2 + $0x28] sm:$0xff] %vm466, %v10105
      %10138 = vst.msk [vmem:[#allocation2 + $0x30] sm:$0xff] %vm466, %v10106
      %10139 = vst.msk [vmem:[#allocation2 + $0x38] sm:$0xff] %vm466, %v10107
      %10140 = vst.msk [vmem:[#allocation2 + $0x40] sm:$0xff] %vm466, %v10108
      %10141 = vst.msk [vmem:[#allocation2 + $0x48] sm:$0xff] %vm466, %v10109
      %10142 = vst.msk [vmem:[#allocation2 + $0x50] sm:$0xff] %vm466, %v10110
      %10143 = vst.msk [vmem:[#allocation2 + $0x58] sm:$0xff] %vm466, %v10111
      %10144 = vst.msk [vmem:[#allocation2 + $0x60] sm:$0xff] %vm466, %v10112
      %10145 = vst.msk [vmem:[#allocation2 + $0x68] sm:$0xff] %vm466, %v10113
      %10146 = vst.msk [vmem:[#allocation2 + $0x70] sm:$0xff] %vm466, %v10114
      %10147 = vst.msk [vmem:[#allocation2 + $0x78] sm:$0xff] %vm466, %v10115
      %10148 = vst.msk [vmem:[#allocation2 + $0x80] sm:$0xff] %vm466, %v10116
      %10149 = vst.msk [vmem:[#allocation2 + $0x88] sm:$0xff] %vm466, %v10117
      %10150 = vst.msk [vmem:[#allocation2 + $0x90] sm:$0xff] %vm466, %v10118
      %10151 = vst.msk [vmem:[#allocation2 + $0x98] sm:$0xff] %vm466, %v10119
      %10152 = vst.msk [vmem:[#allocation2 + $0xa0] sm:$0xff] %vm466, %v10120
      %10153 = vst.msk [vmem:[#allocation2 + $0xa8] sm:$0xff] %vm466, %v10121
      %10154 = vst.msk [vmem:[#allocation2 + $0xb0] sm:$0xff] %vm466, %v10122
      %10155 = vst.msk [vmem:[#allocation2 + $0xb8] sm:$0xff] %vm466, %v10123
      %10156 = vst.msk [vmem:[#allocation2 + $0xc0] sm:$0xff] %vm466, %v10124
      %10157 = vst.msk [vmem:[#allocation2 + $0xc8] sm:$0xff] %vm466, %v10125
      %10158 = vst.msk [vmem:[#allocation2 + $0xd0] sm:$0xff] %vm466, %v10126
      %10159 = vst.msk [vmem:[#allocation2 + $0xd8] sm:$0xff] %vm466, %v10127
      %10160 = vst.msk [vmem:[#allocation2 + $0xe0] sm:$0xff] %vm466, %v10128
      %10161 = vst.msk [vmem:[#allocation2 + $0xe8] sm:$0xff] %vm466, %v10129
      %10162 = vst.msk [vmem:[#allocation2 + $0xf0] sm:$0xff] %vm466, %v10130
      %10163 = vst.msk [vmem:[#allocation2 + $0xf8] sm:$0xff] %vm466, %v10131
      %10164 = vst.msk [vmem:[#allocation2 + $0x100] sm:$0xff] %vm466, %v10132
      %10165 = vst.msk [vmem:[#allocation2 + $0x108] sm:$0xff] %vm466, %v10133
      %v10166 = vld [vmem:[%s8] sm:$0xff]
      %v10167 = vld [vmem:[%s8 + $0x8] sm:$0x1]
      %v10168 = vld [vmem:[#allocation2] sm:$0xff]
      %v10169 = vld [vmem:[#allocation2 + $0x8] sm:$0xff]
      %v10170 = vld [vmem:[#allocation2 + $0x10] sm:$0xff]
      %v10171 = vld [vmem:[#allocation2 + $0x18] sm:$0xff]
      %v10172 = vld [vmem:[#allocation2 + $0x20] sm:$0xff]
      %v10173 = vld [vmem:[#allocation2 + $0x28] sm:$0xff]
      %v10174 = vld [vmem:[#allocation2 + $0x30] sm:$0xff]
      %v10175 = vld [vmem:[#allocation2 + $0x38] sm:$0xff]
      %v10176 = vld [vmem:[#allocation2 + $0x40] sm:$0xff]
      %v10177 = vld [vmem:[#allocation2 + $0x48] sm:$0xff]
      %v10178 = vld [vmem:[#allocation2 + $0x50] sm:$0xff]
      %v10179 = vld [vmem:[#allocation2 + $0x58] sm:$0xff]
      %v10180 = vld [vmem:[#allocation2 + $0x60] sm:$0xff]
      %v10181 = vld [vmem:[#allocation2 + $0x68] sm:$0xff]
      %v10182 = vld [vmem:[#allocation2 + $0x70] sm:$0xff]
      %v10183 = vld [vmem:[#allocation2 + $0x78] sm:$0xff]
      %v10184 = vld [vmem:[#allocation2 + $0x80] sm:$0xff]
      %v10185 = vld [vmem:[#allocation2 + $0x88] sm:$0xff]
      %v10186 = vld [vmem:[#allocation2 + $0x90] sm:$0xff]
      %v10187 = vld [vmem:[#allocation2 + $0x98] sm:$0xff]
      %v10188 = vld [vmem:[#allocation2 + $0xa0] sm:$0xff]
      %v10189 = vld [vmem:[#allocation2 + $0xa8] sm:$0xff]
      %v10190 = vld [vmem:[#allocation2 + $0xb0] sm:$0xff]
      %v10191 = vld [vmem:[#allocation2 + $0xb8] sm:$0xff]
      %v10192 = vld [vmem:[#allocation2 + $0xc0] sm:$0xff]
      %v10193 = vld [vmem:[#allocation2 + $0xc8] sm:$0xff]
      %v10194 = vld [vmem:[#allocation2 + $0xd0] sm:$0xff]
      %v10195 = vld [vmem:[#allocation2 + $0xd8] sm:$0xff]
      %v10196 = vld [vmem:[#allocation2 + $0xe0] sm:$0xff]
      %v10197 = vld [vmem:[#allocation2 + $0xe8] sm:$0xff]
      %v10198 = vld [vmem:[#allocation2 + $0xf0] sm:$0xff]
      %v10199 = vld [vmem:[#allocation2 + $0xf8] sm:$0xff]
      %v10200 = vld [vmem:[#allocation2 + $0x100] sm:$0xff]
      %v10201 = vld [vmem:[#allocation2 + $0x108] sm:$0xff]
      %v10202 = vld [vmem:[#allocation2 + $0x110] sm:$0xff]
      %v10203 = vld [vmem:[#allocation2 + $0x118] sm:$0xff]
      %v10205 = vrot.slane %v10203, 7
      %v10242 = vrot.slane %v10168, 7
      %v10243 = vrot.slane %v10169, 7
      %v10244 = vsel %vm8226, %v10242, %v10243
      %v10245 = vrot.slane %v10170, 7
      %v10246 = vsel %vm8226, %v10243, %v10245
      %v10247 = vrot.slane %v10171, 7
      %v10248 = vsel %vm8226, %v10245, %v10247
      %v10249 = vrot.slane %v10172, 7
      %v10250 = vsel %vm8226, %v10247, %v10249
      %v10251 = vrot.slane %v10173, 7
      %v10252 = vsel %vm8226, %v10249, %v10251
      %v10253 = vrot.slane %v10174, 7
      %v10254 = vsel %vm8226, %v10251, %v10253
      %v10255 = vrot.slane %v10175, 7
      %v10256 = vsel %vm8226, %v10253, %v10255
      %v10257 = vrot.slane %v10176, 7
      %v10258 = vsel %vm8226, %v10255, %v10257
      %v10259 = vrot.slane %v10177, 7
      %v10260 = vsel %vm8226, %v10257, %v10259
      %v10261 = vrot.slane %v10178, 7
      %v10262 = vsel %vm8226, %v10259, %v10261
      %v10263 = vrot.slane %v10179, 7
      %v10264 = vsel %vm8226, %v10261, %v10263
      %v10265 = vrot.slane %v10180, 7
      %v10266 = vsel %vm8226, %v10263, %v10265
      %v10267 = vrot.slane %v10181, 7
      %v10268 = vsel %vm8226, %v10265, %v10267
      %v10269 = vrot.slane %v10182, 7
      %v10270 = vsel %vm8226, %v10267, %v10269
      %v10271 = vrot.slane %v10183, 7
      %v10272 = vsel %vm8226, %v10269, %v10271
      %v10273 = vrot.slane %v10184, 7
      %v10274 = vsel %vm8226, %v10271, %v10273
      %v10275 = vrot.slane %v10185, 7
      %v10276 = vsel %vm8226, %v10273, %v10275
      %v10277 = vrot.slane %v10186, 7
      %v10278 = vsel %vm8226, %v10275, %v10277
      %v10279 = vrot.slane %v10187, 7
      %v10280 = vsel %vm8226, %v10277, %v10279
      %v10281 = vrot.slane %v10188, 7
      %v10282 = vsel %vm8226, %v10279, %v10281
      %v10283 = vrot.slane %v10189, 7
      %v10284 = vsel %vm8226, %v10281, %v10283
      %v10285 = vrot.slane %v10190, 7
      %v10286 = vsel %vm8226, %v10283, %v10285
      %v10287 = vrot.slane %v10191, 7
      %v10288 = vsel %vm8226, %v10285, %v10287
      %v10289 = vrot.slane %v10192, 7
      %v10290 = vsel %vm8226, %v10287, %v10289
      %v10291 = vrot.slane %v10193, 7
      %v10292 = vsel %vm8226, %v10289, %v10291
      %v10293 = vrot.slane %v10194, 7
      %v10294 = vsel %vm8226, %v10291, %v10293
      %v10295 = vrot.slane %v10195, 7
      %v10296 = vsel %vm8226, %v10293, %v10295
      %v10297 = vrot.slane %v10196, 7
      %v10298 = vsel %vm8226, %v10295, %v10297
      %v10299 = vrot.slane %v10197, 7
      %v10300 = vsel %vm8226, %v10297, %v10299
      %v10301 = vrot.slane %v10198, 7
      %v10302 = vsel %vm8226, %v10299, %v10301
      %v10303 = vrot.slane %v10199, 7
      %v10304 = vsel %vm8226, %v10301, %v10303
      %v10305 = vrot.slane %v10200, 7
      %v10306 = vsel %vm8226, %v10303, %v10305
      %v10307 = vrot.slane %v10201, 7
      %v10308 = vsel %vm8226, %v10305, %v10307
      %v10309 = vrot.slane %v10202, 7
      %v10310 = vsel %vm8226, %v10307, %v10309
      %v10311 = vsel %vm8226, %v10309, %v10205
      %v10348 = vsel %vm8226, %v10205, %v10242
      %v10349 = vsel %vm8370, %v10348, 0.0
      %v10350 = vsel %vm8371, %v10244, 0.0
      %v10351 = vsel %vm8372, %v10246, 0.0
      %v10352 = vsel %vm8373, %v10248, 0.0
      %v10353 = vsel %vm8374, %v10250, 0.0
      %v10354 = vsel %vm8375, %v10252, 0.0
      %v10355 = vsel %vm8376, %v10254, 0.0
      %v10356 = vsel %vm8377, %v10256, 0.0
      %v10357 = vsel %vm8378, %v10258, 0.0
      %v10358 = vsel %vm8379, %v10260, 0.0
      %v10359 = vsel %vm8380, %v10262, 0.0
      %v10360 = vsel %vm8381, %v10264, 0.0
      %v10361 = vsel %vm8382, %v10266, 0.0
      %v10362 = vsel %vm8383, %v10268, 0.0
      %v10363 = vsel %vm8384, %v10270, 0.0
      %v10364 = vsel %vm8385, %v10272, 0.0
      %v10365 = vsel %vm8386, %v10274, 0.0
      %v10366 = vsel %vm8387, %v10276, 0.0
      %v10367 = vsel %vm8388, %v10278, 0.0
      %v10368 = vsel %vm8389, %v10280, 0.0
      %v10369 = vsel %vm8390, %v10282, 0.0
      %v10370 = vsel %vm8391, %v10284, 0.0
      %v10371 = vsel %vm8392, %v10286, 0.0
      %v10372 = vsel %vm8393, %v10288, 0.0
      %v10373 = vsel %vm8394, %v10290, 0.0
      %v10374 = vsel %vm8395, %v10292, 0.0
      %v10375 = vsel %vm8396, %v10294, 0.0
      %v10376 = vsel %vm8397, %v10296, 0.0
      %v10377 = vsel %vm8398, %v10298, 0.0
      %v10378 = vsel %vm8399, %v10300, 0.0
      %v10379 = vsel %vm8400, %v10302, 0.0
      %v10380 = vsel %vm8401, %v10304, 0.0
      %v10381 = vsel %vm8402, %v10306, 0.0
      %v10382 = vsel %vm8403, %v10308, 0.0
      %v10383 = vsel %vm8404, %v10310, 0.0
      %v10384 = vsel %vm8405, %v10311, 0.0
      %v10385 = vrot.slane %v10168, 1
      %v10386 = vrot.slane %v10169, 1
      %v10387 = vsel %vm8442, %v10385, %v10386
      %v10388 = vrot.slane %v10170, 1
      %v10389 = vsel %vm8442, %v10386, %v10388
      %v10390 = vrot.slane %v10171, 1
      %v10391 = vsel %vm8442, %v10388, %v10390
      %v10392 = vrot.slane %v10172, 1
      %v10393 = vsel %vm8442, %v10390, %v10392
      %v10394 = vrot.slane %v10173, 1
      %v10395 = vsel %vm8442, %v10392, %v10394
      %v10396 = vrot.slane %v10174, 1
      %v10397 = vsel %vm8442, %v10394, %v10396
      %v10398 = vrot.slane %v10175, 1
      %v10399 = vsel %vm8442, %v10396, %v10398
      %v10400 = vrot.slane %v10176, 1
      %v10401 = vsel %vm8442, %v10398, %v10400
      %v10402 = vrot.slane %v10177, 1
      %v10403 = vsel %vm8442, %v10400, %v10402
      %v10404 = vrot.slane %v10178, 1
      %v10405 = vsel %vm8442, %v10402, %v10404
      %v10406 = vrot.slane %v10179, 1
      %v10407 = vsel %vm8442, %v10404, %v10406
      %v10408 = vrot.slane %v10180, 1
      %v10409 = vsel %vm8442, %v10406, %v10408
      %v10410 = vrot.slane %v10181, 1
      %v10411 = vsel %vm8442, %v10408, %v10410
      %v10412 = vrot.slane %v10182, 1
      %v10413 = vsel %vm8442, %v10410, %v10412
      %v10414 = vrot.slane %v10183, 1
      %v10415 = vsel %vm8442, %v10412, %v10414
      %v10416 = vrot.slane %v10184, 1
      %v10417 = vsel %vm8442, %v10414, %v10416
      %v10418 = vrot.slane %v10185, 1
      %v10419 = vsel %vm8442, %v10416, %v10418
      %v10420 = vrot.slane %v10186, 1
      %v10421 = vsel %vm8442, %v10418, %v10420
      %v10422 = vrot.slane %v10187, 1
      %v10423 = vsel %vm8442, %v10420, %v10422
      %v10424 = vrot.slane %v10188, 1
      %v10425 = vsel %vm8442, %v10422, %v10424
      %v10426 = vrot.slane %v10189, 1
      %v10427 = vsel %vm8442, %v10424, %v10426
      %v10428 = vrot.slane %v10190, 1
      %v10429 = vsel %vm8442, %v10426, %v10428
      %v10430 = vrot.slane %v10191, 1
      %v10431 = vsel %vm8442, %v10428, %v10430
      %v10432 = vrot.slane %v10192, 1
      %v10433 = vsel %vm8442, %v10430, %v10432
      %v10434 = vrot.slane %v10193, 1
      %v10435 = vsel %vm8442, %v10432, %v10434
      %v10436 = vrot.slane %v10194, 1
      %v10437 = vsel %vm8442, %v10434, %v10436
      %v10438 = vrot.slane %v10195, 1
      %v10439 = vsel %vm8442, %v10436, %v10438
      %v10440 = vrot.slane %v10196, 1
      %v10441 = vsel %vm8442, %v10438, %v10440
      %v10442 = vrot.slane %v10197, 1
      %v10443 = vsel %vm8442, %v10440, %v10442
      %v10444 = vrot.slane %v10198, 1
      %v10445 = vsel %vm8442, %v10442, %v10444
      %v10446 = vrot.slane %v10199, 1
      %v10447 = vsel %vm8442, %v10444, %v10446
      %v10448 = vrot.slane %v10200, 1
      %v10449 = vsel %vm8442, %v10446, %v10448
      %v10450 = vrot.slane %v10201, 1
      %v10451 = vsel %vm8442, %v10448, %v10450
      %v10452 = vrot.slane %v10202, 1
      %v10453 = vsel %vm8442, %v10450, %v10452
      %v10454 = vrot.slane %v10203, 1
      %v10455 = vsel %vm8442, %v10452, %v10454
      %v10493 = vsel %vm8442, %v10454, %v10385
      %v10494 = vsel %vm8588, %v10387, 0.0
      %v10495 = vsel %vm8589, %v10389, 0.0
      %v10496 = vsel %vm8590, %v10391, 0.0
      %v10497 = vsel %vm8591, %v10393, 0.0
      %v10498 = vsel %vm8592, %v10395, 0.0
      %v10499 = vsel %vm8593, %v10397, 0.0
      %v10500 = vsel %vm8594, %v10399, 0.0
      %v10501 = vsel %vm8595, %v10401, 0.0
      %v10502 = vsel %vm8596, %v10403, 0.0
      %v10503 = vsel %vm8597, %v10405, 0.0
      %v10504 = vsel %vm8598, %v10407, 0.0
      %v10505 = vsel %vm8599, %v10409, 0.0
      %v10506 = vsel %vm8600, %v10411, 0.0
      %v10507 = vsel %vm8601, %v10413, 0.0
      %v10508 = vsel %vm8602, %v10415, 0.0
      %v10509 = vsel %vm8603, %v10417, 0.0
      %v10510 = vsel %vm8604, %v10419, 0.0
      %v10511 = vsel %vm8605, %v10421, 0.0
      %v10512 = vsel %vm8606, %v10423, 0.0
      %v10513 = vsel %vm8607, %v10425, 0.0
      %v10514 = vsel %vm8608, %v10427, 0.0
      %v10515 = vsel %vm8609, %v10429, 0.0
      %v10516 = vsel %vm8610, %v10431, 0.0
      %v10517 = vsel %vm8611, %v10433, 0.0
      %v10518 = vsel %vm8612, %v10435, 0.0
      %v10519 = vsel %vm8613, %v10437, 0.0
      %v10520 = vsel %vm8614, %v10439, 0.0
      %v10521 = vsel %vm8615, %v10441, 0.0
      %v10522 = vsel %vm8616, %v10443, 0.0
      %v10523 = vsel %vm8617, %v10445, 0.0
      %v10524 = vsel %vm8618, %v10447, 0.0
      %v10525 = vsel %vm8619, %v10449, 0.0
      %v10526 = vsel %vm8620, %v10451, 0.0
      %v10527 = vsel %vm8621, %v10453, 0.0
      %v10528 = vsel %vm8622, %v10455, 0.0
      %v10529 = vsel %vm8623, %v10493, 0.0
      %v10530 = vpack.c.bf16 %v10350, %v10349
      %v10531 = vpack.c.bf16 %v10352, %v10351
      %v10532 = vpack.c.bf16 %v10354, %v10353
      %v10533 = vpack.c.bf16 %v10356, %v10355
      %v10534 = vpack.c.bf16 %v10358, %v10357
      %v10535 = vpack.c.bf16 %v10360, %v10359
      %v10536 = vpack.c.bf16 %v10362, %v10361
      %v10537 = vpack.c.bf16 %v10364, %v10363
      %v10538 = vpack.c.bf16 %v10366, %v10365
      %v10539 = vpack.c.bf16 %v10368, %v10367
      %v10540 = vpack.c.bf16 %v10370, %v10369
      %v10541 = vpack.c.bf16 %v10372, %v10371
      %v10542 = vpack.c.bf16 %v10374, %v10373
      %v10543 = vpack.c.bf16 %v10376, %v10375
      %v10544 = vpack.c.bf16 %v10378, %v10377
      %v10545 = vpack.c.bf16 %v10380, %v10379
      %v10546 = vpack.c.bf16 %v10382, %v10381
      %v10547 = vpack.c.bf16 %v10384, %v10383
      %v10548 = vpack.c.bf16 %v10169, %v10168
      %v10549 = vpack.c.bf16 %v10171, %v10170
      %v10550 = vpack.c.bf16 %v10173, %v10172
      %v10551 = vpack.c.bf16 %v10175, %v10174
      %v10552 = vpack.c.bf16 %v10177, %v10176
      %v10553 = vpack.c.bf16 %v10179, %v10178
      %v10554 = vpack.c.bf16 %v10181, %v10180
      %v10555 = vpack.c.bf16 %v10183, %v10182
      %v10556 = vpack.c.bf16 %v10185, %v10184
      %v10557 = vpack.c.bf16 %v10187, %v10186
      %v10558 = vpack.c.bf16 %v10189, %v10188
      %v10559 = vpack.c.bf16 %v10191, %v10190
      %v10560 = vpack.c.bf16 %v10193, %v10192
      %v10561 = vpack.c.bf16 %v10195, %v10194
      %v10562 = vpack.c.bf16 %v10197, %v10196
      %v10563 = vpack.c.bf16 %v10199, %v10198
      %v10564 = vpack.c.bf16 %v10201, %v10200
      %v10565 = vpack.c.bf16 %v10203, %v10202
      %v10566 = vpack.c.bf16 %v10495, %v10494
      %v10567 = vpack.c.bf16 %v10497, %v10496
      %v10568 = vpack.c.bf16 %v10499, %v10498
      %v10569 = vpack.c.bf16 %v10501, %v10500
      %v10570 = vpack.c.bf16 %v10503, %v10502
      %v10571 = vpack.c.bf16 %v10505, %v10504
      %v10572 = vpack.c.bf16 %v10507, %v10506
      %v10573 = vpack.c.bf16 %v10509, %v10508
      %v10574 = vpack.c.bf16 %v10511, %v10510
      %v10575 = vpack.c.bf16 %v10513, %v10512
      %v10576 = vpack.c.bf16 %v10515, %v10514
      %v10577 = vpack.c.bf16 %v10517, %v10516
      %v10578 = vpack.c.bf16 %v10519, %v10518
      %v10579 = vpack.c.bf16 %v10521, %v10520
      %v10580 = vpack.c.bf16 %v10523, %v10522
      %v10581 = vpack.c.bf16 %v10525, %v10524
      %v10582 = vpack.c.bf16 %v10527, %v10526
      %v10583 = vpack.c.bf16 %v10529, %v10528
      %v10584 = vld [vmem:[#allocation6] sm:$0x1]
      %10586 = vset.pattern.permute.xlu0 0
      %10587 = vperm.xlu0 %10586, %v10584
      %v10588 = vpop.permute.xlu0 %10587
      %v10590 = vlaneseq
      %v10591 = vshrl.u32 %v10590, 7
      %v10592 = vsub.s32 0, %v10591
      %v10593 = vrot.slane %v10588, %v10592
      %v10596 = vcombine.high %v10166, %v10166
      %v10598 = vunpack.c.l.s4 1966171168
      %v10599 = vunpack.c.0.s8 %v10598
      %v10600 = vlaneseq
      %v10601 = vshrl.u32 %v10600, 7
      %v10602 = vsub.s32 %v10599, %v10601
      %v10603 = vrot.slane %v10166, %v10602
      %v10605 = vunpack.c.l.s4 1966171168
      %v10606 = vunpack.c.0.s8 %v10605
      %v10607 = vlaneseq
      %v10608 = vshrl.u32 %v10607, 7
      %v10609 = vsub.s32 %v10606, %v10608
      %v10610 = vrot.slane %v10596, %v10609
      %v10611 = vcombine.high %v10603, %v10603
      %v10612 = vcombine.high %v10610, %v10610
      %v10614 = vunpack.c.l.s4 1966171168
      %v10615 = vunpack.c.0.s8 %v10614
      %v10616 = vlaneseq
      %v10617 = vshrl.u32 %v10616, 7
      %v10618 = vsub.s32 %v10615, %v10617
      %v10619 = vrot.slane %v10603, %v10618
      %v10621 = vunpack.c.l.s4 1966171168
      %v10622 = vunpack.c.0.s8 %v10621
      %v10623 = vlaneseq
      %v10624 = vshrl.u32 %v10623, 7
      %v10625 = vsub.s32 %v10622, %v10624
      %v10626 = vrot.slane %v10610, %v10625
      %v10628 = vunpack.c.l.s4 1966171168
      %v10629 = vunpack.c.0.s8 %v10628
      %v10630 = vlaneseq
      %v10631 = vshrl.u32 %v10630, 7
      %v10632 = vsub.s32 %v10629, %v10631
      %v10633 = vrot.slane %v10611, %v10632
      %v10635 = vunpack.c.l.s4 1966171168
      %v10636 = vunpack.c.0.s8 %v10635
      %v10637 = vlaneseq
      %v10638 = vshrl.u32 %v10637, 7
      %v10639 = vsub.s32 %v10636, %v10638
      %v10640 = vrot.slane %v10612, %v10639
      %v10641 = vcombine.high %v10619, %v10619
      %v10642 = vcombine.high %v10626, %v10626
      %v10643 = vcombine.high %v10633, %v10633
      %v10644 = vcombine.high %v10640, %v10640
      %v10646 = vunpack.c.l.s4 1966171168
      %v10647 = vunpack.c.0.s8 %v10646
      %v10648 = vlaneseq
      %v10649 = vshrl.u32 %v10648, 7
      %v10650 = vsub.s32 %v10647, %v10649
      %v10651 = vrot.slane %v10167, %v10650
      %v10653 = vunpack.c.l.s4 1966171168
      %v10654 = vunpack.c.0.s8 %v10653
      %v10655 = vlaneseq
      %v10656 = vshrl.u32 %v10655, 7
      %v10657 = vsub.s32 %v10654, %v10656
      %v10658 = vrot.slane %v10651, %v10657
      %10668 = vmatprep.subr.bf16.mxu0 %v10548
      %10669 = vmatpush1.bf16.xpose.msra.mxu0 %v10530
      %10670 = vmatprep.subr.bf16.mxu0 %v10549
      %10671 = vmatpush1.bf16.xpose.msra.mxu0 %v10531
      %10672 = vmatprep.subr.bf16.mxu0 %v10550
      %10673 = vmatpush1.bf16.xpose.msra.mxu0 %v10532
      %10674 = vmatprep.subr.bf16.mxu0 %v10551
      %10675 = vmatpush1.bf16.xpose.msra.mxu0 %v10533
      %10676 = vmatprep.subr.bf16.mxu0 %v10552
      %10677 = vmatpush1.bf16.xpose.msra.mxu0 %v10534
      %10678 = vmatprep.subr.bf16.mxu0 %v10553
      %10679 = vmatpush1.bf16.xpose.msra.mxu0 %v10535
      %10680 = vmatprep.subr.bf16.mxu0 %v10554
      %10681 = vmatpush1.bf16.xpose.msra.mxu0 %v10536
      %10682 = vmatprep.subr.bf16.mxu0 %v10555
      %10683 = vmatpush1.bf16.xpose.msra.mxu0 %v10537
      %10684 = vmatprep.subr.bf16.mxu0 %v10556
      %10685 = vmatpush1.bf16.xpose.msra.mxu0 %v10538
      %10686 = vmatprep.subr.bf16.mxu0 %v10557
      %10687 = vmatpush1.bf16.xpose.msra.mxu0 %v10539
      %10688 = vmatprep.subr.bf16.mxu0 %v10558
      %10689 = vmatpush1.bf16.xpose.msra.mxu0 %v10540
      %10690 = vmatprep.subr.bf16.mxu0 %v10559
      %10691 = vmatpush1.bf16.xpose.msra.mxu0 %v10541
      %10692 = vmatprep.subr.bf16.mxu0 %v10560
      %10693 = vmatpush1.bf16.xpose.msra.mxu0 %v10542
      %10694 = vmatprep.subr.bf16.mxu0 %v10561
      %10695 = vmatpush1.bf16.xpose.msra.mxu0 %v10543
      %10696 = vmatprep.subr.bf16.mxu0 %v10562
      %10697 = vmatpush1.bf16.xpose.msra.mxu0 %v10544
      %10698 = vmatprep.subr.bf16.mxu0 %v10563
      %10699 = vmatpush1.bf16.xpose.msra.mxu0 %v10545
      %10700 = vmatprep.mubr.bf16.mxu0 %v10633
      %10701 = vmatmul.mubr.bf16.gmra.mrb[0].mxu0 %v10619
      %v10702 = vpop.f32.mrb[0].mxu0
      %v10703 = vadd.f32 %v10593, %v10702
      %v10704 = vpop.f32.mrb[0].mxu0
      %v10705 = vadd.f32 %v10593, %v10704
      %v10706 = vpop.f32.mrb[0].mxu0
      %v10707 = vpop.f32.mrb[0].mxu0
      %10708 = vdwg.mxu0
      %10709 = vmatprep.subr.bf16.mxu0 %v10531
      %10710 = vmatpush1.bf16.xpose.msra.mxu0 %v10566
      %10711 = vmatprep.subr.bf16.mxu0 %v10532
      %10712 = vmatpush1.bf16.xpose.msra.mxu0 %v10567
      %10713 = vmatprep.subr.bf16.mxu0 %v10533
      %10714 = vmatpush1.bf16.xpose.msra.mxu0 %v10568
      %10715 = vmatprep.subr.bf16.mxu0 %v10534
      %10716 = vmatpush1.bf16.xpose.msra.mxu0 %v10569
      %10717 = vmatprep.subr.bf16.mxu0 %v10535
      %10718 = vmatpush1.bf16.xpose.msra.mxu0 %v10570
      %10719 = vmatprep.subr.bf16.mxu0 %v10536
      %10720 = vmatpush1.bf16.xpose.msra.mxu0 %v10571
      %10721 = vmatprep.subr.bf16.mxu0 %v10537
      %10722 = vmatpush1.bf16.xpose.msra.mxu0 %v10572
      %10723 = vmatprep.subr.bf16.mxu0 %v10538
      %10724 = vmatpush1.bf16.xpose.msra.mxu0 %v10573
      %10725 = vmatprep.subr.bf16.mxu0 %v10539
      %10726 = vmatpush1.bf16.xpose.msra.mxu0 %v10574
      %10727 = vmatprep.subr.bf16.mxu0 %v10540
      %10728 = vmatpush1.bf16.xpose.msra.mxu0 %v10575
      %10729 = vmatprep.subr.bf16.mxu0 %v10541
      %10730 = vmatpush1.bf16.xpose.msra.mxu0 %v10576
      %10731 = vmatprep.subr.bf16.mxu0 %v10542
      %10732 = vmatpush1.bf16.xpose.msra.mxu0 %v10577
      %10733 = vmatprep.subr.bf16.mxu0 %v10543
      %10734 = vmatpush1.bf16.xpose.msra.mxu0 %v10578
      %10735 = vmatprep.subr.bf16.mxu0 %v10544
      %10736 = vmatpush1.bf16.xpose.msra.mxu0 %v10579
      %10737 = vmatprep.subr.bf16.mxu0 %v10545
      %10738 = vmatpush1.bf16.xpose.msra.mxu0 %v10580
      %10739 = vmatprep.subr.bf16.mxu0 %v10546
      %10740 = vmatpush1.bf16.xpose.msra.mxu0 %v10581
      %10741 = vmatprep.mubr.bf16.mxu0 %v10643
      %10742 = vmatmul.mubr.bf16.gmra.mrb[0].mxu0 %v10641
      %v10743 = vpop.f32.mrb[0].mxu0
      %v10744 = vadd.f32 %v10703, %v10743
      %v10745 = vpop.f32.mrb[0].mxu0
      %v10746 = vadd.f32 %v10705, %v10745
      %v10747 = vpop.f32.mrb[0].mxu0
      %v10748 = vpop.f32.mrb[0].mxu0
      %10749 = vdwg.mxu0
      %10750 = vmatprep.subr.bf16.mxu0 %v10567
      %10751 = vmatpush1.bf16.xpose.msra.mxu0 %v10549
      %10752 = vmatprep.subr.bf16.mxu0 %v10568
      %10753 = vmatpush1.bf16.xpose.msra.mxu0 %v10550
      %10754 = vmatprep.subr.bf16.mxu0 %v10569
      %10755 = vmatpush1.bf16.xpose.msra.mxu0 %v10551
      %10756 = vmatprep.subr.bf16.mxu0 %v10570
      %10757 = vmatpush1.bf16.xpose.msra.mxu0 %v10552
      %10758 = vmatprep.subr.bf16.mxu0 %v10571
      %10759 = vmatpush1.bf16.xpose.msra.mxu0 %v10553
      %10760 = vmatprep.subr.bf16.mxu0 %v10572
      %10761 = vmatpush1.bf16.xpose.msra.mxu0 %v10554
      %10762 = vmatprep.subr.bf16.mxu0 %v10573
      %10763 = vmatpush1.bf16.xpose.msra.mxu0 %v10555
      %10764 = vmatprep.subr.bf16.mxu0 %v10574
      %10765 = vmatpush1.bf16.xpose.msra.mxu0 %v10556
      %10766 = vmatprep.subr.bf16.mxu0 %v10575
      %10767 = vmatpush1.bf16.xpose.msra.mxu0 %v10557
      %10768 = vmatprep.subr.bf16.mxu0 %v10576
      %10769 = vmatpush1.bf16.xpose.msra.mxu0 %v10558
      %10770 = vmatprep.subr.bf16.mxu0 %v10577
      %10771 = vmatpush1.bf16.xpose.msra.mxu0 %v10559
      %10772 = vmatprep.subr.bf16.mxu0 %v10578
      %10773 = vmatpush1.bf16.xpose.msra.mxu0 %v10560
      %10774 = vmatprep.subr.bf16.mxu0 %v10579
      %10775 = vmatpush1.bf16.xpose.msra.mxu0 %v10561
      %10776 = vmatprep.subr.bf16.mxu0 %v10580
      %10777 = vmatpush1.bf16.xpose.msra.mxu0 %v10562
      %10778 = vmatprep.subr.bf16.mxu0 %v10581
      %10779 = vmatpush1.bf16.xpose.msra.mxu0 %v10563
      %10780 = vmatprep.subr.bf16.mxu0 %v10582
      %10781 = vmatpush1.bf16.xpose.msra.mxu0 %v10564
      %10782 = vmatprep.mubr.bf16.mxu0 %v10640
      %10783 = vmatmul.mubr.bf16.gmra.mrb[0].mxu0 %v10626
      %v10784 = vpop.f32.mrb[0].mxu0
      %v10785 = vadd.f32 %v10744, %v10784
      %v10786 = vpop.f32.mrb[0].mxu0
      %v10787 = vadd.f32 %v10746, %v10786
      %v10788 = vpop.f32.mrb[0].mxu0
      %v10789 = vpop.f32.mrb[0].mxu0
      %10790 = vdwg.mxu0
      %10791 = vmatprep.subr.bf16.mxu0 %v10550
      %10792 = vmatpush1.bf16.xpose.msra.mxu0 %v10532
      %10793 = vmatprep.subr.bf16.mxu0 %v10551
      %10794 = vmatpush1.bf16.xpose.msra.mxu0 %v10533
      %10795 = vmatprep.subr.bf16.mxu0 %v10552
      %10796 = vmatpush1.bf16.xpose.msra.mxu0 %v10534
      %10797 = vmatprep.subr.bf16.mxu0 %v10553
      %10798 = vmatpush1.bf16.xpose.msra.mxu0 %v10535
      %10799 = vmatprep.subr.bf16.mxu0 %v10554
      %10800 = vmatpush1.bf16.xpose.msra.mxu0 %v10536
      %10801 = vmatprep.subr.bf16.mxu0 %v10555
      %10802 = vmatpush1.bf16.xpose.msra.mxu0 %v10537
      %10803 = vmatprep.subr.bf16.mxu0 %v10556
      %10804 = vmatpush1.bf16.xpose.msra.mxu0 %v10538
      %10805 = vmatprep.subr.bf16.mxu0 %v10557
      %10806 = vmatpush1.bf16.xpose.msra.mxu0 %v10539
      %10807 = vmatprep.subr.bf16.mxu0 %v10558
      %10808 = vmatpush1.bf16.xpose.msra.mxu0 %v10540
      %10809 = vmatprep.subr.bf16.mxu0 %v10559
      %10810 = vmatpush1.bf16.xpose.msra.mxu0 %v10541
      %10811 = vmatprep.subr.bf16.mxu0 %v10560
      %10812 = vmatpush1.bf16.xpose.msra.mxu0 %v10542
      %10813 = vmatprep.subr.bf16.mxu0 %v10561
      %10814 = vmatpush1.bf16.xpose.msra.mxu0 %v10543
      %10815 = vmatprep.subr.bf16.mxu0 %v10562
      %10816 = vmatpush1.bf16.xpose.msra.mxu0 %v10544
      %10817 = vmatprep.subr.bf16.mxu0 %v10563
      %10818 = vmatpush1.bf16.xpose.msra.mxu0 %v10545
      %10819 = vmatprep.subr.bf16.mxu0 %v10564
      %10820 = vmatpush1.bf16.xpose.msra.mxu0 %v10546
      %10821 = vmatprep.subr.bf16.mxu0 %v10565
      %10822 = vmatpush1.bf16.xpose.msra.mxu0 %v10547
      %10823 = vmatprep.mubr.bf16.mxu0 %v10644
      %10824 = vmatmul.mubr.bf16.gmra.mrb[0].mxu0 %v10642
      %v10825 = vpop.f32.mrb[0].mxu0
      %v10826 = vadd.f32 %v10785, %v10825
      %v10827 = vpop.f32.mrb[0].mxu0
      %v10828 = vadd.f32 %v10787, %v10827
      %v10829 = vpop.f32.mrb[0].mxu0
      %v10830 = vpop.f32.mrb[0].mxu0
      %10831 = vdwg.mxu0
      %10832 = vmatprep.subr.bf16.mxu0 0
      %10833 = vmatpush1.bf16.xpose.msra.mxu0 %v10568
      %10834 = vmatprep.subr.bf16.mxu0 0
      %10835 = vmatpush1.bf16.xpose.msra.mxu0 %v10569
      %10836 = vmatprep.subr.bf16.mxu0 0
      %10837 = vmatpush1.bf16.xpose.msra.mxu0 %v10570
      %10838 = vmatprep.subr.bf16.mxu0 0
      %10839 = vmatpush1.bf16.xpose.msra.mxu0 %v10571
      %10840 = vmatprep.subr.bf16.mxu0 0
      %10841 = vmatpush1.bf16.xpose.msra.mxu0 %v10572
      %10842 = vmatprep.subr.bf16.mxu0 0
      %10843 = vmatpush1.bf16.xpose.msra.mxu0 %v10573
      %10844 = vmatprep.subr.bf16.mxu0 0
      %10845 = vmatpush1.bf16.xpose.msra.mxu0 %v10574
      %10846 = vmatprep.subr.bf16.mxu0 0
      %10847 = vmatpush1.bf16.xpose.msra.mxu0 %v10575
      %10848 = vmatprep.subr.bf16.mxu0 0
      %10849 = vmatpush1.bf16.xpose.msra.mxu0 %v10576
      %10850 = vmatprep.subr.bf16.mxu0 0
      %10851 = vmatpush1.bf16.xpose.msra.mxu0 %v10577
      %10852 = vmatprep.subr.bf16.mxu0 0
      %10853 = vmatpush1.bf16.xpose.msra.mxu0 %v10578
      %10854 = vmatprep.subr.bf16.mxu0 0
      %10855 = vmatpush1.bf16.xpose.msra.mxu0 %v10579
      %10856 = vmatprep.subr.bf16.mxu0 0
      %10857 = vmatpush1.bf16.xpose.msra.mxu0 %v10580
      %10858 = vmatprep.subr.bf16.mxu0 0
      %10859 = vmatpush1.bf16.xpose.msra.mxu0 %v10581
      %10860 = vmatprep.subr.bf16.mxu0 0
      %10861 = vmatpush1.bf16.xpose.msra.mxu0 %v10582
      %10862 = vmatprep.subr.bf16.mxu0 0
      %10863 = vmatpush1.bf16.xpose.msra.mxu0 %v10583
      %10864 = vmatprep.mubr.bf16.mxu0 0
      %10865 = vmatmul.mubr.bf16.gmra.mrb[0].mxu0 %v10658
      %v10866 = vpop.f32.mrb[0].mxu0
      %v10867 = vadd.f32 %v10826, %v10866
      %v10868 = vpop.f32.mrb[0].mxu0
      %v10869 = vadd.f32 %v10828, %v10868
      %v10870 = vpop.f32.mrb[0].mxu0
      %v10871 = vpop.f32.mrb[0].mxu0
      %10872 = vdwg.mxu0
      %v10875 = vcombine.low %v10867, %v10869
      %v10877 = vunpack.c.l.s4 1966171168
      %v10878 = vunpack.c.0.s8 %v10877
      %v10879 = vlaneseq
      %v10880 = vshrl.u32 %v10879, 7
      %v10881 = vsub.s32 %v10878, %v10880
      %v10882 = vrot.slane %v10875, %v10881
      %v10884 = vunpack.c.l.s4 1966171168
      %v10885 = vunpack.c.0.s8 %v10884
      %v10886 = vlaneseq
      %v10887 = vshrl.u32 %v10886, 7
      %v10888 = vsub.s32 %v10885, %v10887
      %v10889 = vrot.slane %v10882, %v10888
      %v10891 = vlaneseq
      %vm10892 = vcmp.ge.s32.totalorder %v10891, 0
      %vm10893 = vcmp.lt.s32.totalorder %v10891, 256
      %vm10894 = vmand %vm10892, %vm10893
      %10895 = vst.msk [vmem:[%s359] sm:$0x3] %vm10894, %v10889
      %p10896 = scmp.lt.s32.totalorder %s23, 1
      %s10897 = scalar_select %p10896, %s23, 1
      %s10898 = smul.addr %s10897, 2
      %s10899 = scalar_lea.vmem %s10, %s10898
      // Predicated region
      $region68: #{_convlstm_forward.1} parent=59 // pred_check
        %p10900 = pneg %p256
      $region69: #{_convlstm_forward.1} parent=59 // pred_check_branch
        %10902 = sbr.rel (%p10900) target = $region71
      $region70: #{_convlstm_forward.1} parent=59 // pred_region
        _
      $region71: #{_convlstm_forward.1} parent=59 // pred_fallthru
        _
    $region60: #{_convlstm_forward.1} parent=5 // pred_fallthru
      _
    %p10903 = scmp.le.s32.totalorder 2, %s18
    // Predicated region
    $region72: #{_convlstm_forward.1} parent=5 // pred_check
      %p10904 = pneg %p10903
    $region73: #{_convlstm_forward.1} parent=5 // pred_check_branch
      %10906 = sbr.rel (%p10904) target = $region75
    $region74: #{_convlstm_forward.1} parent=5 // pred_region
      %s10907 = ssub.s32 %s18, 2
      // Predicated region
      $region76: #{_convlstm_forward.1} parent=74 // pred_check
        %p10908 = pneg %p262
      $region77: #{_convlstm_forward.1} parent=74 // pred_check_branch
        %10910 = sbr.rel (%p10908) target = $region79
      $region78: #{_convlstm_forward.1} parent=74 // pred_region
        %p10911 = scmp.lt.s32.totalorder %s24, 1
        %s10912 = scalar_select %p10911, %s24, 1
        %s10913 = smul.addr %s10912, 2
        %s10914 = scalar_lea.vmem %s10, %s10913
      $region79: #{_convlstm_forward.1} parent=74 // pred_fallthru
        _
    $region75: #{_convlstm_forward.1} parent=5 // pred_fallthru
      _
  $region6: #{_convlstm_forward.1} parent=0 // loop_footer
    %s22 = sadd.s32 1, %s18
  $region7: #{_convlstm_forward.1} parent=0 // loop_footer_branch
    %17 = sbr.rel target = $region3
  $region8: #{_convlstm_forward.1} parent=0 // loop_exit
    _

</llo_original>
